<compile_context>
chip_gen: v7x
topology: tpu7x:2x2x1
jax: 0.10.0
libtpu: 0.0.40
codegen_flags: <defaults>
</compile_context>

<pallas_src>
import functools

import jax
import jax.numpy as jnp
import numpy as np
from jax.experimental import pallas as pl
from jax.experimental.pallas import tpu as pltpu

LRELU_SLOPE = 0.2
BN_EPS = 1e-5
KSIZE = 4

# Conservative per-pallas_call VMEM footprint budget.  Inputs are double
# buffered by the pipeline, so keep the raw estimate well below the smallest
# scoped-VMEM default across generations (16 MiB on v5e, 32 MiB on v6e/v7x).
VMEM_BUDGET = 12 * 1024 * 1024


# ----------------------------- Pallas kernels -----------------------------

def _conv_act_kernel(p_ref, w_ref, o_ref, *, fuse_lrelu):
    # conv-as-matmul (bf16 operands, f32 accumulation) + optional LeakyReLU(0.2)
    y = jnp.dot(p_ref[...], w_ref[...], preferred_element_type=jnp.float32)
    if fuse_lrelu:
        y = jnp.where(y > 0, y, LRELU_SLOPE * y)
    o_ref[...] = y.astype(o_ref.dtype)


def _conv_bn_lrelu_kernel(p_ref, w_ref, g_ref, b_ref, o_ref):
    # Whole layer resident in VMEM: conv-as-matmul, BatchNorm with batch
    # statistics (centered / two-pass variance), LeakyReLU(0.2) — all fused.
    y = jnp.dot(p_ref[...], w_ref[...], preferred_element_type=jnp.float32)
    mean = jnp.mean(y, axis=0, keepdims=True)
    yc = y - mean
    var = jnp.mean(yc * yc, axis=0, keepdims=True)          # biased variance
    scale = g_ref[...] * jax.lax.rsqrt(var + BN_EPS)
    z = yc * scale + b_ref[...]
    o_ref[...] = jnp.where(z > 0, z, LRELU_SLOPE * z).astype(o_ref.dtype)


def _conv_bn_lrelu_head_kernel(p_ref, w_ref, g_ref, b_ref, w5_ref, seg_ref, o_ref):
    # Layer 4 (conv + BN + LReLU) fused with layer 5 (4x4 valid conv producing
    # one scalar per sample).  No intermediate activation ever leaves VMEM.
    y = jnp.dot(p_ref[...], w_ref[...], preferred_element_type=jnp.float32)
    mean = jnp.mean(y, axis=0, keepdims=True)
    yc = y - mean
    var = jnp.mean(yc * yc, axis=0, keepdims=True)
    scale = g_ref[...] * jax.lax.rsqrt(var + BN_EPS)
    z = yc * scale + b_ref[...]
    z = jnp.where(z > 0, z, LRELU_SLOPE * z)                 # (R4, C4) f32
    # layer 5: out[n] = sum_{p,c} z[n*S + p, c] * w5[p, c]
    zw = z * w5_ref[...]                                     # (R4, C4)
    t5 = jnp.dot(seg_ref[...], zw, preferred_element_type=jnp.float32)  # (N, C4)
    o_ref[...] = jnp.sum(t5, axis=1, keepdims=True)          # (N, 1)


def _bn_lrelu_kernel(x_ref, m_ref, sc_ref, b_ref, o_ref):
    # Fallback-only: normalize + LeakyReLU for layers too large to fuse.
    z = (x_ref[...] - m_ref[...]) * sc_ref[...] + b_ref[...]
    o_ref[...] = jnp.where(z > 0, z, LRELU_SLOPE * z).astype(o_ref.dtype)


# ----------------------------- tiling helpers -----------------------------

def _pick_row_tile(rows, row_bytes, fixed_bytes=0):
    """Largest row tile whose (double-buffered) footprint fits VMEM_BUDGET.

    Prefers a single full-`rows` block: per-grid-step overhead (~0.35 us)
    dominates at these sizes, so fewer/larger steps win.
    """
    if 2 * (rows * row_bytes + fixed_bytes) <= VMEM_BUDGET:
        return rows
    t = max(8, (VMEM_BUDGET // (2 * row_bytes)) // 8 * 8)
    t = min(t, max(8, rows // 8 * 8))
    while t > 8 and rows % t:
        t -= 8
    if rows % t:
        return rows      # no clean multiple-of-8 divisor: correctness first
    return t


# ----------------------------- pallas_call wrappers -----------------------------

def conv_act(patches, w_mat, *, lrelu, out_dtype):
    R, K = patches.shape
    C = w_mat.shape[1]
    row_bytes = K * patches.dtype.itemsize + C * (4 + jnp.dtype(out_dtype).itemsize)
    t = _pick_row_tile(R, row_bytes, fixed_bytes=K * C * w_mat.dtype.itemsize)
    kernel = functools.partial(_conv_act_kernel, fuse_lrelu=lrelu)
    return pl.pallas_call(
        kernel,
        out_shape=jax.ShapeDtypeStruct((R, C), out_dtype),
        grid_spec=pltpu.PrefetchScalarGridSpec(
            num_scalar_prefetch=0, grid=(R // t,),
            in_specs=[pl.BlockSpec((t, K), lambda i: (i, 0)),
                      pl.BlockSpec((K, C), lambda i: (0, 0))],
            out_specs=pl.BlockSpec((t, C), lambda i: (i, 0))),
        compiler_params=pltpu.CompilerParams(
            dimension_semantics=("parallel",)),
    )(patches, w_mat)


def bn_lrelu(y, mean, scale, beta, *, out_dtype):
    # Fallback-only (large layers): tiled, row-parallel normalize + LReLU.
    R, C = y.shape
    t = _pick_row_tile(R, C * (4 + jnp.dtype(out_dtype).itemsize))
    return pl.pallas_call(
        _bn_lrelu_kernel,
        out_shape=jax.ShapeDtypeStruct((R, C), out_dtype),
        grid_spec=pltpu.PrefetchScalarGridSpec(
            num_scalar_prefetch=0, grid=(R // t,),
            in_specs=[pl.BlockSpec((t, C), lambda i: (i, 0)),
                      pl.BlockSpec((1, C), lambda i: (0, 0)),
                      pl.BlockSpec((1, C), lambda i: (0, 0)),
                      pl.BlockSpec((1, C), lambda i: (0, 0))],
            out_specs=pl.BlockSpec((t, C), lambda i: (i, 0))),
        compiler_params=pltpu.CompilerParams(
            dimension_semantics=("parallel",)),
    )(y, mean.astype(jnp.float32), scale.astype(jnp.float32),
      beta.astype(jnp.float32))


def conv_bn_lrelu(patches, w_mat, gamma, beta, *, out_dtype=jnp.bfloat16):
    R, K = patches.shape
    C = w_mat.shape[1]
    est = 2 * (R * K * patches.dtype.itemsize + K * C * w_mat.dtype.itemsize) \
        + R * C * (jnp.dtype(out_dtype).itemsize + 4)
    if est > VMEM_BUDGET:
        # Too big to keep the whole layer in VMEM: tiled conv, stats in XLA,
        # tiled BN+LReLU.  (Never hit at the shipped shapes.)
        y = conv_act(patches, w_mat, lrelu=False, out_dtype=jnp.float32)
        mean = jnp.mean(y, axis=0, keepdims=True)
        var = jnp.var(y, axis=0, keepdims=True)
        scale = gamma[None, :] * jax.lax.rsqrt(var + BN_EPS)
        return bn_lrelu(y, mean, scale, beta[None, :], out_dtype=out_dtype)

    g = gamma.reshape(1, C).astype(jnp.float32)
    b = beta.reshape(1, C).astype(jnp.float32)
    return pl.pallas_call(
        _conv_bn_lrelu_kernel,
        out_shape=jax.ShapeDtypeStruct((R, C), out_dtype),
        grid_spec=pltpu.PrefetchScalarGridSpec(
            num_scalar_prefetch=0, grid=(1,),
            in_specs=[pl.BlockSpec((R, K), lambda i: (0, 0)),
                      pl.BlockSpec((K, C), lambda i: (0, 0)),
                      pl.BlockSpec((1, C), lambda i: (0, 0)),
                      pl.BlockSpec((1, C), lambda i: (0, 0))],
            out_specs=pl.BlockSpec((R, C), lambda i: (0, 0))),
        compiler_params=pltpu.CompilerParams(
            dimension_semantics=("arbitrary",)),
    )(patches, w_mat, g, b)


def conv_bn_lrelu_head(patches, w_mat, gamma, beta, w5_tiled, seg):
    R, K = patches.shape
    C = w_mat.shape[1]
    N = seg.shape[0]
    g = gamma.reshape(1, C).astype(jnp.float32)
    b = beta.reshape(1, C).astype(jnp.float32)
    return pl.pallas_call(
        _conv_bn_lrelu_head_kernel,
        out_shape=jax.ShapeDtypeStruct((N, 1), jnp.float32),
        grid_spec=pltpu.PrefetchScalarGridSpec(
            num_scalar_prefetch=0, grid=(1,),
            in_specs=[pl.BlockSpec((R, K), lambda i: (0, 0)),
                      pl.BlockSpec((K, C), lambda i: (0, 0)),
                      pl.BlockSpec((1, C), lambda i: (0, 0)),
                      pl.BlockSpec((1, C), lambda i: (0, 0)),
                      pl.BlockSpec((R, C), lambda i: (0, 0)),
                      pl.BlockSpec((N, R), lambda i: (0, 0))],
            out_specs=pl.BlockSpec((N, 1), lambda i: (0, 0))),
        compiler_params=pltpu.CompilerParams(
            dimension_semantics=("arbitrary",)),
    )(patches, w_mat, g, b, w5_tiled, seg)


# ----------------------------- glue (plain JAX) -----------------------------

def im2col(x_nhwc, k, stride, pad):
    """Extract conv patches.  Returns ((N*Ho*Wo, k*k*C), (N, Ho, Wo))."""
    N, H, W, C = x_nhwc.shape
    if pad:
        x_nhwc = jnp.pad(x_nhwc, ((0, 0), (pad, pad), (pad, pad), (0, 0)))
    Ho = (H + 2 * pad - k) // stride + 1
    Wo = (W + 2 * pad - k) // stride + 1
    cols = []
    for kh in range(k):
        for kw in range(k):
            cols.append(x_nhwc[:, kh:kh + stride * Ho:stride,
                               kw:kw + stride * Wo:stride, :])    # (N,Ho,Wo,C)
    patches = jnp.concatenate(cols, axis=-1)                       # (kh, kw, cin)
    return patches.reshape(N * Ho * Wo, k * k * C), (N, Ho, Wo)


def w_to_mat(w_oihw, dtype=jnp.bfloat16):
    """PyTorch OIHW conv weight -> (kh*kw*Cin, Cout) matching im2col ordering."""
    cout, cin, kh, kw = w_oihw.shape
    return jnp.transpose(w_oihw, (2, 3, 1, 0)).reshape(kh * kw * cin, cout).astype(dtype)


def pack_params(params):
    """Hoisted, once-per-model weight packing (bf16 MXU operands)."""
    packed = {f"w{i}": w_to_mat(params[f"w{i}"]) for i in range(1, 6)}
    # Layer-5 weight also as an (kh*kw, Cin) f32 matrix for the fused head.
    cout5, cin5, kh5, kw5 = params["w5"].shape
    packed["w5_hw_c"] = jnp.transpose(params["w5"], (2, 3, 1, 0)).reshape(
        kh5 * kw5, cin5).astype(jnp.float32)
    for i in (2, 3, 4):
        packed[f"g{i}"] = params[f"g{i}"].astype(jnp.float32)
        packed[f"b{i}"] = params[f"b{i}"].astype(jnp.float32)
    return packed


def init_params(key, n_channels=3, n_fmaps=8):
    ks = jax.random.split(key, 5)

    def conv_w(k, cout, cin):
        return (0.02 * jax.random.normal(k, (cout, cin, KSIZE, KSIZE))).astype(jnp.float32)

    p = {
        "w1": conv_w(ks[0], n_fmaps, n_channels),
        "w2": conv_w(ks[1], n_fmaps * 2, n_fmaps),
        "w3": conv_w(ks[2], n_fmaps * 4, n_fmaps * 2),
        "w4": conv_w(ks[3], n_fmaps * 8, n_fmaps * 4),
        "w5": conv_w(ks[4], 1, n_fmaps * 8),
    }
    for idx, c in ((2, n_fmaps * 2), (3, n_fmaps * 4), (4, n_fmaps * 8)):
        p[f"g{idx}"] = jnp.ones((c,), jnp.float32)
        p[f"b{idx}"] = jnp.zeros((c,), jnp.float32)
    return p


def discriminator_forward(packed, x_nchw, activate=False):
    # NCHW -> NHWC; matmul operands in bf16 (f32 accumulation inside kernels).
    x = jnp.transpose(x_nchw, (0, 2, 3, 1)).astype(jnp.bfloat16)

    # layer 1: Conv(4, s=2, p=1) + LeakyReLU(0.2)  (row-parallel tiles)
    p, (N, Ho, Wo) = im2col(x, KSIZE, 2, 1)
    x = conv_act(p, packed["w1"], lrelu=True,
                 out_dtype=jnp.bfloat16).reshape(N, Ho, Wo, -1)

    # layers 2-3: Conv + BatchNorm(batch stats) + LeakyReLU fused in one kernel
    for idx in (2, 3):
        p, (N, Ho, Wo) = im2col(x, KSIZE, 2, 1)
        x = conv_bn_lrelu(p, packed[f"w{idx}"], packed[f"g{idx}"],
                          packed[f"b{idx}"]).reshape(N, Ho, Wo, -1)

    # layer 4 (Conv+BN+LReLU) fused with layer 5 (4x4 valid conv -> 1 scalar)
    p, (N, Ho, Wo) = im2col(x, KSIZE, 2, 1)
    if Ho == KSIZE and Wo == KSIZE:
        spatial = Ho * Wo
        seg = jnp.asarray(np.kron(np.eye(N, dtype=np.float32),
                                  np.ones((1, spatial), np.float32)))   # (N, N*16)
        w5t = jnp.tile(packed["w5_hw_c"], (N, 1))                       # (N*16, C4)
        out = conv_bn_lrelu_head(p, packed["w4"], packed["g4"], packed["b4"],
                                 w5t, seg).reshape(-1)
    else:
        # General spatial size: keep layer 5 as its own (plain) conv.
        x = conv_bn_lrelu(p, packed["w4"], packed["g4"],
                          packed["b4"]).reshape(N, Ho, Wo, -1)
        p5, _ = im2col(x, KSIZE, 1, 0)
        out = conv_act(p5, packed["w5"], lrelu=False,
                       out_dtype=jnp.float32).reshape(-1)

    if activate:
        out = jax.nn.sigmoid(out)   # tiny elementwise on N scalars; kept in glue
    return out


# ----------------------------- pure-JAX reference -----------------------------

def discriminator_ref(params, x_nchw, activate=False):
    def conv(x, w, stride, pad):
        return jax.lax.conv_general_dilated(
            x, w, (stride, stride), [(pad, pad), (pad, pad)],
            dimension_numbers=("NCHW", "OIHW", "NCHW"))

    def lrelu(x):
        return jnp.where(x > 0, x, LRELU_SLOPE * x)

    def bn(x, g, b):
        mean = jnp.mean(x, axis=(0, 2, 3), keepdims=True)
        var = jnp.var(x, axis=(0, 2, 3), keepdims=True)
        return ((x - mean) * jax.lax.rsqrt(var + BN_EPS)
                * g[None, :, None, None] + b[None, :, None, None])

    x = x_nchw.astype(jnp.float32)
    x = lrelu(conv(x, params["w1"], 2, 1))
    x = lrelu(bn(conv(x, params["w2"], 2, 1), params["g2"], params["b2"]))
    x = lrelu(bn(conv(x, params["w3"], 2, 1), params["g3"], params["b3"]))
    x = lrelu(bn(conv(x, params["w4"], 2, 1), params["g4"], params["b4"]))
    x = conv(x, params["w5"], 1, 0)
    out = x.reshape(-1)
    if activate:
        out = jax.nn.sigmoid(out)
    return out


# ----------------------------- main -----------------------------

if __name__ == "__main__":
    key = jax.random.PRNGKey(0)
    k_param, k_x = jax.random.split(key)

    N, C, H = 2, 3, 64           # 64x64 input: minimum spatial size for this stack
    n_fmaps = 8                  # small feature maps for the synthetic test
    params = init_params(k_param, n_channels=C, n_fmaps=n_fmaps)
    packed = pack_params(params)         # weight packing hoisted out of forward
    x = jax.random.normal(k_x, (N, C, H, H), dtype=jnp.float32)

    fwd = jax.jit(lambda pk, xx: discriminator_forward(pk, xx, activate=False))
    out = jax.block_until_ready(fwd(packed, x))
    assert out.shape == (N,), out.shape

    ref = jax.block_until_ready(discriminator_ref(params, x, activate=False))
    # bf16 MXU operands (per perf feedback) -> compare with bf16-appropriate
    # tolerance against the f32 reference; structural errors are O(1).
    np.testing.assert_allclose(np.asarray(out), np.asarray(ref), rtol=5e-2, atol=5e-2)

    print("KERNEL_OK")
</pallas_src>

<mosaic_0001>
module attributes {stable_mosaic.version = 11 : i64} {
  func.func @_conv_act_kernel(%arg0: i32, %arg1: memref<2048x48xbf16, #tpu.memory_space<vmem>>, %arg2: memref<48x8xbf16, #tpu.memory_space<vmem>>, %arg3: memref<2048x8xbf16, #tpu.memory_space<vmem>>) attributes {dimension_semantics = [#tpu.dimension_semantics<parallel>], iteration_bounds = array<i64: 1>, scalar_prefetch = 0 : i64, scratch_operands = 0 : i64, tpu.core_type = #tpu.core_type<tc>, window_params = [{transform_indices = @transform_0, window_bounds = array<i64: 2048, 48>}, {pipeline_mode = #tpu.pipeline_mode<synchronous>, transform_indices = @transform_1, window_bounds = array<i64: 48, 8>}, {transform_indices = @transform_2, window_bounds = array<i64: 2048, 8>}]} {
    %c0 = arith.constant 0 : index
    %c0_0 = arith.constant 0 : index
    %0 = vector.load %arg1[%c0, %c0_0] : memref<2048x48xbf16, #tpu.memory_space<vmem>>, vector<2048x48xbf16>
    %c0_1 = arith.constant 0 : index
    %c0_2 = arith.constant 0 : index
    %1 = vector.load %arg2[%c0_1, %c0_2] : memref<48x8xbf16, #tpu.memory_space<vmem>>, vector<48x8xbf16>
    %cst = arith.constant dense<0.000000e+00> : vector<2048x8xf32>
    %2 = tpu.matmul %0, %1, %cst {dimension_numbers = #tpu.dot_dimension_numbers<[1], [0], [0], [1], [0, 0, 1, 1], [], []>} : vector<2048x48xbf16>, vector<48x8xbf16>, vector<2048x8xf32> -> vector<2048x8xf32>
    %cst_3 = arith.constant 0.000000e+00 : f32
    %3 = vector.broadcast %cst_3 : f32 to vector<2048x8xf32>
    %4 = arith.cmpf ogt, %2, %3 : vector<2048x8xf32>
    %cst_4 = arith.constant 2.000000e-01 : f32
    %5 = vector.broadcast %cst_4 : f32 to vector<2048x8xf32>
    %6 = arith.mulf %5, %2 : vector<2048x8xf32>
    %7 = arith.select %4, %2, %6 : vector<2048x8xi1>, vector<2048x8xf32>
    %8 = arith.truncf %7 : vector<2048x8xf32> to vector<2048x8xbf16>
    %c0_5 = arith.constant 0 : index
    %c0_6 = arith.constant 0 : index
    %9 = vector.load %arg3[%c0_5, %c0_6] : memref<2048x8xbf16, #tpu.memory_space<vmem>>, vector<2048x8xbf16>
    tpu.vector_store %arg3[%c0_5, %c0_6], %8 {strides = array<i32>} : memref<2048x8xbf16, #tpu.memory_space<vmem>>, vector<2048x8xbf16>,
    return
  }
  func.func @transform_0(%arg0: i32) -> (i32, i32) {
    %c0_i32 = arith.constant 0 : i32
    %c0_i32_0 = arith.constant 0 : i32
    return %arg0, %c0_i32 : i32, i32
  }
  func.func @transform_1(%arg0: i32) -> (i32, i32) {
    %c0_i32 = arith.constant 0 : i32
    %c0_i32_0 = arith.constant 0 : i32
    %c0_i32_1 = arith.constant 0 : i32
    return %c0_i32, %c0_i32_0 : i32, i32
  }
  func.func @transform_2(%arg0: i32) -> (i32, i32) {
    %c0_i32 = arith.constant 0 : i32
    %c0_i32_0 = arith.constant 0 : i32
    return %arg0, %c0_i32 : i32, i32
  }
}

module attributes {stable_mosaic.version = 11 : i64} {
  func.func @_conv_bn_lrelu_kernel(%arg0: i32, %arg1: memref<512x128xbf16, #tpu.memory_space<vmem>>, %arg2: memref<128x16xbf16, #tpu.memory_space<vmem>>, %arg3: memref<1x16xf32, #tpu.memory_space<vmem>>, %arg4: memref<1x16xf32, #tpu.memory_space<vmem>>, %arg5: memref<512x16xbf16, #tpu.memory_space<vmem>>) attributes {dimension_semantics = [#tpu.dimension_semantics<arbitrary>], iteration_bounds = array<i64: 1>, scalar_prefetch = 0 : i64, scratch_operands = 0 : i64, tpu.core_type = #tpu.core_type<tc>, window_params = [{pipeline_mode = #tpu.pipeline_mode<synchronous>, transform_indices = @transform_0, window_bounds = array<i64: 512, 128>}, {pipeline_mode = #tpu.pipeline_mode<synchronous>, transform_indices = @transform_1, window_bounds = array<i64: 128, 16>}, {pipeline_mode = #tpu.pipeline_mode<synchronous>, transform_indices = @transform_2, window_bounds = array<i64: 1, 16>}, {pipeline_mode = #tpu.pipeline_mode<synchronous>, transform_indices = @transform_3, window_bounds = array<i64: 1, 16>}, {pipeline_mode = #tpu.pipeline_mode<synchronous>, transform_indices = @transform_4, window_bounds = array<i64: 512, 16>}]} {
    %c0 = arith.constant 0 : index
    %c0_0 = arith.constant 0 : index
    %0 = vector.load %arg1[%c0, %c0_0] : memref<512x128xbf16, #tpu.memory_space<vmem>>, vector<512x128xbf16>
    %c0_1 = arith.constant 0 : index
    %c0_2 = arith.constant 0 : index
    %1 = vector.load %arg2[%c0_1, %c0_2] : memref<128x16xbf16, #tpu.memory_space<vmem>>, vector<128x16xbf16>
    %cst = arith.constant dense<0.000000e+00> : vector<512x16xf32>
    %2 = tpu.matmul %0, %1, %cst {dimension_numbers = #tpu.dot_dimension_numbers<[1], [0], [0], [1], [0, 0, 1, 1], [], []>} : vector<512x128xbf16>, vector<128x16xbf16>, vector<512x16xf32> -> vector<512x16xf32>
    %cst_3 = arith.constant dense<0.000000e+00> : vector<16xf32>
    %3 = vector.multi_reduction <add>, %2, %cst_3 [0] : vector<512x16xf32> to vector<16xf32>
    %4 = vector.shape_cast %3 : vector<16xf32> to vector<1x16xf32>
    %cst_4 = arith.constant 5.120000e+02 : f32
    %5 = vector.broadcast %cst_4 : f32 to vector<1x16xf32>
    %6 = arith.divf %4, %5 : vector<1x16xf32>
    %7 = vector.broadcast %6 : vector<1x16xf32> to vector<512x16xf32>
    %8 = arith.subf %2, %7 : vector<512x16xf32>
    %9 = arith.mulf %8, %8 : vector<512x16xf32>
    %cst_5 = arith.constant dense<0.000000e+00> : vector<16xf32>
    %10 = vector.multi_reduction <add>, %9, %cst_5 [0] : vector<512x16xf32> to vector<16xf32>
    %11 = vector.shape_cast %10 : vector<16xf32> to vector<1x16xf32>
    %cst_6 = arith.constant 5.120000e+02 : f32
    %12 = vector.broadcast %cst_6 : f32 to vector<1x16xf32>
    %13 = arith.divf %11, %12 : vector<1x16xf32>
    %c0_7 = arith.constant 0 : index
    %c0_8 = arith.constant 0 : index
    %14 = vector.load %arg3[%c0_7, %c0_8] : memref<1x16xf32, #tpu.memory_space<vmem>>, vector<1x16xf32>
    %cst_9 = arith.constant 9.99999974E-6 : f32
    %15 = vector.broadcast %cst_9 : f32 to vector<1x16xf32>
    %16 = arith.addf %13, %15 : vector<1x16xf32>
    %17 = math.rsqrt %16 : vector<1x16xf32>
    %18 = arith.mulf %14, %17 : vector<1x16xf32>
    %19 = vector.broadcast %18 : vector<1x16xf32> to vector<512x16xf32>
    %20 = arith.mulf %8, %19 : vector<512x16xf32>
    %c0_10 = arith.constant 0 : index
    %c0_11 = arith.constant 0 : index
    %21 = vector.load %arg4[%c0_10, %c0_11] : memref<1x16xf32, #tpu.memory_space<vmem>>, vector<1x16xf32>
    %22 = vector.broadcast %21 : vector<1x16xf32> to vector<512x16xf32>
    %23 = arith.addf %20, %22 : vector<512x16xf32>
    %cst_12 = arith.constant 0.000000e+00 : f32
    %24 = vector.broadcast %cst_12 : f32 to vector<512x16xf32>
    %25 = arith.cmpf ogt, %23, %24 : vector<512x16xf32>
    %cst_13 = arith.constant 2.000000e-01 : f32
    %26 = vector.broadcast %cst_13 : f32 to vector<512x16xf32>
    %27 = arith.mulf %26, %23 : vector<512x16xf32>
    %28 = arith.select %25, %23, %27 : vector<512x16xi1>, vector<512x16xf32>
    %29 = arith.truncf %28 : vector<512x16xf32> to vector<512x16xbf16>
    %c0_14 = arith.constant 0 : index
    %c0_15 = arith.constant 0 : index
    %30 = vector.load %arg5[%c0_14, %c0_15] : memref<512x16xbf16, #tpu.memory_space<vmem>>, vector<512x16xbf16>
    tpu.vector_store %arg5[%c0_14, %c0_15], %29 {strides = array<i32>} : memref<512x16xbf16, #tpu.memory_space<vmem>>, vector<512x16xbf16>,
    return
  }
  func.func @transform_0(%arg0: i32) -> (i32, i32) {
    %c0_i32 = arith.constant 0 : i32
    %c0_i32_0 = arith.constant 0 : i32
    %c0_i32_1 = arith.constant 0 : i32
    return %c0_i32, %c0_i32_0 : i32, i32
  }
  func.func @transform_1(%arg0: i32) -> (i32, i32) {
    %c0_i32 = arith.constant 0 : i32
    %c0_i32_0 = arith.constant 0 : i32
    %c0_i32_1 = arith.constant 0 : i32
    return %c0_i32, %c0_i32_0 : i32, i32
  }
  func.func @transform_2(%arg0: i32) -> (i32, i32) {
    %c0_i32 = arith.constant 0 : i32
    %c0_i32_0 = arith.constant 0 : i32
    %c0_i32_1 = arith.constant 0 : i32
    return %c0_i32, %c0_i32_0 : i32, i32
  }
  func.func @transform_3(%arg0: i32) -> (i32, i32) {
    %c0_i32 = arith.constant 0 : i32
    %c0_i32_0 = arith.constant 0 : i32
    %c0_i32_1 = arith.constant 0 : i32
    return %c0_i32, %c0_i32_0 : i32, i32
  }
  func.func @transform_4(%arg0: i32) -> (i32, i32) {
    %c0_i32 = arith.constant 0 : i32
    %c0_i32_0 = arith.constant 0 : i32
    %c0_i32_1 = arith.constant 0 : i32
    return %c0_i32, %c0_i32_0 : i32, i32
  }
}

module attributes {stable_mosaic.version = 11 : i64} {
  func.func @_conv_bn_lrelu_kernel(%arg0: i32, %arg1: memref<128x256xbf16, #tpu.memory_space<vmem>>, %arg2: memref<256x32xbf16, #tpu.memory_space<vmem>>, %arg3: memref<1x32xf32, #tpu.memory_space<vmem>>, %arg4: memref<1x32xf32, #tpu.memory_space<vmem>>, %arg5: memref<128x32xbf16, #tpu.memory_space<vmem>>) attributes {dimension_semantics = [#tpu.dimension_semantics<arbitrary>], iteration_bounds = array<i64: 1>, scalar_prefetch = 0 : i64, scratch_operands = 0 : i64, tpu.core_type = #tpu.core_type<tc>, window_params = [{pipeline_mode = #tpu.pipeline_mode<synchronous>, transform_indices = @transform_0, window_bounds = array<i64: 128, 256>}, {pipeline_mode = #tpu.pipeline_mode<synchronous>, transform_indices = @transform_1, window_bounds = array<i64: 256, 32>}, {pipeline_mode = #tpu.pipeline_mode<synchronous>, transform_indices = @transform_2, window_bounds = array<i64: 1, 32>}, {pipeline_mode = #tpu.pipeline_mode<synchronous>, transform_indices = @transform_3, window_bounds = array<i64: 1, 32>}, {pipeline_mode = #tpu.pipeline_mode<synchronous>, transform_indices = @transform_4, window_bounds = array<i64: 128, 32>}]} {
    %c0 = arith.constant 0 : index
    %c0_0 = arith.constant 0 : index
    %0 = vector.load %arg1[%c0, %c0_0] : memref<128x256xbf16, #tpu.memory_space<vmem>>, vector<128x256xbf16>
    %c0_1 = arith.constant 0 : index
    %c0_2 = arith.constant 0 : index
    %1 = vector.load %arg2[%c0_1, %c0_2] : memref<256x32xbf16, #tpu.memory_space<vmem>>, vector<256x32xbf16>
    %cst = arith.constant dense<0.000000e+00> : vector<128x32xf32>
    %2 = tpu.matmul %0, %1, %cst {dimension_numbers = #tpu.dot_dimension_numbers<[1], [0], [0], [1], [0, 0, 1, 1], [], []>} : vector<128x256xbf16>, vector<256x32xbf16>, vector<128x32xf32> -> vector<128x32xf32>
    %cst_3 = arith.constant dense<0.000000e+00> : vector<32xf32>
    %3 = vector.multi_reduction <add>, %2, %cst_3 [0] : vector<128x32xf32> to vector<32xf32>
    %4 = vector.shape_cast %3 : vector<32xf32> to vector<1x32xf32>
    %cst_4 = arith.constant 1.280000e+02 : f32
    %5 = vector.broadcast %cst_4 : f32 to vector<1x32xf32>
    %6 = arith.divf %4, %5 : vector<1x32xf32>
    %7 = vector.broadcast %6 : vector<1x32xf32> to vector<128x32xf32>
    %8 = arith.subf %2, %7 : vector<128x32xf32>
    %9 = arith.mulf %8, %8 : vector<128x32xf32>
    %cst_5 = arith.constant dense<0.000000e+00> : vector<32xf32>
    %10 = vector.multi_reduction <add>, %9, %cst_5 [0] : vector<128x32xf32> to vector<32xf32>
    %11 = vector.shape_cast %10 : vector<32xf32> to vector<1x32xf32>
    %cst_6 = arith.constant 1.280000e+02 : f32
    %12 = vector.broadcast %cst_6 : f32 to vector<1x32xf32>
    %13 = arith.divf %11, %12 : vector<1x32xf32>
    %c0_7 = arith.constant 0 : index
    %c0_8 = arith.constant 0 : index
    %14 = vector.load %arg3[%c0_7, %c0_8] : memref<1x32xf32, #tpu.memory_space<vmem>>, vector<1x32xf32>
    %cst_9 = arith.constant 9.99999974E-6 : f32
    %15 = vector.broadcast %cst_9 : f32 to vector<1x32xf32>
    %16 = arith.addf %13, %15 : vector<1x32xf32>
    %17 = math.rsqrt %16 : vector<1x32xf32>
    %18 = arith.mulf %14, %17 : vector<1x32xf32>
    %19 = vector.broadcast %18 : vector<1x32xf32> to vector<128x32xf32>
    %20 = arith.mulf %8, %19 : vector<128x32xf32>
    %c0_10 = arith.constant 0 : index
    %c0_11 = arith.constant 0 : index
    %21 = vector.load %arg4[%c0_10, %c0_11] : memref<1x32xf32, #tpu.memory_space<vmem>>, vector<1x32xf32>
    %22 = vector.broadcast %21 : vector<1x32xf32> to vector<128x32xf32>
    %23 = arith.addf %20, %22 : vector<128x32xf32>
    %cst_12 = arith.constant 0.000000e+00 : f32
    %24 = vector.broadcast %cst_12 : f32 to vector<128x32xf32>
    %25 = arith.cmpf ogt, %23, %24 : vector<128x32xf32>
    %cst_13 = arith.constant 2.000000e-01 : f32
    %26 = vector.broadcast %cst_13 : f32 to vector<128x32xf32>
    %27 = arith.mulf %26, %23 : vector<128x32xf32>
    %28 = arith.select %25, %23, %27 : vector<128x32xi1>, vector<128x32xf32>
    %29 = arith.truncf %28 : vector<128x32xf32> to vector<128x32xbf16>
    %c0_14 = arith.constant 0 : index
    %c0_15 = arith.constant 0 : index
    %30 = vector.load %arg5[%c0_14, %c0_15] : memref<128x32xbf16, #tpu.memory_space<vmem>>, vector<128x32xbf16>
    tpu.vector_store %arg5[%c0_14, %c0_15], %29 {strides = array<i32>} : memref<128x32xbf16, #tpu.memory_space<vmem>>, vector<128x32xbf16>,
    return
  }
  func.func @transform_0(%arg0: i32) -> (i32, i32) {
    %c0_i32 = arith.constant 0 : i32
    %c0_i32_0 = arith.constant 0 : i32
    %c0_i32_1 = arith.constant 0 : i32
    return %c0_i32, %c0_i32_0 : i32, i32
  }
  func.func @transform_1(%arg0: i32) -> (i32, i32) {
    %c0_i32 = arith.constant 0 : i32
    %c0_i32_0 = arith.constant 0 : i32
    %c0_i32_1 = arith.constant 0 : i32
    return %c0_i32, %c0_i32_0 : i32, i32
  }
  func.func @transform_2(%arg0: i32) -> (i32, i32) {
    %c0_i32 = arith.constant 0 : i32
    %c0_i32_0 = arith.constant 0 : i32
    %c0_i32_1 = arith.constant 0 : i32
    return %c0_i32, %c0_i32_0 : i32, i32
  }
  func.func @transform_3(%arg0: i32) -> (i32, i32) {
    %c0_i32 = arith.constant 0 : i32
    %c0_i32_0 = arith.constant 0 : i32
    %c0_i32_1 = arith.constant 0 : i32
    return %c0_i32, %c0_i32_0 : i32, i32
  }
  func.func @transform_4(%arg0: i32) -> (i32, i32) {
    %c0_i32 = arith.constant 0 : i32
    %c0_i32_0 = arith.constant 0 : i32
    %c0_i32_1 = arith.constant 0 : i32
    return %c0_i32, %c0_i32_0 : i32, i32
  }
}

module attributes {stable_mosaic.version = 11 : i64} {
  func.func @_conv_bn_lrelu_head_kernel(%arg0: i32, %arg1: memref<32x512xbf16, #tpu.memory_space<vmem>>, %arg2: memref<512x64xbf16, #tpu.memory_space<vmem>>, %arg3: memref<1x64xf32, #tpu.memory_space<vmem>>, %arg4: memref<1x64xf32, #tpu.memory_space<vmem>>, %arg5: memref<32x64xf32, #tpu.memory_space<vmem>>, %arg6: memref<2x32xf32, #tpu.memory_space<vmem>>, %arg7: memref<2x1xf32, #tpu.memory_space<vmem>>) attributes {dimension_semantics = [#tpu.dimension_semantics<arbitrary>], iteration_bounds = array<i64: 1>, scalar_prefetch = 0 : i64, scratch_operands = 0 : i64, tpu.core_type = #tpu.core_type<tc>, window_params = [{pipeline_mode = #tpu.pipeline_mode<synchronous>, transform_indices = @transform_0, window_bounds = array<i64: 32, 512>}, {pipeline_mode = #tpu.pipeline_mode<synchronous>, transform_indices = @transform_1, window_bounds = array<i64: 512, 64>}, {pipeline_mode = #tpu.pipeline_mode<synchronous>, transform_indices = @transform_2, window_bounds = array<i64: 1, 64>}, {pipeline_mode = #tpu.pipeline_mode<synchronous>, transform_indices = @transform_3, window_bounds = array<i64: 1, 64>}, {pipeline_mode = #tpu.pipeline_mode<synchronous>, transform_indices = @transform_4, window_bounds = array<i64: 32, 64>}, {pipeline_mode = #tpu.pipeline_mode<synchronous>, transform_indices = @transform_5, window_bounds = array<i64: 2, 32>}, {pipeline_mode = #tpu.pipeline_mode<synchronous>, transform_indices = @transform_6, window_bounds = array<i64: 2, 1>}]} {
    %c0 = arith.constant 0 : index
    %c0_0 = arith.constant 0 : index
    %0 = vector.load %arg1[%c0, %c0_0] : memref<32x512xbf16, #tpu.memory_space<vmem>>, vector<32x512xbf16>
    %c0_1 = arith.constant 0 : index
    %c0_2 = arith.constant 0 : index
    %1 = vector.load %arg2[%c0_1, %c0_2] : memref<512x64xbf16, #tpu.memory_space<vmem>>, vector<512x64xbf16>
    %cst = arith.constant dense<0.000000e+00> : vector<32x64xf32>
    %2 = tpu.matmul %0, %1, %cst {dimension_numbers = #tpu.dot_dimension_numbers<[1], [0], [0], [1], [0, 0, 1, 1], [], []>} : vector<32x512xbf16>, vector<512x64xbf16>, vector<32x64xf32> -> vector<32x64xf32>
    %cst_3 = arith.constant dense<0.000000e+00> : vector<64xf32>
    %3 = vector.multi_reduction <add>, %2, %cst_3 [0] : vector<32x64xf32> to vector<64xf32>
    %4 = vector.shape_cast %3 : vector<64xf32> to vector<1x64xf32>
    %cst_4 = arith.constant 3.200000e+01 : f32
    %5 = vector.broadcast %cst_4 : f32 to vector<1x64xf32>
    %6 = arith.divf %4, %5 : vector<1x64xf32>
    %7 = vector.broadcast %6 : vector<1x64xf32> to vector<32x64xf32>
    %8 = arith.subf %2, %7 : vector<32x64xf32>
    %9 = arith.mulf %8, %8 : vector<32x64xf32>
    %cst_5 = arith.constant dense<0.000000e+00> : vector<64xf32>
    %10 = vector.multi_reduction <add>, %9, %cst_5 [0] : vector<32x64xf32> to vector<64xf32>
    %11 = vector.shape_cast %10 : vector<64xf32> to vector<1x64xf32>
    %cst_6 = arith.constant 3.200000e+01 : f32
    %12 = vector.broadcast %cst_6 : f32 to vector<1x64xf32>
    %13 = arith.divf %11, %12 : vector<1x64xf32>
    %c0_7 = arith.constant 0 : index
    %c0_8 = arith.constant 0 : index
    %14 = vector.load %arg3[%c0_7, %c0_8] : memref<1x64xf32, #tpu.memory_space<vmem>>, vector<1x64xf32>
    %cst_9 = arith.constant 9.99999974E-6 : f32
    %15 = vector.broadcast %cst_9 : f32 to vector<1x64xf32>
    %16 = arith.addf %13, %15 : vector<1x64xf32>
    %17 = math.rsqrt %16 : vector<1x64xf32>
    %18 = arith.mulf %14, %17 : vector<1x64xf32>
    %19 = vector.broadcast %18 : vector<1x64xf32> to vector<32x64xf32>
    %20 = arith.mulf %8, %19 : vector<32x64xf32>
    %c0_10 = arith.constant 0 : index
    %c0_11 = arith.constant 0 : index
    %21 = vector.load %arg4[%c0_10, %c0_11] : memref<1x64xf32, #tpu.memory_space<vmem>>, vector<1x64xf32>
    %22 = vector.broadcast %21 : vector<1x64xf32> to vector<32x64xf32>
    %23 = arith.addf %20, %22 : vector<32x64xf32>
    %cst_12 = arith.constant 0.000000e+00 : f32
    %24 = vector.broadcast %cst_12 : f32 to vector<32x64xf32>
    %25 = arith.cmpf ogt, %23, %24 : vector<32x64xf32>
    %cst_13 = arith.constant 2.000000e-01 : f32
    %26 = vector.broadcast %cst_13 : f32 to vector<32x64xf32>
    %27 = arith.mulf %26, %23 : vector<32x64xf32>
    %28 = arith.select %25, %23, %27 : vector<32x64xi1>, vector<32x64xf32>
    %c0_14 = arith.constant 0 : index
    %c0_15 = arith.constant 0 : index
    %29 = vector.load %arg5[%c0_14, %c0_15] : memref<32x64xf32, #tpu.memory_space<vmem>>, vector<32x64xf32>
    %30 = arith.mulf %28, %29 : vector<32x64xf32>
    %c0_16 = arith.constant 0 : index
    %c0_17 = arith.constant 0 : index
    %31 = vector.load %arg6[%c0_16, %c0_17] : memref<2x32xf32, #tpu.memory_space<vmem>>, vector<2x32xf32>
    %cst_18 = arith.constant dense<0.000000e+00> : vector<2x64xf32>
    %32 = tpu.matmul %31, %30, %cst_18 {dimension_numbers = #tpu.dot_dimension_numbers<[1], [0], [0], [1], [0, 0, 1, 1], [], []>} : vector<2x32xf32>, vector<32x64xf32>, vector<2x64xf32> -> vector<2x64xf32>
    %cst_19 = arith.constant dense<0.000000e+00> : vector<2xf32>
    %33 = vector.multi_reduction <add>, %32, %cst_19 [1] : vector<2x64xf32> to vector<2xf32>
    %34 = vector.shape_cast %33 : vector<2xf32> to vector<2x1xf32>
    %c0_20 = arith.constant 0 : index
    %c0_21 = arith.constant 0 : index
    %35 = vector.load %arg7[%c0_20, %c0_21] : memref<2x1xf32, #tpu.memory_space<vmem>>, vector<2x1xf32>
    tpu.vector_store %arg7[%c0_20, %c0_21], %34 {strides = array<i32>} : memref<2x1xf32, #tpu.memory_space<vmem>>, vector<2x1xf32>,
    return
  }
  func.func @transform_0(%arg0: i32) -> (i32, i32) {
    %c0_i32 = arith.constant 0 : i32
    %c0_i32_0 = arith.constant 0 : i32
    %c0_i32_1 = arith.constant 0 : i32
    return %c0_i32, %c0_i32_0 : i32, i32
  }
  func.func @transform_1(%arg0: i32) -> (i32, i32) {
    %c0_i32 = arith.constant 0 : i32
    %c0_i32_0 = arith.constant 0 : i32
    %c0_i32_1 = arith.constant 0 : i32
    return %c0_i32, %c0_i32_0 : i32, i32
  }
  func.func @transform_2(%arg0: i32) -> (i32, i32) {
    %c0_i32 = arith.constant 0 : i32
    %c0_i32_0 = arith.constant 0 : i32
    %c0_i32_1 = arith.constant 0 : i32
    return %c0_i32, %c0_i32_0 : i32, i32
  }
  func.func @transform_3(%arg0: i32) -> (i32, i32) {
    %c0_i32 = arith.constant 0 : i32
    %c0_i32_0 = arith.constant 0 : i32
    %c0_i32_1 = arith.constant 0 : i32
    return %c0_i32, %c0_i32_0 : i32, i32
  }
  func.func @transform_4(%arg0: i32) -> (i32, i32) {
    %c0_i32 = arith.constant 0 : i32
    %c0_i32_0 = arith.constant 0 : i32
    %c0_i32_1 = arith.constant 0 : i32
    return %c0_i32, %c0_i32_0 : i32, i32
  }
  func.func @transform_5(%arg0: i32) -> (i32, i32) {
    %c0_i32 = arith.constant 0 : i32
    %c0_i32_0 = arith.constant 0 : i32
    %c0_i32_1 = arith.constant 0 : i32
    return %c0_i32, %c0_i32_0 : i32, i32
  }
  func.func @transform_6(%arg0: i32) -> (i32, i32) {
    %c0_i32 = arith.constant 0 : i32
    %c0_i32_0 = arith.constant 0 : i32
    %c0_i32_1 = arith.constant 0 : i32
    return %c0_i32, %c0_i32_0 : i32, i32
  }
}

</mosaic_0001>

<llo_original>
// kernel: _lambda_.4
$region0: #{_lambda_.4}
  #allocation0 [shape = 'u32[]', space=smem, size = 0x4, offset = 0x4, fixed_abs, tag = 'smem constant byte address 0x4 - core index']
  #allocation1 [shape = 'u32[144,128]{1,0:T(1,128)}', space=vmem, size = 0x12000, scoped, tag = 'internal scratch']
  %s0 = inlined_call_operand.vmem [shape: bf16[2048,48], index: 0, kind: input, shape index: {}]
  %s1 = inlined_call_operand.vmem [shape: bf16[48,8], index: 1, kind: input, shape index: {}]
  %s2 = inlined_call_operand.vmem [shape: bf16[2048,8], index: 2, kind: output, shape index: {}]
  %s3 = sld [smem:[#allocation0]]
  $region18: #{_lambda_.4} parent=0
    _
  %s5 = ssub.s32 1, %s3
  %s6 = scalar_select 0, %s5, %s3
  // Predicated region
  $region2: #{_lambda_.4} parent=0 // pred_check
    _
  $region3: #{_lambda_.4} parent=0 // pred_check_branch
    %8 = sbr.rel (0) target = $region5
  $region4: #{_lambda_.4} parent=0 // pred_region
    _
  $region5: #{_lambda_.4} parent=0 // pred_fallthru
    _
  // Predicated region
  $region6: #{_lambda_.4} parent=0 // pred_check
    _
  $region7: #{_lambda_.4} parent=0 // pred_check_branch
    %10 = sbr.rel (0) target = $region9
  $region8: #{_lambda_.4} parent=0 // pred_region
    _
  $region9: #{_lambda_.4} parent=0 // pred_fallthru
    _
  %v12 = vld [vmem:[%s0] sm:$0xf]
  %v13 = vld [vmem:[%s0 + $0x4] sm:$0xf]
  %v14 = vld [vmem:[%s0 + $0x8] sm:$0xf]
  %v15 = vld [vmem:[%s0 + $0xc] sm:$0xf]
  %v16 = vld [vmem:[%s0 + $0x10] sm:$0xf]
  %v17 = vld [vmem:[%s0 + $0x14] sm:$0xf]
  %v18 = vld [vmem:[%s0 + $0x18] sm:$0xf]
  %v19 = vld [vmem:[%s0 + $0x1c] sm:$0xf]
  %v20 = vld [vmem:[%s0 + $0x20] sm:$0xf]
  %v21 = vld [vmem:[%s0 + $0x24] sm:$0xf]
  %v22 = vld [vmem:[%s0 + $0x28] sm:$0xf]
  %v23 = vld [vmem:[%s0 + $0x2c] sm:$0xf]
  %v24 = vld [vmem:[%s0 + $0x30] sm:$0xf]
  %v25 = vld [vmem:[%s0 + $0x34] sm:$0xf]
  %v26 = vld [vmem:[%s0 + $0x38] sm:$0xf]
  %v27 = vld [vmem:[%s0 + $0x3c] sm:$0xf]
  %v28 = vld [vmem:[%s0 + $0x40] sm:$0xf]
  %v29 = vld [vmem:[%s0 + $0x44] sm:$0xf]
  %v30 = vld [vmem:[%s0 + $0x48] sm:$0xf]
  %v31 = vld [vmem:[%s0 + $0x4c] sm:$0xf]
  %v32 = vld [vmem:[%s0 + $0x50] sm:$0xf]
  %v33 = vld [vmem:[%s0 + $0x54] sm:$0xf]
  %v34 = vld [vmem:[%s0 + $0x58] sm:$0xf]
  %v35 = vld [vmem:[%s0 + $0x5c] sm:$0xf]
  %v36 = vld [vmem:[%s0 + $0x60] sm:$0xf]
  %v37 = vld [vmem:[%s0 + $0x64] sm:$0xf]
  %v38 = vld [vmem:[%s0 + $0x68] sm:$0xf]
  %v39 = vld [vmem:[%s0 + $0x6c] sm:$0xf]
  %v40 = vld [vmem:[%s0 + $0x70] sm:$0xf]
  %v41 = vld [vmem:[%s0 + $0x74] sm:$0xf]
  %v42 = vld [vmem:[%s0 + $0x78] sm:$0xf]
  %v43 = vld [vmem:[%s0 + $0x7c] sm:$0xf]
  %v44 = vld [vmem:[%s0 + $0x80] sm:$0xf]
  %v45 = vld [vmem:[%s0 + $0x84] sm:$0xf]
  %v46 = vld [vmem:[%s0 + $0x88] sm:$0xf]
  %v47 = vld [vmem:[%s0 + $0x8c] sm:$0xf]
  %v48 = vld [vmem:[%s0 + $0x90] sm:$0xf]
  %v49 = vld [vmem:[%s0 + $0x94] sm:$0xf]
  %v50 = vld [vmem:[%s0 + $0x98] sm:$0xf]
  %v51 = vld [vmem:[%s0 + $0x9c] sm:$0xf]
  %v52 = vld [vmem:[%s0 + $0xa0] sm:$0xf]
  %v53 = vld [vmem:[%s0 + $0xa4] sm:$0xf]
  %v54 = vld [vmem:[%s0 + $0xa8] sm:$0xf]
  %v55 = vld [vmem:[%s0 + $0xac] sm:$0xf]
  %v56 = vld [vmem:[%s0 + $0xb0] sm:$0xf]
  %v57 = vld [vmem:[%s0 + $0xb4] sm:$0xf]
  %v58 = vld [vmem:[%s0 + $0xb8] sm:$0xf]
  %v59 = vld [vmem:[%s0 + $0xbc] sm:$0xf]
  %v60 = vld [vmem:[%s0 + $0xc0] sm:$0xf]
  %v61 = vld [vmem:[%s0 + $0xc4] sm:$0xf]
  %v62 = vld [vmem:[%s0 + $0xc8] sm:$0xf]
  %v63 = vld [vmem:[%s0 + $0xcc] sm:$0xf]
  %v64 = vld [vmem:[%s0 + $0xd0] sm:$0xf]
  %v65 = vld [vmem:[%s0 + $0xd4] sm:$0xf]
  %v66 = vld [vmem:[%s0 + $0xd8] sm:$0xf]
  %v67 = vld [vmem:[%s0 + $0xdc] sm:$0xf]
  %v68 = vld [vmem:[%s0 + $0xe0] sm:$0xf]
  %v69 = vld [vmem:[%s0 + $0xe4] sm:$0xf]
  %v70 = vld [vmem:[%s0 + $0xe8] sm:$0xf]
  %v71 = vld [vmem:[%s0 + $0xec] sm:$0xf]
  %v72 = vld [vmem:[%s0 + $0xf0] sm:$0xf]
  %v73 = vld [vmem:[%s0 + $0xf4] sm:$0xf]
  %v74 = vld [vmem:[%s0 + $0xf8] sm:$0xf]
  %v75 = vld [vmem:[%s0 + $0xfc] sm:$0xf]
  %v76 = vld [vmem:[%s0 + $0x100] sm:$0xf]
  %v77 = vld [vmem:[%s0 + $0x104] sm:$0xf]
  %v78 = vld [vmem:[%s0 + $0x108] sm:$0xf]
  %v79 = vld [vmem:[%s0 + $0x10c] sm:$0xf]
  %v80 = vld [vmem:[%s0 + $0x110] sm:$0xf]
  %v81 = vld [vmem:[%s0 + $0x114] sm:$0xf]
  %v82 = vld [vmem:[%s0 + $0x118] sm:$0xf]
  %v83 = vld [vmem:[%s0 + $0x11c] sm:$0xf]
  %v84 = vld [vmem:[%s0 + $0x120] sm:$0xf]
  %v85 = vld [vmem:[%s0 + $0x124] sm:$0xf]
  %v86 = vld [vmem:[%s0 + $0x128] sm:$0xf]
  %v87 = vld [vmem:[%s0 + $0x12c] sm:$0xf]
  %v88 = vld [vmem:[%s0 + $0x130] sm:$0xf]
  %v89 = vld [vmem:[%s0 + $0x134] sm:$0xf]
  %v90 = vld [vmem:[%s0 + $0x138] sm:$0xf]
  %v91 = vld [vmem:[%s0 + $0x13c] sm:$0xf]
  %v92 = vld [vmem:[%s0 + $0x140] sm:$0xf]
  %v93 = vld [vmem:[%s0 + $0x144] sm:$0xf]
  %v94 = vld [vmem:[%s0 + $0x148] sm:$0xf]
  %v95 = vld [vmem:[%s0 + $0x14c] sm:$0xf]
  %v96 = vld [vmem:[%s0 + $0x150] sm:$0xf]
  %v97 = vld [vmem:[%s0 + $0x154] sm:$0xf]
  %v98 = vld [vmem:[%s0 + $0x158] sm:$0xf]
  %v99 = vld [vmem:[%s0 + $0x15c] sm:$0xf]
  %v100 = vld [vmem:[%s0 + $0x160] sm:$0xf]
  %v101 = vld [vmem:[%s0 + $0x164] sm:$0xf]
  %v102 = vld [vmem:[%s0 + $0x168] sm:$0xf]
  %v103 = vld [vmem:[%s0 + $0x16c] sm:$0xf]
  %v104 = vld [vmem:[%s0 + $0x170] sm:$0xf]
  %v105 = vld [vmem:[%s0 + $0x174] sm:$0xf]
  %v106 = vld [vmem:[%s0 + $0x178] sm:$0xf]
  %v107 = vld [vmem:[%s0 + $0x17c] sm:$0xf]
  %v108 = vld [vmem:[%s0 + $0x180] sm:$0xf]
  %v109 = vld [vmem:[%s0 + $0x184] sm:$0xf]
  %v110 = vld [vmem:[%s0 + $0x188] sm:$0xf]
  %v111 = vld [vmem:[%s0 + $0x18c] sm:$0xf]
  %v112 = vld [vmem:[%s0 + $0x190] sm:$0xf]
  %v113 = vld [vmem:[%s0 + $0x194] sm:$0xf]
  %v114 = vld [vmem:[%s0 + $0x198] sm:$0xf]
  %v115 = vld [vmem:[%s0 + $0x19c] sm:$0xf]
  %v116 = vld [vmem:[%s0 + $0x1a0] sm:$0xf]
  %v117 = vld [vmem:[%s0 + $0x1a4] sm:$0xf]
  %v118 = vld [vmem:[%s0 + $0x1a8] sm:$0xf]
  %v119 = vld [vmem:[%s0 + $0x1ac] sm:$0xf]
  %v120 = vld [vmem:[%s0 + $0x1b0] sm:$0xf]
  %v121 = vld [vmem:[%s0 + $0x1b4] sm:$0xf]
  %v122 = vld [vmem:[%s0 + $0x1b8] sm:$0xf]
  %v123 = vld [vmem:[%s0 + $0x1bc] sm:$0xf]
  %v124 = vld [vmem:[%s0 + $0x1c0] sm:$0xf]
  %v125 = vld [vmem:[%s0 + $0x1c4] sm:$0xf]
  %v126 = vld [vmem:[%s0 + $0x1c8] sm:$0xf]
  %v127 = vld [vmem:[%s0 + $0x1cc] sm:$0xf]
  %v128 = vld [vmem:[%s0 + $0x1d0] sm:$0xf]
  %v129 = vld [vmem:[%s0 + $0x1d4] sm:$0xf]
  %v130 = vld [vmem:[%s0 + $0x1d8] sm:$0xf]
  %v131 = vld [vmem:[%s0 + $0x1dc] sm:$0xf]
  %v132 = vld [vmem:[%s0 + $0x1e0] sm:$0xf]
  %v133 = vld [vmem:[%s0 + $0x1e4] sm:$0xf]
  %v134 = vld [vmem:[%s0 + $0x1e8] sm:$0xf]
  %v135 = vld [vmem:[%s0 + $0x1ec] sm:$0xf]
  %v136 = vld [vmem:[%s0 + $0x1f0] sm:$0xf]
  %v137 = vld [vmem:[%s0 + $0x1f4] sm:$0xf]
  %v138 = vld [vmem:[%s0 + $0x1f8] sm:$0xf]
  %v139 = vld [vmem:[%s0 + $0x1fc] sm:$0xf]
  %v140 = vld [vmem:[%s0 + $0x200] sm:$0xf]
  %v141 = vld [vmem:[%s0 + $0x204] sm:$0xf]
  %v142 = vld [vmem:[%s0 + $0x208] sm:$0xf]
  %v143 = vld [vmem:[%s0 + $0x20c] sm:$0xf]
  %v144 = vld [vmem:[%s0 + $0x210] sm:$0xf]
  %v145 = vld [vmem:[%s0 + $0x214] sm:$0xf]
  %v146 = vld [vmem:[%s0 + $0x218] sm:$0xf]
  %v147 = vld [vmem:[%s0 + $0x21c] sm:$0xf]
  %v148 = vld [vmem:[%s0 + $0x220] sm:$0xf]
  %v149 = vld [vmem:[%s0 + $0x224] sm:$0xf]
  %v150 = vld [vmem:[%s0 + $0x228] sm:$0xf]
  %v151 = vld [vmem:[%s0 + $0x22c] sm:$0xf]
  %v152 = vld [vmem:[%s0 + $0x230] sm:$0xf]
  %v153 = vld [vmem:[%s0 + $0x234] sm:$0xf]
  %v154 = vld [vmem:[%s0 + $0x238] sm:$0xf]
  %v155 = vld [vmem:[%s0 + $0x23c] sm:$0xf]
  %v156 = vld [vmem:[%s0 + $0x240] sm:$0xf]
  %v157 = vld [vmem:[%s0 + $0x244] sm:$0xf]
  %v158 = vld [vmem:[%s0 + $0x248] sm:$0xf]
  %v159 = vld [vmem:[%s0 + $0x24c] sm:$0xf]
  %v160 = vld [vmem:[%s0 + $0x250] sm:$0xf]
  %v161 = vld [vmem:[%s0 + $0x254] sm:$0xf]
  %v162 = vld [vmem:[%s0 + $0x258] sm:$0xf]
  %v163 = vld [vmem:[%s0 + $0x25c] sm:$0xf]
  %v164 = vld [vmem:[%s0 + $0x260] sm:$0xf]
  %v165 = vld [vmem:[%s0 + $0x264] sm:$0xf]
  %v166 = vld [vmem:[%s0 + $0x268] sm:$0xf]
  %v167 = vld [vmem:[%s0 + $0x26c] sm:$0xf]
  %v168 = vld [vmem:[%s0 + $0x270] sm:$0xf]
  %v169 = vld [vmem:[%s0 + $0x274] sm:$0xf]
  %v170 = vld [vmem:[%s0 + $0x278] sm:$0xf]
  %v171 = vld [vmem:[%s0 + $0x27c] sm:$0xf]
  %v172 = vld [vmem:[%s0 + $0x280] sm:$0xf]
  %v173 = vld [vmem:[%s0 + $0x284] sm:$0xf]
  %v174 = vld [vmem:[%s0 + $0x288] sm:$0xf]
  %v175 = vld [vmem:[%s0 + $0x28c] sm:$0xf]
  %v176 = vld [vmem:[%s0 + $0x290] sm:$0xf]
  %v177 = vld [vmem:[%s0 + $0x294] sm:$0xf]
  %v178 = vld [vmem:[%s0 + $0x298] sm:$0xf]
  %v179 = vld [vmem:[%s0 + $0x29c] sm:$0xf]
  %v180 = vld [vmem:[%s0 + $0x2a0] sm:$0xf]
  %v181 = vld [vmem:[%s0 + $0x2a4] sm:$0xf]
  %v182 = vld [vmem:[%s0 + $0x2a8] sm:$0xf]
  %v183 = vld [vmem:[%s0 + $0x2ac] sm:$0xf]
  %v184 = vld [vmem:[%s0 + $0x2b0] sm:$0xf]
  %v185 = vld [vmem:[%s0 + $0x2b4] sm:$0xf]
  %v186 = vld [vmem:[%s0 + $0x2b8] sm:$0xf]
  %v187 = vld [vmem:[%s0 + $0x2bc] sm:$0xf]
  %v188 = vld [vmem:[%s0 + $0x2c0] sm:$0xf]
  %v189 = vld [vmem:[%s0 + $0x2c4] sm:$0xf]
  %v190 = vld [vmem:[%s0 + $0x2c8] sm:$0xf]
  %v191 = vld [vmem:[%s0 + $0x2cc] sm:$0xf]
  %v192 = vld [vmem:[%s0 + $0x2d0] sm:$0xf]
  %v193 = vld [vmem:[%s0 + $0x2d4] sm:$0xf]
  %v194 = vld [vmem:[%s0 + $0x2d8] sm:$0xf]
  %v195 = vld [vmem:[%s0 + $0x2dc] sm:$0xf]
  %v196 = vld [vmem:[%s0 + $0x2e0] sm:$0xf]
  %v197 = vld [vmem:[%s0 + $0x2e4] sm:$0xf]
  %v198 = vld [vmem:[%s0 + $0x2e8] sm:$0xf]
  %v199 = vld [vmem:[%s0 + $0x2ec] sm:$0xf]
  %v200 = vld [vmem:[%s0 + $0x2f0] sm:$0xf]
  %v201 = vld [vmem:[%s0 + $0x2f4] sm:$0xf]
  %v202 = vld [vmem:[%s0 + $0x2f8] sm:$0xf]
  %v203 = vld [vmem:[%s0 + $0x2fc] sm:$0xf]
  %v204 = vld [vmem:[%s0 + $0x300] sm:$0xf]
  %v205 = vld [vmem:[%s0 + $0x304] sm:$0xf]
  %v206 = vld [vmem:[%s0 + $0x308] sm:$0xf]
  %v207 = vld [vmem:[%s0 + $0x30c] sm:$0xf]
  %v208 = vld [vmem:[%s0 + $0x310] sm:$0xf]
  %v209 = vld [vmem:[%s0 + $0x314] sm:$0xf]
  %v210 = vld [vmem:[%s0 + $0x318] sm:$0xf]
  %v211 = vld [vmem:[%s0 + $0x31c] sm:$0xf]
  %v212 = vld [vmem:[%s0 + $0x320] sm:$0xf]
  %v213 = vld [vmem:[%s0 + $0x324] sm:$0xf]
  %v214 = vld [vmem:[%s0 + $0x328] sm:$0xf]
  %v215 = vld [vmem:[%s0 + $0x32c] sm:$0xf]
  %v216 = vld [vmem:[%s0 + $0x330] sm:$0xf]
  %v217 = vld [vmem:[%s0 + $0x334] sm:$0xf]
  %v218 = vld [vmem:[%s0 + $0x338] sm:$0xf]
  %v219 = vld [vmem:[%s0 + $0x33c] sm:$0xf]
  %v220 = vld [vmem:[%s0 + $0x340] sm:$0xf]
  %v221 = vld [vmem:[%s0 + $0x344] sm:$0xf]
  %v222 = vld [vmem:[%s0 + $0x348] sm:$0xf]
  %v223 = vld [vmem:[%s0 + $0x34c] sm:$0xf]
  %v224 = vld [vmem:[%s0 + $0x350] sm:$0xf]
  %v225 = vld [vmem:[%s0 + $0x354] sm:$0xf]
  %v226 = vld [vmem:[%s0 + $0x358] sm:$0xf]
  %v227 = vld [vmem:[%s0 + $0x35c] sm:$0xf]
  %v228 = vld [vmem:[%s0 + $0x360] sm:$0xf]
  %v229 = vld [vmem:[%s0 + $0x364] sm:$0xf]
  %v230 = vld [vmem:[%s0 + $0x368] sm:$0xf]
  %v231 = vld [vmem:[%s0 + $0x36c] sm:$0xf]
  %v232 = vld [vmem:[%s0 + $0x370] sm:$0xf]
  %v233 = vld [vmem:[%s0 + $0x374] sm:$0xf]
  %v234 = vld [vmem:[%s0 + $0x378] sm:$0xf]
  %v235 = vld [vmem:[%s0 + $0x37c] sm:$0xf]
  %v236 = vld [vmem:[%s0 + $0x380] sm:$0xf]
  %v237 = vld [vmem:[%s0 + $0x384] sm:$0xf]
  %v238 = vld [vmem:[%s0 + $0x388] sm:$0xf]
  %v239 = vld [vmem:[%s0 + $0x38c] sm:$0xf]
  %v240 = vld [vmem:[%s0 + $0x390] sm:$0xf]
  %v241 = vld [vmem:[%s0 + $0x394] sm:$0xf]
  %v242 = vld [vmem:[%s0 + $0x398] sm:$0xf]
  %v243 = vld [vmem:[%s0 + $0x39c] sm:$0xf]
  %v244 = vld [vmem:[%s0 + $0x3a0] sm:$0xf]
  %v245 = vld [vmem:[%s0 + $0x3a4] sm:$0xf]
  %v246 = vld [vmem:[%s0 + $0x3a8] sm:$0xf]
  %v247 = vld [vmem:[%s0 + $0x3ac] sm:$0xf]
  %v248 = vld [vmem:[%s0 + $0x3b0] sm:$0xf]
  %v249 = vld [vmem:[%s0 + $0x3b4] sm:$0xf]
  %v250 = vld [vmem:[%s0 + $0x3b8] sm:$0xf]
  %v251 = vld [vmem:[%s0 + $0x3bc] sm:$0xf]
  %v252 = vld [vmem:[%s0 + $0x3c0] sm:$0xf]
  %v253 = vld [vmem:[%s0 + $0x3c4] sm:$0xf]
  %v254 = vld [vmem:[%s0 + $0x3c8] sm:$0xf]
  %v255 = vld [vmem:[%s0 + $0x3cc] sm:$0xf]
  %v256 = vld [vmem:[%s0 + $0x3d0] sm:$0xf]
  %v257 = vld [vmem:[%s0 + $0x3d4] sm:$0xf]
  %v258 = vld [vmem:[%s0 + $0x3d8] sm:$0xf]
  %v259 = vld [vmem:[%s0 + $0x3dc] sm:$0xf]
  %v260 = vld [vmem:[%s0 + $0x3e0] sm:$0xf]
  %v261 = vld [vmem:[%s0 + $0x3e4] sm:$0xf]
  %v262 = vld [vmem:[%s0 + $0x3e8] sm:$0xf]
  %v263 = vld [vmem:[%s0 + $0x3ec] sm:$0xf]
  %v264 = vld [vmem:[%s0 + $0x3f0] sm:$0xf]
  %v265 = vld [vmem:[%s0 + $0x3f4] sm:$0xf]
  %v266 = vld [vmem:[%s0 + $0x3f8] sm:$0xf]
  %v267 = vld [vmem:[%s0 + $0x3fc] sm:$0xf]
  %v268 = vld [vmem:[%s1] sm:$0xf]
  %v269 = vld [vmem:[%s1 + $0x4] sm:$0xf]
  %v270 = vld [vmem:[%s1 + $0x8] sm:$0xf]
  %v271 = vld [vmem:[%s1 + $0xc] sm:$0xf]
  %v272 = vld [vmem:[%s1 + $0x10] sm:$0xf]
  %v273 = vld [vmem:[%s1 + $0x14] sm:$0xf]
  %v530 = vunpack.c.l.b16 %v12
  %v531 = vunpack.c.l.b16 %v13
  %v532 = vunpack.c.l.b16 %v14
  %v533 = vunpack.c.l.b16 %v15
  %v534 = vunpack.c.l.b16 %v16
  %v535 = vunpack.c.l.b16 %v17
  %v536 = vunpack.c.l.b16 %v18
  %v537 = vunpack.c.l.b16 %v19
  %v538 = vunpack.c.l.b16 %v20
  %v539 = vunpack.c.l.b16 %v21
  %v540 = vunpack.c.l.b16 %v22
  %v541 = vunpack.c.l.b16 %v23
  %v542 = vunpack.c.l.b16 %v24
  %v543 = vunpack.c.l.b16 %v25
  %v544 = vunpack.c.l.b16 %v26
  %v545 = vunpack.c.l.b16 %v27
  %v546 = vunpack.c.l.b16 %v28
  %v547 = vunpack.c.l.b16 %v29
  %v548 = vunpack.c.l.b16 %v30
  %v549 = vunpack.c.l.b16 %v31
  %v550 = vunpack.c.l.b16 %v32
  %v551 = vunpack.c.l.b16 %v33
  %v552 = vunpack.c.l.b16 %v34
  %v553 = vunpack.c.l.b16 %v35
  %v554 = vunpack.c.l.b16 %v36
  %v555 = vunpack.c.l.b16 %v37
  %v556 = vunpack.c.l.b16 %v38
  %v557 = vunpack.c.l.b16 %v39
  %v558 = vunpack.c.l.b16 %v40
  %v559 = vunpack.c.l.b16 %v41
  %v560 = vunpack.c.l.b16 %v42
  %v561 = vunpack.c.l.b16 %v43
  %v562 = vunpack.c.l.b16 %v44
  %v563 = vunpack.c.l.b16 %v45
  %v564 = vunpack.c.l.b16 %v46
  %v565 = vunpack.c.l.b16 %v47
  %v566 = vunpack.c.l.b16 %v48
  %v567 = vunpack.c.l.b16 %v49
  %v568 = vunpack.c.l.b16 %v50
  %v569 = vunpack.c.l.b16 %v51
  %v570 = vunpack.c.l.b16 %v52
  %v571 = vunpack.c.l.b16 %v53
  %v572 = vunpack.c.l.b16 %v54
  %v573 = vunpack.c.l.b16 %v55
  %v574 = vunpack.c.l.b16 %v56
  %v575 = vunpack.c.l.b16 %v57
  %v576 = vunpack.c.l.b16 %v58
  %v577 = vunpack.c.l.b16 %v59
  %v578 = vunpack.c.l.b16 %v60
  %v579 = vunpack.c.l.b16 %v61
  %v580 = vunpack.c.l.b16 %v62
  %v581 = vunpack.c.l.b16 %v63
  %v582 = vunpack.c.l.b16 %v64
  %v583 = vunpack.c.l.b16 %v65
  %v584 = vunpack.c.l.b16 %v66
  %v585 = vunpack.c.l.b16 %v67
  %v586 = vunpack.c.l.b16 %v68
  %v587 = vunpack.c.l.b16 %v69
  %v588 = vunpack.c.l.b16 %v70
  %v589 = vunpack.c.l.b16 %v71
  %v590 = vunpack.c.l.b16 %v72
  %v591 = vunpack.c.l.b16 %v73
  %v592 = vunpack.c.l.b16 %v74
  %v593 = vunpack.c.l.b16 %v75
  %v594 = vunpack.c.l.b16 %v76
  %v595 = vunpack.c.l.b16 %v77
  %v596 = vunpack.c.l.b16 %v78
  %v597 = vunpack.c.l.b16 %v79
  %v598 = vunpack.c.l.b16 %v80
  %v599 = vunpack.c.l.b16 %v81
  %v600 = vunpack.c.l.b16 %v82
  %v601 = vunpack.c.l.b16 %v83
  %v602 = vunpack.c.l.b16 %v84
  %v603 = vunpack.c.l.b16 %v85
  %v604 = vunpack.c.l.b16 %v86
  %v605 = vunpack.c.l.b16 %v87
  %v606 = vunpack.c.l.b16 %v88
  %v607 = vunpack.c.l.b16 %v89
  %v608 = vunpack.c.l.b16 %v90
  %v609 = vunpack.c.l.b16 %v91
  %v610 = vunpack.c.l.b16 %v92
  %v611 = vunpack.c.l.b16 %v93
  %v612 = vunpack.c.l.b16 %v94
  %v613 = vunpack.c.l.b16 %v95
  %v614 = vunpack.c.l.b16 %v96
  %v615 = vunpack.c.l.b16 %v97
  %v616 = vunpack.c.l.b16 %v98
  %v617 = vunpack.c.l.b16 %v99
  %v618 = vunpack.c.l.b16 %v100
  %v619 = vunpack.c.l.b16 %v101
  %v620 = vunpack.c.l.b16 %v102
  %v621 = vunpack.c.l.b16 %v103
  %v622 = vunpack.c.l.b16 %v104
  %v623 = vunpack.c.l.b16 %v105
  %v624 = vunpack.c.l.b16 %v106
  %v625 = vunpack.c.l.b16 %v107
  %v626 = vunpack.c.l.b16 %v108
  %v627 = vunpack.c.l.b16 %v109
  %v628 = vunpack.c.l.b16 %v110
  %v629 = vunpack.c.l.b16 %v111
  %v630 = vunpack.c.l.b16 %v112
  %v631 = vunpack.c.l.b16 %v113
  %v632 = vunpack.c.l.b16 %v114
  %v633 = vunpack.c.l.b16 %v115
  %v634 = vunpack.c.l.b16 %v116
  %v635 = vunpack.c.l.b16 %v117
  %v636 = vunpack.c.l.b16 %v118
  %v637 = vunpack.c.l.b16 %v119
  %v638 = vunpack.c.l.b16 %v120
  %v639 = vunpack.c.l.b16 %v121
  %v640 = vunpack.c.l.b16 %v122
  %v641 = vunpack.c.l.b16 %v123
  %v642 = vunpack.c.l.b16 %v124
  %v643 = vunpack.c.l.b16 %v125
  %v644 = vunpack.c.l.b16 %v126
  %v645 = vunpack.c.l.b16 %v127
  %v646 = vunpack.c.l.b16 %v128
  %v647 = vunpack.c.l.b16 %v129
  %v648 = vunpack.c.l.b16 %v130
  %v649 = vunpack.c.l.b16 %v131
  %v650 = vunpack.c.l.b16 %v132
  %v651 = vunpack.c.l.b16 %v133
  %v652 = vunpack.c.l.b16 %v134
  %v653 = vunpack.c.l.b16 %v135
  %v654 = vunpack.c.l.b16 %v136
  %v655 = vunpack.c.l.b16 %v137
  %v656 = vunpack.c.l.b16 %v138
  %v657 = vunpack.c.l.b16 %v139
  %v658 = vunpack.c.l.b16 %v140
  %v659 = vunpack.c.l.b16 %v141
  %v660 = vunpack.c.l.b16 %v142
  %v661 = vunpack.c.l.b16 %v143
  %v662 = vunpack.c.l.b16 %v144
  %v663 = vunpack.c.l.b16 %v145
  %v664 = vunpack.c.l.b16 %v146
  %v665 = vunpack.c.l.b16 %v147
  %v666 = vunpack.c.l.b16 %v148
  %v667 = vunpack.c.l.b16 %v149
  %v668 = vunpack.c.l.b16 %v150
  %v669 = vunpack.c.l.b16 %v151
  %v670 = vunpack.c.l.b16 %v152
  %v671 = vunpack.c.l.b16 %v153
  %v672 = vunpack.c.l.b16 %v154
  %v673 = vunpack.c.l.b16 %v155
  %v674 = vunpack.c.l.b16 %v156
  %v675 = vunpack.c.l.b16 %v157
  %v676 = vunpack.c.l.b16 %v158
  %v677 = vunpack.c.l.b16 %v159
  %v678 = vunpack.c.l.b16 %v160
  %v679 = vunpack.c.l.b16 %v161
  %v680 = vunpack.c.l.b16 %v162
  %v681 = vunpack.c.l.b16 %v163
  %v682 = vunpack.c.l.b16 %v164
  %v683 = vunpack.c.l.b16 %v165
  %v684 = vunpack.c.l.b16 %v166
  %v685 = vunpack.c.l.b16 %v167
  %v686 = vunpack.c.l.b16 %v168
  %v687 = vunpack.c.l.b16 %v169
  %v688 = vunpack.c.l.b16 %v170
  %v689 = vunpack.c.l.b16 %v171
  %v690 = vunpack.c.l.b16 %v172
  %v691 = vunpack.c.l.b16 %v173
  %v692 = vunpack.c.l.b16 %v174
  %v693 = vunpack.c.l.b16 %v175
  %v694 = vunpack.c.l.b16 %v176
  %v695 = vunpack.c.l.b16 %v177
  %v696 = vunpack.c.l.b16 %v178
  %v697 = vunpack.c.l.b16 %v179
  %v698 = vunpack.c.l.b16 %v180
  %v699 = vunpack.c.l.b16 %v181
  %v700 = vunpack.c.l.b16 %v182
  %v701 = vunpack.c.l.b16 %v183
  %v702 = vunpack.c.l.b16 %v184
  %v703 = vunpack.c.l.b16 %v185
  %v704 = vunpack.c.l.b16 %v186
  %v705 = vunpack.c.l.b16 %v187
  %v706 = vunpack.c.l.b16 %v188
  %v707 = vunpack.c.l.b16 %v189
  %v708 = vunpack.c.l.b16 %v190
  %v709 = vunpack.c.l.b16 %v191
  %v710 = vunpack.c.l.b16 %v192
  %v711 = vunpack.c.l.b16 %v193
  %v712 = vunpack.c.l.b16 %v194
  %v713 = vunpack.c.l.b16 %v195
  %v714 = vunpack.c.l.b16 %v196
  %v715 = vunpack.c.l.b16 %v197
  %v716 = vunpack.c.l.b16 %v198
  %v717 = vunpack.c.l.b16 %v199
  %v718 = vunpack.c.l.b16 %v200
  %v719 = vunpack.c.l.b16 %v201
  %v720 = vunpack.c.l.b16 %v202
  %v721 = vunpack.c.l.b16 %v203
  %v722 = vunpack.c.l.b16 %v204
  %v723 = vunpack.c.l.b16 %v205
  %v724 = vunpack.c.l.b16 %v206
  %v725 = vunpack.c.l.b16 %v207
  %v726 = vunpack.c.l.b16 %v208
  %v727 = vunpack.c.l.b16 %v209
  %v728 = vunpack.c.l.b16 %v210
  %v729 = vunpack.c.l.b16 %v211
  %v730 = vunpack.c.l.b16 %v212
  %v731 = vunpack.c.l.b16 %v213
  %v732 = vunpack.c.l.b16 %v214
  %v733 = vunpack.c.l.b16 %v215
  %v734 = vunpack.c.l.b16 %v216
  %v735 = vunpack.c.l.b16 %v217
  %v736 = vunpack.c.l.b16 %v218
  %v737 = vunpack.c.l.b16 %v219
  %v738 = vunpack.c.l.b16 %v220
  %v739 = vunpack.c.l.b16 %v221
  %v740 = vunpack.c.l.b16 %v222
  %v741 = vunpack.c.l.b16 %v223
  %v742 = vunpack.c.l.b16 %v224
  %v743 = vunpack.c.l.b16 %v225
  %v744 = vunpack.c.l.b16 %v226
  %v745 = vunpack.c.l.b16 %v227
  %v746 = vunpack.c.l.b16 %v228
  %v747 = vunpack.c.l.b16 %v229
  %v748 = vunpack.c.l.b16 %v230
  %v749 = vunpack.c.l.b16 %v231
  %v750 = vunpack.c.l.b16 %v232
  %v751 = vunpack.c.l.b16 %v233
  %v752 = vunpack.c.l.b16 %v234
  %v753 = vunpack.c.l.b16 %v235
  %v754 = vunpack.c.l.b16 %v236
  %v755 = vunpack.c.l.b16 %v237
  %v756 = vunpack.c.l.b16 %v238
  %v757 = vunpack.c.l.b16 %v239
  %v758 = vunpack.c.l.b16 %v240
  %v759 = vunpack.c.l.b16 %v241
  %v760 = vunpack.c.l.b16 %v242
  %v761 = vunpack.c.l.b16 %v243
  %v762 = vunpack.c.l.b16 %v244
  %v763 = vunpack.c.l.b16 %v245
  %v764 = vunpack.c.l.b16 %v246
  %v765 = vunpack.c.l.b16 %v247
  %v766 = vunpack.c.l.b16 %v248
  %v767 = vunpack.c.l.b16 %v249
  %v768 = vunpack.c.l.b16 %v250
  %v769 = vunpack.c.l.b16 %v251
  %v770 = vunpack.c.l.b16 %v252
  %v771 = vunpack.c.l.b16 %v253
  %v772 = vunpack.c.l.b16 %v254
  %v773 = vunpack.c.l.b16 %v255
  %v774 = vunpack.c.l.b16 %v256
  %v775 = vunpack.c.l.b16 %v257
  %v776 = vunpack.c.l.b16 %v258
  %v777 = vunpack.c.l.b16 %v259
  %v778 = vunpack.c.l.b16 %v260
  %v779 = vunpack.c.l.b16 %v261
  %v780 = vunpack.c.l.b16 %v262
  %v781 = vunpack.c.l.b16 %v263
  %v782 = vunpack.c.l.b16 %v264
  %v783 = vunpack.c.l.b16 %v265
  %v784 = vunpack.c.l.b16 %v266
  %v785 = vunpack.c.l.b16 %v267
  %v786 = vpack.c.b16 %v531, %v530
  %v787 = vpack.c.b16 %v533, %v532
  %v788 = vpack.c.b16 %v535, %v534
  %v789 = vpack.c.b16 %v537, %v536
  %v790 = vpack.c.b16 %v539, %v538
  %v791 = vpack.c.b16 %v541, %v540
  %v792 = vpack.c.b16 %v543, %v542
  %v793 = vpack.c.b16 %v545, %v544
  %v794 = vpack.c.b16 %v547, %v546
  %v795 = vpack.c.b16 %v549, %v548
  %v796 = vpack.c.b16 %v551, %v550
  %v797 = vpack.c.b16 %v553, %v552
  %v798 = vpack.c.b16 %v555, %v554
  %v799 = vpack.c.b16 %v557, %v556
  %v800 = vpack.c.b16 %v559, %v558
  %v801 = vpack.c.b16 %v561, %v560
  %v802 = vpack.c.b16 %v563, %v562
  %v803 = vpack.c.b16 %v565, %v564
  %v804 = vpack.c.b16 %v567, %v566
  %v805 = vpack.c.b16 %v569, %v568
  %v806 = vpack.c.b16 %v571, %v570
  %v807 = vpack.c.b16 %v573, %v572
  %v808 = vpack.c.b16 %v575, %v574
  %v809 = vpack.c.b16 %v577, %v576
  %v810 = vpack.c.b16 %v579, %v578
  %v811 = vpack.c.b16 %v581, %v580
  %v812 = vpack.c.b16 %v583, %v582
  %v813 = vpack.c.b16 %v585, %v584
  %v814 = vpack.c.b16 %v587, %v586
  %v815 = vpack.c.b16 %v589, %v588
  %v816 = vpack.c.b16 %v591, %v590
  %v817 = vpack.c.b16 %v593, %v592
  %v818 = vpack.c.b16 %v595, %v594
  %v819 = vpack.c.b16 %v597, %v596
  %v820 = vpack.c.b16 %v599, %v598
  %v821 = vpack.c.b16 %v601, %v600
  %v822 = vpack.c.b16 %v603, %v602
  %v823 = vpack.c.b16 %v605, %v604
  %v824 = vpack.c.b16 %v607, %v606
  %v825 = vpack.c.b16 %v609, %v608
  %v826 = vpack.c.b16 %v611, %v610
  %v827 = vpack.c.b16 %v613, %v612
  %v828 = vpack.c.b16 %v615, %v614
  %v829 = vpack.c.b16 %v617, %v616
  %v830 = vpack.c.b16 %v619, %v618
  %v831 = vpack.c.b16 %v621, %v620
  %v832 = vpack.c.b16 %v623, %v622
  %v833 = vpack.c.b16 %v625, %v624
  %v834 = vpack.c.b16 %v627, %v626
  %v835 = vpack.c.b16 %v629, %v628
  %v836 = vpack.c.b16 %v631, %v630
  %v837 = vpack.c.b16 %v633, %v632
  %v838 = vpack.c.b16 %v635, %v634
  %v839 = vpack.c.b16 %v637, %v636
  %v840 = vpack.c.b16 %v639, %v638
  %v841 = vpack.c.b16 %v641, %v640
  %v842 = vpack.c.b16 %v643, %v642
  %v843 = vpack.c.b16 %v645, %v644
  %v844 = vpack.c.b16 %v647, %v646
  %v845 = vpack.c.b16 %v649, %v648
  %v846 = vpack.c.b16 %v651, %v650
  %v847 = vpack.c.b16 %v653, %v652
  %v848 = vpack.c.b16 %v655, %v654
  %v849 = vpack.c.b16 %v657, %v656
  %v850 = vpack.c.b16 %v659, %v658
  %v851 = vpack.c.b16 %v661, %v660
  %v852 = vpack.c.b16 %v663, %v662
  %v853 = vpack.c.b16 %v665, %v664
  %v854 = vpack.c.b16 %v667, %v666
  %v855 = vpack.c.b16 %v669, %v668
  %v856 = vpack.c.b16 %v671, %v670
  %v857 = vpack.c.b16 %v673, %v672
  %v858 = vpack.c.b16 %v675, %v674
  %v859 = vpack.c.b16 %v677, %v676
  %v860 = vpack.c.b16 %v679, %v678
  %v861 = vpack.c.b16 %v681, %v680
  %v862 = vpack.c.b16 %v683, %v682
  %v863 = vpack.c.b16 %v685, %v684
  %v864 = vpack.c.b16 %v687, %v686
  %v865 = vpack.c.b16 %v689, %v688
  %v866 = vpack.c.b16 %v691, %v690
  %v867 = vpack.c.b16 %v693, %v692
  %v868 = vpack.c.b16 %v695, %v694
  %v869 = vpack.c.b16 %v697, %v696
  %v870 = vpack.c.b16 %v699, %v698
  %v871 = vpack.c.b16 %v701, %v700
  %v872 = vpack.c.b16 %v703, %v702
  %v873 = vpack.c.b16 %v705, %v704
  %v874 = vpack.c.b16 %v707, %v706
  %v875 = vpack.c.b16 %v709, %v708
  %v876 = vpack.c.b16 %v711, %v710
  %v877 = vpack.c.b16 %v713, %v712
  %v878 = vpack.c.b16 %v715, %v714
  %v879 = vpack.c.b16 %v717, %v716
  %v880 = vpack.c.b16 %v719, %v718
  %v881 = vpack.c.b16 %v721, %v720
  %v882 = vpack.c.b16 %v723, %v722
  %v883 = vpack.c.b16 %v725, %v724
  %v884 = vpack.c.b16 %v727, %v726
  %v885 = vpack.c.b16 %v729, %v728
  %v886 = vpack.c.b16 %v731, %v730
  %v887 = vpack.c.b16 %v733, %v732
  %v888 = vpack.c.b16 %v735, %v734
  %v889 = vpack.c.b16 %v737, %v736
  %v890 = vpack.c.b16 %v739, %v738
  %v891 = vpack.c.b16 %v741, %v740
  %v892 = vpack.c.b16 %v743, %v742
  %v893 = vpack.c.b16 %v745, %v744
  %v894 = vpack.c.b16 %v747, %v746
  %v895 = vpack.c.b16 %v749, %v748
  %v896 = vpack.c.b16 %v751, %v750
  %v897 = vpack.c.b16 %v753, %v752
  %v898 = vpack.c.b16 %v755, %v754
  %v899 = vpack.c.b16 %v757, %v756
  %v900 = vpack.c.b16 %v759, %v758
  %v901 = vpack.c.b16 %v761, %v760
  %v902 = vpack.c.b16 %v763, %v762
  %v903 = vpack.c.b16 %v765, %v764
  %v904 = vpack.c.b16 %v767, %v766
  %v905 = vpack.c.b16 %v769, %v768
  %v906 = vpack.c.b16 %v771, %v770
  %v907 = vpack.c.b16 %v773, %v772
  %v908 = vpack.c.b16 %v775, %v774
  %v909 = vpack.c.b16 %v777, %v776
  %v910 = vpack.c.b16 %v779, %v778
  %v911 = vpack.c.b16 %v781, %v780
  %v912 = vpack.c.b16 %v783, %v782
  %v913 = vpack.c.b16 %v785, %v784
  %v920 = vunpack.c.l.b16 %v268
  %v921 = vunpack.c.l.b16 %v269
  %v922 = vunpack.c.l.b16 %v270
  %v923 = vunpack.c.l.b16 %v271
  %v924 = vunpack.c.l.b16 %v272
  %v925 = vunpack.c.l.b16 %v273
  %v926 = vpack.c.b16 %v921, %v920
  %v927 = vpack.c.b16 %v923, %v922
  %v928 = vpack.c.b16 %v925, %v924
  %vm932 = vcmask 392192
  %v934 = vsel %vm932, %v786, 0
  %v937 = vsel %vm932, %v787, 0
  %v940 = vsel %vm932, %v788, 0
  %v943 = vsel %vm932, %v789, 0
  %v946 = vsel %vm932, %v790, 0
  %v949 = vsel %vm932, %v791, 0
  %v952 = vsel %vm932, %v792, 0
  %v955 = vsel %vm932, %v793, 0
  %v958 = vsel %vm932, %v794, 0
  %v961 = vsel %vm932, %v795, 0
  %v964 = vsel %vm932, %v796, 0
  %v967 = vsel %vm932, %v797, 0
  %v970 = vsel %vm932, %v798, 0
  %v973 = vsel %vm932, %v799, 0
  %v976 = vsel %vm932, %v800, 0
  %v979 = vsel %vm932, %v801, 0
  %v982 = vsel %vm932, %v802, 0
  %v985 = vsel %vm932, %v803, 0
  %v988 = vsel %vm932, %v804, 0
  %v991 = vsel %vm932, %v805, 0
  %v994 = vsel %vm932, %v806, 0
  %v997 = vsel %vm932, %v807, 0
  %v1000 = vsel %vm932, %v808, 0
  %v1003 = vsel %vm932, %v809, 0
  %v1006 = vsel %vm932, %v810, 0
  %v1009 = vsel %vm932, %v811, 0
  %v1012 = vsel %vm932, %v812, 0
  %v1015 = vsel %vm932, %v813, 0
  %v1018 = vsel %vm932, %v814, 0
  %v1021 = vsel %vm932, %v815, 0
  %v1024 = vsel %vm932, %v816, 0
  %v1027 = vsel %vm932, %v817, 0
  %v1030 = vsel %vm932, %v818, 0
  %v1033 = vsel %vm932, %v819, 0
  %v1036 = vsel %vm932, %v820, 0
  %v1039 = vsel %vm932, %v821, 0
  %v1042 = vsel %vm932, %v822, 0
  %v1045 = vsel %vm932, %v823, 0
  %v1048 = vsel %vm932, %v824, 0
  %v1051 = vsel %vm932, %v825, 0
  %v1054 = vsel %vm932, %v826, 0
  %v1057 = vsel %vm932, %v827, 0
  %v1060 = vsel %vm932, %v828, 0
  %v1063 = vsel %vm932, %v829, 0
  %v1066 = vsel %vm932, %v830, 0
  %v1069 = vsel %vm932, %v831, 0
  %v1072 = vsel %vm932, %v832, 0
  %v1075 = vsel %vm932, %v833, 0
  %v1078 = vsel %vm932, %v834, 0
  %v1081 = vsel %vm932, %v835, 0
  %v1084 = vsel %vm932, %v836, 0
  %v1087 = vsel %vm932, %v837, 0
  %v1090 = vsel %vm932, %v838, 0
  %v1093 = vsel %vm932, %v839, 0
  %v1096 = vsel %vm932, %v840, 0
  %v1099 = vsel %vm932, %v841, 0
  %v1102 = vsel %vm932, %v842, 0
  %v1105 = vsel %vm932, %v843, 0
  %v1108 = vsel %vm932, %v844, 0
  %v1111 = vsel %vm932, %v845, 0
  %v1114 = vsel %vm932, %v846, 0
  %v1117 = vsel %vm932, %v847, 0
  %v1120 = vsel %vm932, %v848, 0
  %v1123 = vsel %vm932, %v849, 0
  %v1126 = vsel %vm932, %v850, 0
  %v1129 = vsel %vm932, %v851, 0
  %v1132 = vsel %vm932, %v852, 0
  %v1135 = vsel %vm932, %v853, 0
  %v1138 = vsel %vm932, %v854, 0
  %v1141 = vsel %vm932, %v855, 0
  %v1144 = vsel %vm932, %v856, 0
  %v1147 = vsel %vm932, %v857, 0
  %v1150 = vsel %vm932, %v858, 0
  %v1153 = vsel %vm932, %v859, 0
  %v1156 = vsel %vm932, %v860, 0
  %v1159 = vsel %vm932, %v861, 0
  %v1162 = vsel %vm932, %v862, 0
  %v1165 = vsel %vm932, %v863, 0
  %v1168 = vsel %vm932, %v864, 0
  %v1171 = vsel %vm932, %v865, 0
  %v1174 = vsel %vm932, %v866, 0
  %v1177 = vsel %vm932, %v867, 0
  %v1180 = vsel %vm932, %v868, 0
  %v1183 = vsel %vm932, %v869, 0
  %v1186 = vsel %vm932, %v870, 0
  %v1189 = vsel %vm932, %v871, 0
  %v1192 = vsel %vm932, %v872, 0
  %v1195 = vsel %vm932, %v873, 0
  %v1198 = vsel %vm932, %v874, 0
  %v1201 = vsel %vm932, %v875, 0
  %v1204 = vsel %vm932, %v876, 0
  %v1207 = vsel %vm932, %v877, 0
  %v1210 = vsel %vm932, %v878, 0
  %v1213 = vsel %vm932, %v879, 0
  %v1216 = vsel %vm932, %v880, 0
  %v1219 = vsel %vm932, %v881, 0
  %v1222 = vsel %vm932, %v882, 0
  %v1225 = vsel %vm932, %v883, 0
  %v1228 = vsel %vm932, %v884, 0
  %v1231 = vsel %vm932, %v885, 0
  %v1234 = vsel %vm932, %v886, 0
  %v1237 = vsel %vm932, %v887, 0
  %v1240 = vsel %vm932, %v888, 0
  %v1243 = vsel %vm932, %v889, 0
  %v1246 = vsel %vm932, %v890, 0
  %v1249 = vsel %vm932, %v891, 0
  %v1252 = vsel %vm932, %v892, 0
  %v1255 = vsel %vm932, %v893, 0
  %v1258 = vsel %vm932, %v894, 0
  %v1261 = vsel %vm932, %v895, 0
  %v1264 = vsel %vm932, %v896, 0
  %v1267 = vsel %vm932, %v897, 0
  %v1270 = vsel %vm932, %v898, 0
  %v1273 = vsel %vm932, %v899, 0
  %v1276 = vsel %vm932, %v900, 0
  %v1279 = vsel %vm932, %v901, 0
  %v1282 = vsel %vm932, %v902, 0
  %v1285 = vsel %vm932, %v903, 0
  %v1288 = vsel %vm932, %v904, 0
  %v1291 = vsel %vm932, %v905, 0
  %v1294 = vsel %vm932, %v906, 0
  %v1297 = vsel %vm932, %v907, 0
  %v1300 = vsel %vm932, %v908, 0
  %v1303 = vsel %vm932, %v909, 0
  %v1306 = vsel %vm932, %v910, 0
  %v1309 = vsel %vm932, %v911, 0
  %v1312 = vsel %vm932, %v912, 0
  %v1315 = vsel %vm932, %v913, 0
  %1317 = vmatprep.subr.bf16.mxu0 0
  %1318 = vmatpush1.bf16.msra.mxu0 %v926
  %1319 = vmatprep.subr.bf16.mxu0 0
  %1320 = vmatpush1.bf16.msra.mxu0 %v927
  %1321 = vmatprep.subr.bf16.mxu0 0
  %1322 = vmatpush1.bf16.msra.mxu0 %v928
  %1323 = vmatprep.subr.bf16.mxu0 0
  %1324 = vmatpush1.bf16.msra.mxu0 0
  %1325 = vmatprep.subr.bf16.mxu0 0
  %1326 = vmatpush1.bf16.msra.mxu0 0
  %1327 = vmatprep.subr.bf16.mxu0 0
  %1328 = vmatpush1.bf16.msra.mxu0 0
  %1329 = vmatprep.subr.bf16.mxu0 0
  %1330 = vmatpush1.bf16.msra.mxu0 0
  %1331 = vmatprep.subr.bf16.mxu0 0
  %1332 = vmatpush1.bf16.msra.mxu0 0
  %1333 = vmatprep.subr.bf16.mxu0 0
  %1334 = vmatpush1.bf16.msra.mxu0 0
  %1335 = vmatprep.subr.bf16.mxu0 0
  %1336 = vmatpush1.bf16.msra.mxu0 0
  %1337 = vmatprep.subr.bf16.mxu0 0
  %1338 = vmatpush1.bf16.msra.mxu0 0
  %1339 = vmatprep.subr.bf16.mxu0 0
  %1340 = vmatpush1.bf16.msra.mxu0 0
  %1341 = vmatprep.subr.bf16.mxu0 0
  %1342 = vmatpush1.bf16.msra.mxu0 0
  %1343 = vmatprep.subr.bf16.mxu0 0
  %1344 = vmatpush1.bf16.msra.mxu0 0
  %1345 = vmatprep.subr.bf16.mxu0 0
  %1346 = vmatpush1.bf16.msra.mxu0 0
  %1347 = vmatprep.subr.bf16.mxu0 0
  %1348 = vmatpush1.bf16.msra.mxu0 0
  %1349 = vmatprep.mubr.bf16.mxu0 0
  %1350 = vmatmul.mubr.bf16.gmra.mrb[0].mxu0 %v934
  %v1351 = vpop.f32.mrb[0].mxu0
  %v1352 = vadd.f32 0.0, %v1351
  %v1353 = vpop.f32.mrb[0].mxu0
  %v1354 = vpop.f32.mrb[0].mxu0
  %v1355 = vadd.f32 0.0, %v1354
  %v1356 = vpop.f32.mrb[0].mxu0
  %1357 = vmatprep.mubr.bf16.mxu0 0
  %1358 = vmatmul.mubr.bf16.gmra.mrb[0].mxu0 %v937
  %v1359 = vpop.f32.mrb[0].mxu0
  %v1360 = vadd.f32 0.0, %v1359
  %v1361 = vpop.f32.mrb[0].mxu0
  %v1362 = vpop.f32.mrb[0].mxu0
  %v1363 = vadd.f32 0.0, %v1362
  %v1364 = vpop.f32.mrb[0].mxu0
  %1365 = vmatprep.mubr.bf16.mxu0 0
  %1366 = vmatmul.mubr.bf16.gmra.mrb[0].mxu0 %v940
  %v1367 = vpop.f32.mrb[0].mxu0
  %v1368 = vadd.f32 0.0, %v1367
  %v1369 = vpop.f32.mrb[0].mxu0
  %v1370 = vpop.f32.mrb[0].mxu0
  %v1371 = vadd.f32 0.0, %v1370
  %v1372 = vpop.f32.mrb[0].mxu0
  %1373 = vmatprep.mubr.bf16.mxu0 0
  %1374 = vmatmul.mubr.bf16.gmra.mrb[0].mxu0 %v943
  %v1375 = vpop.f32.mrb[0].mxu0
  %v1376 = vadd.f32 0.0, %v1375
  %v1377 = vpop.f32.mrb[0].mxu0
  %v1378 = vpop.f32.mrb[0].mxu0
  %v1379 = vadd.f32 0.0, %v1378
  %v1380 = vpop.f32.mrb[0].mxu0
  %1381 = vmatprep.mubr.bf16.mxu0 0
  %1382 = vmatmul.mubr.bf16.gmra.mrb[0].mxu0 %v946
  %v1383 = vpop.f32.mrb[0].mxu0
  %v1384 = vadd.f32 0.0, %v1383
  %v1385 = vpop.f32.mrb[0].mxu0
  %v1386 = vpop.f32.mrb[0].mxu0
  %v1387 = vadd.f32 0.0, %v1386
  %v1388 = vpop.f32.mrb[0].mxu0
  %1389 = vmatprep.mubr.bf16.mxu0 0
  %1390 = vmatmul.mubr.bf16.gmra.mrb[0].mxu0 %v949
  %v1391 = vpop.f32.mrb[0].mxu0
  %v1392 = vadd.f32 0.0, %v1391
  %v1393 = vpop.f32.mrb[0].mxu0
  %v1394 = vpop.f32.mrb[0].mxu0
  %v1395 = vadd.f32 0.0, %v1394
  %v1396 = vpop.f32.mrb[0].mxu0
  %1397 = vmatprep.mubr.bf16.mxu0 0
  %1398 = vmatmul.mubr.bf16.gmra.mrb[0].mxu0 %v952
  %v1399 = vpop.f32.mrb[0].mxu0
  %v1400 = vadd.f32 0.0, %v1399
  %v1401 = vpop.f32.mrb[0].mxu0
  %v1402 = vpop.f32.mrb[0].mxu0
  %v1403 = vadd.f32 0.0, %v1402
  %v1404 = vpop.f32.mrb[0].mxu0
  %1405 = vmatprep.mubr.bf16.mxu0 0
  %1406 = vmatmul.mubr.bf16.gmra.mrb[0].mxu0 %v955
  %v1407 = vpop.f32.mrb[0].mxu0
  %v1408 = vadd.f32 0.0, %v1407
  %v1409 = vpop.f32.mrb[0].mxu0
  %v1410 = vpop.f32.mrb[0].mxu0
  %v1411 = vadd.f32 0.0, %v1410
  %v1412 = vpop.f32.mrb[0].mxu0
  %1413 = vmatprep.mubr.bf16.mxu0 0
  %1414 = vmatmul.mubr.bf16.gmra.mrb[0].mxu0 %v958
  %v1415 = vpop.f32.mrb[0].mxu0
  %v1416 = vadd.f32 0.0, %v1415
  %v1417 = vpop.f32.mrb[0].mxu0
  %v1418 = vpop.f32.mrb[0].mxu0
  %v1419 = vadd.f32 0.0, %v1418
  %v1420 = vpop.f32.mrb[0].mxu0
  %1421 = vmatprep.mubr.bf16.mxu0 0
  %1422 = vmatmul.mubr.bf16.gmra.mrb[0].mxu0 %v961
  %v1423 = vpop.f32.mrb[0].mxu0
  %v1424 = vadd.f32 0.0, %v1423
  %v1425 = vpop.f32.mrb[0].mxu0
  %v1426 = vpop.f32.mrb[0].mxu0
  %v1427 = vadd.f32 0.0, %v1426
  %v1428 = vpop.f32.mrb[0].mxu0
  %1429 = vmatprep.mubr.bf16.mxu0 0
  %1430 = vmatmul.mubr.bf16.gmra.mrb[0].mxu0 %v964
  %v1431 = vpop.f32.mrb[0].mxu0
  %v1432 = vadd.f32 0.0, %v1431
  %v1433 = vpop.f32.mrb[0].mxu0
  %v1434 = vpop.f32.mrb[0].mxu0
  %v1435 = vadd.f32 0.0, %v1434
  %v1436 = vpop.f32.mrb[0].mxu0
  %1437 = vmatprep.mubr.bf16.mxu0 0
  %1438 = vmatmul.mubr.bf16.gmra.mrb[0].mxu0 %v967
  %v1439 = vpop.f32.mrb[0].mxu0
  %v1440 = vadd.f32 0.0, %v1439
  %v1441 = vpop.f32.mrb[0].mxu0
  %v1442 = vpop.f32.mrb[0].mxu0
  %v1443 = vadd.f32 0.0, %v1442
  %v1444 = vpop.f32.mrb[0].mxu0
  %1445 = vmatprep.mubr.bf16.mxu0 0
  %1446 = vmatmul.mubr.bf16.gmra.mrb[0].mxu0 %v970
  %v1447 = vpop.f32.mrb[0].mxu0
  %v1448 = vadd.f32 0.0, %v1447
  %v1449 = vpop.f32.mrb[0].mxu0
  %v1450 = vpop.f32.mrb[0].mxu0
  %v1451 = vadd.f32 0.0, %v1450
  %v1452 = vpop.f32.mrb[0].mxu0
  %1453 = vmatprep.mubr.bf16.mxu0 0
  %1454 = vmatmul.mubr.bf16.gmra.mrb[0].mxu0 %v973
  %v1455 = vpop.f32.mrb[0].mxu0
  %v1456 = vadd.f32 0.0, %v1455
  %v1457 = vpop.f32.mrb[0].mxu0
  %v1458 = vpop.f32.mrb[0].mxu0
  %v1459 = vadd.f32 0.0, %v1458
  %v1460 = vpop.f32.mrb[0].mxu0
  %1461 = vmatprep.mubr.bf16.mxu0 0
  %1462 = vmatmul.mubr.bf16.gmra.mrb[0].mxu0 %v976
  %v1463 = vpop.f32.mrb[0].mxu0
  %v1464 = vadd.f32 0.0, %v1463
  %v1465 = vpop.f32.mrb[0].mxu0
  %v1466 = vpop.f32.mrb[0].mxu0
  %v1467 = vadd.f32 0.0, %v1466
  %v1468 = vpop.f32.mrb[0].mxu0
  %1469 = vmatprep.mubr.bf16.mxu0 0
  %1470 = vmatmul.mubr.bf16.gmra.mrb[0].mxu0 %v979
  %v1471 = vpop.f32.mrb[0].mxu0
  %v1472 = vadd.f32 0.0, %v1471
  %v1473 = vpop.f32.mrb[0].mxu0
  %v1474 = vpop.f32.mrb[0].mxu0
  %v1475 = vadd.f32 0.0, %v1474
  %v1476 = vpop.f32.mrb[0].mxu0
  %1477 = vmatprep.mubr.bf16.mxu0 0
  %1478 = vmatmul.mubr.bf16.gmra.mrb[0].mxu0 %v982
  %v1479 = vpop.f32.mrb[0].mxu0
  %v1480 = vadd.f32 0.0, %v1479
  %v1481 = vpop.f32.mrb[0].mxu0
  %v1482 = vpop.f32.mrb[0].mxu0
  %v1483 = vadd.f32 0.0, %v1482
  %v1484 = vpop.f32.mrb[0].mxu0
  %1485 = vmatprep.mubr.bf16.mxu0 0
  %1486 = vmatmul.mubr.bf16.gmra.mrb[0].mxu0 %v985
  %v1487 = vpop.f32.mrb[0].mxu0
  %v1488 = vadd.f32 0.0, %v1487
  %v1489 = vpop.f32.mrb[0].mxu0
  %v1490 = vpop.f32.mrb[0].mxu0
  %v1491 = vadd.f32 0.0, %v1490
  %v1492 = vpop.f32.mrb[0].mxu0
  %1493 = vmatprep.mubr.bf16.mxu0 0
  %1494 = vmatmul.mubr.bf16.gmra.mrb[0].mxu0 %v988
  %v1495 = vpop.f32.mrb[0].mxu0
  %v1496 = vadd.f32 0.0, %v1495
  %v1497 = vpop.f32.mrb[0].mxu0
  %v1498 = vpop.f32.mrb[0].mxu0
  %v1499 = vadd.f32 0.0, %v1498
  %v1500 = vpop.f32.mrb[0].mxu0
  %1501 = vmatprep.mubr.bf16.mxu0 0
  %1502 = vmatmul.mubr.bf16.gmra.mrb[0].mxu0 %v991
  %v1503 = vpop.f32.mrb[0].mxu0
  %v1504 = vadd.f32 0.0, %v1503
  %v1505 = vpop.f32.mrb[0].mxu0
  %v1506 = vpop.f32.mrb[0].mxu0
  %v1507 = vadd.f32 0.0, %v1506
  %v1508 = vpop.f32.mrb[0].mxu0
  %1509 = vmatprep.mubr.bf16.mxu0 0
  %1510 = vmatmul.mubr.bf16.gmra.mrb[0].mxu0 %v994
  %v1511 = vpop.f32.mrb[0].mxu0
  %v1512 = vadd.f32 0.0, %v1511
  %v1513 = vpop.f32.mrb[0].mxu0
  %v1514 = vpop.f32.mrb[0].mxu0
  %v1515 = vadd.f32 0.0, %v1514
  %v1516 = vpop.f32.mrb[0].mxu0
  %1517 = vmatprep.mubr.bf16.mxu0 0
  %1518 = vmatmul.mubr.bf16.gmra.mrb[0].mxu0 %v997
  %v1519 = vpop.f32.mrb[0].mxu0
  %v1520 = vadd.f32 0.0, %v1519
  %v1521 = vpop.f32.mrb[0].mxu0
  %v1522 = vpop.f32.mrb[0].mxu0
  %v1523 = vadd.f32 0.0, %v1522
  %v1524 = vpop.f32.mrb[0].mxu0
  %1525 = vmatprep.mubr.bf16.mxu0 0
  %1526 = vmatmul.mubr.bf16.gmra.mrb[0].mxu0 %v1000
  %v1527 = vpop.f32.mrb[0].mxu0
  %v1528 = vadd.f32 0.0, %v1527
  %v1529 = vpop.f32.mrb[0].mxu0
  %v1530 = vpop.f32.mrb[0].mxu0
  %v1531 = vadd.f32 0.0, %v1530
  %v1532 = vpop.f32.mrb[0].mxu0
  %1533 = vmatprep.mubr.bf16.mxu0 0
  %1534 = vmatmul.mubr.bf16.gmra.mrb[0].mxu0 %v1003
  %v1535 = vpop.f32.mrb[0].mxu0
  %v1536 = vadd.f32 0.0, %v1535
  %v1537 = vpop.f32.mrb[0].mxu0
  %v1538 = vpop.f32.mrb[0].mxu0
  %v1539 = vadd.f32 0.0, %v1538
  %v1540 = vpop.f32.mrb[0].mxu0
  %1541 = vmatprep.mubr.bf16.mxu0 0
  %1542 = vmatmul.mubr.bf16.gmra.mrb[0].mxu0 %v1006
  %v1543 = vpop.f32.mrb[0].mxu0
  %v1544 = vadd.f32 0.0, %v1543
  %v1545 = vpop.f32.mrb[0].mxu0
  %v1546 = vpop.f32.mrb[0].mxu0
  %v1547 = vadd.f32 0.0, %v1546
  %v1548 = vpop.f32.mrb[0].mxu0
  %1549 = vmatprep.mubr.bf16.mxu0 0
  %1550 = vmatmul.mubr.bf16.gmra.mrb[0].mxu0 %v1009
  %v1551 = vpop.f32.mrb[0].mxu0
  %v1552 = vadd.f32 0.0, %v1551
  %v1553 = vpop.f32.mrb[0].mxu0
  %v1554 = vpop.f32.mrb[0].mxu0
  %v1555 = vadd.f32 0.0, %v1554
  %v1556 = vpop.f32.mrb[0].mxu0
  %1557 = vmatprep.mubr.bf16.mxu0 0
  %1558 = vmatmul.mubr.bf16.gmra.mrb[0].mxu0 %v1012
  %v1559 = vpop.f32.mrb[0].mxu0
  %v1560 = vadd.f32 0.0, %v1559
  %v1561 = vpop.f32.mrb[0].mxu0
  %v1562 = vpop.f32.mrb[0].mxu0
  %v1563 = vadd.f32 0.0, %v1562
  %v1564 = vpop.f32.mrb[0].mxu0
  %1565 = vmatprep.mubr.bf16.mxu0 0
  %1566 = vmatmul.mubr.bf16.gmra.mrb[0].mxu0 %v1015
  %v1567 = vpop.f32.mrb[0].mxu0
  %v1568 = vadd.f32 0.0, %v1567
  %v1569 = vpop.f32.mrb[0].mxu0
  %v1570 = vpop.f32.mrb[0].mxu0
  %v1571 = vadd.f32 0.0, %v1570
  %v1572 = vpop.f32.mrb[0].mxu0
  %1573 = vmatprep.mubr.bf16.mxu0 0
  %1574 = vmatmul.mubr.bf16.gmra.mrb[0].mxu0 %v1018
  %v1575 = vpop.f32.mrb[0].mxu0
  %v1576 = vadd.f32 0.0, %v1575
  %v1577 = vpop.f32.mrb[0].mxu0
  %v1578 = vpop.f32.mrb[0].mxu0
  %v1579 = vadd.f32 0.0, %v1578
  %v1580 = vpop.f32.mrb[0].mxu0
  %1581 = vmatprep.mubr.bf16.mxu0 0
  %1582 = vmatmul.mubr.bf16.gmra.mrb[0].mxu0 %v1021
  %v1583 = vpop.f32.mrb[0].mxu0
  %v1584 = vadd.f32 0.0, %v1583
  %v1585 = vpop.f32.mrb[0].mxu0
  %v1586 = vpop.f32.mrb[0].mxu0
  %v1587 = vadd.f32 0.0, %v1586
  %v1588 = vpop.f32.mrb[0].mxu0
  %1589 = vmatprep.mubr.bf16.mxu0 0
  %1590 = vmatmul.mubr.bf16.gmra.mrb[0].mxu0 %v1024
  %v1591 = vpop.f32.mrb[0].mxu0
  %v1592 = vadd.f32 0.0, %v1591
  %v1593 = vpop.f32.mrb[0].mxu0
  %v1594 = vpop.f32.mrb[0].mxu0
  %v1595 = vadd.f32 0.0, %v1594
  %v1596 = vpop.f32.mrb[0].mxu0
  %1597 = vmatprep.mubr.bf16.mxu0 0
  %1598 = vmatmul.mubr.bf16.gmra.mrb[0].mxu0 %v1027
  %v1599 = vpop.f32.mrb[0].mxu0
  %v1600 = vadd.f32 0.0, %v1599
  %v1601 = vpop.f32.mrb[0].mxu0
  %v1602 = vpop.f32.mrb[0].mxu0
  %v1603 = vadd.f32 0.0, %v1602
  %v1604 = vpop.f32.mrb[0].mxu0
  %1605 = vmatprep.mubr.bf16.mxu0 0
  %1606 = vmatmul.mubr.bf16.gmra.mrb[0].mxu0 %v1030
  %v1607 = vpop.f32.mrb[0].mxu0
  %v1608 = vadd.f32 0.0, %v1607
  %v1609 = vpop.f32.mrb[0].mxu0
  %v1610 = vpop.f32.mrb[0].mxu0
  %v1611 = vadd.f32 0.0, %v1610
  %v1612 = vpop.f32.mrb[0].mxu0
  %1613 = vmatprep.mubr.bf16.mxu0 0
  %1614 = vmatmul.mubr.bf16.gmra.mrb[0].mxu0 %v1033
  %v1615 = vpop.f32.mrb[0].mxu0
  %v1616 = vadd.f32 0.0, %v1615
  %v1617 = vpop.f32.mrb[0].mxu0
  %v1618 = vpop.f32.mrb[0].mxu0
  %v1619 = vadd.f32 0.0, %v1618
  %v1620 = vpop.f32.mrb[0].mxu0
  %1621 = vmatprep.mubr.bf16.mxu0 0
  %1622 = vmatmul.mubr.bf16.gmra.mrb[0].mxu0 %v1036
  %v1623 = vpop.f32.mrb[0].mxu0
  %v1624 = vadd.f32 0.0, %v1623
  %v1625 = vpop.f32.mrb[0].mxu0
  %v1626 = vpop.f32.mrb[0].mxu0
  %v1627 = vadd.f32 0.0, %v1626
  %v1628 = vpop.f32.mrb[0].mxu0
  %1629 = vmatprep.mubr.bf16.mxu0 0
  %1630 = vmatmul.mubr.bf16.gmra.mrb[0].mxu0 %v1039
  %v1631 = vpop.f32.mrb[0].mxu0
  %v1632 = vadd.f32 0.0, %v1631
  %v1633 = vpop.f32.mrb[0].mxu0
  %v1634 = vpop.f32.mrb[0].mxu0
  %v1635 = vadd.f32 0.0, %v1634
  %v1636 = vpop.f32.mrb[0].mxu0
  %1637 = vmatprep.mubr.bf16.mxu0 0
  %1638 = vmatmul.mubr.bf16.gmra.mrb[0].mxu0 %v1042
  %v1639 = vpop.f32.mrb[0].mxu0
  %v1640 = vadd.f32 0.0, %v1639
  %v1641 = vpop.f32.mrb[0].mxu0
  %v1642 = vpop.f32.mrb[0].mxu0
  %v1643 = vadd.f32 0.0, %v1642
  %v1644 = vpop.f32.mrb[0].mxu0
  %1645 = vmatprep.mubr.bf16.mxu0 0
  %1646 = vmatmul.mubr.bf16.gmra.mrb[0].mxu0 %v1045
  %v1647 = vpop.f32.mrb[0].mxu0
  %v1648 = vadd.f32 0.0, %v1647
  %v1649 = vpop.f32.mrb[0].mxu0
  %v1650 = vpop.f32.mrb[0].mxu0
  %v1651 = vadd.f32 0.0, %v1650
  %v1652 = vpop.f32.mrb[0].mxu0
  %1653 = vmatprep.mubr.bf16.mxu0 0
  %1654 = vmatmul.mubr.bf16.gmra.mrb[0].mxu0 %v1048
  %v1655 = vpop.f32.mrb[0].mxu0
  %v1656 = vadd.f32 0.0, %v1655
  %v1657 = vpop.f32.mrb[0].mxu0
  %v1658 = vpop.f32.mrb[0].mxu0
  %v1659 = vadd.f32 0.0, %v1658
  %v1660 = vpop.f32.mrb[0].mxu0
  %1661 = vmatprep.mubr.bf16.mxu0 0
  %1662 = vmatmul.mubr.bf16.gmra.mrb[0].mxu0 %v1051
  %v1663 = vpop.f32.mrb[0].mxu0
  %v1664 = vadd.f32 0.0, %v1663
  %v1665 = vpop.f32.mrb[0].mxu0
  %v1666 = vpop.f32.mrb[0].mxu0
  %v1667 = vadd.f32 0.0, %v1666
  %v1668 = vpop.f32.mrb[0].mxu0
  %1669 = vmatprep.mubr.bf16.mxu0 0
  %1670 = vmatmul.mubr.bf16.gmra.mrb[0].mxu0 %v1054
  %v1671 = vpop.f32.mrb[0].mxu0
  %v1672 = vadd.f32 0.0, %v1671
  %v1673 = vpop.f32.mrb[0].mxu0
  %v1674 = vpop.f32.mrb[0].mxu0
  %v1675 = vadd.f32 0.0, %v1674
  %v1676 = vpop.f32.mrb[0].mxu0
  %1677 = vmatprep.mubr.bf16.mxu0 0
  %1678 = vmatmul.mubr.bf16.gmra.mrb[0].mxu0 %v1057
  %v1679 = vpop.f32.mrb[0].mxu0
  %v1680 = vadd.f32 0.0, %v1679
  %v1681 = vpop.f32.mrb[0].mxu0
  %v1682 = vpop.f32.mrb[0].mxu0
  %v1683 = vadd.f32 0.0, %v1682
  %v1684 = vpop.f32.mrb[0].mxu0
  %1685 = vmatprep.mubr.bf16.mxu0 0
  %1686 = vmatmul.mubr.bf16.gmra.mrb[0].mxu0 %v1060
  %v1687 = vpop.f32.mrb[0].mxu0
  %v1688 = vadd.f32 0.0, %v1687
  %v1689 = vpop.f32.mrb[0].mxu0
  %v1690 = vpop.f32.mrb[0].mxu0
  %v1691 = vadd.f32 0.0, %v1690
  %v1692 = vpop.f32.mrb[0].mxu0
  %1693 = vmatprep.mubr.bf16.mxu0 0
  %1694 = vmatmul.mubr.bf16.gmra.mrb[0].mxu0 %v1063
  %v1695 = vpop.f32.mrb[0].mxu0
  %v1696 = vadd.f32 0.0, %v1695
  %v1697 = vpop.f32.mrb[0].mxu0
  %v1698 = vpop.f32.mrb[0].mxu0
  %v1699 = vadd.f32 0.0, %v1698
  %v1700 = vpop.f32.mrb[0].mxu0
  %1701 = vmatprep.mubr.bf16.mxu0 0
  %1702 = vmatmul.mubr.bf16.gmra.mrb[0].mxu0 %v1066
  %v1703 = vpop.f32.mrb[0].mxu0
  %v1704 = vadd.f32 0.0, %v1703
  %v1705 = vpop.f32.mrb[0].mxu0
  %v1706 = vpop.f32.mrb[0].mxu0
  %v1707 = vadd.f32 0.0, %v1706
  %v1708 = vpop.f32.mrb[0].mxu0
  %1709 = vmatprep.mubr.bf16.mxu0 0
  %1710 = vmatmul.mubr.bf16.gmra.mrb[0].mxu0 %v1069
  %v1711 = vpop.f32.mrb[0].mxu0
  %v1712 = vadd.f32 0.0, %v1711
  %v1713 = vpop.f32.mrb[0].mxu0
  %v1714 = vpop.f32.mrb[0].mxu0
  %v1715 = vadd.f32 0.0, %v1714
  %v1716 = vpop.f32.mrb[0].mxu0
  %1717 = vmatprep.mubr.bf16.mxu0 0
  %1718 = vmatmul.mubr.bf16.gmra.mrb[0].mxu0 %v1072
  %v1719 = vpop.f32.mrb[0].mxu0
  %v1720 = vadd.f32 0.0, %v1719
  %v1721 = vpop.f32.mrb[0].mxu0
  %v1722 = vpop.f32.mrb[0].mxu0
  %v1723 = vadd.f32 0.0, %v1722
  %v1724 = vpop.f32.mrb[0].mxu0
  %1725 = vmatprep.mubr.bf16.mxu0 0
  %1726 = vmatmul.mubr.bf16.gmra.mrb[0].mxu0 %v1075
  %v1727 = vpop.f32.mrb[0].mxu0
  %v1728 = vadd.f32 0.0, %v1727
  %v1729 = vpop.f32.mrb[0].mxu0
  %v1730 = vpop.f32.mrb[0].mxu0
  %v1731 = vadd.f32 0.0, %v1730
  %v1732 = vpop.f32.mrb[0].mxu0
  %1733 = vmatprep.mubr.bf16.mxu0 0
  %1734 = vmatmul.mubr.bf16.gmra.mrb[0].mxu0 %v1078
  %v1735 = vpop.f32.mrb[0].mxu0
  %v1736 = vadd.f32 0.0, %v1735
  %v1737 = vpop.f32.mrb[0].mxu0
  %v1738 = vpop.f32.mrb[0].mxu0
  %v1739 = vadd.f32 0.0, %v1738
  %v1740 = vpop.f32.mrb[0].mxu0
  %1741 = vmatprep.mubr.bf16.mxu0 0
  %1742 = vmatmul.mubr.bf16.gmra.mrb[0].mxu0 %v1081
  %v1743 = vpop.f32.mrb[0].mxu0
  %v1744 = vadd.f32 0.0, %v1743
  %v1745 = vpop.f32.mrb[0].mxu0
  %v1746 = vpop.f32.mrb[0].mxu0
  %v1747 = vadd.f32 0.0, %v1746
  %v1748 = vpop.f32.mrb[0].mxu0
  %1749 = vmatprep.mubr.bf16.mxu0 0
  %1750 = vmatmul.mubr.bf16.gmra.mrb[0].mxu0 %v1084
  %v1751 = vpop.f32.mrb[0].mxu0
  %v1752 = vadd.f32 0.0, %v1751
  %v1753 = vpop.f32.mrb[0].mxu0
  %v1754 = vpop.f32.mrb[0].mxu0
  %v1755 = vadd.f32 0.0, %v1754
  %v1756 = vpop.f32.mrb[0].mxu0
  %1757 = vmatprep.mubr.bf16.mxu0 0
  %1758 = vmatmul.mubr.bf16.gmra.mrb[0].mxu0 %v1087
  %v1759 = vpop.f32.mrb[0].mxu0
  %v1760 = vadd.f32 0.0, %v1759
  %v1761 = vpop.f32.mrb[0].mxu0
  %v1762 = vpop.f32.mrb[0].mxu0
  %v1763 = vadd.f32 0.0, %v1762
  %v1764 = vpop.f32.mrb[0].mxu0
  %1765 = vmatprep.mubr.bf16.mxu0 0
  %1766 = vmatmul.mubr.bf16.gmra.mrb[0].mxu0 %v1090
  %v1767 = vpop.f32.mrb[0].mxu0
  %v1768 = vadd.f32 0.0, %v1767
  %v1769 = vpop.f32.mrb[0].mxu0
  %v1770 = vpop.f32.mrb[0].mxu0
  %v1771 = vadd.f32 0.0, %v1770
  %v1772 = vpop.f32.mrb[0].mxu0
  %1773 = vmatprep.mubr.bf16.mxu0 0
  %1774 = vmatmul.mubr.bf16.gmra.mrb[0].mxu0 %v1093
  %v1775 = vpop.f32.mrb[0].mxu0
  %v1776 = vadd.f32 0.0, %v1775
  %v1777 = vpop.f32.mrb[0].mxu0
  %v1778 = vpop.f32.mrb[0].mxu0
  %v1779 = vadd.f32 0.0, %v1778
  %v1780 = vpop.f32.mrb[0].mxu0
  %1781 = vmatprep.mubr.bf16.mxu0 0
  %1782 = vmatmul.mubr.bf16.gmra.mrb[0].mxu0 %v1096
  %v1783 = vpop.f32.mrb[0].mxu0
  %v1784 = vadd.f32 0.0, %v1783
  %v1785 = vpop.f32.mrb[0].mxu0
  %v1786 = vpop.f32.mrb[0].mxu0
  %v1787 = vadd.f32 0.0, %v1786
  %v1788 = vpop.f32.mrb[0].mxu0
  %1789 = vmatprep.mubr.bf16.mxu0 0
  %1790 = vmatmul.mubr.bf16.gmra.mrb[0].mxu0 %v1099
  %v1791 = vpop.f32.mrb[0].mxu0
  %v1792 = vadd.f32 0.0, %v1791
  %v1793 = vpop.f32.mrb[0].mxu0
  %v1794 = vpop.f32.mrb[0].mxu0
  %v1795 = vadd.f32 0.0, %v1794
  %v1796 = vpop.f32.mrb[0].mxu0
  %1797 = vmatprep.mubr.bf16.mxu0 0
  %1798 = vmatmul.mubr.bf16.gmra.mrb[0].mxu0 %v1102
  %v1799 = vpop.f32.mrb[0].mxu0
  %v1800 = vadd.f32 0.0, %v1799
  %v1801 = vpop.f32.mrb[0].mxu0
  %v1802 = vpop.f32.mrb[0].mxu0
  %v1803 = vadd.f32 0.0, %v1802
  %v1804 = vpop.f32.mrb[0].mxu0
  %1805 = vmatprep.mubr.bf16.mxu0 0
  %1806 = vmatmul.mubr.bf16.gmra.mrb[0].mxu0 %v1105
  %v1807 = vpop.f32.mrb[0].mxu0
  %v1808 = vadd.f32 0.0, %v1807
  %v1809 = vpop.f32.mrb[0].mxu0
  %v1810 = vpop.f32.mrb[0].mxu0
  %v1811 = vadd.f32 0.0, %v1810
  %v1812 = vpop.f32.mrb[0].mxu0
  %1813 = vmatprep.mubr.bf16.mxu0 0
  %1814 = vmatmul.mubr.bf16.gmra.mrb[0].mxu0 %v1108
  %v1815 = vpop.f32.mrb[0].mxu0
  %v1816 = vadd.f32 0.0, %v1815
  %v1817 = vpop.f32.mrb[0].mxu0
  %v1818 = vpop.f32.mrb[0].mxu0
  %v1819 = vadd.f32 0.0, %v1818
  %v1820 = vpop.f32.mrb[0].mxu0
  %1821 = vmatprep.mubr.bf16.mxu0 0
  %1822 = vmatmul.mubr.bf16.gmra.mrb[0].mxu0 %v1111
  %v1823 = vpop.f32.mrb[0].mxu0
  %v1824 = vadd.f32 0.0, %v1823
  %v1825 = vpop.f32.mrb[0].mxu0
  %v1826 = vpop.f32.mrb[0].mxu0
  %v1827 = vadd.f32 0.0, %v1826
  %v1828 = vpop.f32.mrb[0].mxu0
  %1829 = vmatprep.mubr.bf16.mxu0 0
  %1830 = vmatmul.mubr.bf16.gmra.mrb[0].mxu0 %v1114
  %v1831 = vpop.f32.mrb[0].mxu0
  %v1832 = vadd.f32 0.0, %v1831
  %v1833 = vpop.f32.mrb[0].mxu0
  %v1834 = vpop.f32.mrb[0].mxu0
  %v1835 = vadd.f32 0.0, %v1834
  %v1836 = vpop.f32.mrb[0].mxu0
  %1837 = vmatprep.mubr.bf16.mxu0 0
  %1838 = vmatmul.mubr.bf16.gmra.mrb[0].mxu0 %v1117
  %v1839 = vpop.f32.mrb[0].mxu0
  %v1840 = vadd.f32 0.0, %v1839
  %v1841 = vpop.f32.mrb[0].mxu0
  %v1842 = vpop.f32.mrb[0].mxu0
  %v1843 = vadd.f32 0.0, %v1842
  %v1844 = vpop.f32.mrb[0].mxu0
  %1845 = vmatprep.mubr.bf16.mxu0 0
  %1846 = vmatmul.mubr.bf16.gmra.mrb[0].mxu0 %v1120
  %v1847 = vpop.f32.mrb[0].mxu0
  %v1848 = vadd.f32 0.0, %v1847
  %v1849 = vpop.f32.mrb[0].mxu0
  %v1850 = vpop.f32.mrb[0].mxu0
  %v1851 = vadd.f32 0.0, %v1850
  %v1852 = vpop.f32.mrb[0].mxu0
  %1853 = vmatprep.mubr.bf16.mxu0 0
  %1854 = vmatmul.mubr.bf16.gmra.mrb[0].mxu0 %v1123
  %v1855 = vpop.f32.mrb[0].mxu0
  %v1856 = vadd.f32 0.0, %v1855
  %v1857 = vpop.f32.mrb[0].mxu0
  %v1858 = vpop.f32.mrb[0].mxu0
  %v1859 = vadd.f32 0.0, %v1858
  %v1860 = vpop.f32.mrb[0].mxu0
  %1861 = vmatprep.mubr.bf16.mxu0 0
  %1862 = vmatmul.mubr.bf16.gmra.mrb[0].mxu0 %v1126
  %v1863 = vpop.f32.mrb[0].mxu0
  %v1864 = vadd.f32 0.0, %v1863
  %v1865 = vpop.f32.mrb[0].mxu0
  %v1866 = vpop.f32.mrb[0].mxu0
  %v1867 = vadd.f32 0.0, %v1866
  %v1868 = vpop.f32.mrb[0].mxu0
  %1869 = vmatprep.mubr.bf16.mxu0 0
  %1870 = vmatmul.mubr.bf16.gmra.mrb[0].mxu0 %v1129
  %v1871 = vpop.f32.mrb[0].mxu0
  %v1872 = vadd.f32 0.0, %v1871
  %v1873 = vpop.f32.mrb[0].mxu0
  %v1874 = vpop.f32.mrb[0].mxu0
  %v1875 = vadd.f32 0.0, %v1874
  %v1876 = vpop.f32.mrb[0].mxu0
  %1877 = vmatprep.mubr.bf16.mxu0 0
  %1878 = vmatmul.mubr.bf16.gmra.mrb[0].mxu0 %v1132
  %v1879 = vpop.f32.mrb[0].mxu0
  %v1880 = vadd.f32 0.0, %v1879
  %v1881 = vpop.f32.mrb[0].mxu0
  %v1882 = vpop.f32.mrb[0].mxu0
  %v1883 = vadd.f32 0.0, %v1882
  %v1884 = vpop.f32.mrb[0].mxu0
  %1885 = vmatprep.mubr.bf16.mxu0 0
  %1886 = vmatmul.mubr.bf16.gmra.mrb[0].mxu0 %v1135
  %v1887 = vpop.f32.mrb[0].mxu0
  %v1888 = vadd.f32 0.0, %v1887
  %v1889 = vpop.f32.mrb[0].mxu0
  %v1890 = vpop.f32.mrb[0].mxu0
  %v1891 = vadd.f32 0.0, %v1890
  %v1892 = vpop.f32.mrb[0].mxu0
  %1893 = vmatprep.mubr.bf16.mxu0 0
  %1894 = vmatmul.mubr.bf16.gmra.mrb[0].mxu0 %v1138
  %v1895 = vpop.f32.mrb[0].mxu0
  %v1896 = vadd.f32 0.0, %v1895
  %v1897 = vpop.f32.mrb[0].mxu0
  %v1898 = vpop.f32.mrb[0].mxu0
  %v1899 = vadd.f32 0.0, %v1898
  %v1900 = vpop.f32.mrb[0].mxu0
  %1901 = vmatprep.mubr.bf16.mxu0 0
  %1902 = vmatmul.mubr.bf16.gmra.mrb[0].mxu0 %v1141
  %v1903 = vpop.f32.mrb[0].mxu0
  %v1904 = vadd.f32 0.0, %v1903
  %v1905 = vpop.f32.mrb[0].mxu0
  %v1906 = vpop.f32.mrb[0].mxu0
  %v1907 = vadd.f32 0.0, %v1906
  %v1908 = vpop.f32.mrb[0].mxu0
  %1909 = vmatprep.mubr.bf16.mxu0 0
  %1910 = vmatmul.mubr.bf16.gmra.mrb[0].mxu0 %v1144
  %v1911 = vpop.f32.mrb[0].mxu0
  %v1912 = vadd.f32 0.0, %v1911
  %v1913 = vpop.f32.mrb[0].mxu0
  %v1914 = vpop.f32.mrb[0].mxu0
  %v1915 = vadd.f32 0.0, %v1914
  %v1916 = vpop.f32.mrb[0].mxu0
  %1917 = vmatprep.mubr.bf16.mxu0 0
  %1918 = vmatmul.mubr.bf16.gmra.mrb[0].mxu0 %v1147
  %v1919 = vpop.f32.mrb[0].mxu0
  %v1920 = vadd.f32 0.0, %v1919
  %v1921 = vpop.f32.mrb[0].mxu0
  %v1922 = vpop.f32.mrb[0].mxu0
  %v1923 = vadd.f32 0.0, %v1922
  %v1924 = vpop.f32.mrb[0].mxu0
  %1925 = vmatprep.mubr.bf16.mxu0 0
  %1926 = vmatmul.mubr.bf16.gmra.mrb[0].mxu0 %v1150
  %v1927 = vpop.f32.mrb[0].mxu0
  %v1928 = vadd.f32 0.0, %v1927
  %v1929 = vpop.f32.mrb[0].mxu0
  %v1930 = vpop.f32.mrb[0].mxu0
  %v1931 = vadd.f32 0.0, %v1930
  %v1932 = vpop.f32.mrb[0].mxu0
  %1933 = vmatprep.mubr.bf16.mxu0 0
  %1934 = vmatmul.mubr.bf16.gmra.mrb[0].mxu0 %v1153
  %v1935 = vpop.f32.mrb[0].mxu0
  %v1936 = vadd.f32 0.0, %v1935
  %v1937 = vpop.f32.mrb[0].mxu0
  %v1938 = vpop.f32.mrb[0].mxu0
  %v1939 = vadd.f32 0.0, %v1938
  %v1940 = vpop.f32.mrb[0].mxu0
  %1941 = vmatprep.mubr.bf16.mxu0 0
  %1942 = vmatmul.mubr.bf16.gmra.mrb[0].mxu0 %v1156
  %v1943 = vpop.f32.mrb[0].mxu0
  %v1944 = vadd.f32 0.0, %v1943
  %v1945 = vpop.f32.mrb[0].mxu0
  %v1946 = vpop.f32.mrb[0].mxu0
  %v1947 = vadd.f32 0.0, %v1946
  %v1948 = vpop.f32.mrb[0].mxu0
  %1949 = vmatprep.mubr.bf16.mxu0 0
  %1950 = vmatmul.mubr.bf16.gmra.mrb[0].mxu0 %v1159
  %v1951 = vpop.f32.mrb[0].mxu0
  %v1952 = vadd.f32 0.0, %v1951
  %v1953 = vpop.f32.mrb[0].mxu0
  %v1954 = vpop.f32.mrb[0].mxu0
  %v1955 = vadd.f32 0.0, %v1954
  %v1956 = vpop.f32.mrb[0].mxu0
  %1957 = vmatprep.mubr.bf16.mxu0 0
  %1958 = vmatmul.mubr.bf16.gmra.mrb[0].mxu0 %v1162
  %v1959 = vpop.f32.mrb[0].mxu0
  %v1960 = vadd.f32 0.0, %v1959
  %v1961 = vpop.f32.mrb[0].mxu0
  %v1962 = vpop.f32.mrb[0].mxu0
  %v1963 = vadd.f32 0.0, %v1962
  %v1964 = vpop.f32.mrb[0].mxu0
  %1965 = vmatprep.mubr.bf16.mxu0 0
  %1966 = vmatmul.mubr.bf16.gmra.mrb[0].mxu0 %v1165
  %v1967 = vpop.f32.mrb[0].mxu0
  %v1968 = vadd.f32 0.0, %v1967
  %v1969 = vpop.f32.mrb[0].mxu0
  %v1970 = vpop.f32.mrb[0].mxu0
  %v1971 = vadd.f32 0.0, %v1970
  %v1972 = vpop.f32.mrb[0].mxu0
  %1973 = vmatprep.mubr.bf16.mxu0 0
  %1974 = vmatmul.mubr.bf16.gmra.mrb[0].mxu0 %v1168
  %v1975 = vpop.f32.mrb[0].mxu0
  %v1976 = vadd.f32 0.0, %v1975
  %v1977 = vpop.f32.mrb[0].mxu0
  %v1978 = vpop.f32.mrb[0].mxu0
  %v1979 = vadd.f32 0.0, %v1978
  %v1980 = vpop.f32.mrb[0].mxu0
  %1981 = vmatprep.mubr.bf16.mxu0 0
  %1982 = vmatmul.mubr.bf16.gmra.mrb[0].mxu0 %v1171
  %v1983 = vpop.f32.mrb[0].mxu0
  %v1984 = vadd.f32 0.0, %v1983
  %v1985 = vpop.f32.mrb[0].mxu0
  %v1986 = vpop.f32.mrb[0].mxu0
  %v1987 = vadd.f32 0.0, %v1986
  %v1988 = vpop.f32.mrb[0].mxu0
  %1989 = vmatprep.mubr.bf16.mxu0 0
  %1990 = vmatmul.mubr.bf16.gmra.mrb[0].mxu0 %v1174
  %v1991 = vpop.f32.mrb[0].mxu0
  %v1992 = vadd.f32 0.0, %v1991
  %v1993 = vpop.f32.mrb[0].mxu0
  %v1994 = vpop.f32.mrb[0].mxu0
  %v1995 = vadd.f32 0.0, %v1994
  %v1996 = vpop.f32.mrb[0].mxu0
  %1997 = vmatprep.mubr.bf16.mxu0 0
  %1998 = vmatmul.mubr.bf16.gmra.mrb[0].mxu0 %v1177
  %v1999 = vpop.f32.mrb[0].mxu0
  %v2000 = vadd.f32 0.0, %v1999
  %v2001 = vpop.f32.mrb[0].mxu0
  %v2002 = vpop.f32.mrb[0].mxu0
  %v2003 = vadd.f32 0.0, %v2002
  %v2004 = vpop.f32.mrb[0].mxu0
  %2005 = vmatprep.mubr.bf16.mxu0 0
  %2006 = vmatmul.mubr.bf16.gmra.mrb[0].mxu0 %v1180
  %v2007 = vpop.f32.mrb[0].mxu0
  %v2008 = vadd.f32 0.0, %v2007
  %v2009 = vpop.f32.mrb[0].mxu0
  %v2010 = vpop.f32.mrb[0].mxu0
  %v2011 = vadd.f32 0.0, %v2010
  %v2012 = vpop.f32.mrb[0].mxu0
  %2013 = vmatprep.mubr.bf16.mxu0 0
  %2014 = vmatmul.mubr.bf16.gmra.mrb[0].mxu0 %v1183
  %v2015 = vpop.f32.mrb[0].mxu0
  %v2016 = vadd.f32 0.0, %v2015
  %v2017 = vpop.f32.mrb[0].mxu0
  %v2018 = vpop.f32.mrb[0].mxu0
  %v2019 = vadd.f32 0.0, %v2018
  %v2020 = vpop.f32.mrb[0].mxu0
  %2021 = vmatprep.mubr.bf16.mxu0 0
  %2022 = vmatmul.mubr.bf16.gmra.mrb[0].mxu0 %v1186
  %v2023 = vpop.f32.mrb[0].mxu0
  %v2024 = vadd.f32 0.0, %v2023
  %v2025 = vpop.f32.mrb[0].mxu0
  %v2026 = vpop.f32.mrb[0].mxu0
  %v2027 = vadd.f32 0.0, %v2026
  %v2028 = vpop.f32.mrb[0].mxu0
  %2029 = vmatprep.mubr.bf16.mxu0 0
  %2030 = vmatmul.mubr.bf16.gmra.mrb[0].mxu0 %v1189
  %v2031 = vpop.f32.mrb[0].mxu0
  %v2032 = vadd.f32 0.0, %v2031
  %v2033 = vpop.f32.mrb[0].mxu0
  %v2034 = vpop.f32.mrb[0].mxu0
  %v2035 = vadd.f32 0.0, %v2034
  %v2036 = vpop.f32.mrb[0].mxu0
  %2037 = vmatprep.mubr.bf16.mxu0 0
  %2038 = vmatmul.mubr.bf16.gmra.mrb[0].mxu0 %v1192
  %v2039 = vpop.f32.mrb[0].mxu0
  %v2040 = vadd.f32 0.0, %v2039
  %v2041 = vpop.f32.mrb[0].mxu0
  %v2042 = vpop.f32.mrb[0].mxu0
  %v2043 = vadd.f32 0.0, %v2042
  %v2044 = vpop.f32.mrb[0].mxu0
  %2045 = vmatprep.mubr.bf16.mxu0 0
  %2046 = vmatmul.mubr.bf16.gmra.mrb[0].mxu0 %v1195
  %v2047 = vpop.f32.mrb[0].mxu0
  %v2048 = vadd.f32 0.0, %v2047
  %v2049 = vpop.f32.mrb[0].mxu0
  %v2050 = vpop.f32.mrb[0].mxu0
  %v2051 = vadd.f32 0.0, %v2050
  %v2052 = vpop.f32.mrb[0].mxu0
  %2053 = vmatprep.mubr.bf16.mxu0 0
  %2054 = vmatmul.mubr.bf16.gmra.mrb[0].mxu0 %v1198
  %v2055 = vpop.f32.mrb[0].mxu0
  %v2056 = vadd.f32 0.0, %v2055
  %v2057 = vpop.f32.mrb[0].mxu0
  %v2058 = vpop.f32.mrb[0].mxu0
  %v2059 = vadd.f32 0.0, %v2058
  %v2060 = vpop.f32.mrb[0].mxu0
  %2061 = vmatprep.mubr.bf16.mxu0 0
  %2062 = vmatmul.mubr.bf16.gmra.mrb[0].mxu0 %v1201
  %v2063 = vpop.f32.mrb[0].mxu0
  %v2064 = vadd.f32 0.0, %v2063
  %v2065 = vpop.f32.mrb[0].mxu0
  %v2066 = vpop.f32.mrb[0].mxu0
  %v2067 = vadd.f32 0.0, %v2066
  %v2068 = vpop.f32.mrb[0].mxu0
  %2069 = vmatprep.mubr.bf16.mxu0 0
  %2070 = vmatmul.mubr.bf16.gmra.mrb[0].mxu0 %v1204
  %v2071 = vpop.f32.mrb[0].mxu0
  %v2072 = vadd.f32 0.0, %v2071
  %v2073 = vpop.f32.mrb[0].mxu0
  %v2074 = vpop.f32.mrb[0].mxu0
  %v2075 = vadd.f32 0.0, %v2074
  %v2076 = vpop.f32.mrb[0].mxu0
  %2077 = vmatprep.mubr.bf16.mxu0 0
  %2078 = vmatmul.mubr.bf16.gmra.mrb[0].mxu0 %v1207
  %v2079 = vpop.f32.mrb[0].mxu0
  %v2080 = vadd.f32 0.0, %v2079
  %v2081 = vpop.f32.mrb[0].mxu0
  %v2082 = vpop.f32.mrb[0].mxu0
  %v2083 = vadd.f32 0.0, %v2082
  %v2084 = vpop.f32.mrb[0].mxu0
  %2085 = vmatprep.mubr.bf16.mxu0 0
  %2086 = vmatmul.mubr.bf16.gmra.mrb[0].mxu0 %v1210
  %v2087 = vpop.f32.mrb[0].mxu0
  %v2088 = vadd.f32 0.0, %v2087
  %v2089 = vpop.f32.mrb[0].mxu0
  %v2090 = vpop.f32.mrb[0].mxu0
  %v2091 = vadd.f32 0.0, %v2090
  %v2092 = vpop.f32.mrb[0].mxu0
  %2093 = vmatprep.mubr.bf16.mxu0 0
  %2094 = vmatmul.mubr.bf16.gmra.mrb[0].mxu0 %v1213
  %v2095 = vpop.f32.mrb[0].mxu0
  %v2096 = vadd.f32 0.0, %v2095
  %v2097 = vpop.f32.mrb[0].mxu0
  %v2098 = vpop.f32.mrb[0].mxu0
  %v2099 = vadd.f32 0.0, %v2098
  %v2100 = vpop.f32.mrb[0].mxu0
  %2101 = vmatprep.mubr.bf16.mxu0 0
  %2102 = vmatmul.mubr.bf16.gmra.mrb[0].mxu0 %v1216
  %v2103 = vpop.f32.mrb[0].mxu0
  %v2104 = vadd.f32 0.0, %v2103
  %v2105 = vpop.f32.mrb[0].mxu0
  %v2106 = vpop.f32.mrb[0].mxu0
  %v2107 = vadd.f32 0.0, %v2106
  %v2108 = vpop.f32.mrb[0].mxu0
  %2109 = vmatprep.mubr.bf16.mxu0 0
  %2110 = vmatmul.mubr.bf16.gmra.mrb[0].mxu0 %v1219
  %v2111 = vpop.f32.mrb[0].mxu0
  %v2112 = vadd.f32 0.0, %v2111
  %v2113 = vpop.f32.mrb[0].mxu0
  %v2114 = vpop.f32.mrb[0].mxu0
  %v2115 = vadd.f32 0.0, %v2114
  %v2116 = vpop.f32.mrb[0].mxu0
  %2117 = vmatprep.mubr.bf16.mxu0 0
  %2118 = vmatmul.mubr.bf16.gmra.mrb[0].mxu0 %v1222
  %v2119 = vpop.f32.mrb[0].mxu0
  %v2120 = vadd.f32 0.0, %v2119
  %v2121 = vpop.f32.mrb[0].mxu0
  %v2122 = vpop.f32.mrb[0].mxu0
  %v2123 = vadd.f32 0.0, %v2122
  %v2124 = vpop.f32.mrb[0].mxu0
  %2125 = vmatprep.mubr.bf16.mxu0 0
  %2126 = vmatmul.mubr.bf16.gmra.mrb[0].mxu0 %v1225
  %v2127 = vpop.f32.mrb[0].mxu0
  %v2128 = vadd.f32 0.0, %v2127
  %v2129 = vpop.f32.mrb[0].mxu0
  %v2130 = vpop.f32.mrb[0].mxu0
  %v2131 = vadd.f32 0.0, %v2130
  %v2132 = vpop.f32.mrb[0].mxu0
  %2133 = vmatprep.mubr.bf16.mxu0 0
  %2134 = vmatmul.mubr.bf16.gmra.mrb[0].mxu0 %v1228
  %v2135 = vpop.f32.mrb[0].mxu0
  %v2136 = vadd.f32 0.0, %v2135
  %v2137 = vpop.f32.mrb[0].mxu0
  %v2138 = vpop.f32.mrb[0].mxu0
  %v2139 = vadd.f32 0.0, %v2138
  %v2140 = vpop.f32.mrb[0].mxu0
  %2141 = vmatprep.mubr.bf16.mxu0 0
  %2142 = vmatmul.mubr.bf16.gmra.mrb[0].mxu0 %v1231
  %v2143 = vpop.f32.mrb[0].mxu0
  %v2144 = vadd.f32 0.0, %v2143
  %v2145 = vpop.f32.mrb[0].mxu0
  %v2146 = vpop.f32.mrb[0].mxu0
  %v2147 = vadd.f32 0.0, %v2146
  %v2148 = vpop.f32.mrb[0].mxu0
  %2149 = vmatprep.mubr.bf16.mxu0 0
  %2150 = vmatmul.mubr.bf16.gmra.mrb[0].mxu0 %v1234
  %v2151 = vpop.f32.mrb[0].mxu0
  %v2152 = vadd.f32 0.0, %v2151
  %v2153 = vpop.f32.mrb[0].mxu0
  %v2154 = vpop.f32.mrb[0].mxu0
  %v2155 = vadd.f32 0.0, %v2154
  %v2156 = vpop.f32.mrb[0].mxu0
  %2157 = vmatprep.mubr.bf16.mxu0 0
  %2158 = vmatmul.mubr.bf16.gmra.mrb[0].mxu0 %v1237
  %v2159 = vpop.f32.mrb[0].mxu0
  %v2160 = vadd.f32 0.0, %v2159
  %v2161 = vpop.f32.mrb[0].mxu0
  %v2162 = vpop.f32.mrb[0].mxu0
  %v2163 = vadd.f32 0.0, %v2162
  %v2164 = vpop.f32.mrb[0].mxu0
  %2165 = vmatprep.mubr.bf16.mxu0 0
  %2166 = vmatmul.mubr.bf16.gmra.mrb[0].mxu0 %v1240
  %v2167 = vpop.f32.mrb[0].mxu0
  %v2168 = vadd.f32 0.0, %v2167
  %v2169 = vpop.f32.mrb[0].mxu0
  %v2170 = vpop.f32.mrb[0].mxu0
  %v2171 = vadd.f32 0.0, %v2170
  %v2172 = vpop.f32.mrb[0].mxu0
  %2173 = vmatprep.mubr.bf16.mxu0 0
  %2174 = vmatmul.mubr.bf16.gmra.mrb[0].mxu0 %v1243
  %v2175 = vpop.f32.mrb[0].mxu0
  %v2176 = vadd.f32 0.0, %v2175
  %v2177 = vpop.f32.mrb[0].mxu0
  %v2178 = vpop.f32.mrb[0].mxu0
  %v2179 = vadd.f32 0.0, %v2178
  %v2180 = vpop.f32.mrb[0].mxu0
  %2181 = vmatprep.mubr.bf16.mxu0 0
  %2182 = vmatmul.mubr.bf16.gmra.mrb[0].mxu0 %v1246
  %v2183 = vpop.f32.mrb[0].mxu0
  %v2184 = vadd.f32 0.0, %v2183
  %v2185 = vpop.f32.mrb[0].mxu0
  %v2186 = vpop.f32.mrb[0].mxu0
  %v2187 = vadd.f32 0.0, %v2186
  %v2188 = vpop.f32.mrb[0].mxu0
  %2189 = vmatprep.mubr.bf16.mxu0 0
  %2190 = vmatmul.mubr.bf16.gmra.mrb[0].mxu0 %v1249
  %v2191 = vpop.f32.mrb[0].mxu0
  %v2192 = vadd.f32 0.0, %v2191
  %v2193 = vpop.f32.mrb[0].mxu0
  %v2194 = vpop.f32.mrb[0].mxu0
  %v2195 = vadd.f32 0.0, %v2194
  %v2196 = vpop.f32.mrb[0].mxu0
  %2197 = vmatprep.mubr.bf16.mxu0 0
  %2198 = vmatmul.mubr.bf16.gmra.mrb[0].mxu0 %v1252
  %v2199 = vpop.f32.mrb[0].mxu0
  %v2200 = vadd.f32 0.0, %v2199
  %v2201 = vpop.f32.mrb[0].mxu0
  %v2202 = vpop.f32.mrb[0].mxu0
  %v2203 = vadd.f32 0.0, %v2202
  %v2204 = vpop.f32.mrb[0].mxu0
  %2205 = vmatprep.mubr.bf16.mxu0 0
  %2206 = vmatmul.mubr.bf16.gmra.mrb[0].mxu0 %v1255
  %v2207 = vpop.f32.mrb[0].mxu0
  %v2208 = vadd.f32 0.0, %v2207
  %v2209 = vpop.f32.mrb[0].mxu0
  %v2210 = vpop.f32.mrb[0].mxu0
  %v2211 = vadd.f32 0.0, %v2210
  %v2212 = vpop.f32.mrb[0].mxu0
  %2213 = vmatprep.mubr.bf16.mxu0 0
  %2214 = vmatmul.mubr.bf16.gmra.mrb[0].mxu0 %v1258
  %v2215 = vpop.f32.mrb[0].mxu0
  %v2216 = vadd.f32 0.0, %v2215
  %v2217 = vpop.f32.mrb[0].mxu0
  %v2218 = vpop.f32.mrb[0].mxu0
  %v2219 = vadd.f32 0.0, %v2218
  %v2220 = vpop.f32.mrb[0].mxu0
  %2221 = vmatprep.mubr.bf16.mxu0 0
  %2222 = vmatmul.mubr.bf16.gmra.mrb[0].mxu0 %v1261
  %v2223 = vpop.f32.mrb[0].mxu0
  %v2224 = vadd.f32 0.0, %v2223
  %v2225 = vpop.f32.mrb[0].mxu0
  %v2226 = vpop.f32.mrb[0].mxu0
  %v2227 = vadd.f32 0.0, %v2226
  %v2228 = vpop.f32.mrb[0].mxu0
  %2229 = vmatprep.mubr.bf16.mxu0 0
  %2230 = vmatmul.mubr.bf16.gmra.mrb[0].mxu0 %v1264
  %v2231 = vpop.f32.mrb[0].mxu0
  %v2232 = vadd.f32 0.0, %v2231
  %v2233 = vpop.f32.mrb[0].mxu0
  %v2234 = vpop.f32.mrb[0].mxu0
  %v2235 = vadd.f32 0.0, %v2234
  %v2236 = vpop.f32.mrb[0].mxu0
  %2237 = vmatprep.mubr.bf16.mxu0 0
  %2238 = vmatmul.mubr.bf16.gmra.mrb[0].mxu0 %v1267
  %v2239 = vpop.f32.mrb[0].mxu0
  %v2240 = vadd.f32 0.0, %v2239
  %v2241 = vpop.f32.mrb[0].mxu0
  %v2242 = vpop.f32.mrb[0].mxu0
  %v2243 = vadd.f32 0.0, %v2242
  %v2244 = vpop.f32.mrb[0].mxu0
  %2245 = vmatprep.mubr.bf16.mxu0 0
  %2246 = vmatmul.mubr.bf16.gmra.mrb[0].mxu0 %v1270
  %v2247 = vpop.f32.mrb[0].mxu0
  %v2248 = vadd.f32 0.0, %v2247
  %v2249 = vpop.f32.mrb[0].mxu0
  %v2250 = vpop.f32.mrb[0].mxu0
  %v2251 = vadd.f32 0.0, %v2250
  %v2252 = vpop.f32.mrb[0].mxu0
  %2253 = vmatprep.mubr.bf16.mxu0 0
  %2254 = vmatmul.mubr.bf16.gmra.mrb[0].mxu0 %v1273
  %v2255 = vpop.f32.mrb[0].mxu0
  %v2256 = vadd.f32 0.0, %v2255
  %v2257 = vpop.f32.mrb[0].mxu0
  %v2258 = vpop.f32.mrb[0].mxu0
  %v2259 = vadd.f32 0.0, %v2258
  %v2260 = vpop.f32.mrb[0].mxu0
  %2261 = vmatprep.mubr.bf16.mxu0 0
  %2262 = vmatmul.mubr.bf16.gmra.mrb[0].mxu0 %v1276
  %v2263 = vpop.f32.mrb[0].mxu0
  %v2264 = vadd.f32 0.0, %v2263
  %v2265 = vpop.f32.mrb[0].mxu0
  %v2266 = vpop.f32.mrb[0].mxu0
  %v2267 = vadd.f32 0.0, %v2266
  %v2268 = vpop.f32.mrb[0].mxu0
  %2269 = vmatprep.mubr.bf16.mxu0 0
  %2270 = vmatmul.mubr.bf16.gmra.mrb[0].mxu0 %v1279
  %v2271 = vpop.f32.mrb[0].mxu0
  %v2272 = vadd.f32 0.0, %v2271
  %v2273 = vpop.f32.mrb[0].mxu0
  %v2274 = vpop.f32.mrb[0].mxu0
  %v2275 = vadd.f32 0.0, %v2274
  %v2276 = vpop.f32.mrb[0].mxu0
  %2277 = vmatprep.mubr.bf16.mxu0 0
  %2278 = vmatmul.mubr.bf16.gmra.mrb[0].mxu0 %v1282
  %v2279 = vpop.f32.mrb[0].mxu0
  %v2280 = vadd.f32 0.0, %v2279
  %v2281 = vpop.f32.mrb[0].mxu0
  %v2282 = vpop.f32.mrb[0].mxu0
  %v2283 = vadd.f32 0.0, %v2282
  %v2284 = vpop.f32.mrb[0].mxu0
  %2285 = vmatprep.mubr.bf16.mxu0 0
  %2286 = vmatmul.mubr.bf16.gmra.mrb[0].mxu0 %v1285
  %v2287 = vpop.f32.mrb[0].mxu0
  %v2288 = vadd.f32 0.0, %v2287
  %v2289 = vpop.f32.mrb[0].mxu0
  %v2290 = vpop.f32.mrb[0].mxu0
  %v2291 = vadd.f32 0.0, %v2290
  %v2292 = vpop.f32.mrb[0].mxu0
  %2293 = vmatprep.mubr.bf16.mxu0 0
  %2294 = vmatmul.mubr.bf16.gmra.mrb[0].mxu0 %v1288
  %v2295 = vpop.f32.mrb[0].mxu0
  %v2296 = vadd.f32 0.0, %v2295
  %v2297 = vpop.f32.mrb[0].mxu0
  %v2298 = vpop.f32.mrb[0].mxu0
  %v2299 = vadd.f32 0.0, %v2298
  %v2300 = vpop.f32.mrb[0].mxu0
  %2301 = vmatprep.mubr.bf16.mxu0 0
  %2302 = vmatmul.mubr.bf16.gmra.mrb[0].mxu0 %v1291
  %v2303 = vpop.f32.mrb[0].mxu0
  %v2304 = vadd.f32 0.0, %v2303
  %v2305 = vpop.f32.mrb[0].mxu0
  %v2306 = vpop.f32.mrb[0].mxu0
  %v2307 = vadd.f32 0.0, %v2306
  %v2308 = vpop.f32.mrb[0].mxu0
  %2309 = vmatprep.mubr.bf16.mxu0 0
  %2310 = vmatmul.mubr.bf16.gmra.mrb[0].mxu0 %v1294
  %v2311 = vpop.f32.mrb[0].mxu0
  %v2312 = vadd.f32 0.0, %v2311
  %v2313 = vpop.f32.mrb[0].mxu0
  %v2314 = vpop.f32.mrb[0].mxu0
  %v2315 = vadd.f32 0.0, %v2314
  %v2316 = vpop.f32.mrb[0].mxu0
  %2317 = vmatprep.mubr.bf16.mxu0 0
  %2318 = vmatmul.mubr.bf16.gmra.mrb[0].mxu0 %v1297
  %v2319 = vpop.f32.mrb[0].mxu0
  %v2320 = vadd.f32 0.0, %v2319
  %v2321 = vpop.f32.mrb[0].mxu0
  %v2322 = vpop.f32.mrb[0].mxu0
  %v2323 = vadd.f32 0.0, %v2322
  %v2324 = vpop.f32.mrb[0].mxu0
  %2325 = vmatprep.mubr.bf16.mxu0 0
  %2326 = vmatmul.mubr.bf16.gmra.mrb[0].mxu0 %v1300
  %v2327 = vpop.f32.mrb[0].mxu0
  %v2328 = vadd.f32 0.0, %v2327
  %v2329 = vpop.f32.mrb[0].mxu0
  %v2330 = vpop.f32.mrb[0].mxu0
  %v2331 = vadd.f32 0.0, %v2330
  %v2332 = vpop.f32.mrb[0].mxu0
  %2333 = vmatprep.mubr.bf16.mxu0 0
  %2334 = vmatmul.mubr.bf16.gmra.mrb[0].mxu0 %v1303
  %v2335 = vpop.f32.mrb[0].mxu0
  %v2336 = vadd.f32 0.0, %v2335
  %v2337 = vpop.f32.mrb[0].mxu0
  %v2338 = vpop.f32.mrb[0].mxu0
  %v2339 = vadd.f32 0.0, %v2338
  %v2340 = vpop.f32.mrb[0].mxu0
  %2341 = vmatprep.mubr.bf16.mxu0 0
  %2342 = vmatmul.mubr.bf16.gmra.mrb[0].mxu0 %v1306
  %v2343 = vpop.f32.mrb[0].mxu0
  %v2344 = vadd.f32 0.0, %v2343
  %v2345 = vpop.f32.mrb[0].mxu0
  %v2346 = vpop.f32.mrb[0].mxu0
  %v2347 = vadd.f32 0.0, %v2346
  %v2348 = vpop.f32.mrb[0].mxu0
  %2349 = vmatprep.mubr.bf16.mxu0 0
  %2350 = vmatmul.mubr.bf16.gmra.mrb[0].mxu0 %v1309
  %v2351 = vpop.f32.mrb[0].mxu0
  %v2352 = vadd.f32 0.0, %v2351
  %v2353 = vpop.f32.mrb[0].mxu0
  %v2354 = vpop.f32.mrb[0].mxu0
  %v2355 = vadd.f32 0.0, %v2354
  %v2356 = vpop.f32.mrb[0].mxu0
  %2357 = vmatprep.mubr.bf16.mxu0 0
  %2358 = vmatmul.mubr.bf16.gmra.mrb[0].mxu0 %v1312
  %v2359 = vpop.f32.mrb[0].mxu0
  %v2360 = vadd.f32 0.0, %v2359
  %v2361 = vpop.f32.mrb[0].mxu0
  %v2362 = vpop.f32.mrb[0].mxu0
  %v2363 = vadd.f32 0.0, %v2362
  %v2364 = vpop.f32.mrb[0].mxu0
  %2365 = vmatprep.mubr.bf16.mxu0 0
  %2366 = vmatmul.mubr.bf16.gmra.mrb[0].mxu0 %v1315
  %v2367 = vpop.f32.mrb[0].mxu0
  %v2368 = vadd.f32 0.0, %v2367
  %v2369 = vpop.f32.mrb[0].mxu0
  %v2370 = vpop.f32.mrb[0].mxu0
  %v2371 = vadd.f32 0.0, %v2370
  %v2372 = vpop.f32.mrb[0].mxu0
  %2373 = vdwg.mxu0
  %vm2374 = vcmp.gt.f32.partialorder %v1352, 0.0
  %vm2375 = vcmp.gt.f32.partialorder %v1355, 0.0
  %vm2376 = vcmp.gt.f32.partialorder %v1360, 0.0
  %vm2377 = vcmp.gt.f32.partialorder %v1363, 0.0
  %vm2378 = vcmp.gt.f32.partialorder %v1368, 0.0
  %vm2379 = vcmp.gt.f32.partialorder %v1371, 0.0
  %vm2380 = vcmp.gt.f32.partialorder %v1376, 0.0
  %vm2381 = vcmp.gt.f32.partialorder %v1379, 0.0
  %vm2382 = vcmp.gt.f32.partialorder %v1384, 0.0
  %vm2383 = vcmp.gt.f32.partialorder %v1387, 0.0
  %vm2384 = vcmp.gt.f32.partialorder %v1392, 0.0
  %vm2385 = vcmp.gt.f32.partialorder %v1395, 0.0
  %vm2386 = vcmp.gt.f32.partialorder %v1400, 0.0
  %vm2387 = vcmp.gt.f32.partialorder %v1403, 0.0
  %vm2388 = vcmp.gt.f32.partialorder %v1408, 0.0
  %vm2389 = vcmp.gt.f32.partialorder %v1411, 0.0
  %vm2390 = vcmp.gt.f32.partialorder %v1416, 0.0
  %vm2391 = vcmp.gt.f32.partialorder %v1419, 0.0
  %vm2392 = vcmp.gt.f32.partialorder %v1424, 0.0
  %vm2393 = vcmp.gt.f32.partialorder %v1427, 0.0
  %vm2394 = vcmp.gt.f32.partialorder %v1432, 0.0
  %vm2395 = vcmp.gt.f32.partialorder %v1435, 0.0
  %vm2396 = vcmp.gt.f32.partialorder %v1440, 0.0
  %vm2397 = vcmp.gt.f32.partialorder %v1443, 0.0
  %vm2398 = vcmp.gt.f32.partialorder %v1448, 0.0
  %vm2399 = vcmp.gt.f32.partialorder %v1451, 0.0
  %vm2400 = vcmp.gt.f32.partialorder %v1456, 0.0
  %vm2401 = vcmp.gt.f32.partialorder %v1459, 0.0
  %vm2402 = vcmp.gt.f32.partialorder %v1464, 0.0
  %vm2403 = vcmp.gt.f32.partialorder %v1467, 0.0
  %vm2404 = vcmp.gt.f32.partialorder %v1472, 0.0
  %vm2405 = vcmp.gt.f32.partialorder %v1475, 0.0
  %vm2406 = vcmp.gt.f32.partialorder %v1480, 0.0
  %vm2407 = vcmp.gt.f32.partialorder %v1483, 0.0
  %vm2408 = vcmp.gt.f32.partialorder %v1488, 0.0
  %vm2409 = vcmp.gt.f32.partialorder %v1491, 0.0
  %vm2410 = vcmp.gt.f32.partialorder %v1496, 0.0
  %vm2411 = vcmp.gt.f32.partialorder %v1499, 0.0
  %vm2412 = vcmp.gt.f32.partialorder %v1504, 0.0
  %vm2413 = vcmp.gt.f32.partialorder %v1507, 0.0
  %vm2414 = vcmp.gt.f32.partialorder %v1512, 0.0
  %vm2415 = vcmp.gt.f32.partialorder %v1515, 0.0
  %vm2416 = vcmp.gt.f32.partialorder %v1520, 0.0
  %vm2417 = vcmp.gt.f32.partialorder %v1523, 0.0
  %vm2418 = vcmp.gt.f32.partialorder %v1528, 0.0
  %vm2419 = vcmp.gt.f32.partialorder %v1531, 0.0
  %vm2420 = vcmp.gt.f32.partialorder %v1536, 0.0
  %vm2421 = vcmp.gt.f32.partialorder %v1539, 0.0
  %vm2422 = vcmp.gt.f32.partialorder %v1544, 0.0
  %vm2423 = vcmp.gt.f32.partialorder %v1547, 0.0
  %vm2424 = vcmp.gt.f32.partialorder %v1552, 0.0
  %vm2425 = vcmp.gt.f32.partialorder %v1555, 0.0
  %vm2426 = vcmp.gt.f32.partialorder %v1560, 0.0
  %vm2427 = vcmp.gt.f32.partialorder %v1563, 0.0
  %vm2428 = vcmp.gt.f32.partialorder %v1568, 0.0
  %vm2429 = vcmp.gt.f32.partialorder %v1571, 0.0
  %vm2430 = vcmp.gt.f32.partialorder %v1576, 0.0
  %vm2431 = vcmp.gt.f32.partialorder %v1579, 0.0
  %vm2432 = vcmp.gt.f32.partialorder %v1584, 0.0
  %vm2433 = vcmp.gt.f32.partialorder %v1587, 0.0
  %vm2434 = vcmp.gt.f32.partialorder %v1592, 0.0
  %vm2435 = vcmp.gt.f32.partialorder %v1595, 0.0
  %vm2436 = vcmp.gt.f32.partialorder %v1600, 0.0
  %vm2437 = vcmp.gt.f32.partialorder %v1603, 0.0
  %vm2438 = vcmp.gt.f32.partialorder %v1608, 0.0
  %vm2439 = vcmp.gt.f32.partialorder %v1611, 0.0
  %vm2440 = vcmp.gt.f32.partialorder %v1616, 0.0
  %vm2441 = vcmp.gt.f32.partialorder %v1619, 0.0
  %vm2442 = vcmp.gt.f32.partialorder %v1624, 0.0
  %vm2443 = vcmp.gt.f32.partialorder %v1627, 0.0
  %vm2444 = vcmp.gt.f32.partialorder %v1632, 0.0
  %vm2445 = vcmp.gt.f32.partialorder %v1635, 0.0
  %vm2446 = vcmp.gt.f32.partialorder %v1640, 0.0
  %vm2447 = vcmp.gt.f32.partialorder %v1643, 0.0
  %vm2448 = vcmp.gt.f32.partialorder %v1648, 0.0
  %vm2449 = vcmp.gt.f32.partialorder %v1651, 0.0
  %vm2450 = vcmp.gt.f32.partialorder %v1656, 0.0
  %vm2451 = vcmp.gt.f32.partialorder %v1659, 0.0
  %vm2452 = vcmp.gt.f32.partialorder %v1664, 0.0
  %vm2453 = vcmp.gt.f32.partialorder %v1667, 0.0
  %vm2454 = vcmp.gt.f32.partialorder %v1672, 0.0
  %vm2455 = vcmp.gt.f32.partialorder %v1675, 0.0
  %vm2456 = vcmp.gt.f32.partialorder %v1680, 0.0
  %vm2457 = vcmp.gt.f32.partialorder %v1683, 0.0
  %vm2458 = vcmp.gt.f32.partialorder %v1688, 0.0
  %vm2459 = vcmp.gt.f32.partialorder %v1691, 0.0
  %vm2460 = vcmp.gt.f32.partialorder %v1696, 0.0
  %vm2461 = vcmp.gt.f32.partialorder %v1699, 0.0
  %vm2462 = vcmp.gt.f32.partialorder %v1704, 0.0
  %vm2463 = vcmp.gt.f32.partialorder %v1707, 0.0
  %vm2464 = vcmp.gt.f32.partialorder %v1712, 0.0
  %vm2465 = vcmp.gt.f32.partialorder %v1715, 0.0
  %vm2466 = vcmp.gt.f32.partialorder %v1720, 0.0
  %vm2467 = vcmp.gt.f32.partialorder %v1723, 0.0
  %vm2468 = vcmp.gt.f32.partialorder %v1728, 0.0
  %vm2469 = vcmp.gt.f32.partialorder %v1731, 0.0
  %vm2470 = vcmp.gt.f32.partialorder %v1736, 0.0
  %vm2471 = vcmp.gt.f32.partialorder %v1739, 0.0
  %vm2472 = vcmp.gt.f32.partialorder %v1744, 0.0
  %vm2473 = vcmp.gt.f32.partialorder %v1747, 0.0
  %vm2474 = vcmp.gt.f32.partialorder %v1752, 0.0
  %vm2475 = vcmp.gt.f32.partialorder %v1755, 0.0
  %vm2476 = vcmp.gt.f32.partialorder %v1760, 0.0
  %vm2477 = vcmp.gt.f32.partialorder %v1763, 0.0
  %vm2478 = vcmp.gt.f32.partialorder %v1768, 0.0
  %vm2479 = vcmp.gt.f32.partialorder %v1771, 0.0
  %vm2480 = vcmp.gt.f32.partialorder %v1776, 0.0
  %vm2481 = vcmp.gt.f32.partialorder %v1779, 0.0
  %vm2482 = vcmp.gt.f32.partialorder %v1784, 0.0
  %vm2483 = vcmp.gt.f32.partialorder %v1787, 0.0
  %vm2484 = vcmp.gt.f32.partialorder %v1792, 0.0
  %vm2485 = vcmp.gt.f32.partialorder %v1795, 0.0
  %vm2486 = vcmp.gt.f32.partialorder %v1800, 0.0
  %vm2487 = vcmp.gt.f32.partialorder %v1803, 0.0
  %vm2488 = vcmp.gt.f32.partialorder %v1808, 0.0
  %vm2489 = vcmp.gt.f32.partialorder %v1811, 0.0
  %vm2490 = vcmp.gt.f32.partialorder %v1816, 0.0
  %vm2491 = vcmp.gt.f32.partialorder %v1819, 0.0
  %vm2492 = vcmp.gt.f32.partialorder %v1824, 0.0
  %vm2493 = vcmp.gt.f32.partialorder %v1827, 0.0
  %vm2494 = vcmp.gt.f32.partialorder %v1832, 0.0
  %vm2495 = vcmp.gt.f32.partialorder %v1835, 0.0
  %vm2496 = vcmp.gt.f32.partialorder %v1840, 0.0
  %vm2497 = vcmp.gt.f32.partialorder %v1843, 0.0
  %vm2498 = vcmp.gt.f32.partialorder %v1848, 0.0
  %vm2499 = vcmp.gt.f32.partialorder %v1851, 0.0
  %vm2500 = vcmp.gt.f32.partialorder %v1856, 0.0
  %vm2501 = vcmp.gt.f32.partialorder %v1859, 0.0
  %vm2502 = vcmp.gt.f32.partialorder %v1864, 0.0
  %vm2503 = vcmp.gt.f32.partialorder %v1867, 0.0
  %vm2504 = vcmp.gt.f32.partialorder %v1872, 0.0
  %vm2505 = vcmp.gt.f32.partialorder %v1875, 0.0
  %vm2506 = vcmp.gt.f32.partialorder %v1880, 0.0
  %vm2507 = vcmp.gt.f32.partialorder %v1883, 0.0
  %vm2508 = vcmp.gt.f32.partialorder %v1888, 0.0
  %vm2509 = vcmp.gt.f32.partialorder %v1891, 0.0
  %vm2510 = vcmp.gt.f32.partialorder %v1896, 0.0
  %vm2511 = vcmp.gt.f32.partialorder %v1899, 0.0
  %vm2512 = vcmp.gt.f32.partialorder %v1904, 0.0
  %vm2513 = vcmp.gt.f32.partialorder %v1907, 0.0
  %vm2514 = vcmp.gt.f32.partialorder %v1912, 0.0
  %vm2515 = vcmp.gt.f32.partialorder %v1915, 0.0
  %vm2516 = vcmp.gt.f32.partialorder %v1920, 0.0
  %vm2517 = vcmp.gt.f32.partialorder %v1923, 0.0
  %vm2518 = vcmp.gt.f32.partialorder %v1928, 0.0
  %vm2519 = vcmp.gt.f32.partialorder %v1931, 0.0
  %vm2520 = vcmp.gt.f32.partialorder %v1936, 0.0
  %vm2521 = vcmp.gt.f32.partialorder %v1939, 0.0
  %vm2522 = vcmp.gt.f32.partialorder %v1944, 0.0
  %vm2523 = vcmp.gt.f32.partialorder %v1947, 0.0
  %vm2524 = vcmp.gt.f32.partialorder %v1952, 0.0
  %vm2525 = vcmp.gt.f32.partialorder %v1955, 0.0
  %vm2526 = vcmp.gt.f32.partialorder %v1960, 0.0
  %vm2527 = vcmp.gt.f32.partialorder %v1963, 0.0
  %vm2528 = vcmp.gt.f32.partialorder %v1968, 0.0
  %vm2529 = vcmp.gt.f32.partialorder %v1971, 0.0
  %vm2530 = vcmp.gt.f32.partialorder %v1976, 0.0
  %vm2531 = vcmp.gt.f32.partialorder %v1979, 0.0
  %vm2532 = vcmp.gt.f32.partialorder %v1984, 0.0
  %vm2533 = vcmp.gt.f32.partialorder %v1987, 0.0
  %vm2534 = vcmp.gt.f32.partialorder %v1992, 0.0
  %vm2535 = vcmp.gt.f32.partialorder %v1995, 0.0
  %vm2536 = vcmp.gt.f32.partialorder %v2000, 0.0
  %vm2537 = vcmp.gt.f32.partialorder %v2003, 0.0
  %vm2538 = vcmp.gt.f32.partialorder %v2008, 0.0
  %vm2539 = vcmp.gt.f32.partialorder %v2011, 0.0
  %vm2540 = vcmp.gt.f32.partialorder %v2016, 0.0
  %vm2541 = vcmp.gt.f32.partialorder %v2019, 0.0
  %vm2542 = vcmp.gt.f32.partialorder %v2024, 0.0
  %vm2543 = vcmp.gt.f32.partialorder %v2027, 0.0
  %vm2544 = vcmp.gt.f32.partialorder %v2032, 0.0
  %vm2545 = vcmp.gt.f32.partialorder %v2035, 0.0
  %vm2546 = vcmp.gt.f32.partialorder %v2040, 0.0
  %vm2547 = vcmp.gt.f32.partialorder %v2043, 0.0
  %vm2548 = vcmp.gt.f32.partialorder %v2048, 0.0
  %vm2549 = vcmp.gt.f32.partialorder %v2051, 0.0
  %vm2550 = vcmp.gt.f32.partialorder %v2056, 0.0
  %vm2551 = vcmp.gt.f32.partialorder %v2059, 0.0
  %vm2552 = vcmp.gt.f32.partialorder %v2064, 0.0
  %vm2553 = vcmp.gt.f32.partialorder %v2067, 0.0
  %vm2554 = vcmp.gt.f32.partialorder %v2072, 0.0
  %vm2555 = vcmp.gt.f32.partialorder %v2075, 0.0
  %vm2556 = vcmp.gt.f32.partialorder %v2080, 0.0
  %vm2557 = vcmp.gt.f32.partialorder %v2083, 0.0
  %vm2558 = vcmp.gt.f32.partialorder %v2088, 0.0
  %vm2559 = vcmp.gt.f32.partialorder %v2091, 0.0
  %vm2560 = vcmp.gt.f32.partialorder %v2096, 0.0
  %vm2561 = vcmp.gt.f32.partialorder %v2099, 0.0
  %vm2562 = vcmp.gt.f32.partialorder %v2104, 0.0
  %vm2563 = vcmp.gt.f32.partialorder %v2107, 0.0
  %vm2564 = vcmp.gt.f32.partialorder %v2112, 0.0
  %vm2565 = vcmp.gt.f32.partialorder %v2115, 0.0
  %vm2566 = vcmp.gt.f32.partialorder %v2120, 0.0
  %vm2567 = vcmp.gt.f32.partialorder %v2123, 0.0
  %vm2568 = vcmp.gt.f32.partialorder %v2128, 0.0
  %vm2569 = vcmp.gt.f32.partialorder %v2131, 0.0
  %vm2570 = vcmp.gt.f32.partialorder %v2136, 0.0
  %vm2571 = vcmp.gt.f32.partialorder %v2139, 0.0
  %vm2572 = vcmp.gt.f32.partialorder %v2144, 0.0
  %vm2573 = vcmp.gt.f32.partialorder %v2147, 0.0
  %vm2574 = vcmp.gt.f32.partialorder %v2152, 0.0
  %vm2575 = vcmp.gt.f32.partialorder %v2155, 0.0
  %vm2576 = vcmp.gt.f32.partialorder %v2160, 0.0
  %vm2577 = vcmp.gt.f32.partialorder %v2163, 0.0
  %vm2578 = vcmp.gt.f32.partialorder %v2168, 0.0
  %vm2579 = vcmp.gt.f32.partialorder %v2171, 0.0
  %vm2580 = vcmp.gt.f32.partialorder %v2176, 0.0
  %vm2581 = vcmp.gt.f32.partialorder %v2179, 0.0
  %vm2582 = vcmp.gt.f32.partialorder %v2184, 0.0
  %vm2583 = vcmp.gt.f32.partialorder %v2187, 0.0
  %vm2584 = vcmp.gt.f32.partialorder %v2192, 0.0
  %vm2585 = vcmp.gt.f32.partialorder %v2195, 0.0
  %vm2586 = vcmp.gt.f32.partialorder %v2200, 0.0
  %vm2587 = vcmp.gt.f32.partialorder %v2203, 0.0
  %vm2588 = vcmp.gt.f32.partialorder %v2208, 0.0
  %vm2589 = vcmp.gt.f32.partialorder %v2211, 0.0
  %vm2590 = vcmp.gt.f32.partialorder %v2216, 0.0
  %vm2591 = vcmp.gt.f32.partialorder %v2219, 0.0
  %vm2592 = vcmp.gt.f32.partialorder %v2224, 0.0
  %vm2593 = vcmp.gt.f32.partialorder %v2227, 0.0
  %vm2594 = vcmp.gt.f32.partialorder %v2232, 0.0
  %vm2595 = vcmp.gt.f32.partialorder %v2235, 0.0
  %vm2596 = vcmp.gt.f32.partialorder %v2240, 0.0
  %vm2597 = vcmp.gt.f32.partialorder %v2243, 0.0
  %vm2598 = vcmp.gt.f32.partialorder %v2248, 0.0
  %vm2599 = vcmp.gt.f32.partialorder %v2251, 0.0
  %vm2600 = vcmp.gt.f32.partialorder %v2256, 0.0
  %vm2601 = vcmp.gt.f32.partialorder %v2259, 0.0
  %vm2602 = vcmp.gt.f32.partialorder %v2264, 0.0
  %vm2603 = vcmp.gt.f32.partialorder %v2267, 0.0
  %vm2604 = vcmp.gt.f32.partialorder %v2272, 0.0
  %vm2605 = vcmp.gt.f32.partialorder %v2275, 0.0
  %vm2606 = vcmp.gt.f32.partialorder %v2280, 0.0
  %vm2607 = vcmp.gt.f32.partialorder %v2283, 0.0
  %vm2608 = vcmp.gt.f32.partialorder %v2288, 0.0
  %vm2609 = vcmp.gt.f32.partialorder %v2291, 0.0
  %vm2610 = vcmp.gt.f32.partialorder %v2296, 0.0
  %vm2611 = vcmp.gt.f32.partialorder %v2299, 0.0
  %vm2612 = vcmp.gt.f32.partialorder %v2304, 0.0
  %vm2613 = vcmp.gt.f32.partialorder %v2307, 0.0
  %vm2614 = vcmp.gt.f32.partialorder %v2312, 0.0
  %vm2615 = vcmp.gt.f32.partialorder %v2315, 0.0
  %vm2616 = vcmp.gt.f32.partialorder %v2320, 0.0
  %vm2617 = vcmp.gt.f32.partialorder %v2323, 0.0
  %vm2618 = vcmp.gt.f32.partialorder %v2328, 0.0
  %vm2619 = vcmp.gt.f32.partialorder %v2331, 0.0
  %vm2620 = vcmp.gt.f32.partialorder %v2336, 0.0
  %vm2621 = vcmp.gt.f32.partialorder %v2339, 0.0
  %vm2622 = vcmp.gt.f32.partialorder %v2344, 0.0
  %vm2623 = vcmp.gt.f32.partialorder %v2347, 0.0
  %vm2624 = vcmp.gt.f32.partialorder %v2352, 0.0
  %vm2625 = vcmp.gt.f32.partialorder %v2355, 0.0
  %vm2626 = vcmp.gt.f32.partialorder %v2360, 0.0
  %vm2627 = vcmp.gt.f32.partialorder %v2363, 0.0
  %vm2628 = vcmp.gt.f32.partialorder %v2368, 0.0
  %vm2629 = vcmp.gt.f32.partialorder %v2371, 0.0
  %v2630 = vmul.f32 %v1352, 0.2
  %v2631 = vmul.f32 %v1355, 0.2
  %v2632 = vmul.f32 %v1360, 0.2
  %v2633 = vmul.f32 %v1363, 0.2
  %v2634 = vmul.f32 %v1368, 0.2
  %v2635 = vmul.f32 %v1371, 0.2
  %v2636 = vmul.f32 %v1376, 0.2
  %v2637 = vmul.f32 %v1379, 0.2
  %v2638 = vmul.f32 %v1384, 0.2
  %v2639 = vmul.f32 %v1387, 0.2
  %v2640 = vmul.f32 %v1392, 0.2
  %v2641 = vmul.f32 %v1395, 0.2
  %v2642 = vmul.f32 %v1400, 0.2
  %v2643 = vmul.f32 %v1403, 0.2
  %v2644 = vmul.f32 %v1408, 0.2
  %v2645 = vmul.f32 %v1411, 0.2
  %v2646 = vmul.f32 %v1416, 0.2
  %v2647 = vmul.f32 %v1419, 0.2
  %v2648 = vmul.f32 %v1424, 0.2
  %v2649 = vmul.f32 %v1427, 0.2
  %v2650 = vmul.f32 %v1432, 0.2
  %v2651 = vmul.f32 %v1435, 0.2
  %v2652 = vmul.f32 %v1440, 0.2
  %v2653 = vmul.f32 %v1443, 0.2
  %v2654 = vmul.f32 %v1448, 0.2
  %v2655 = vmul.f32 %v1451, 0.2
  %v2656 = vmul.f32 %v1456, 0.2
  %v2657 = vmul.f32 %v1459, 0.2
  %v2658 = vmul.f32 %v1464, 0.2
  %v2659 = vmul.f32 %v1467, 0.2
  %v2660 = vmul.f32 %v1472, 0.2
  %v2661 = vmul.f32 %v1475, 0.2
  %v2662 = vmul.f32 %v1480, 0.2
  %v2663 = vmul.f32 %v1483, 0.2
  %v2664 = vmul.f32 %v1488, 0.2
  %v2665 = vmul.f32 %v1491, 0.2
  %v2666 = vmul.f32 %v1496, 0.2
  %v2667 = vmul.f32 %v1499, 0.2
  %v2668 = vmul.f32 %v1504, 0.2
  %v2669 = vmul.f32 %v1507, 0.2
  %v2670 = vmul.f32 %v1512, 0.2
  %v2671 = vmul.f32 %v1515, 0.2
  %v2672 = vmul.f32 %v1520, 0.2
  %v2673 = vmul.f32 %v1523, 0.2
  %v2674 = vmul.f32 %v1528, 0.2
  %v2675 = vmul.f32 %v1531, 0.2
  %v2676 = vmul.f32 %v1536, 0.2
  %v2677 = vmul.f32 %v1539, 0.2
  %v2678 = vmul.f32 %v1544, 0.2
  %v2679 = vmul.f32 %v1547, 0.2
  %v2680 = vmul.f32 %v1552, 0.2
  %v2681 = vmul.f32 %v1555, 0.2
  %v2682 = vmul.f32 %v1560, 0.2
  %v2683 = vmul.f32 %v1563, 0.2
  %v2684 = vmul.f32 %v1568, 0.2
  %v2685 = vmul.f32 %v1571, 0.2
  %v2686 = vmul.f32 %v1576, 0.2
  %v2687 = vmul.f32 %v1579, 0.2
  %v2688 = vmul.f32 %v1584, 0.2
  %v2689 = vmul.f32 %v1587, 0.2
  %v2690 = vmul.f32 %v1592, 0.2
  %v2691 = vmul.f32 %v1595, 0.2
  %v2692 = vmul.f32 %v1600, 0.2
  %v2693 = vmul.f32 %v1603, 0.2
  %v2694 = vmul.f32 %v1608, 0.2
  %v2695 = vmul.f32 %v1611, 0.2
  %v2696 = vmul.f32 %v1616, 0.2
  %v2697 = vmul.f32 %v1619, 0.2
  %v2698 = vmul.f32 %v1624, 0.2
  %v2699 = vmul.f32 %v1627, 0.2
  %v2700 = vmul.f32 %v1632, 0.2
  %v2701 = vmul.f32 %v1635, 0.2
  %v2702 = vmul.f32 %v1640, 0.2
  %v2703 = vmul.f32 %v1643, 0.2
  %v2704 = vmul.f32 %v1648, 0.2
  %v2705 = vmul.f32 %v1651, 0.2
  %v2706 = vmul.f32 %v1656, 0.2
  %v2707 = vmul.f32 %v1659, 0.2
  %v2708 = vmul.f32 %v1664, 0.2
  %v2709 = vmul.f32 %v1667, 0.2
  %v2710 = vmul.f32 %v1672, 0.2
  %v2711 = vmul.f32 %v1675, 0.2
  %v2712 = vmul.f32 %v1680, 0.2
  %v2713 = vmul.f32 %v1683, 0.2
  %v2714 = vmul.f32 %v1688, 0.2
  %v2715 = vmul.f32 %v1691, 0.2
  %v2716 = vmul.f32 %v1696, 0.2
  %v2717 = vmul.f32 %v1699, 0.2
  %v2718 = vmul.f32 %v1704, 0.2
  %v2719 = vmul.f32 %v1707, 0.2
  %v2720 = vmul.f32 %v1712, 0.2
  %v2721 = vmul.f32 %v1715, 0.2
  %v2722 = vmul.f32 %v1720, 0.2
  %v2723 = vmul.f32 %v1723, 0.2
  %v2724 = vmul.f32 %v1728, 0.2
  %v2725 = vmul.f32 %v1731, 0.2
  %v2726 = vmul.f32 %v1736, 0.2
  %v2727 = vmul.f32 %v1739, 0.2
  %v2728 = vmul.f32 %v1744, 0.2
  %v2729 = vmul.f32 %v1747, 0.2
  %v2730 = vmul.f32 %v1752, 0.2
  %v2731 = vmul.f32 %v1755, 0.2
  %v2732 = vmul.f32 %v1760, 0.2
  %v2733 = vmul.f32 %v1763, 0.2
  %v2734 = vmul.f32 %v1768, 0.2
  %v2735 = vmul.f32 %v1771, 0.2
  %v2736 = vmul.f32 %v1776, 0.2
  %v2737 = vmul.f32 %v1779, 0.2
  %v2738 = vmul.f32 %v1784, 0.2
  %v2739 = vmul.f32 %v1787, 0.2
  %v2740 = vmul.f32 %v1792, 0.2
  %v2741 = vmul.f32 %v1795, 0.2
  %v2742 = vmul.f32 %v1800, 0.2
  %v2743 = vmul.f32 %v1803, 0.2
  %v2744 = vmul.f32 %v1808, 0.2
  %v2745 = vmul.f32 %v1811, 0.2
  %v2746 = vmul.f32 %v1816, 0.2
  %v2747 = vmul.f32 %v1819, 0.2
  %v2748 = vmul.f32 %v1824, 0.2
  %v2749 = vmul.f32 %v1827, 0.2
  %v2750 = vmul.f32 %v1832, 0.2
  %v2751 = vmul.f32 %v1835, 0.2
  %v2752 = vmul.f32 %v1840, 0.2
  %v2753 = vmul.f32 %v1843, 0.2
  %v2754 = vmul.f32 %v1848, 0.2
  %v2755 = vmul.f32 %v1851, 0.2
  %v2756 = vmul.f32 %v1856, 0.2
  %v2757 = vmul.f32 %v1859, 0.2
  %v2758 = vmul.f32 %v1864, 0.2
  %v2759 = vmul.f32 %v1867, 0.2
  %v2760 = vmul.f32 %v1872, 0.2
  %v2761 = vmul.f32 %v1875, 0.2
  %v2762 = vmul.f32 %v1880, 0.2
  %v2763 = vmul.f32 %v1883, 0.2
  %v2764 = vmul.f32 %v1888, 0.2
  %v2765 = vmul.f32 %v1891, 0.2
  %v2766 = vmul.f32 %v1896, 0.2
  %v2767 = vmul.f32 %v1899, 0.2
  %v2768 = vmul.f32 %v1904, 0.2
  %v2769 = vmul.f32 %v1907, 0.2
  %v2770 = vmul.f32 %v1912, 0.2
  %v2771 = vmul.f32 %v1915, 0.2
  %v2772 = vmul.f32 %v1920, 0.2
  %v2773 = vmul.f32 %v1923, 0.2
  %v2774 = vmul.f32 %v1928, 0.2
  %v2775 = vmul.f32 %v1931, 0.2
  %v2776 = vmul.f32 %v1936, 0.2
  %v2777 = vmul.f32 %v1939, 0.2
  %v2778 = vmul.f32 %v1944, 0.2
  %v2779 = vmul.f32 %v1947, 0.2
  %v2780 = vmul.f32 %v1952, 0.2
  %v2781 = vmul.f32 %v1955, 0.2
  %v2782 = vmul.f32 %v1960, 0.2
  %v2783 = vmul.f32 %v1963, 0.2
  %v2784 = vmul.f32 %v1968, 0.2
  %v2785 = vmul.f32 %v1971, 0.2
  %v2786 = vmul.f32 %v1976, 0.2
  %v2787 = vmul.f32 %v1979, 0.2
  %v2788 = vmul.f32 %v1984, 0.2
  %v2789 = vmul.f32 %v1987, 0.2
  %v2790 = vmul.f32 %v1992, 0.2
  %v2791 = vmul.f32 %v1995, 0.2
  %v2792 = vmul.f32 %v2000, 0.2
  %v2793 = vmul.f32 %v2003, 0.2
  %v2794 = vmul.f32 %v2008, 0.2
  %v2795 = vmul.f32 %v2011, 0.2
  %v2796 = vmul.f32 %v2016, 0.2
  %v2797 = vmul.f32 %v2019, 0.2
  %v2798 = vmul.f32 %v2024, 0.2
  %v2799 = vmul.f32 %v2027, 0.2
  %v2800 = vmul.f32 %v2032, 0.2
  %v2801 = vmul.f32 %v2035, 0.2
  %v2802 = vmul.f32 %v2040, 0.2
  %v2803 = vmul.f32 %v2043, 0.2
  %v2804 = vmul.f32 %v2048, 0.2
  %v2805 = vmul.f32 %v2051, 0.2
  %v2806 = vmul.f32 %v2056, 0.2
  %v2807 = vmul.f32 %v2059, 0.2
  %v2808 = vmul.f32 %v2064, 0.2
  %v2809 = vmul.f32 %v2067, 0.2
  %v2810 = vmul.f32 %v2072, 0.2
  %v2811 = vmul.f32 %v2075, 0.2
  %v2812 = vmul.f32 %v2080, 0.2
  %v2813 = vmul.f32 %v2083, 0.2
  %v2814 = vmul.f32 %v2088, 0.2
  %v2815 = vmul.f32 %v2091, 0.2
  %v2816 = vmul.f32 %v2096, 0.2
  %v2817 = vmul.f32 %v2099, 0.2
  %v2818 = vmul.f32 %v2104, 0.2
  %v2819 = vmul.f32 %v2107, 0.2
  %v2820 = vmul.f32 %v2112, 0.2
  %v2821 = vmul.f32 %v2115, 0.2
  %v2822 = vmul.f32 %v2120, 0.2
  %v2823 = vmul.f32 %v2123, 0.2
  %v2824 = vmul.f32 %v2128, 0.2
  %v2825 = vmul.f32 %v2131, 0.2
  %v2826 = vmul.f32 %v2136, 0.2
  %v2827 = vmul.f32 %v2139, 0.2
  %v2828 = vmul.f32 %v2144, 0.2
  %v2829 = vmul.f32 %v2147, 0.2
  %v2830 = vmul.f32 %v2152, 0.2
  %v2831 = vmul.f32 %v2155, 0.2
  %v2832 = vmul.f32 %v2160, 0.2
  %v2833 = vmul.f32 %v2163, 0.2
  %v2834 = vmul.f32 %v2168, 0.2
  %v2835 = vmul.f32 %v2171, 0.2
  %v2836 = vmul.f32 %v2176, 0.2
  %v2837 = vmul.f32 %v2179, 0.2
  %v2838 = vmul.f32 %v2184, 0.2
  %v2839 = vmul.f32 %v2187, 0.2
  %v2840 = vmul.f32 %v2192, 0.2
  %v2841 = vmul.f32 %v2195, 0.2
  %v2842 = vmul.f32 %v2200, 0.2
  %v2843 = vmul.f32 %v2203, 0.2
  %v2844 = vmul.f32 %v2208, 0.2
  %v2845 = vmul.f32 %v2211, 0.2
  %v2846 = vmul.f32 %v2216, 0.2
  %v2847 = vmul.f32 %v2219, 0.2
  %v2848 = vmul.f32 %v2224, 0.2
  %v2849 = vmul.f32 %v2227, 0.2
  %v2850 = vmul.f32 %v2232, 0.2
  %v2851 = vmul.f32 %v2235, 0.2
  %v2852 = vmul.f32 %v2240, 0.2
  %v2853 = vmul.f32 %v2243, 0.2
  %v2854 = vmul.f32 %v2248, 0.2
  %v2855 = vmul.f32 %v2251, 0.2
  %v2856 = vmul.f32 %v2256, 0.2
  %v2857 = vmul.f32 %v2259, 0.2
  %v2858 = vmul.f32 %v2264, 0.2
  %v2859 = vmul.f32 %v2267, 0.2
  %v2860 = vmul.f32 %v2272, 0.2
  %v2861 = vmul.f32 %v2275, 0.2
  %v2862 = vmul.f32 %v2280, 0.2
  %v2863 = vmul.f32 %v2283, 0.2
  %v2864 = vmul.f32 %v2288, 0.2
  %v2865 = vmul.f32 %v2291, 0.2
  %v2866 = vmul.f32 %v2296, 0.2
  %v2867 = vmul.f32 %v2299, 0.2
  %v2868 = vmul.f32 %v2304, 0.2
  %v2869 = vmul.f32 %v2307, 0.2
  %v2870 = vmul.f32 %v2312, 0.2
  %v2871 = vmul.f32 %v2315, 0.2
  %v2872 = vmul.f32 %v2320, 0.2
  %v2873 = vmul.f32 %v2323, 0.2
  %v2874 = vmul.f32 %v2328, 0.2
  %v2875 = vmul.f32 %v2331, 0.2
  %v2876 = vmul.f32 %v2336, 0.2
  %v2877 = vmul.f32 %v2339, 0.2
  %v2878 = vmul.f32 %v2344, 0.2
  %v2879 = vmul.f32 %v2347, 0.2
  %v2880 = vmul.f32 %v2352, 0.2
  %v2881 = vmul.f32 %v2355, 0.2
  %v2882 = vmul.f32 %v2360, 0.2
  %v2883 = vmul.f32 %v2363, 0.2
  %v2884 = vmul.f32 %v2368, 0.2
  %v2885 = vmul.f32 %v2371, 0.2
  %v2886 = vsel %vm2374, %v1352, %v2630
  %v2887 = vsel %vm2375, %v1355, %v2631
  %v2888 = vsel %vm2376, %v1360, %v2632
  %v2889 = vsel %vm2377, %v1363, %v2633
  %v2890 = vsel %vm2378, %v1368, %v2634
  %v2891 = vsel %vm2379, %v1371, %v2635
  %v2892 = vsel %vm2380, %v1376, %v2636
  %v2893 = vsel %vm2381, %v1379, %v2637
  %v2894 = vsel %vm2382, %v1384, %v2638
  %v2895 = vsel %vm2383, %v1387, %v2639
  %v2896 = vsel %vm2384, %v1392, %v2640
  %v2897 = vsel %vm2385, %v1395, %v2641
  %v2898 = vsel %vm2386, %v1400, %v2642
  %v2899 = vsel %vm2387, %v1403, %v2643
  %v2900 = vsel %vm2388, %v1408, %v2644
  %v2901 = vsel %vm2389, %v1411, %v2645
  %v2902 = vsel %vm2390, %v1416, %v2646
  %v2903 = vsel %vm2391, %v1419, %v2647
  %v2904 = vsel %vm2392, %v1424, %v2648
  %v2905 = vsel %vm2393, %v1427, %v2649
  %v2906 = vsel %vm2394, %v1432, %v2650
  %v2907 = vsel %vm2395, %v1435, %v2651
  %v2908 = vsel %vm2396, %v1440, %v2652
  %v2909 = vsel %vm2397, %v1443, %v2653
  %v2910 = vsel %vm2398, %v1448, %v2654
  %v2911 = vsel %vm2399, %v1451, %v2655
  %v2912 = vsel %vm2400, %v1456, %v2656
  %v2913 = vsel %vm2401, %v1459, %v2657
  %v2914 = vsel %vm2402, %v1464, %v2658
  %v2915 = vsel %vm2403, %v1467, %v2659
  %v2916 = vsel %vm2404, %v1472, %v2660
  %v2917 = vsel %vm2405, %v1475, %v2661
  %v2918 = vsel %vm2406, %v1480, %v2662
  %v2919 = vsel %vm2407, %v1483, %v2663
  %v2920 = vsel %vm2408, %v1488, %v2664
  %v2921 = vsel %vm2409, %v1491, %v2665
  %v2922 = vsel %vm2410, %v1496, %v2666
  %v2923 = vsel %vm2411, %v1499, %v2667
  %v2924 = vsel %vm2412, %v1504, %v2668
  %v2925 = vsel %vm2413, %v1507, %v2669
  %v2926 = vsel %vm2414, %v1512, %v2670
  %v2927 = vsel %vm2415, %v1515, %v2671
  %v2928 = vsel %vm2416, %v1520, %v2672
  %v2929 = vsel %vm2417, %v1523, %v2673
  %v2930 = vsel %vm2418, %v1528, %v2674
  %v2931 = vsel %vm2419, %v1531, %v2675
  %v2932 = vsel %vm2420, %v1536, %v2676
  %v2933 = vsel %vm2421, %v1539, %v2677
  %v2934 = vsel %vm2422, %v1544, %v2678
  %v2935 = vsel %vm2423, %v1547, %v2679
  %v2936 = vsel %vm2424, %v1552, %v2680
  %v2937 = vsel %vm2425, %v1555, %v2681
  %v2938 = vsel %vm2426, %v1560, %v2682
  %v2939 = vsel %vm2427, %v1563, %v2683
  %v2940 = vsel %vm2428, %v1568, %v2684
  %v2941 = vsel %vm2429, %v1571, %v2685
  %v2942 = vsel %vm2430, %v1576, %v2686
  %v2943 = vsel %vm2431, %v1579, %v2687
  %v2944 = vsel %vm2432, %v1584, %v2688
  %v2945 = vsel %vm2433, %v1587, %v2689
  %v2946 = vsel %vm2434, %v1592, %v2690
  %v2947 = vsel %vm2435, %v1595, %v2691
  %v2948 = vsel %vm2436, %v1600, %v2692
  %v2949 = vsel %vm2437, %v1603, %v2693
  %v2950 = vsel %vm2438, %v1608, %v2694
  %v2951 = vsel %vm2439, %v1611, %v2695
  %v2952 = vsel %vm2440, %v1616, %v2696
  %v2953 = vsel %vm2441, %v1619, %v2697
  %v2954 = vsel %vm2442, %v1624, %v2698
  %v2955 = vsel %vm2443, %v1627, %v2699
  %v2956 = vsel %vm2444, %v1632, %v2700
  %v2957 = vsel %vm2445, %v1635, %v2701
  %v2958 = vsel %vm2446, %v1640, %v2702
  %v2959 = vsel %vm2447, %v1643, %v2703
  %v2960 = vsel %vm2448, %v1648, %v2704
  %v2961 = vsel %vm2449, %v1651, %v2705
  %v2962 = vsel %vm2450, %v1656, %v2706
  %v2963 = vsel %vm2451, %v1659, %v2707
  %v2964 = vsel %vm2452, %v1664, %v2708
  %v2965 = vsel %vm2453, %v1667, %v2709
  %v2966 = vsel %vm2454, %v1672, %v2710
  %v2967 = vsel %vm2455, %v1675, %v2711
  %v2968 = vsel %vm2456, %v1680, %v2712
  %v2969 = vsel %vm2457, %v1683, %v2713
  %v2970 = vsel %vm2458, %v1688, %v2714
  %v2971 = vsel %vm2459, %v1691, %v2715
  %v2972 = vsel %vm2460, %v1696, %v2716
  %v2973 = vsel %vm2461, %v1699, %v2717
  %v2974 = vsel %vm2462, %v1704, %v2718
  %v2975 = vsel %vm2463, %v1707, %v2719
  %v2976 = vsel %vm2464, %v1712, %v2720
  %v2977 = vsel %vm2465, %v1715, %v2721
  %v2978 = vsel %vm2466, %v1720, %v2722
  %v2979 = vsel %vm2467, %v1723, %v2723
  %v2980 = vsel %vm2468, %v1728, %v2724
  %v2981 = vsel %vm2469, %v1731, %v2725
  %v2982 = vsel %vm2470, %v1736, %v2726
  %v2983 = vsel %vm2471, %v1739, %v2727
  %v2984 = vsel %vm2472, %v1744, %v2728
  %v2985 = vsel %vm2473, %v1747, %v2729
  %v2986 = vsel %vm2474, %v1752, %v2730
  %v2987 = vsel %vm2475, %v1755, %v2731
  %v2988 = vsel %vm2476, %v1760, %v2732
  %v2989 = vsel %vm2477, %v1763, %v2733
  %v2990 = vsel %vm2478, %v1768, %v2734
  %v2991 = vsel %vm2479, %v1771, %v2735
  %v2992 = vsel %vm2480, %v1776, %v2736
  %v2993 = vsel %vm2481, %v1779, %v2737
  %v2994 = vsel %vm2482, %v1784, %v2738
  %v2995 = vsel %vm2483, %v1787, %v2739
  %v2996 = vsel %vm2484, %v1792, %v2740
  %v2997 = vsel %vm2485, %v1795, %v2741
  %v2998 = vsel %vm2486, %v1800, %v2742
  %v2999 = vsel %vm2487, %v1803, %v2743
  %v3000 = vsel %vm2488, %v1808, %v2744
  %v3001 = vsel %vm2489, %v1811, %v2745
  %v3002 = vsel %vm2490, %v1816, %v2746
  %v3003 = vsel %vm2491, %v1819, %v2747
  %v3004 = vsel %vm2492, %v1824, %v2748
  %v3005 = vsel %vm2493, %v1827, %v2749
  %v3006 = vsel %vm2494, %v1832, %v2750
  %v3007 = vsel %vm2495, %v1835, %v2751
  %v3008 = vsel %vm2496, %v1840, %v2752
  %v3009 = vsel %vm2497, %v1843, %v2753
  %v3010 = vsel %vm2498, %v1848, %v2754
  %v3011 = vsel %vm2499, %v1851, %v2755
  %v3012 = vsel %vm2500, %v1856, %v2756
  %v3013 = vsel %vm2501, %v1859, %v2757
  %v3014 = vsel %vm2502, %v1864, %v2758
  %v3015 = vsel %vm2503, %v1867, %v2759
  %v3016 = vsel %vm2504, %v1872, %v2760
  %v3017 = vsel %vm2505, %v1875, %v2761
  %v3018 = vsel %vm2506, %v1880, %v2762
  %v3019 = vsel %vm2507, %v1883, %v2763
  %v3020 = vsel %vm2508, %v1888, %v2764
  %v3021 = vsel %vm2509, %v1891, %v2765
  %v3022 = vsel %vm2510, %v1896, %v2766
  %v3023 = vsel %vm2511, %v1899, %v2767
  %v3024 = vsel %vm2512, %v1904, %v2768
  %v3025 = vsel %vm2513, %v1907, %v2769
  %v3026 = vsel %vm2514, %v1912, %v2770
  %v3027 = vsel %vm2515, %v1915, %v2771
  %v3028 = vsel %vm2516, %v1920, %v2772
  %v3029 = vsel %vm2517, %v1923, %v2773
  %v3030 = vsel %vm2518, %v1928, %v2774
  %v3031 = vsel %vm2519, %v1931, %v2775
  %v3032 = vsel %vm2520, %v1936, %v2776
  %v3033 = vsel %vm2521, %v1939, %v2777
  %v3034 = vsel %vm2522, %v1944, %v2778
  %v3035 = vsel %vm2523, %v1947, %v2779
  %v3036 = vsel %vm2524, %v1952, %v2780
  %v3037 = vsel %vm2525, %v1955, %v2781
  %v3038 = vsel %vm2526, %v1960, %v2782
  %v3039 = vsel %vm2527, %v1963, %v2783
  %v3040 = vsel %vm2528, %v1968, %v2784
  %v3041 = vsel %vm2529, %v1971, %v2785
  %v3042 = vsel %vm2530, %v1976, %v2786
  %v3043 = vsel %vm2531, %v1979, %v2787
  %v3044 = vsel %vm2532, %v1984, %v2788
  %v3045 = vsel %vm2533, %v1987, %v2789
  %v3046 = vsel %vm2534, %v1992, %v2790
  %v3047 = vsel %vm2535, %v1995, %v2791
  %v3048 = vsel %vm2536, %v2000, %v2792
  %v3049 = vsel %vm2537, %v2003, %v2793
  %v3050 = vsel %vm2538, %v2008, %v2794
  %v3051 = vsel %vm2539, %v2011, %v2795
  %v3052 = vsel %vm2540, %v2016, %v2796
  %v3053 = vsel %vm2541, %v2019, %v2797
  %v3054 = vsel %vm2542, %v2024, %v2798
  %v3055 = vsel %vm2543, %v2027, %v2799
  %v3056 = vsel %vm2544, %v2032, %v2800
  %v3057 = vsel %vm2545, %v2035, %v2801
  %v3058 = vsel %vm2546, %v2040, %v2802
  %v3059 = vsel %vm2547, %v2043, %v2803
  %v3060 = vsel %vm2548, %v2048, %v2804
  %v3061 = vsel %vm2549, %v2051, %v2805
  %v3062 = vsel %vm2550, %v2056, %v2806
  %v3063 = vsel %vm2551, %v2059, %v2807
  %v3064 = vsel %vm2552, %v2064, %v2808
  %v3065 = vsel %vm2553, %v2067, %v2809
  %v3066 = vsel %vm2554, %v2072, %v2810
  %v3067 = vsel %vm2555, %v2075, %v2811
  %v3068 = vsel %vm2556, %v2080, %v2812
  %v3069 = vsel %vm2557, %v2083, %v2813
  %v3070 = vsel %vm2558, %v2088, %v2814
  %v3071 = vsel %vm2559, %v2091, %v2815
  %v3072 = vsel %vm2560, %v2096, %v2816
  %v3073 = vsel %vm2561, %v2099, %v2817
  %v3074 = vsel %vm2562, %v2104, %v2818
  %v3075 = vsel %vm2563, %v2107, %v2819
  %v3076 = vsel %vm2564, %v2112, %v2820
  %v3077 = vsel %vm2565, %v2115, %v2821
  %v3078 = vsel %vm2566, %v2120, %v2822
  %v3079 = vsel %vm2567, %v2123, %v2823
  %v3080 = vsel %vm2568, %v2128, %v2824
  %v3081 = vsel %vm2569, %v2131, %v2825
  %v3082 = vsel %vm2570, %v2136, %v2826
  %v3083 = vsel %vm2571, %v2139, %v2827
  %v3084 = vsel %vm2572, %v2144, %v2828
  %v3085 = vsel %vm2573, %v2147, %v2829
  %v3086 = vsel %vm2574, %v2152, %v2830
  %v3087 = vsel %vm2575, %v2155, %v2831
  %v3088 = vsel %vm2576, %v2160, %v2832
  %v3089 = vsel %vm2577, %v2163, %v2833
  %v3090 = vsel %vm2578, %v2168, %v2834
  %v3091 = vsel %vm2579, %v2171, %v2835
  %v3092 = vsel %vm2580, %v2176, %v2836
  %v3093 = vsel %vm2581, %v2179, %v2837
  %v3094 = vsel %vm2582, %v2184, %v2838
  %v3095 = vsel %vm2583, %v2187, %v2839
  %v3096 = vsel %vm2584, %v2192, %v2840
  %v3097 = vsel %vm2585, %v2195, %v2841
  %v3098 = vsel %vm2586, %v2200, %v2842
  %v3099 = vsel %vm2587, %v2203, %v2843
  %v3100 = vsel %vm2588, %v2208, %v2844
  %v3101 = vsel %vm2589, %v2211, %v2845
  %v3102 = vsel %vm2590, %v2216, %v2846
  %v3103 = vsel %vm2591, %v2219, %v2847
  %v3104 = vsel %vm2592, %v2224, %v2848
  %v3105 = vsel %vm2593, %v2227, %v2849
  %v3106 = vsel %vm2594, %v2232, %v2850
  %v3107 = vsel %vm2595, %v2235, %v2851
  %v3108 = vsel %vm2596, %v2240, %v2852
  %v3109 = vsel %vm2597, %v2243, %v2853
  %v3110 = vsel %vm2598, %v2248, %v2854
  %v3111 = vsel %vm2599, %v2251, %v2855
  %v3112 = vsel %vm2600, %v2256, %v2856
  %v3113 = vsel %vm2601, %v2259, %v2857
  %v3114 = vsel %vm2602, %v2264, %v2858
  %v3115 = vsel %vm2603, %v2267, %v2859
  %v3116 = vsel %vm2604, %v2272, %v2860
  %v3117 = vsel %vm2605, %v2275, %v2861
  %v3118 = vsel %vm2606, %v2280, %v2862
  %v3119 = vsel %vm2607, %v2283, %v2863
  %v3120 = vsel %vm2608, %v2288, %v2864
  %v3121 = vsel %vm2609, %v2291, %v2865
  %v3122 = vsel %vm2610, %v2296, %v2866
  %v3123 = vsel %vm2611, %v2299, %v2867
  %v3124 = vsel %vm2612, %v2304, %v2868
  %v3125 = vsel %vm2613, %v2307, %v2869
  %v3126 = vsel %vm2614, %v2312, %v2870
  %v3127 = vsel %vm2615, %v2315, %v2871
  %v3128 = vsel %vm2616, %v2320, %v2872
  %v3129 = vsel %vm2617, %v2323, %v2873
  %v3130 = vsel %vm2618, %v2328, %v2874
  %v3131 = vsel %vm2619, %v2331, %v2875
  %v3132 = vsel %vm2620, %v2336, %v2876
  %v3133 = vsel %vm2621, %v2339, %v2877
  %v3134 = vsel %vm2622, %v2344, %v2878
  %v3135 = vsel %vm2623, %v2347, %v2879
  %v3136 = vsel %vm2624, %v2352, %v2880
  %v3137 = vsel %vm2625, %v2355, %v2881
  %v3138 = vsel %vm2626, %v2360, %v2882
  %v3139 = vsel %vm2627, %v2363, %v2883
  %v3140 = vsel %vm2628, %v2368, %v2884
  %v3141 = vsel %vm2629, %v2371, %v2885
  %v3142 = vpack.c.bf16 %v2887, %v2886
  %v3143 = vpack.c.bf16 %v2889, %v2888
  %v3144 = vpack.c.bf16 %v2891, %v2890
  %v3145 = vpack.c.bf16 %v2893, %v2892
  %v3146 = vpack.c.bf16 %v2895, %v2894
  %v3147 = vpack.c.bf16 %v2897, %v2896
  %v3148 = vpack.c.bf16 %v2899, %v2898
  %v3149 = vpack.c.bf16 %v2901, %v2900
  %v3150 = vpack.c.bf16 %v2903, %v2902
  %v3151 = vpack.c.bf16 %v2905, %v2904
  %v3152 = vpack.c.bf16 %v2907, %v2906
  %v3153 = vpack.c.bf16 %v2909, %v2908
  %v3154 = vpack.c.bf16 %v2911, %v2910
  %v3155 = vpack.c.bf16 %v2913, %v2912
  %v3156 = vpack.c.bf16 %v2915, %v2914
  %v3157 = vpack.c.bf16 %v2917, %v2916
  %v3158 = vpack.c.bf16 %v2919, %v2918
  %v3159 = vpack.c.bf16 %v2921, %v2920
  %v3160 = vpack.c.bf16 %v2923, %v2922
  %v3161 = vpack.c.bf16 %v2925, %v2924
  %v3162 = vpack.c.bf16 %v2927, %v2926
  %v3163 = vpack.c.bf16 %v2929, %v2928
  %v3164 = vpack.c.bf16 %v2931, %v2930
  %v3165 = vpack.c.bf16 %v2933, %v2932
  %v3166 = vpack.c.bf16 %v2935, %v2934
  %v3167 = vpack.c.bf16 %v2937, %v2936
  %v3168 = vpack.c.bf16 %v2939, %v2938
  %v3169 = vpack.c.bf16 %v2941, %v2940
  %v3170 = vpack.c.bf16 %v2943, %v2942
  %v3171 = vpack.c.bf16 %v2945, %v2944
  %v3172 = vpack.c.bf16 %v2947, %v2946
  %v3173 = vpack.c.bf16 %v2949, %v2948
  %v3174 = vpack.c.bf16 %v2951, %v2950
  %v3175 = vpack.c.bf16 %v2953, %v2952
  %v3176 = vpack.c.bf16 %v2955, %v2954
  %v3177 = vpack.c.bf16 %v2957, %v2956
  %v3178 = vpack.c.bf16 %v2959, %v2958
  %v3179 = vpack.c.bf16 %v2961, %v2960
  %v3180 = vpack.c.bf16 %v2963, %v2962
  %v3181 = vpack.c.bf16 %v2965, %v2964
  %v3182 = vpack.c.bf16 %v2967, %v2966
  %v3183 = vpack.c.bf16 %v2969, %v2968
  %v3184 = vpack.c.bf16 %v2971, %v2970
  %v3185 = vpack.c.bf16 %v2973, %v2972
  %v3186 = vpack.c.bf16 %v2975, %v2974
  %v3187 = vpack.c.bf16 %v2977, %v2976
  %v3188 = vpack.c.bf16 %v2979, %v2978
  %v3189 = vpack.c.bf16 %v2981, %v2980
  %v3190 = vpack.c.bf16 %v2983, %v2982
  %v3191 = vpack.c.bf16 %v2985, %v2984
  %v3192 = vpack.c.bf16 %v2987, %v2986
  %v3193 = vpack.c.bf16 %v2989, %v2988
  %v3194 = vpack.c.bf16 %v2991, %v2990
  %v3195 = vpack.c.bf16 %v2993, %v2992
  %v3196 = vpack.c.bf16 %v2995, %v2994
  %v3197 = vpack.c.bf16 %v2997, %v2996
  %v3198 = vpack.c.bf16 %v2999, %v2998
  %v3199 = vpack.c.bf16 %v3001, %v3000
  %v3200 = vpack.c.bf16 %v3003, %v3002
  %v3201 = vpack.c.bf16 %v3005, %v3004
  %v3202 = vpack.c.bf16 %v3007, %v3006
  %v3203 = vpack.c.bf16 %v3009, %v3008
  %v3204 = vpack.c.bf16 %v3011, %v3010
  %v3205 = vpack.c.bf16 %v3013, %v3012
  %v3206 = vpack.c.bf16 %v3015, %v3014
  %v3207 = vpack.c.bf16 %v3017, %v3016
  %v3208 = vpack.c.bf16 %v3019, %v3018
  %v3209 = vpack.c.bf16 %v3021, %v3020
  %v3210 = vpack.c.bf16 %v3023, %v3022
  %v3211 = vpack.c.bf16 %v3025, %v3024
  %v3212 = vpack.c.bf16 %v3027, %v3026
  %v3213 = vpack.c.bf16 %v3029, %v3028
  %v3214 = vpack.c.bf16 %v3031, %v3030
  %v3215 = vpack.c.bf16 %v3033, %v3032
  %v3216 = vpack.c.bf16 %v3035, %v3034
  %v3217 = vpack.c.bf16 %v3037, %v3036
  %v3218 = vpack.c.bf16 %v3039, %v3038
  %v3219 = vpack.c.bf16 %v3041, %v3040
  %v3220 = vpack.c.bf16 %v3043, %v3042
  %v3221 = vpack.c.bf16 %v3045, %v3044
  %v3222 = vpack.c.bf16 %v3047, %v3046
  %v3223 = vpack.c.bf16 %v3049, %v3048
  %v3224 = vpack.c.bf16 %v3051, %v3050
  %v3225 = vpack.c.bf16 %v3053, %v3052
  %v3226 = vpack.c.bf16 %v3055, %v3054
  %v3227 = vpack.c.bf16 %v3057, %v3056
  %v3228 = vpack.c.bf16 %v3059, %v3058
  %v3229 = vpack.c.bf16 %v3061, %v3060
  %v3230 = vpack.c.bf16 %v3063, %v3062
  %v3231 = vpack.c.bf16 %v3065, %v3064
  %v3232 = vpack.c.bf16 %v3067, %v3066
  %v3233 = vpack.c.bf16 %v3069, %v3068
  %v3234 = vpack.c.bf16 %v3071, %v3070
  %v3235 = vpack.c.bf16 %v3073, %v3072
  %v3236 = vpack.c.bf16 %v3075, %v3074
  %v3237 = vpack.c.bf16 %v3077, %v3076
  %v3238 = vpack.c.bf16 %v3079, %v3078
  %v3239 = vpack.c.bf16 %v3081, %v3080
  %v3240 = vpack.c.bf16 %v3083, %v3082
  %v3241 = vpack.c.bf16 %v3085, %v3084
  %v3242 = vpack.c.bf16 %v3087, %v3086
  %v3243 = vpack.c.bf16 %v3089, %v3088
  %v3244 = vpack.c.bf16 %v3091, %v3090
  %v3245 = vpack.c.bf16 %v3093, %v3092
  %v3246 = vpack.c.bf16 %v3095, %v3094
  %v3247 = vpack.c.bf16 %v3097, %v3096
  %v3248 = vpack.c.bf16 %v3099, %v3098
  %v3249 = vpack.c.bf16 %v3101, %v3100
  %v3250 = vpack.c.bf16 %v3103, %v3102
  %v3251 = vpack.c.bf16 %v3105, %v3104
  %v3252 = vpack.c.bf16 %v3107, %v3106
  %v3253 = vpack.c.bf16 %v3109, %v3108
  %v3254 = vpack.c.bf16 %v3111, %v3110
  %v3255 = vpack.c.bf16 %v3113, %v3112
  %v3256 = vpack.c.bf16 %v3115, %v3114
  %v3257 = vpack.c.bf16 %v3117, %v3116
  %v3258 = vpack.c.bf16 %v3119, %v3118
  %v3259 = vpack.c.bf16 %v3121, %v3120
  %v3260 = vpack.c.bf16 %v3123, %v3122
  %v3261 = vpack.c.bf16 %v3125, %v3124
  %v3262 = vpack.c.bf16 %v3127, %v3126
  %v3263 = vpack.c.bf16 %v3129, %v3128
  %v3264 = vpack.c.bf16 %v3131, %v3130
  %v3265 = vpack.c.bf16 %v3133, %v3132
  %v3266 = vpack.c.bf16 %v3135, %v3134
  %v3267 = vpack.c.bf16 %v3137, %v3136
  %v3268 = vpack.c.bf16 %v3139, %v3138
  %v3269 = vpack.c.bf16 %v3141, %v3140
  %v3398 = vunpack.c.l.b16 %v3142
  %v3399 = vunpack.c.h.b16 %v3142
  %v3400 = vunpack.c.l.b16 %v3143
  %v3401 = vunpack.c.h.b16 %v3143
  %v3402 = vunpack.c.l.b16 %v3144
  %v3403 = vunpack.c.h.b16 %v3144
  %v3404 = vunpack.c.l.b16 %v3145
  %v3405 = vunpack.c.h.b16 %v3145
  %v3406 = vunpack.c.l.b16 %v3146
  %v3407 = vunpack.c.h.b16 %v3146
  %v3408 = vunpack.c.l.b16 %v3147
  %v3409 = vunpack.c.h.b16 %v3147
  %v3410 = vunpack.c.l.b16 %v3148
  %v3411 = vunpack.c.h.b16 %v3148
  %v3412 = vunpack.c.l.b16 %v3149
  %v3413 = vunpack.c.h.b16 %v3149
  %v3414 = vunpack.c.l.b16 %v3150
  %v3415 = vunpack.c.h.b16 %v3150
  %v3416 = vunpack.c.l.b16 %v3151
  %v3417 = vunpack.c.h.b16 %v3151
  %v3418 = vunpack.c.l.b16 %v3152
  %v3419 = vunpack.c.h.b16 %v3152
  %v3420 = vunpack.c.l.b16 %v3153
  %v3421 = vunpack.c.h.b16 %v3153
  %v3422 = vunpack.c.l.b16 %v3154
  %v3423 = vunpack.c.h.b16 %v3154
  %v3424 = vunpack.c.l.b16 %v3155
  %v3425 = vunpack.c.h.b16 %v3155
  %v3426 = vunpack.c.l.b16 %v3156
  %v3427 = vunpack.c.h.b16 %v3156
  %v3428 = vunpack.c.l.b16 %v3157
  %v3429 = vunpack.c.h.b16 %v3157
  %v3430 = vunpack.c.l.b16 %v3158
  %v3431 = vunpack.c.h.b16 %v3158
  %v3432 = vunpack.c.l.b16 %v3159
  %v3433 = vunpack.c.h.b16 %v3159
  %v3434 = vunpack.c.l.b16 %v3160
  %v3435 = vunpack.c.h.b16 %v3160
  %v3436 = vunpack.c.l.b16 %v3161
  %v3437 = vunpack.c.h.b16 %v3161
  %v3438 = vunpack.c.l.b16 %v3162
  %v3439 = vunpack.c.h.b16 %v3162
  %v3440 = vunpack.c.l.b16 %v3163
  %v3441 = vunpack.c.h.b16 %v3163
  %v3442 = vunpack.c.l.b16 %v3164
  %v3443 = vunpack.c.h.b16 %v3164
  %v3444 = vunpack.c.l.b16 %v3165
  %v3445 = vunpack.c.h.b16 %v3165
  %v3446 = vunpack.c.l.b16 %v3166
  %v3447 = vunpack.c.h.b16 %v3166
  %v3448 = vunpack.c.l.b16 %v3167
  %v3449 = vunpack.c.h.b16 %v3167
  %v3450 = vunpack.c.l.b16 %v3168
  %v3451 = vunpack.c.h.b16 %v3168
  %v3452 = vunpack.c.l.b16 %v3169
  %v3453 = vunpack.c.h.b16 %v3169
  %v3454 = vunpack.c.l.b16 %v3170
  %v3455 = vunpack.c.h.b16 %v3170
  %v3456 = vunpack.c.l.b16 %v3171
  %v3457 = vunpack.c.h.b16 %v3171
  %v3458 = vunpack.c.l.b16 %v3172
  %v3459 = vunpack.c.h.b16 %v3172
  %v3460 = vunpack.c.l.b16 %v3173
  %v3461 = vunpack.c.h.b16 %v3173
  %v3462 = vunpack.c.l.b16 %v3174
  %v3463 = vunpack.c.h.b16 %v3174
  %v3464 = vunpack.c.l.b16 %v3175
  %v3465 = vunpack.c.h.b16 %v3175
  %v3466 = vunpack.c.l.b16 %v3176
  %v3467 = vunpack.c.h.b16 %v3176
  %v3468 = vunpack.c.l.b16 %v3177
  %v3469 = vunpack.c.h.b16 %v3177
  %v3470 = vunpack.c.l.b16 %v3178
  %v3471 = vunpack.c.h.b16 %v3178
  %v3472 = vunpack.c.l.b16 %v3179
  %v3473 = vunpack.c.h.b16 %v3179
  %v3474 = vunpack.c.l.b16 %v3180
  %v3475 = vunpack.c.h.b16 %v3180
  %v3476 = vunpack.c.l.b16 %v3181
  %v3477 = vunpack.c.h.b16 %v3181
  %v3478 = vunpack.c.l.b16 %v3182
  %v3479 = vunpack.c.h.b16 %v3182
  %v3480 = vunpack.c.l.b16 %v3183
  %v3481 = vunpack.c.h.b16 %v3183
  %v3482 = vunpack.c.l.b16 %v3184
  %v3483 = vunpack.c.h.b16 %v3184
  %v3484 = vunpack.c.l.b16 %v3185
  %v3485 = vunpack.c.h.b16 %v3185
  %v3486 = vunpack.c.l.b16 %v3186
  %v3487 = vunpack.c.h.b16 %v3186
  %v3488 = vunpack.c.l.b16 %v3187
  %v3489 = vunpack.c.h.b16 %v3187
  %v3490 = vunpack.c.l.b16 %v3188
  %v3491 = vunpack.c.h.b16 %v3188
  %v3492 = vunpack.c.l.b16 %v3189
  %v3493 = vunpack.c.h.b16 %v3189
  %v3494 = vunpack.c.l.b16 %v3190
  %v3495 = vunpack.c.h.b16 %v3190
  %v3496 = vunpack.c.l.b16 %v3191
  %v3497 = vunpack.c.h.b16 %v3191
  %v3498 = vunpack.c.l.b16 %v3192
  %v3499 = vunpack.c.h.b16 %v3192
  %v3500 = vunpack.c.l.b16 %v3193
  %v3501 = vunpack.c.h.b16 %v3193
  %v3502 = vunpack.c.l.b16 %v3194
  %v3503 = vunpack.c.h.b16 %v3194
  %v3504 = vunpack.c.l.b16 %v3195
  %v3505 = vunpack.c.h.b16 %v3195
  %v3506 = vunpack.c.l.b16 %v3196
  %v3507 = vunpack.c.h.b16 %v3196
  %v3508 = vunpack.c.l.b16 %v3197
  %v3509 = vunpack.c.h.b16 %v3197
  %v3510 = vunpack.c.l.b16 %v3198
  %v3511 = vunpack.c.h.b16 %v3198
  %v3512 = vunpack.c.l.b16 %v3199
  %v3513 = vunpack.c.h.b16 %v3199
  %v3514 = vunpack.c.l.b16 %v3200
  %v3515 = vunpack.c.h.b16 %v3200
  %v3516 = vunpack.c.l.b16 %v3201
  %v3517 = vunpack.c.h.b16 %v3201
  %v3518 = vunpack.c.l.b16 %v3202
  %v3519 = vunpack.c.h.b16 %v3202
  %v3520 = vunpack.c.l.b16 %v3203
  %v3521 = vunpack.c.h.b16 %v3203
  %v3522 = vunpack.c.l.b16 %v3204
  %v3523 = vunpack.c.h.b16 %v3204
  %v3524 = vunpack.c.l.b16 %v3205
  %v3525 = vunpack.c.h.b16 %v3205
  %v3526 = vunpack.c.l.b16 %v3206
  %v3527 = vunpack.c.h.b16 %v3206
  %v3528 = vunpack.c.l.b16 %v3207
  %v3529 = vunpack.c.h.b16 %v3207
  %v3530 = vunpack.c.l.b16 %v3208
  %v3531 = vunpack.c.h.b16 %v3208
  %v3532 = vunpack.c.l.b16 %v3209
  %v3533 = vunpack.c.h.b16 %v3209
  %v3534 = vunpack.c.l.b16 %v3210
  %v3535 = vunpack.c.h.b16 %v3210
  %v3536 = vunpack.c.l.b16 %v3211
  %v3537 = vunpack.c.h.b16 %v3211
  %v3538 = vunpack.c.l.b16 %v3212
  %v3539 = vunpack.c.h.b16 %v3212
  %v3540 = vunpack.c.l.b16 %v3213
  %v3541 = vunpack.c.h.b16 %v3213
  %v3542 = vunpack.c.l.b16 %v3214
  %v3543 = vunpack.c.h.b16 %v3214
  %v3544 = vunpack.c.l.b16 %v3215
  %v3545 = vunpack.c.h.b16 %v3215
  %v3546 = vunpack.c.l.b16 %v3216
  %v3547 = vunpack.c.h.b16 %v3216
  %v3548 = vunpack.c.l.b16 %v3217
  %v3549 = vunpack.c.h.b16 %v3217
  %v3550 = vunpack.c.l.b16 %v3218
  %v3551 = vunpack.c.h.b16 %v3218
  %v3552 = vunpack.c.l.b16 %v3219
  %v3553 = vunpack.c.h.b16 %v3219
  %v3554 = vunpack.c.l.b16 %v3220
  %v3555 = vunpack.c.h.b16 %v3220
  %v3556 = vunpack.c.l.b16 %v3221
  %v3557 = vunpack.c.h.b16 %v3221
  %v3558 = vunpack.c.l.b16 %v3222
  %v3559 = vunpack.c.h.b16 %v3222
  %v3560 = vunpack.c.l.b16 %v3223
  %v3561 = vunpack.c.h.b16 %v3223
  %v3562 = vunpack.c.l.b16 %v3224
  %v3563 = vunpack.c.h.b16 %v3224
  %v3564 = vunpack.c.l.b16 %v3225
  %v3565 = vunpack.c.h.b16 %v3225
  %v3566 = vunpack.c.l.b16 %v3226
  %v3567 = vunpack.c.h.b16 %v3226
  %v3568 = vunpack.c.l.b16 %v3227
  %v3569 = vunpack.c.h.b16 %v3227
  %v3570 = vunpack.c.l.b16 %v3228
  %v3571 = vunpack.c.h.b16 %v3228
  %v3572 = vunpack.c.l.b16 %v3229
  %v3573 = vunpack.c.h.b16 %v3229
  %v3574 = vunpack.c.l.b16 %v3230
  %v3575 = vunpack.c.h.b16 %v3230
  %v3576 = vunpack.c.l.b16 %v3231
  %v3577 = vunpack.c.h.b16 %v3231
  %v3578 = vunpack.c.l.b16 %v3232
  %v3579 = vunpack.c.h.b16 %v3232
  %v3580 = vunpack.c.l.b16 %v3233
  %v3581 = vunpack.c.h.b16 %v3233
  %v3582 = vunpack.c.l.b16 %v3234
  %v3583 = vunpack.c.h.b16 %v3234
  %v3584 = vunpack.c.l.b16 %v3235
  %v3585 = vunpack.c.h.b16 %v3235
  %v3586 = vunpack.c.l.b16 %v3236
  %v3587 = vunpack.c.h.b16 %v3236
  %v3588 = vunpack.c.l.b16 %v3237
  %v3589 = vunpack.c.h.b16 %v3237
  %v3590 = vunpack.c.l.b16 %v3238
  %v3591 = vunpack.c.h.b16 %v3238
  %v3592 = vunpack.c.l.b16 %v3239
  %v3593 = vunpack.c.h.b16 %v3239
  %v3594 = vunpack.c.l.b16 %v3240
  %v3595 = vunpack.c.h.b16 %v3240
  %v3596 = vunpack.c.l.b16 %v3241
  %v3597 = vunpack.c.h.b16 %v3241
  %v3598 = vunpack.c.l.b16 %v3242
  %v3599 = vunpack.c.h.b16 %v3242
  %v3600 = vunpack.c.l.b16 %v3243
  %v3601 = vunpack.c.h.b16 %v3243
  %v3602 = vunpack.c.l.b16 %v3244
  %v3603 = vunpack.c.h.b16 %v3244
  %v3604 = vunpack.c.l.b16 %v3245
  %v3605 = vunpack.c.h.b16 %v3245
  %v3606 = vunpack.c.l.b16 %v3246
  %v3607 = vunpack.c.h.b16 %v3246
  %v3608 = vunpack.c.l.b16 %v3247
  %v3609 = vunpack.c.h.b16 %v3247
  %v3610 = vunpack.c.l.b16 %v3248
  %v3611 = vunpack.c.h.b16 %v3248
  %v3612 = vunpack.c.l.b16 %v3249
  %v3613 = vunpack.c.h.b16 %v3249
  %v3614 = vunpack.c.l.b16 %v3250
  %v3615 = vunpack.c.h.b16 %v3250
  %v3616 = vunpack.c.l.b16 %v3251
  %v3617 = vunpack.c.h.b16 %v3251
  %v3618 = vunpack.c.l.b16 %v3252
  %v3619 = vunpack.c.h.b16 %v3252
  %v3620 = vunpack.c.l.b16 %v3253
  %v3621 = vunpack.c.h.b16 %v3253
  %v3622 = vunpack.c.l.b16 %v3254
  %v3623 = vunpack.c.h.b16 %v3254
  %v3624 = vunpack.c.l.b16 %v3255
  %v3625 = vunpack.c.h.b16 %v3255
  %v3626 = vunpack.c.l.b16 %v3256
  %v3627 = vunpack.c.h.b16 %v3256
  %v3628 = vunpack.c.l.b16 %v3257
  %v3629 = vunpack.c.h.b16 %v3257
  %v3630 = vunpack.c.l.b16 %v3258
  %v3631 = vunpack.c.h.b16 %v3258
  %v3632 = vunpack.c.l.b16 %v3259
  %v3633 = vunpack.c.h.b16 %v3259
  %v3634 = vunpack.c.l.b16 %v3260
  %v3635 = vunpack.c.h.b16 %v3260
  %v3636 = vunpack.c.l.b16 %v3261
  %v3637 = vunpack.c.h.b16 %v3261
  %v3638 = vunpack.c.l.b16 %v3262
  %v3639 = vunpack.c.h.b16 %v3262
  %v3640 = vunpack.c.l.b16 %v3263
  %v3641 = vunpack.c.h.b16 %v3263
  %v3642 = vunpack.c.l.b16 %v3264
  %v3643 = vunpack.c.h.b16 %v3264
  %v3644 = vunpack.c.l.b16 %v3265
  %v3645 = vunpack.c.h.b16 %v3265
  %v3646 = vunpack.c.l.b16 %v3266
  %v3647 = vunpack.c.h.b16 %v3266
  %v3648 = vunpack.c.l.b16 %v3267
  %v3649 = vunpack.c.h.b16 %v3267
  %v3650 = vunpack.c.l.b16 %v3268
  %v3651 = vunpack.c.h.b16 %v3268
  %v3652 = vunpack.c.l.b16 %v3269
  %v3653 = vunpack.c.h.b16 %v3269
  %v3654 = vpack.c.b16 %v3398, %v3398
  %v3655 = vpack.c.b16 %v3399, %v3399
  %v3656 = vpack.c.b16 %v3400, %v3400
  %v3657 = vpack.c.b16 %v3401, %v3401
  %v3658 = vpack.c.b16 %v3402, %v3402
  %v3659 = vpack.c.b16 %v3403, %v3403
  %v3660 = vpack.c.b16 %v3404, %v3404
  %v3661 = vpack.c.b16 %v3405, %v3405
  %v3662 = vpack.c.b16 %v3406, %v3406
  %v3663 = vpack.c.b16 %v3407, %v3407
  %v3664 = vpack.c.b16 %v3408, %v3408
  %v3665 = vpack.c.b16 %v3409, %v3409
  %v3666 = vpack.c.b16 %v3410, %v3410
  %v3667 = vpack.c.b16 %v3411, %v3411
  %v3668 = vpack.c.b16 %v3412, %v3412
  %v3669 = vpack.c.b16 %v3413, %v3413
  %v3670 = vpack.c.b16 %v3414, %v3414
  %v3671 = vpack.c.b16 %v3415, %v3415
  %v3672 = vpack.c.b16 %v3416, %v3416
  %v3673 = vpack.c.b16 %v3417, %v3417
  %v3674 = vpack.c.b16 %v3418, %v3418
  %v3675 = vpack.c.b16 %v3419, %v3419
  %v3676 = vpack.c.b16 %v3420, %v3420
  %v3677 = vpack.c.b16 %v3421, %v3421
  %v3678 = vpack.c.b16 %v3422, %v3422
  %v3679 = vpack.c.b16 %v3423, %v3423
  %v3680 = vpack.c.b16 %v3424, %v3424
  %v3681 = vpack.c.b16 %v3425, %v3425
  %v3682 = vpack.c.b16 %v3426, %v3426
  %v3683 = vpack.c.b16 %v3427, %v3427
  %v3684 = vpack.c.b16 %v3428, %v3428
  %v3685 = vpack.c.b16 %v3429, %v3429
  %v3686 = vpack.c.b16 %v3430, %v3430
  %v3687 = vpack.c.b16 %v3431, %v3431
  %v3688 = vpack.c.b16 %v3432, %v3432
  %v3689 = vpack.c.b16 %v3433, %v3433
  %v3690 = vpack.c.b16 %v3434, %v3434
  %v3691 = vpack.c.b16 %v3435, %v3435
  %v3692 = vpack.c.b16 %v3436, %v3436
  %v3693 = vpack.c.b16 %v3437, %v3437
  %v3694 = vpack.c.b16 %v3438, %v3438
  %v3695 = vpack.c.b16 %v3439, %v3439
  %v3696 = vpack.c.b16 %v3440, %v3440
  %v3697 = vpack.c.b16 %v3441, %v3441
  %v3698 = vpack.c.b16 %v3442, %v3442
  %v3699 = vpack.c.b16 %v3443, %v3443
  %v3700 = vpack.c.b16 %v3444, %v3444
  %v3701 = vpack.c.b16 %v3445, %v3445
  %v3702 = vpack.c.b16 %v3446, %v3446
  %v3703 = vpack.c.b16 %v3447, %v3447
  %v3704 = vpack.c.b16 %v3448, %v3448
  %v3705 = vpack.c.b16 %v3449, %v3449
  %v3706 = vpack.c.b16 %v3450, %v3450
  %v3707 = vpack.c.b16 %v3451, %v3451
  %v3708 = vpack.c.b16 %v3452, %v3452
  %v3709 = vpack.c.b16 %v3453, %v3453
  %v3710 = vpack.c.b16 %v3454, %v3454
  %v3711 = vpack.c.b16 %v3455, %v3455
  %v3712 = vpack.c.b16 %v3456, %v3456
  %v3713 = vpack.c.b16 %v3457, %v3457
  %v3714 = vpack.c.b16 %v3458, %v3458
  %v3715 = vpack.c.b16 %v3459, %v3459
  %v3716 = vpack.c.b16 %v3460, %v3460
  %v3717 = vpack.c.b16 %v3461, %v3461
  %v3718 = vpack.c.b16 %v3462, %v3462
  %v3719 = vpack.c.b16 %v3463, %v3463
  %v3720 = vpack.c.b16 %v3464, %v3464
  %v3721 = vpack.c.b16 %v3465, %v3465
  %v3722 = vpack.c.b16 %v3466, %v3466
  %v3723 = vpack.c.b16 %v3467, %v3467
  %v3724 = vpack.c.b16 %v3468, %v3468
  %v3725 = vpack.c.b16 %v3469, %v3469
  %v3726 = vpack.c.b16 %v3470, %v3470
  %v3727 = vpack.c.b16 %v3471, %v3471
  %v3728 = vpack.c.b16 %v3472, %v3472
  %v3729 = vpack.c.b16 %v3473, %v3473
  %v3730 = vpack.c.b16 %v3474, %v3474
  %v3731 = vpack.c.b16 %v3475, %v3475
  %v3732 = vpack.c.b16 %v3476, %v3476
  %v3733 = vpack.c.b16 %v3477, %v3477
  %v3734 = vpack.c.b16 %v3478, %v3478
  %v3735 = vpack.c.b16 %v3479, %v3479
  %v3736 = vpack.c.b16 %v3480, %v3480
  %v3737 = vpack.c.b16 %v3481, %v3481
  %v3738 = vpack.c.b16 %v3482, %v3482
  %v3739 = vpack.c.b16 %v3483, %v3483
  %v3740 = vpack.c.b16 %v3484, %v3484
  %v3741 = vpack.c.b16 %v3485, %v3485
  %v3742 = vpack.c.b16 %v3486, %v3486
  %v3743 = vpack.c.b16 %v3487, %v3487
  %v3744 = vpack.c.b16 %v3488, %v3488
  %v3745 = vpack.c.b16 %v3489, %v3489
  %v3746 = vpack.c.b16 %v3490, %v3490
  %v3747 = vpack.c.b16 %v3491, %v3491
  %v3748 = vpack.c.b16 %v3492, %v3492
  %v3749 = vpack.c.b16 %v3493, %v3493
  %v3750 = vpack.c.b16 %v3494, %v3494
  %v3751 = vpack.c.b16 %v3495, %v3495
  %v3752 = vpack.c.b16 %v3496, %v3496
  %v3753 = vpack.c.b16 %v3497, %v3497
  %v3754 = vpack.c.b16 %v3498, %v3498
  %v3755 = vpack.c.b16 %v3499, %v3499
  %v3756 = vpack.c.b16 %v3500, %v3500
  %v3757 = vpack.c.b16 %v3501, %v3501
  %v3758 = vpack.c.b16 %v3502, %v3502
  %v3759 = vpack.c.b16 %v3503, %v3503
  %v3760 = vpack.c.b16 %v3504, %v3504
  %v3761 = vpack.c.b16 %v3505, %v3505
  %v3762 = vpack.c.b16 %v3506, %v3506
  %v3763 = vpack.c.b16 %v3507, %v3507
  %v3764 = vpack.c.b16 %v3508, %v3508
  %v3765 = vpack.c.b16 %v3509, %v3509
  %v3766 = vpack.c.b16 %v3510, %v3510
  %v3767 = vpack.c.b16 %v3511, %v3511
  %v3768 = vpack.c.b16 %v3512, %v3512
  %v3769 = vpack.c.b16 %v3513, %v3513
  %v3770 = vpack.c.b16 %v3514, %v3514
  %v3771 = vpack.c.b16 %v3515, %v3515
  %v3772 = vpack.c.b16 %v3516, %v3516
  %v3773 = vpack.c.b16 %v3517, %v3517
  %v3774 = vpack.c.b16 %v3518, %v3518
  %v3775 = vpack.c.b16 %v3519, %v3519
  %v3776 = vpack.c.b16 %v3520, %v3520
  %v3777 = vpack.c.b16 %v3521, %v3521
  %v3778 = vpack.c.b16 %v3522, %v3522
  %v3779 = vpack.c.b16 %v3523, %v3523
  %v3780 = vpack.c.b16 %v3524, %v3524
  %v3781 = vpack.c.b16 %v3525, %v3525
  %v3782 = vpack.c.b16 %v3526, %v3526
  %v3783 = vpack.c.b16 %v3527, %v3527
  %v3784 = vpack.c.b16 %v3528, %v3528
  %v3785 = vpack.c.b16 %v3529, %v3529
  %v3786 = vpack.c.b16 %v3530, %v3530
  %v3787 = vpack.c.b16 %v3531, %v3531
  %v3788 = vpack.c.b16 %v3532, %v3532
  %v3789 = vpack.c.b16 %v3533, %v3533
  %v3790 = vpack.c.b16 %v3534, %v3534
  %v3791 = vpack.c.b16 %v3535, %v3535
  %v3792 = vpack.c.b16 %v3536, %v3536
  %v3793 = vpack.c.b16 %v3537, %v3537
  %v3794 = vpack.c.b16 %v3538, %v3538
  %v3795 = vpack.c.b16 %v3539, %v3539
  %v3796 = vpack.c.b16 %v3540, %v3540
  %v3797 = vpack.c.b16 %v3541, %v3541
  %v3798 = vpack.c.b16 %v3542, %v3542
  %v3799 = vpack.c.b16 %v3543, %v3543
  %v3800 = vpack.c.b16 %v3544, %v3544
  %v3801 = vpack.c.b16 %v3545, %v3545
  %v3802 = vpack.c.b16 %v3546, %v3546
  %v3803 = vpack.c.b16 %v3547, %v3547
  %v3804 = vpack.c.b16 %v3548, %v3548
  %v3805 = vpack.c.b16 %v3549, %v3549
  %v3806 = vpack.c.b16 %v3550, %v3550
  %v3807 = vpack.c.b16 %v3551, %v3551
  %v3808 = vpack.c.b16 %v3552, %v3552
  %v3809 = vpack.c.b16 %v3553, %v3553
  %v3810 = vpack.c.b16 %v3554, %v3554
  %v3811 = vpack.c.b16 %v3555, %v3555
  %v3812 = vpack.c.b16 %v3556, %v3556
  %v3813 = vpack.c.b16 %v3557, %v3557
  %v3814 = vpack.c.b16 %v3558, %v3558
  %v3815 = vpack.c.b16 %v3559, %v3559
  %v3816 = vpack.c.b16 %v3560, %v3560
  %v3817 = vpack.c.b16 %v3561, %v3561
  %v3818 = vpack.c.b16 %v3562, %v3562
  %v3819 = vpack.c.b16 %v3563, %v3563
  %v3820 = vpack.c.b16 %v3564, %v3564
  %v3821 = vpack.c.b16 %v3565, %v3565
  %v3822 = vpack.c.b16 %v3566, %v3566
  %v3823 = vpack.c.b16 %v3567, %v3567
  %v3824 = vpack.c.b16 %v3568, %v3568
  %v3825 = vpack.c.b16 %v3569, %v3569
  %v3826 = vpack.c.b16 %v3570, %v3570
  %v3827 = vpack.c.b16 %v3571, %v3571
  %v3828 = vpack.c.b16 %v3572, %v3572
  %v3829 = vpack.c.b16 %v3573, %v3573
  %v3830 = vpack.c.b16 %v3574, %v3574
  %v3831 = vpack.c.b16 %v3575, %v3575
  %v3832 = vpack.c.b16 %v3576, %v3576
  %v3833 = vpack.c.b16 %v3577, %v3577
  %v3834 = vpack.c.b16 %v3578, %v3578
  %v3835 = vpack.c.b16 %v3579, %v3579
  %v3836 = vpack.c.b16 %v3580, %v3580
  %v3837 = vpack.c.b16 %v3581, %v3581
  %v3838 = vpack.c.b16 %v3582, %v3582
  %v3839 = vpack.c.b16 %v3583, %v3583
  %v3840 = vpack.c.b16 %v3584, %v3584
  %v3841 = vpack.c.b16 %v3585, %v3585
  %v3842 = vpack.c.b16 %v3586, %v3586
  %v3843 = vpack.c.b16 %v3587, %v3587
  %v3844 = vpack.c.b16 %v3588, %v3588
  %v3845 = vpack.c.b16 %v3589, %v3589
  %v3846 = vpack.c.b16 %v3590, %v3590
  %v3847 = vpack.c.b16 %v3591, %v3591
  %v3848 = vpack.c.b16 %v3592, %v3592
  %v3849 = vpack.c.b16 %v3593, %v3593
  %v3850 = vpack.c.b16 %v3594, %v3594
  %v3851 = vpack.c.b16 %v3595, %v3595
  %v3852 = vpack.c.b16 %v3596, %v3596
  %v3853 = vpack.c.b16 %v3597, %v3597
  %v3854 = vpack.c.b16 %v3598, %v3598
  %v3855 = vpack.c.b16 %v3599, %v3599
  %v3856 = vpack.c.b16 %v3600, %v3600
  %v3857 = vpack.c.b16 %v3601, %v3601
  %v3858 = vpack.c.b16 %v3602, %v3602
  %v3859 = vpack.c.b16 %v3603, %v3603
  %v3860 = vpack.c.b16 %v3604, %v3604
  %v3861 = vpack.c.b16 %v3605, %v3605
  %v3862 = vpack.c.b16 %v3606, %v3606
  %v3863 = vpack.c.b16 %v3607, %v3607
  %v3864 = vpack.c.b16 %v3608, %v3608
  %v3865 = vpack.c.b16 %v3609, %v3609
  %v3866 = vpack.c.b16 %v3610, %v3610
  %v3867 = vpack.c.b16 %v3611, %v3611
  %v3868 = vpack.c.b16 %v3612, %v3612
  %v3869 = vpack.c.b16 %v3613, %v3613
  %v3870 = vpack.c.b16 %v3614, %v3614
  %v3871 = vpack.c.b16 %v3615, %v3615
  %v3872 = vpack.c.b16 %v3616, %v3616
  %v3873 = vpack.c.b16 %v3617, %v3617
  %v3874 = vpack.c.b16 %v3618, %v3618
  %v3875 = vpack.c.b16 %v3619, %v3619
  %v3876 = vpack.c.b16 %v3620, %v3620
  %v3877 = vpack.c.b16 %v3621, %v3621
  %v3878 = vpack.c.b16 %v3622, %v3622
  %v3879 = vpack.c.b16 %v3623, %v3623
  %v3880 = vpack.c.b16 %v3624, %v3624
  %v3881 = vpack.c.b16 %v3625, %v3625
  %v3882 = vpack.c.b16 %v3626, %v3626
  %v3883 = vpack.c.b16 %v3627, %v3627
  %v3884 = vpack.c.b16 %v3628, %v3628
  %v3885 = vpack.c.b16 %v3629, %v3629
  %v3886 = vpack.c.b16 %v3630, %v3630
  %v3887 = vpack.c.b16 %v3631, %v3631
  %v3888 = vpack.c.b16 %v3632, %v3632
  %v3889 = vpack.c.b16 %v3633, %v3633
  %v3890 = vpack.c.b16 %v3634, %v3634
  %v3891 = vpack.c.b16 %v3635, %v3635
  %v3892 = vpack.c.b16 %v3636, %v3636
  %v3893 = vpack.c.b16 %v3637, %v3637
  %v3894 = vpack.c.b16 %v3638, %v3638
  %v3895 = vpack.c.b16 %v3639, %v3639
  %v3896 = vpack.c.b16 %v3640, %v3640
  %v3897 = vpack.c.b16 %v3641, %v3641
  %v3898 = vpack.c.b16 %v3642, %v3642
  %v3899 = vpack.c.b16 %v3643, %v3643
  %v3900 = vpack.c.b16 %v3644, %v3644
  %v3901 = vpack.c.b16 %v3645, %v3645
  %v3902 = vpack.c.b16 %v3646, %v3646
  %v3903 = vpack.c.b16 %v3647, %v3647
  %v3904 = vpack.c.b16 %v3648, %v3648
  %v3905 = vpack.c.b16 %v3649, %v3649
  %v3906 = vpack.c.b16 %v3650, %v3650
  %v3907 = vpack.c.b16 %v3651, %v3651
  %v3908 = vpack.c.b16 %v3652, %v3652
  %v3909 = vpack.c.b16 %v3653, %v3653
  %vm4166 = vcmask 60416
  %4167 = vst.msk [vmem:[%s2] sm:$0xf] %vm4166, %v3654
  %4168 = vst.msk [vmem:[%s2 + $0x4] sm:$0xf] %vm4166, %v3655
  %4169 = vst.msk [vmem:[%s2 + $0x8] sm:$0xf] %vm4166, %v3656
  %4170 = vst.msk [vmem:[%s2 + $0xc] sm:$0xf] %vm4166, %v3657
  %4171 = vst.msk [vmem:[%s2 + $0x10] sm:$0xf] %vm4166, %v3658
  %4172 = vst.msk [vmem:[%s2 + $0x14] sm:$0xf] %vm4166, %v3659
  %4173 = vst.msk [vmem:[%s2 + $0x18] sm:$0xf] %vm4166, %v3660
  %4174 = vst.msk [vmem:[%s2 + $0x1c] sm:$0xf] %vm4166, %v3661
  %4175 = vst.msk [vmem:[%s2 + $0x20] sm:$0xf] %vm4166, %v3662
  %4176 = vst.msk [vmem:[%s2 + $0x24] sm:$0xf] %vm4166, %v3663
  %4177 = vst.msk [vmem:[%s2 + $0x28] sm:$0xf] %vm4166, %v3664
  %4178 = vst.msk [vmem:[%s2 + $0x2c] sm:$0xf] %vm4166, %v3665
  %4179 = vst.msk [vmem:[%s2 + $0x30] sm:$0xf] %vm4166, %v3666
  %4180 = vst.msk [vmem:[%s2 + $0x34] sm:$0xf] %vm4166, %v3667
  %4181 = vst.msk [vmem:[%s2 + $0x38] sm:$0xf] %vm4166, %v3668
  %4182 = vst.msk [vmem:[%s2 + $0x3c] sm:$0xf] %vm4166, %v3669
  %4183 = vst.msk [vmem:[%s2 + $0x40] sm:$0xf] %vm4166, %v3670
  %4184 = vst.msk [vmem:[%s2 + $0x44] sm:$0xf] %vm4166, %v3671
  %4185 = vst.msk [vmem:[%s2 + $0x48] sm:$0xf] %vm4166, %v3672
  %4186 = vst.msk [vmem:[%s2 + $0x4c] sm:$0xf] %vm4166, %v3673
  %4187 = vst.msk [vmem:[%s2 + $0x50] sm:$0xf] %vm4166, %v3674
  %4188 = vst.msk [vmem:[%s2 + $0x54] sm:$0xf] %vm4166, %v3675
  %4189 = vst.msk [vmem:[%s2 + $0x58] sm:$0xf] %vm4166, %v3676
  %4190 = vst.msk [vmem:[%s2 + $0x5c] sm:$0xf] %vm4166, %v3677
  %4191 = vst.msk [vmem:[%s2 + $0x60] sm:$0xf] %vm4166, %v3678
  %4192 = vst.msk [vmem:[%s2 + $0x64] sm:$0xf] %vm4166, %v3679
  %4193 = vst.msk [vmem:[%s2 + $0x68] sm:$0xf] %vm4166, %v3680
  %4194 = vst.msk [vmem:[%s2 + $0x6c] sm:$0xf] %vm4166, %v3681
  %4195 = vst.msk [vmem:[%s2 + $0x70] sm:$0xf] %vm4166, %v3682
  %4196 = vst.msk [vmem:[%s2 + $0x74] sm:$0xf] %vm4166, %v3683
  %4197 = vst.msk [vmem:[%s2 + $0x78] sm:$0xf] %vm4166, %v3684
  %4198 = vst.msk [vmem:[%s2 + $0x7c] sm:$0xf] %vm4166, %v3685
  %4199 = vst.msk [vmem:[%s2 + $0x80] sm:$0xf] %vm4166, %v3686
  %4200 = vst.msk [vmem:[%s2 + $0x84] sm:$0xf] %vm4166, %v3687
  %4201 = vst.msk [vmem:[%s2 + $0x88] sm:$0xf] %vm4166, %v3688
  %4202 = vst.msk [vmem:[%s2 + $0x8c] sm:$0xf] %vm4166, %v3689
  %4203 = vst.msk [vmem:[%s2 + $0x90] sm:$0xf] %vm4166, %v3690
  %4204 = vst.msk [vmem:[%s2 + $0x94] sm:$0xf] %vm4166, %v3691
  %4205 = vst.msk [vmem:[%s2 + $0x98] sm:$0xf] %vm4166, %v3692
  %4206 = vst.msk [vmem:[%s2 + $0x9c] sm:$0xf] %vm4166, %v3693
  %4207 = vst.msk [vmem:[%s2 + $0xa0] sm:$0xf] %vm4166, %v3694
  %4208 = vst.msk [vmem:[%s2 + $0xa4] sm:$0xf] %vm4166, %v3695
  %4209 = vst.msk [vmem:[%s2 + $0xa8] sm:$0xf] %vm4166, %v3696
  %4210 = vst.msk [vmem:[%s2 + $0xac] sm:$0xf] %vm4166, %v3697
  %4211 = vst.msk [vmem:[%s2 + $0xb0] sm:$0xf] %vm4166, %v3698
  %4212 = vst.msk [vmem:[%s2 + $0xb4] sm:$0xf] %vm4166, %v3699
  %4213 = vst.msk [vmem:[%s2 + $0xb8] sm:$0xf] %vm4166, %v3700
  %4214 = vst.msk [vmem:[%s2 + $0xbc] sm:$0xf] %vm4166, %v3701
  %4215 = vst.msk [vmem:[%s2 + $0xc0] sm:$0xf] %vm4166, %v3702
  %4216 = vst.msk [vmem:[%s2 + $0xc4] sm:$0xf] %vm4166, %v3703
  %4217 = vst.msk [vmem:[%s2 + $0xc8] sm:$0xf] %vm4166, %v3704
  %4218 = vst.msk [vmem:[%s2 + $0xcc] sm:$0xf] %vm4166, %v3705
  %4219 = vst.msk [vmem:[%s2 + $0xd0] sm:$0xf] %vm4166, %v3706
  %4220 = vst.msk [vmem:[%s2 + $0xd4] sm:$0xf] %vm4166, %v3707
  %4221 = vst.msk [vmem:[%s2 + $0xd8] sm:$0xf] %vm4166, %v3708
  %4222 = vst.msk [vmem:[%s2 + $0xdc] sm:$0xf] %vm4166, %v3709
  %4223 = vst.msk [vmem:[%s2 + $0xe0] sm:$0xf] %vm4166, %v3710
  %4224 = vst.msk [vmem:[%s2 + $0xe4] sm:$0xf] %vm4166, %v3711
  %4225 = vst.msk [vmem:[%s2 + $0xe8] sm:$0xf] %vm4166, %v3712
  %4226 = vst.msk [vmem:[%s2 + $0xec] sm:$0xf] %vm4166, %v3713
  %4227 = vst.msk [vmem:[%s2 + $0xf0] sm:$0xf] %vm4166, %v3714
  %4228 = vst.msk [vmem:[%s2 + $0xf4] sm:$0xf] %vm4166, %v3715
  %4229 = vst.msk [vmem:[%s2 + $0xf8] sm:$0xf] %vm4166, %v3716
  %4230 = vst.msk [vmem:[%s2 + $0xfc] sm:$0xf] %vm4166, %v3717
  %4231 = vst.msk [vmem:[%s2 + $0x100] sm:$0xf] %vm4166, %v3718
  %4232 = vst.msk [vmem:[%s2 + $0x104] sm:$0xf] %vm4166, %v3719
  %4233 = vst.msk [vmem:[%s2 + $0x108] sm:$0xf] %vm4166, %v3720
  %4234 = vst.msk [vmem:[%s2 + $0x10c] sm:$0xf] %vm4166, %v3721
  %4235 = vst.msk [vmem:[%s2 + $0x110] sm:$0xf] %vm4166, %v3722
  %4236 = vst.msk [vmem:[%s2 + $0x114] sm:$0xf] %vm4166, %v3723
  %4237 = vst.msk [vmem:[%s2 + $0x118] sm:$0xf] %vm4166, %v3724
  %4238 = vst.msk [vmem:[%s2 + $0x11c] sm:$0xf] %vm4166, %v3725
  %4239 = vst.msk [vmem:[%s2 + $0x120] sm:$0xf] %vm4166, %v3726
  %4240 = vst.msk [vmem:[%s2 + $0x124] sm:$0xf] %vm4166, %v3727
  %4241 = vst.msk [vmem:[%s2 + $0x128] sm:$0xf] %vm4166, %v3728
  %4242 = vst.msk [vmem:[%s2 + $0x12c] sm:$0xf] %vm4166, %v3729
  %4243 = vst.msk [vmem:[%s2 + $0x130] sm:$0xf] %vm4166, %v3730
  %4244 = vst.msk [vmem:[%s2 + $0x134] sm:$0xf] %vm4166, %v3731
  %4245 = vst.msk [vmem:[%s2 + $0x138] sm:$0xf] %vm4166, %v3732
  %4246 = vst.msk [vmem:[%s2 + $0x13c] sm:$0xf] %vm4166, %v3733
  %4247 = vst.msk [vmem:[%s2 + $0x140] sm:$0xf] %vm4166, %v3734
  %4248 = vst.msk [vmem:[%s2 + $0x144] sm:$0xf] %vm4166, %v3735
  %4249 = vst.msk [vmem:[%s2 + $0x148] sm:$0xf] %vm4166, %v3736
  %4250 = vst.msk [vmem:[%s2 + $0x14c] sm:$0xf] %vm4166, %v3737
  %4251 = vst.msk [vmem:[%s2 + $0x150] sm:$0xf] %vm4166, %v3738
  %4252 = vst.msk [vmem:[%s2 + $0x154] sm:$0xf] %vm4166, %v3739
  %4253 = vst.msk [vmem:[%s2 + $0x158] sm:$0xf] %vm4166, %v3740
  %4254 = vst.msk [vmem:[%s2 + $0x15c] sm:$0xf] %vm4166, %v3741
  %4255 = vst.msk [vmem:[%s2 + $0x160] sm:$0xf] %vm4166, %v3742
  %4256 = vst.msk [vmem:[%s2 + $0x164] sm:$0xf] %vm4166, %v3743
  %4257 = vst.msk [vmem:[%s2 + $0x168] sm:$0xf] %vm4166, %v3744
  %4258 = vst.msk [vmem:[%s2 + $0x16c] sm:$0xf] %vm4166, %v3745
  %4259 = vst.msk [vmem:[%s2 + $0x170] sm:$0xf] %vm4166, %v3746
  %4260 = vst.msk [vmem:[%s2 + $0x174] sm:$0xf] %vm4166, %v3747
  %4261 = vst.msk [vmem:[%s2 + $0x178] sm:$0xf] %vm4166, %v3748
  %4262 = vst.msk [vmem:[%s2 + $0x17c] sm:$0xf] %vm4166, %v3749
  %4263 = vst.msk [vmem:[%s2 + $0x180] sm:$0xf] %vm4166, %v3750
  %4264 = vst.msk [vmem:[%s2 + $0x184] sm:$0xf] %vm4166, %v3751
  %4265 = vst.msk [vmem:[%s2 + $0x188] sm:$0xf] %vm4166, %v3752
  %4266 = vst.msk [vmem:[%s2 + $0x18c] sm:$0xf] %vm4166, %v3753
  %4267 = vst.msk [vmem:[%s2 + $0x190] sm:$0xf] %vm4166, %v3754
  %4268 = vst.msk [vmem:[%s2 + $0x194] sm:$0xf] %vm4166, %v3755
  %4269 = vst.msk [vmem:[%s2 + $0x198] sm:$0xf] %vm4166, %v3756
  %4270 = vst.msk [vmem:[%s2 + $0x19c] sm:$0xf] %vm4166, %v3757
  %4271 = vst.msk [vmem:[%s2 + $0x1a0] sm:$0xf] %vm4166, %v3758
  %4272 = vst.msk [vmem:[%s2 + $0x1a4] sm:$0xf] %vm4166, %v3759
  %4273 = vst.msk [vmem:[%s2 + $0x1a8] sm:$0xf] %vm4166, %v3760
  %4274 = vst.msk [vmem:[%s2 + $0x1ac] sm:$0xf] %vm4166, %v3761
  %4275 = vst.msk [vmem:[%s2 + $0x1b0] sm:$0xf] %vm4166, %v3762
  %4276 = vst.msk [vmem:[%s2 + $0x1b4] sm:$0xf] %vm4166, %v3763
  %4277 = vst.msk [vmem:[%s2 + $0x1b8] sm:$0xf] %vm4166, %v3764
  %4278 = vst.msk [vmem:[%s2 + $0x1bc] sm:$0xf] %vm4166, %v3765
  %4279 = vst.msk [vmem:[%s2 + $0x1c0] sm:$0xf] %vm4166, %v3766
  %4280 = vst.msk [vmem:[%s2 + $0x1c4] sm:$0xf] %vm4166, %v3767
  %4281 = vst.msk [vmem:[%s2 + $0x1c8] sm:$0xf] %vm4166, %v3768
  %4282 = vst.msk [vmem:[%s2 + $0x1cc] sm:$0xf] %vm4166, %v3769
  %4283 = vst.msk [vmem:[%s2 + $0x1d0] sm:$0xf] %vm4166, %v3770
  %4284 = vst.msk [vmem:[%s2 + $0x1d4] sm:$0xf] %vm4166, %v3771
  %4285 = vst.msk [vmem:[%s2 + $0x1d8] sm:$0xf] %vm4166, %v3772
  %4286 = vst.msk [vmem:[%s2 + $0x1dc] sm:$0xf] %vm4166, %v3773
  %4287 = vst.msk [vmem:[%s2 + $0x1e0] sm:$0xf] %vm4166, %v3774
  %4288 = vst.msk [vmem:[%s2 + $0x1e4] sm:$0xf] %vm4166, %v3775
  %4289 = vst.msk [vmem:[%s2 + $0x1e8] sm:$0xf] %vm4166, %v3776
  %4290 = vst.msk [vmem:[%s2 + $0x1ec] sm:$0xf] %vm4166, %v3777
  %4291 = vst.msk [vmem:[%s2 + $0x1f0] sm:$0xf] %vm4166, %v3778
  %4292 = vst.msk [vmem:[%s2 + $0x1f4] sm:$0xf] %vm4166, %v3779
  %4293 = vst.msk [vmem:[%s2 + $0x1f8] sm:$0xf] %vm4166, %v3780
  %4294 = vst.msk [vmem:[%s2 + $0x1fc] sm:$0xf] %vm4166, %v3781
  %4295 = vst.msk [vmem:[%s2 + $0x200] sm:$0xf] %vm4166, %v3782
  %4296 = vst.msk [vmem:[%s2 + $0x204] sm:$0xf] %vm4166, %v3783
  %4297 = vst.msk [vmem:[%s2 + $0x208] sm:$0xf] %vm4166, %v3784
  %4298 = vst.msk [vmem:[%s2 + $0x20c] sm:$0xf] %vm4166, %v3785
  %4299 = vst.msk [vmem:[%s2 + $0x210] sm:$0xf] %vm4166, %v3786
  %4300 = vst.msk [vmem:[%s2 + $0x214] sm:$0xf] %vm4166, %v3787
  %4301 = vst.msk [vmem:[%s2 + $0x218] sm:$0xf] %vm4166, %v3788
  %4302 = vst.msk [vmem:[%s2 + $0x21c] sm:$0xf] %vm4166, %v3789
  %4303 = vst.msk [vmem:[%s2 + $0x220] sm:$0xf] %vm4166, %v3790
  %4304 = vst.msk [vmem:[%s2 + $0x224] sm:$0xf] %vm4166, %v3791
  %4305 = vst.msk [vmem:[%s2 + $0x228] sm:$0xf] %vm4166, %v3792
  %4306 = vst.msk [vmem:[%s2 + $0x22c] sm:$0xf] %vm4166, %v3793
  %4307 = vst.msk [vmem:[%s2 + $0x230] sm:$0xf] %vm4166, %v3794
  %4308 = vst.msk [vmem:[%s2 + $0x234] sm:$0xf] %vm4166, %v3795
  %4309 = vst.msk [vmem:[%s2 + $0x238] sm:$0xf] %vm4166, %v3796
  %4310 = vst.msk [vmem:[%s2 + $0x23c] sm:$0xf] %vm4166, %v3797
  %4311 = vst.msk [vmem:[%s2 + $0x240] sm:$0xf] %vm4166, %v3798
  %4312 = vst.msk [vmem:[%s2 + $0x244] sm:$0xf] %vm4166, %v3799
  %4313 = vst.msk [vmem:[%s2 + $0x248] sm:$0xf] %vm4166, %v3800
  %4314 = vst.msk [vmem:[%s2 + $0x24c] sm:$0xf] %vm4166, %v3801
  %4315 = vst.msk [vmem:[%s2 + $0x250] sm:$0xf] %vm4166, %v3802
  %4316 = vst.msk [vmem:[%s2 + $0x254] sm:$0xf] %vm4166, %v3803
  %4317 = vst.msk [vmem:[%s2 + $0x258] sm:$0xf] %vm4166, %v3804
  %4318 = vst.msk [vmem:[%s2 + $0x25c] sm:$0xf] %vm4166, %v3805
  %4319 = vst.msk [vmem:[%s2 + $0x260] sm:$0xf] %vm4166, %v3806
  %4320 = vst.msk [vmem:[%s2 + $0x264] sm:$0xf] %vm4166, %v3807
  %4321 = vst.msk [vmem:[%s2 + $0x268] sm:$0xf] %vm4166, %v3808
  %4322 = vst.msk [vmem:[%s2 + $0x26c] sm:$0xf] %vm4166, %v3809
  %4323 = vst.msk [vmem:[%s2 + $0x270] sm:$0xf] %vm4166, %v3810
  %4324 = vst.msk [vmem:[%s2 + $0x274] sm:$0xf] %vm4166, %v3811
  %4325 = vst.msk [vmem:[%s2 + $0x278] sm:$0xf] %vm4166, %v3812
  %4326 = vst.msk [vmem:[%s2 + $0x27c] sm:$0xf] %vm4166, %v3813
  %4327 = vst.msk [vmem:[%s2 + $0x280] sm:$0xf] %vm4166, %v3814
  %4328 = vst.msk [vmem:[%s2 + $0x284] sm:$0xf] %vm4166, %v3815
  %4329 = vst.msk [vmem:[%s2 + $0x288] sm:$0xf] %vm4166, %v3816
  %4330 = vst.msk [vmem:[%s2 + $0x28c] sm:$0xf] %vm4166, %v3817
  %4331 = vst.msk [vmem:[%s2 + $0x290] sm:$0xf] %vm4166, %v3818
  %4332 = vst.msk [vmem:[%s2 + $0x294] sm:$0xf] %vm4166, %v3819
  %4333 = vst.msk [vmem:[%s2 + $0x298] sm:$0xf] %vm4166, %v3820
  %4334 = vst.msk [vmem:[%s2 + $0x29c] sm:$0xf] %vm4166, %v3821
  %4335 = vst.msk [vmem:[%s2 + $0x2a0] sm:$0xf] %vm4166, %v3822
  %4336 = vst.msk [vmem:[%s2 + $0x2a4] sm:$0xf] %vm4166, %v3823
  %4337 = vst.msk [vmem:[%s2 + $0x2a8] sm:$0xf] %vm4166, %v3824
  %4338 = vst.msk [vmem:[%s2 + $0x2ac] sm:$0xf] %vm4166, %v3825
  %4339 = vst.msk [vmem:[%s2 + $0x2b0] sm:$0xf] %vm4166, %v3826
  %4340 = vst.msk [vmem:[%s2 + $0x2b4] sm:$0xf] %vm4166, %v3827
  %4341 = vst.msk [vmem:[%s2 + $0x2b8] sm:$0xf] %vm4166, %v3828
  %4342 = vst.msk [vmem:[%s2 + $0x2bc] sm:$0xf] %vm4166, %v3829
  %4343 = vst.msk [vmem:[%s2 + $0x2c0] sm:$0xf] %vm4166, %v3830
  %4344 = vst.msk [vmem:[%s2 + $0x2c4] sm:$0xf] %vm4166, %v3831
  %4345 = vst.msk [vmem:[%s2 + $0x2c8] sm:$0xf] %vm4166, %v3832
  %4346 = vst.msk [vmem:[%s2 + $0x2cc] sm:$0xf] %vm4166, %v3833
  %4347 = vst.msk [vmem:[%s2 + $0x2d0] sm:$0xf] %vm4166, %v3834
  %4348 = vst.msk [vmem:[%s2 + $0x2d4] sm:$0xf] %vm4166, %v3835
  %4349 = vst.msk [vmem:[%s2 + $0x2d8] sm:$0xf] %vm4166, %v3836
  %4350 = vst.msk [vmem:[%s2 + $0x2dc] sm:$0xf] %vm4166, %v3837
  %4351 = vst.msk [vmem:[%s2 + $0x2e0] sm:$0xf] %vm4166, %v3838
  %4352 = vst.msk [vmem:[%s2 + $0x2e4] sm:$0xf] %vm4166, %v3839
  %4353 = vst.msk [vmem:[%s2 + $0x2e8] sm:$0xf] %vm4166, %v3840
  %4354 = vst.msk [vmem:[%s2 + $0x2ec] sm:$0xf] %vm4166, %v3841
  %4355 = vst.msk [vmem:[%s2 + $0x2f0] sm:$0xf] %vm4166, %v3842
  %4356 = vst.msk [vmem:[%s2 + $0x2f4] sm:$0xf] %vm4166, %v3843
  %4357 = vst.msk [vmem:[%s2 + $0x2f8] sm:$0xf] %vm4166, %v3844
  %4358 = vst.msk [vmem:[%s2 + $0x2fc] sm:$0xf] %vm4166, %v3845
  %4359 = vst.msk [vmem:[%s2 + $0x300] sm:$0xf] %vm4166, %v3846
  %4360 = vst.msk [vmem:[%s2 + $0x304] sm:$0xf] %vm4166, %v3847
  %4361 = vst.msk [vmem:[%s2 + $0x308] sm:$0xf] %vm4166, %v3848
  %4362 = vst.msk [vmem:[%s2 + $0x30c] sm:$0xf] %vm4166, %v3849
  %4363 = vst.msk [vmem:[%s2 + $0x310] sm:$0xf] %vm4166, %v3850
  %4364 = vst.msk [vmem:[%s2 + $0x314] sm:$0xf] %vm4166, %v3851
  %4365 = vst.msk [vmem:[%s2 + $0x318] sm:$0xf] %vm4166, %v3852
  %4366 = vst.msk [vmem:[%s2 + $0x31c] sm:$0xf] %vm4166, %v3853
  %4367 = vst.msk [vmem:[%s2 + $0x320] sm:$0xf] %vm4166, %v3854
  %4368 = vst.msk [vmem:[%s2 + $0x324] sm:$0xf] %vm4166, %v3855
  %4369 = vst.msk [vmem:[%s2 + $0x328] sm:$0xf] %vm4166, %v3856
  %4370 = vst.msk [vmem:[%s2 + $0x32c] sm:$0xf] %vm4166, %v3857
  %4371 = vst.msk [vmem:[%s2 + $0x330] sm:$0xf] %vm4166, %v3858
  %4372 = vst.msk [vmem:[%s2 + $0x334] sm:$0xf] %vm4166, %v3859
  %4373 = vst.msk [vmem:[%s2 + $0x338] sm:$0xf] %vm4166, %v3860
  %4374 = vst.msk [vmem:[%s2 + $0x33c] sm:$0xf] %vm4166, %v3861
  %4375 = vst.msk [vmem:[%s2 + $0x340] sm:$0xf] %vm4166, %v3862
  %4376 = vst.msk [vmem:[%s2 + $0x344] sm:$0xf] %vm4166, %v3863
  %4377 = vst.msk [vmem:[%s2 + $0x348] sm:$0xf] %vm4166, %v3864
  %4378 = vst.msk [vmem:[%s2 + $0x34c] sm:$0xf] %vm4166, %v3865
  %4379 = vst.msk [vmem:[%s2 + $0x350] sm:$0xf] %vm4166, %v3866
  %4380 = vst.msk [vmem:[%s2 + $0x354] sm:$0xf] %vm4166, %v3867
  %4381 = vst.msk [vmem:[%s2 + $0x358] sm:$0xf] %vm4166, %v3868
  %4382 = vst.msk [vmem:[%s2 + $0x35c] sm:$0xf] %vm4166, %v3869
  %4383 = vst.msk [vmem:[%s2 + $0x360] sm:$0xf] %vm4166, %v3870
  %4384 = vst.msk [vmem:[%s2 + $0x364] sm:$0xf] %vm4166, %v3871
  %4385 = vst.msk [vmem:[%s2 + $0x368] sm:$0xf] %vm4166, %v3872
  %4386 = vst.msk [vmem:[%s2 + $0x36c] sm:$0xf] %vm4166, %v3873
  %4387 = vst.msk [vmem:[%s2 + $0x370] sm:$0xf] %vm4166, %v3874
  %4388 = vst.msk [vmem:[%s2 + $0x374] sm:$0xf] %vm4166, %v3875
  %4389 = vst.msk [vmem:[%s2 + $0x378] sm:$0xf] %vm4166, %v3876
  %4390 = vst.msk [vmem:[%s2 + $0x37c] sm:$0xf] %vm4166, %v3877
  %4391 = vst.msk [vmem:[%s2 + $0x380] sm:$0xf] %vm4166, %v3878
  %4392 = vst.msk [vmem:[%s2 + $0x384] sm:$0xf] %vm4166, %v3879
  %4393 = vst.msk [vmem:[%s2 + $0x388] sm:$0xf] %vm4166, %v3880
  %4394 = vst.msk [vmem:[%s2 + $0x38c] sm:$0xf] %vm4166, %v3881
  %4395 = vst.msk [vmem:[%s2 + $0x390] sm:$0xf] %vm4166, %v3882
  %4396 = vst.msk [vmem:[%s2 + $0x394] sm:$0xf] %vm4166, %v3883
  %4397 = vst.msk [vmem:[%s2 + $0x398] sm:$0xf] %vm4166, %v3884
  %4398 = vst.msk [vmem:[%s2 + $0x39c] sm:$0xf] %vm4166, %v3885
  %4399 = vst.msk [vmem:[%s2 + $0x3a0] sm:$0xf] %vm4166, %v3886
  %4400 = vst.msk [vmem:[%s2 + $0x3a4] sm:$0xf] %vm4166, %v3887
  %4401 = vst.msk [vmem:[%s2 + $0x3a8] sm:$0xf] %vm4166, %v3888
  %4402 = vst.msk [vmem:[%s2 + $0x3ac] sm:$0xf] %vm4166, %v3889
  %4403 = vst.msk [vmem:[%s2 + $0x3b0] sm:$0xf] %vm4166, %v3890
  %4404 = vst.msk [vmem:[%s2 + $0x3b4] sm:$0xf] %vm4166, %v3891
  %4405 = vst.msk [vmem:[%s2 + $0x3b8] sm:$0xf] %vm4166, %v3892
  %4406 = vst.msk [vmem:[%s2 + $0x3bc] sm:$0xf] %vm4166, %v3893
  %4407 = vst.msk [vmem:[%s2 + $0x3c0] sm:$0xf] %vm4166, %v3894
  %4408 = vst.msk [vmem:[%s2 + $0x3c4] sm:$0xf] %vm4166, %v3895
  %4409 = vst.msk [vmem:[%s2 + $0x3c8] sm:$0xf] %vm4166, %v3896
  %4410 = vst.msk [vmem:[%s2 + $0x3cc] sm:$0xf] %vm4166, %v3897
  %4411 = vst.msk [vmem:[%s2 + $0x3d0] sm:$0xf] %vm4166, %v3898
  %4412 = vst.msk [vmem:[%s2 + $0x3d4] sm:$0xf] %vm4166, %v3899
  %4413 = vst.msk [vmem:[%s2 + $0x3d8] sm:$0xf] %vm4166, %v3900
  %4414 = vst.msk [vmem:[%s2 + $0x3dc] sm:$0xf] %vm4166, %v3901
  %4415 = vst.msk [vmem:[%s2 + $0x3e0] sm:$0xf] %vm4166, %v3902
  %4416 = vst.msk [vmem:[%s2 + $0x3e4] sm:$0xf] %vm4166, %v3903
  %4417 = vst.msk [vmem:[%s2 + $0x3e8] sm:$0xf] %vm4166, %v3904
  %4418 = vst.msk [vmem:[%s2 + $0x3ec] sm:$0xf] %vm4166, %v3905
  %4419 = vst.msk [vmem:[%s2 + $0x3f0] sm:$0xf] %vm4166, %v3906
  %4420 = vst.msk [vmem:[%s2 + $0x3f4] sm:$0xf] %vm4166, %v3907
  %4421 = vst.msk [vmem:[%s2 + $0x3f8] sm:$0xf] %vm4166, %v3908
  %4422 = vst.msk [vmem:[%s2 + $0x3fc] sm:$0xf] %vm4166, %v3909
  // Predicated region
  $region10: #{_lambda_.4} parent=0 // pred_check
    _
  $region11: #{_lambda_.4} parent=0 // pred_check_branch
    %4424 = sbr.rel (0) target = $region13
  $region12: #{_lambda_.4} parent=0 // pred_region
    _
  $region13: #{_lambda_.4} parent=0 // pred_fallthru
    _
  // Predicated region
  $region14: #{_lambda_.4} parent=0 // pred_check
    _
  $region15: #{_lambda_.4} parent=0 // pred_check_branch
    %4426 = sbr.rel (0) target = $region17
  $region16: #{_lambda_.4} parent=0 // pred_region
    _
  $region17: #{_lambda_.4} parent=0 // pred_fallthru
    _

// kernel: _lambda_.5
$region0: #{_lambda_.5}
  #allocation0 [shape = 'u32[]', space=smem, size = 0x4, offset = 0x4, fixed_abs, tag = 'smem constant byte address 0x4 - core index']
  #allocation1 [shape = 'u32[144,128]{1,0:T(1,128)}', space=vmem, size = 0x12000, scoped, tag = 'internal scratch']
  %s0 = inlined_call_operand.vmem [shape: bf16[512,128], index: 0, kind: input, shape index: {}]
  %s1 = inlined_call_operand.vmem [shape: bf16[128,16], index: 1, kind: input, shape index: {}]
  %s2 = inlined_call_operand.vmem [shape: f32[1,16], index: 2, kind: input, shape index: {}]
  %s3 = inlined_call_operand.vmem [shape: f32[1,16], index: 3, kind: input, shape index: {}]
  %s4 = inlined_call_operand.vmem [shape: bf16[512,16], index: 4, kind: output, shape index: {}]
  %s5 = sld [smem:[#allocation0]]
  $region26: #{_lambda_.5} parent=0
    _
  %s7 = ssub.s32 1, %s5
  %s8 = scalar_select 0, %s7, %s5
  // Predicated region
  $region2: #{_lambda_.5} parent=0 // pred_check
    _
  $region3: #{_lambda_.5} parent=0 // pred_check_branch
    %10 = sbr.rel (0) target = $region5
  $region4: #{_lambda_.5} parent=0 // pred_region
    _
  $region5: #{_lambda_.5} parent=0 // pred_fallthru
    _
  // Predicated region
  $region6: #{_lambda_.5} parent=0 // pred_check
    _
  $region7: #{_lambda_.5} parent=0 // pred_check_branch
    %12 = sbr.rel (0) target = $region9
  $region8: #{_lambda_.5} parent=0 // pred_region
    _
  $region9: #{_lambda_.5} parent=0 // pred_fallthru
    _
  // Predicated region
  $region10: #{_lambda_.5} parent=0 // pred_check
    _
  $region11: #{_lambda_.5} parent=0 // pred_check_branch
    %14 = sbr.rel (0) target = $region13
  $region12: #{_lambda_.5} parent=0 // pred_region
    _
  $region13: #{_lambda_.5} parent=0 // pred_fallthru
    _
  // Predicated region
  $region14: #{_lambda_.5} parent=0 // pred_check
    _
  $region15: #{_lambda_.5} parent=0 // pred_check_branch
    %16 = sbr.rel (0) target = $region17
  $region16: #{_lambda_.5} parent=0 // pred_region
    _
  $region17: #{_lambda_.5} parent=0 // pred_fallthru
    _
  %v18 = vld [vmem:[%s0] sm:$0xf]
  %v19 = vld [vmem:[%s0 + $0x4] sm:$0xf]
  %v20 = vld [vmem:[%s0 + $0x8] sm:$0xf]
  %v21 = vld [vmem:[%s0 + $0xc] sm:$0xf]
  %v22 = vld [vmem:[%s0 + $0x10] sm:$0xf]
  %v23 = vld [vmem:[%s0 + $0x14] sm:$0xf]
  %v24 = vld [vmem:[%s0 + $0x18] sm:$0xf]
  %v25 = vld [vmem:[%s0 + $0x1c] sm:$0xf]
  %v26 = vld [vmem:[%s0 + $0x20] sm:$0xf]
  %v27 = vld [vmem:[%s0 + $0x24] sm:$0xf]
  %v28 = vld [vmem:[%s0 + $0x28] sm:$0xf]
  %v29 = vld [vmem:[%s0 + $0x2c] sm:$0xf]
  %v30 = vld [vmem:[%s0 + $0x30] sm:$0xf]
  %v31 = vld [vmem:[%s0 + $0x34] sm:$0xf]
  %v32 = vld [vmem:[%s0 + $0x38] sm:$0xf]
  %v33 = vld [vmem:[%s0 + $0x3c] sm:$0xf]
  %v34 = vld [vmem:[%s0 + $0x40] sm:$0xf]
  %v35 = vld [vmem:[%s0 + $0x44] sm:$0xf]
  %v36 = vld [vmem:[%s0 + $0x48] sm:$0xf]
  %v37 = vld [vmem:[%s0 + $0x4c] sm:$0xf]
  %v38 = vld [vmem:[%s0 + $0x50] sm:$0xf]
  %v39 = vld [vmem:[%s0 + $0x54] sm:$0xf]
  %v40 = vld [vmem:[%s0 + $0x58] sm:$0xf]
  %v41 = vld [vmem:[%s0 + $0x5c] sm:$0xf]
  %v42 = vld [vmem:[%s0 + $0x60] sm:$0xf]
  %v43 = vld [vmem:[%s0 + $0x64] sm:$0xf]
  %v44 = vld [vmem:[%s0 + $0x68] sm:$0xf]
  %v45 = vld [vmem:[%s0 + $0x6c] sm:$0xf]
  %v46 = vld [vmem:[%s0 + $0x70] sm:$0xf]
  %v47 = vld [vmem:[%s0 + $0x74] sm:$0xf]
  %v48 = vld [vmem:[%s0 + $0x78] sm:$0xf]
  %v49 = vld [vmem:[%s0 + $0x7c] sm:$0xf]
  %v50 = vld [vmem:[%s0 + $0x80] sm:$0xf]
  %v51 = vld [vmem:[%s0 + $0x84] sm:$0xf]
  %v52 = vld [vmem:[%s0 + $0x88] sm:$0xf]
  %v53 = vld [vmem:[%s0 + $0x8c] sm:$0xf]
  %v54 = vld [vmem:[%s0 + $0x90] sm:$0xf]
  %v55 = vld [vmem:[%s0 + $0x94] sm:$0xf]
  %v56 = vld [vmem:[%s0 + $0x98] sm:$0xf]
  %v57 = vld [vmem:[%s0 + $0x9c] sm:$0xf]
  %v58 = vld [vmem:[%s0 + $0xa0] sm:$0xf]
  %v59 = vld [vmem:[%s0 + $0xa4] sm:$0xf]
  %v60 = vld [vmem:[%s0 + $0xa8] sm:$0xf]
  %v61 = vld [vmem:[%s0 + $0xac] sm:$0xf]
  %v62 = vld [vmem:[%s0 + $0xb0] sm:$0xf]
  %v63 = vld [vmem:[%s0 + $0xb4] sm:$0xf]
  %v64 = vld [vmem:[%s0 + $0xb8] sm:$0xf]
  %v65 = vld [vmem:[%s0 + $0xbc] sm:$0xf]
  %v66 = vld [vmem:[%s0 + $0xc0] sm:$0xf]
  %v67 = vld [vmem:[%s0 + $0xc4] sm:$0xf]
  %v68 = vld [vmem:[%s0 + $0xc8] sm:$0xf]
  %v69 = vld [vmem:[%s0 + $0xcc] sm:$0xf]
  %v70 = vld [vmem:[%s0 + $0xd0] sm:$0xf]
  %v71 = vld [vmem:[%s0 + $0xd4] sm:$0xf]
  %v72 = vld [vmem:[%s0 + $0xd8] sm:$0xf]
  %v73 = vld [vmem:[%s0 + $0xdc] sm:$0xf]
  %v74 = vld [vmem:[%s0 + $0xe0] sm:$0xf]
  %v75 = vld [vmem:[%s0 + $0xe4] sm:$0xf]
  %v76 = vld [vmem:[%s0 + $0xe8] sm:$0xf]
  %v77 = vld [vmem:[%s0 + $0xec] sm:$0xf]
  %v78 = vld [vmem:[%s0 + $0xf0] sm:$0xf]
  %v79 = vld [vmem:[%s0 + $0xf4] sm:$0xf]
  %v80 = vld [vmem:[%s0 + $0xf8] sm:$0xf]
  %v81 = vld [vmem:[%s0 + $0xfc] sm:$0xf]
  %v82 = vld [vmem:[%s1] sm:$0xf]
  %v83 = vld [vmem:[%s1 + $0x4] sm:$0xf]
  %v84 = vld [vmem:[%s1 + $0x8] sm:$0xf]
  %v85 = vld [vmem:[%s1 + $0xc] sm:$0xf]
  %v86 = vld [vmem:[%s1 + $0x10] sm:$0xf]
  %v87 = vld [vmem:[%s1 + $0x14] sm:$0xf]
  %v88 = vld [vmem:[%s1 + $0x18] sm:$0xf]
  %v89 = vld [vmem:[%s1 + $0x1c] sm:$0xf]
  %v90 = vld [vmem:[%s1 + $0x20] sm:$0xf]
  %v91 = vld [vmem:[%s1 + $0x24] sm:$0xf]
  %v92 = vld [vmem:[%s1 + $0x28] sm:$0xf]
  %v93 = vld [vmem:[%s1 + $0x2c] sm:$0xf]
  %v94 = vld [vmem:[%s1 + $0x30] sm:$0xf]
  %v95 = vld [vmem:[%s1 + $0x34] sm:$0xf]
  %v96 = vld [vmem:[%s1 + $0x38] sm:$0xf]
  %v97 = vld [vmem:[%s1 + $0x3c] sm:$0xf]
  %v162 = vunpack.c.l.b16 %v18
  %v163 = vunpack.c.l.b16 %v19
  %v164 = vunpack.c.l.b16 %v20
  %v165 = vunpack.c.l.b16 %v21
  %v166 = vunpack.c.l.b16 %v22
  %v167 = vunpack.c.l.b16 %v23
  %v168 = vunpack.c.l.b16 %v24
  %v169 = vunpack.c.l.b16 %v25
  %v170 = vunpack.c.l.b16 %v26
  %v171 = vunpack.c.l.b16 %v27
  %v172 = vunpack.c.l.b16 %v28
  %v173 = vunpack.c.l.b16 %v29
  %v174 = vunpack.c.l.b16 %v30
  %v175 = vunpack.c.l.b16 %v31
  %v176 = vunpack.c.l.b16 %v32
  %v177 = vunpack.c.l.b16 %v33
  %v178 = vunpack.c.l.b16 %v34
  %v179 = vunpack.c.l.b16 %v35
  %v180 = vunpack.c.l.b16 %v36
  %v181 = vunpack.c.l.b16 %v37
  %v182 = vunpack.c.l.b16 %v38
  %v183 = vunpack.c.l.b16 %v39
  %v184 = vunpack.c.l.b16 %v40
  %v185 = vunpack.c.l.b16 %v41
  %v186 = vunpack.c.l.b16 %v42
  %v187 = vunpack.c.l.b16 %v43
  %v188 = vunpack.c.l.b16 %v44
  %v189 = vunpack.c.l.b16 %v45
  %v190 = vunpack.c.l.b16 %v46
  %v191 = vunpack.c.l.b16 %v47
  %v192 = vunpack.c.l.b16 %v48
  %v193 = vunpack.c.l.b16 %v49
  %v194 = vunpack.c.l.b16 %v50
  %v195 = vunpack.c.l.b16 %v51
  %v196 = vunpack.c.l.b16 %v52
  %v197 = vunpack.c.l.b16 %v53
  %v198 = vunpack.c.l.b16 %v54
  %v199 = vunpack.c.l.b16 %v55
  %v200 = vunpack.c.l.b16 %v56
  %v201 = vunpack.c.l.b16 %v57
  %v202 = vunpack.c.l.b16 %v58
  %v203 = vunpack.c.l.b16 %v59
  %v204 = vunpack.c.l.b16 %v60
  %v205 = vunpack.c.l.b16 %v61
  %v206 = vunpack.c.l.b16 %v62
  %v207 = vunpack.c.l.b16 %v63
  %v208 = vunpack.c.l.b16 %v64
  %v209 = vunpack.c.l.b16 %v65
  %v210 = vunpack.c.l.b16 %v66
  %v211 = vunpack.c.l.b16 %v67
  %v212 = vunpack.c.l.b16 %v68
  %v213 = vunpack.c.l.b16 %v69
  %v214 = vunpack.c.l.b16 %v70
  %v215 = vunpack.c.l.b16 %v71
  %v216 = vunpack.c.l.b16 %v72
  %v217 = vunpack.c.l.b16 %v73
  %v218 = vunpack.c.l.b16 %v74
  %v219 = vunpack.c.l.b16 %v75
  %v220 = vunpack.c.l.b16 %v76
  %v221 = vunpack.c.l.b16 %v77
  %v222 = vunpack.c.l.b16 %v78
  %v223 = vunpack.c.l.b16 %v79
  %v224 = vunpack.c.l.b16 %v80
  %v225 = vunpack.c.l.b16 %v81
  %v226 = vpack.c.b16 %v163, %v162
  %v227 = vpack.c.b16 %v165, %v164
  %v228 = vpack.c.b16 %v167, %v166
  %v229 = vpack.c.b16 %v169, %v168
  %v230 = vpack.c.b16 %v171, %v170
  %v231 = vpack.c.b16 %v173, %v172
  %v232 = vpack.c.b16 %v175, %v174
  %v233 = vpack.c.b16 %v177, %v176
  %v234 = vpack.c.b16 %v179, %v178
  %v235 = vpack.c.b16 %v181, %v180
  %v236 = vpack.c.b16 %v183, %v182
  %v237 = vpack.c.b16 %v185, %v184
  %v238 = vpack.c.b16 %v187, %v186
  %v239 = vpack.c.b16 %v189, %v188
  %v240 = vpack.c.b16 %v191, %v190
  %v241 = vpack.c.b16 %v193, %v192
  %v242 = vpack.c.b16 %v195, %v194
  %v243 = vpack.c.b16 %v197, %v196
  %v244 = vpack.c.b16 %v199, %v198
  %v245 = vpack.c.b16 %v201, %v200
  %v246 = vpack.c.b16 %v203, %v202
  %v247 = vpack.c.b16 %v205, %v204
  %v248 = vpack.c.b16 %v207, %v206
  %v249 = vpack.c.b16 %v209, %v208
  %v250 = vpack.c.b16 %v211, %v210
  %v251 = vpack.c.b16 %v213, %v212
  %v252 = vpack.c.b16 %v215, %v214
  %v253 = vpack.c.b16 %v217, %v216
  %v254 = vpack.c.b16 %v219, %v218
  %v255 = vpack.c.b16 %v221, %v220
  %v256 = vpack.c.b16 %v223, %v222
  %v257 = vpack.c.b16 %v225, %v224
  %v306 = vunpack.c.l.b16 %v82
  %v307 = vunpack.c.l.b16 %v83
  %v308 = vunpack.c.l.b16 %v84
  %v309 = vunpack.c.l.b16 %v85
  %v310 = vunpack.c.l.b16 %v86
  %v311 = vunpack.c.l.b16 %v87
  %v312 = vunpack.c.l.b16 %v88
  %v313 = vunpack.c.l.b16 %v89
  %v314 = vunpack.c.l.b16 %v90
  %v315 = vunpack.c.l.b16 %v91
  %v316 = vunpack.c.l.b16 %v92
  %v317 = vunpack.c.l.b16 %v93
  %v318 = vunpack.c.l.b16 %v94
  %v319 = vunpack.c.l.b16 %v95
  %v320 = vunpack.c.l.b16 %v96
  %v321 = vunpack.c.l.b16 %v97
  %v322 = vpack.c.b16 %v307, %v306
  %v323 = vpack.c.b16 %v309, %v308
  %v324 = vpack.c.b16 %v311, %v310
  %v325 = vpack.c.b16 %v313, %v312
  %v326 = vpack.c.b16 %v315, %v314
  %v327 = vpack.c.b16 %v317, %v316
  %v328 = vpack.c.b16 %v319, %v318
  %v329 = vpack.c.b16 %v321, %v320
  %338 = vmatprep.subr.bf16.mxu0 0
  %339 = vmatpush1.bf16.msra.mxu0 %v322
  %340 = vmatprep.subr.bf16.mxu0 0
  %341 = vmatpush1.bf16.msra.mxu0 %v323
  %342 = vmatprep.subr.bf16.mxu0 0
  %343 = vmatpush1.bf16.msra.mxu0 %v324
  %344 = vmatprep.subr.bf16.mxu0 0
  %345 = vmatpush1.bf16.msra.mxu0 %v325
  %346 = vmatprep.subr.bf16.mxu0 0
  %347 = vmatpush1.bf16.msra.mxu0 %v326
  %348 = vmatprep.subr.bf16.mxu0 0
  %349 = vmatpush1.bf16.msra.mxu0 %v327
  %350 = vmatprep.subr.bf16.mxu0 0
  %351 = vmatpush1.bf16.msra.mxu0 %v328
  %352 = vmatprep.subr.bf16.mxu0 0
  %353 = vmatpush1.bf16.msra.mxu0 %v329
  %354 = vmatprep.subr.bf16.mxu0 0
  %355 = vmatpush1.bf16.msra.mxu0 0
  %356 = vmatprep.subr.bf16.mxu0 0
  %357 = vmatpush1.bf16.msra.mxu0 0
  %358 = vmatprep.subr.bf16.mxu0 0
  %359 = vmatpush1.bf16.msra.mxu0 0
  %360 = vmatprep.subr.bf16.mxu0 0
  %361 = vmatpush1.bf16.msra.mxu0 0
  %362 = vmatprep.subr.bf16.mxu0 0
  %363 = vmatpush1.bf16.msra.mxu0 0
  %364 = vmatprep.subr.bf16.mxu0 0
  %365 = vmatpush1.bf16.msra.mxu0 0
  %366 = vmatprep.subr.bf16.mxu0 0
  %367 = vmatpush1.bf16.msra.mxu0 0
  %368 = vmatprep.subr.bf16.mxu0 0
  %369 = vmatpush1.bf16.msra.mxu0 0
  %370 = vmatprep.mubr.bf16.mxu0 0
  %371 = vmatmul.mubr.bf16.gmra.mrb[0].mxu0 %v226
  %v372 = vpop.f32.mrb[0].mxu0
  %v373 = vadd.f32 0.0, %v372
  %v374 = vpop.f32.mrb[0].mxu0
  %v375 = vpop.f32.mrb[0].mxu0
  %v376 = vadd.f32 0.0, %v375
  %v377 = vpop.f32.mrb[0].mxu0
  %378 = vmatprep.mubr.bf16.mxu0 0
  %379 = vmatmul.mubr.bf16.gmra.mrb[0].mxu0 %v227
  %v380 = vpop.f32.mrb[0].mxu0
  %v381 = vadd.f32 0.0, %v380
  %v382 = vpop.f32.mrb[0].mxu0
  %v383 = vpop.f32.mrb[0].mxu0
  %v384 = vadd.f32 0.0, %v383
  %v385 = vpop.f32.mrb[0].mxu0
  %386 = vmatprep.mubr.bf16.mxu0 0
  %387 = vmatmul.mubr.bf16.gmra.mrb[0].mxu0 %v228
  %v388 = vpop.f32.mrb[0].mxu0
  %v389 = vadd.f32 0.0, %v388
  %v390 = vpop.f32.mrb[0].mxu0
  %v391 = vpop.f32.mrb[0].mxu0
  %v392 = vadd.f32 0.0, %v391
  %v393 = vpop.f32.mrb[0].mxu0
  %394 = vmatprep.mubr.bf16.mxu0 0
  %395 = vmatmul.mubr.bf16.gmra.mrb[0].mxu0 %v229
  %v396 = vpop.f32.mrb[0].mxu0
  %v397 = vadd.f32 0.0, %v396
  %v398 = vpop.f32.mrb[0].mxu0
  %v399 = vpop.f32.mrb[0].mxu0
  %v400 = vadd.f32 0.0, %v399
  %v401 = vpop.f32.mrb[0].mxu0
  %402 = vmatprep.mubr.bf16.mxu0 0
  %403 = vmatmul.mubr.bf16.gmra.mrb[0].mxu0 %v230
  %v404 = vpop.f32.mrb[0].mxu0
  %v405 = vadd.f32 0.0, %v404
  %v406 = vpop.f32.mrb[0].mxu0
  %v407 = vpop.f32.mrb[0].mxu0
  %v408 = vadd.f32 0.0, %v407
  %v409 = vpop.f32.mrb[0].mxu0
  %410 = vmatprep.mubr.bf16.mxu0 0
  %411 = vmatmul.mubr.bf16.gmra.mrb[0].mxu0 %v231
  %v412 = vpop.f32.mrb[0].mxu0
  %v413 = vadd.f32 0.0, %v412
  %v414 = vpop.f32.mrb[0].mxu0
  %v415 = vpop.f32.mrb[0].mxu0
  %v416 = vadd.f32 0.0, %v415
  %v417 = vpop.f32.mrb[0].mxu0
  %418 = vmatprep.mubr.bf16.mxu0 0
  %419 = vmatmul.mubr.bf16.gmra.mrb[0].mxu0 %v232
  %v420 = vpop.f32.mrb[0].mxu0
  %v421 = vadd.f32 0.0, %v420
  %v422 = vpop.f32.mrb[0].mxu0
  %v423 = vpop.f32.mrb[0].mxu0
  %v424 = vadd.f32 0.0, %v423
  %v425 = vpop.f32.mrb[0].mxu0
  %426 = vmatprep.mubr.bf16.mxu0 0
  %427 = vmatmul.mubr.bf16.gmra.mrb[0].mxu0 %v233
  %v428 = vpop.f32.mrb[0].mxu0
  %v429 = vadd.f32 0.0, %v428
  %v430 = vpop.f32.mrb[0].mxu0
  %v431 = vpop.f32.mrb[0].mxu0
  %v432 = vadd.f32 0.0, %v431
  %v433 = vpop.f32.mrb[0].mxu0
  %434 = vmatprep.mubr.bf16.mxu0 0
  %435 = vmatmul.mubr.bf16.gmra.mrb[0].mxu0 %v234
  %v436 = vpop.f32.mrb[0].mxu0
  %v437 = vadd.f32 0.0, %v436
  %v438 = vpop.f32.mrb[0].mxu0
  %v439 = vpop.f32.mrb[0].mxu0
  %v440 = vadd.f32 0.0, %v439
  %v441 = vpop.f32.mrb[0].mxu0
  %442 = vmatprep.mubr.bf16.mxu0 0
  %443 = vmatmul.mubr.bf16.gmra.mrb[0].mxu0 %v235
  %v444 = vpop.f32.mrb[0].mxu0
  %v445 = vadd.f32 0.0, %v444
  %v446 = vpop.f32.mrb[0].mxu0
  %v447 = vpop.f32.mrb[0].mxu0
  %v448 = vadd.f32 0.0, %v447
  %v449 = vpop.f32.mrb[0].mxu0
  %450 = vmatprep.mubr.bf16.mxu0 0
  %451 = vmatmul.mubr.bf16.gmra.mrb[0].mxu0 %v236
  %v452 = vpop.f32.mrb[0].mxu0
  %v453 = vadd.f32 0.0, %v452
  %v454 = vpop.f32.mrb[0].mxu0
  %v455 = vpop.f32.mrb[0].mxu0
  %v456 = vadd.f32 0.0, %v455
  %v457 = vpop.f32.mrb[0].mxu0
  %458 = vmatprep.mubr.bf16.mxu0 0
  %459 = vmatmul.mubr.bf16.gmra.mrb[0].mxu0 %v237
  %v460 = vpop.f32.mrb[0].mxu0
  %v461 = vadd.f32 0.0, %v460
  %v462 = vpop.f32.mrb[0].mxu0
  %v463 = vpop.f32.mrb[0].mxu0
  %v464 = vadd.f32 0.0, %v463
  %v465 = vpop.f32.mrb[0].mxu0
  %466 = vmatprep.mubr.bf16.mxu0 0
  %467 = vmatmul.mubr.bf16.gmra.mrb[0].mxu0 %v238
  %v468 = vpop.f32.mrb[0].mxu0
  %v469 = vadd.f32 0.0, %v468
  %v470 = vpop.f32.mrb[0].mxu0
  %v471 = vpop.f32.mrb[0].mxu0
  %v472 = vadd.f32 0.0, %v471
  %v473 = vpop.f32.mrb[0].mxu0
  %474 = vmatprep.mubr.bf16.mxu0 0
  %475 = vmatmul.mubr.bf16.gmra.mrb[0].mxu0 %v239
  %v476 = vpop.f32.mrb[0].mxu0
  %v477 = vadd.f32 0.0, %v476
  %v478 = vpop.f32.mrb[0].mxu0
  %v479 = vpop.f32.mrb[0].mxu0
  %v480 = vadd.f32 0.0, %v479
  %v481 = vpop.f32.mrb[0].mxu0
  %482 = vmatprep.mubr.bf16.mxu0 0
  %483 = vmatmul.mubr.bf16.gmra.mrb[0].mxu0 %v240
  %v484 = vpop.f32.mrb[0].mxu0
  %v485 = vadd.f32 0.0, %v484
  %v486 = vpop.f32.mrb[0].mxu0
  %v487 = vpop.f32.mrb[0].mxu0
  %v488 = vadd.f32 0.0, %v487
  %v489 = vpop.f32.mrb[0].mxu0
  %490 = vmatprep.mubr.bf16.mxu0 0
  %491 = vmatmul.mubr.bf16.gmra.mrb[0].mxu0 %v241
  %v492 = vpop.f32.mrb[0].mxu0
  %v493 = vadd.f32 0.0, %v492
  %v494 = vpop.f32.mrb[0].mxu0
  %v495 = vpop.f32.mrb[0].mxu0
  %v496 = vadd.f32 0.0, %v495
  %v497 = vpop.f32.mrb[0].mxu0
  %498 = vmatprep.mubr.bf16.mxu0 0
  %499 = vmatmul.mubr.bf16.gmra.mrb[0].mxu0 %v242
  %v500 = vpop.f32.mrb[0].mxu0
  %v501 = vadd.f32 0.0, %v500
  %v502 = vpop.f32.mrb[0].mxu0
  %v503 = vpop.f32.mrb[0].mxu0
  %v504 = vadd.f32 0.0, %v503
  %v505 = vpop.f32.mrb[0].mxu0
  %506 = vmatprep.mubr.bf16.mxu0 0
  %507 = vmatmul.mubr.bf16.gmra.mrb[0].mxu0 %v243
  %v508 = vpop.f32.mrb[0].mxu0
  %v509 = vadd.f32 0.0, %v508
  %v510 = vpop.f32.mrb[0].mxu0
  %v511 = vpop.f32.mrb[0].mxu0
  %v512 = vadd.f32 0.0, %v511
  %v513 = vpop.f32.mrb[0].mxu0
  %514 = vmatprep.mubr.bf16.mxu0 0
  %515 = vmatmul.mubr.bf16.gmra.mrb[0].mxu0 %v244
  %v516 = vpop.f32.mrb[0].mxu0
  %v517 = vadd.f32 0.0, %v516
  %v518 = vpop.f32.mrb[0].mxu0
  %v519 = vpop.f32.mrb[0].mxu0
  %v520 = vadd.f32 0.0, %v519
  %v521 = vpop.f32.mrb[0].mxu0
  %522 = vmatprep.mubr.bf16.mxu0 0
  %523 = vmatmul.mubr.bf16.gmra.mrb[0].mxu0 %v245
  %v524 = vpop.f32.mrb[0].mxu0
  %v525 = vadd.f32 0.0, %v524
  %v526 = vpop.f32.mrb[0].mxu0
  %v527 = vpop.f32.mrb[0].mxu0
  %v528 = vadd.f32 0.0, %v527
  %v529 = vpop.f32.mrb[0].mxu0
  %530 = vmatprep.mubr.bf16.mxu0 0
  %531 = vmatmul.mubr.bf16.gmra.mrb[0].mxu0 %v246
  %v532 = vpop.f32.mrb[0].mxu0
  %v533 = vadd.f32 0.0, %v532
  %v534 = vpop.f32.mrb[0].mxu0
  %v535 = vpop.f32.mrb[0].mxu0
  %v536 = vadd.f32 0.0, %v535
  %v537 = vpop.f32.mrb[0].mxu0
  %538 = vmatprep.mubr.bf16.mxu0 0
  %539 = vmatmul.mubr.bf16.gmra.mrb[0].mxu0 %v247
  %v540 = vpop.f32.mrb[0].mxu0
  %v541 = vadd.f32 0.0, %v540
  %v542 = vpop.f32.mrb[0].mxu0
  %v543 = vpop.f32.mrb[0].mxu0
  %v544 = vadd.f32 0.0, %v543
  %v545 = vpop.f32.mrb[0].mxu0
  %546 = vmatprep.mubr.bf16.mxu0 0
  %547 = vmatmul.mubr.bf16.gmra.mrb[0].mxu0 %v248
  %v548 = vpop.f32.mrb[0].mxu0
  %v549 = vadd.f32 0.0, %v548
  %v550 = vpop.f32.mrb[0].mxu0
  %v551 = vpop.f32.mrb[0].mxu0
  %v552 = vadd.f32 0.0, %v551
  %v553 = vpop.f32.mrb[0].mxu0
  %554 = vmatprep.mubr.bf16.mxu0 0
  %555 = vmatmul.mubr.bf16.gmra.mrb[0].mxu0 %v249
  %v556 = vpop.f32.mrb[0].mxu0
  %v557 = vadd.f32 0.0, %v556
  %v558 = vpop.f32.mrb[0].mxu0
  %v559 = vpop.f32.mrb[0].mxu0
  %v560 = vadd.f32 0.0, %v559
  %v561 = vpop.f32.mrb[0].mxu0
  %562 = vmatprep.mubr.bf16.mxu0 0
  %563 = vmatmul.mubr.bf16.gmra.mrb[0].mxu0 %v250
  %v564 = vpop.f32.mrb[0].mxu0
  %v565 = vadd.f32 0.0, %v564
  %v566 = vpop.f32.mrb[0].mxu0
  %v567 = vpop.f32.mrb[0].mxu0
  %v568 = vadd.f32 0.0, %v567
  %v569 = vpop.f32.mrb[0].mxu0
  %570 = vmatprep.mubr.bf16.mxu0 0
  %571 = vmatmul.mubr.bf16.gmra.mrb[0].mxu0 %v251
  %v572 = vpop.f32.mrb[0].mxu0
  %v573 = vadd.f32 0.0, %v572
  %v574 = vpop.f32.mrb[0].mxu0
  %v575 = vpop.f32.mrb[0].mxu0
  %v576 = vadd.f32 0.0, %v575
  %v577 = vpop.f32.mrb[0].mxu0
  %578 = vmatprep.mubr.bf16.mxu0 0
  %579 = vmatmul.mubr.bf16.gmra.mrb[0].mxu0 %v252
  %v580 = vpop.f32.mrb[0].mxu0
  %v581 = vadd.f32 0.0, %v580
  %v582 = vpop.f32.mrb[0].mxu0
  %v583 = vpop.f32.mrb[0].mxu0
  %v584 = vadd.f32 0.0, %v583
  %v585 = vpop.f32.mrb[0].mxu0
  %586 = vmatprep.mubr.bf16.mxu0 0
  %587 = vmatmul.mubr.bf16.gmra.mrb[0].mxu0 %v253
  %v588 = vpop.f32.mrb[0].mxu0
  %v589 = vadd.f32 0.0, %v588
  %v590 = vpop.f32.mrb[0].mxu0
  %v591 = vpop.f32.mrb[0].mxu0
  %v592 = vadd.f32 0.0, %v591
  %v593 = vpop.f32.mrb[0].mxu0
  %594 = vmatprep.mubr.bf16.mxu0 0
  %595 = vmatmul.mubr.bf16.gmra.mrb[0].mxu0 %v254
  %v596 = vpop.f32.mrb[0].mxu0
  %v597 = vadd.f32 0.0, %v596
  %v598 = vpop.f32.mrb[0].mxu0
  %v599 = vpop.f32.mrb[0].mxu0
  %v600 = vadd.f32 0.0, %v599
  %v601 = vpop.f32.mrb[0].mxu0
  %602 = vmatprep.mubr.bf16.mxu0 0
  %603 = vmatmul.mubr.bf16.gmra.mrb[0].mxu0 %v255
  %v604 = vpop.f32.mrb[0].mxu0
  %v605 = vadd.f32 0.0, %v604
  %v606 = vpop.f32.mrb[0].mxu0
  %v607 = vpop.f32.mrb[0].mxu0
  %v608 = vadd.f32 0.0, %v607
  %v609 = vpop.f32.mrb[0].mxu0
  %610 = vmatprep.mubr.bf16.mxu0 0
  %611 = vmatmul.mubr.bf16.gmra.mrb[0].mxu0 %v256
  %v612 = vpop.f32.mrb[0].mxu0
  %v613 = vadd.f32 0.0, %v612
  %v614 = vpop.f32.mrb[0].mxu0
  %v615 = vpop.f32.mrb[0].mxu0
  %v616 = vadd.f32 0.0, %v615
  %v617 = vpop.f32.mrb[0].mxu0
  %618 = vmatprep.mubr.bf16.mxu0 0
  %619 = vmatmul.mubr.bf16.gmra.mrb[0].mxu0 %v257
  %v620 = vpop.f32.mrb[0].mxu0
  %v621 = vadd.f32 0.0, %v620
  %v622 = vpop.f32.mrb[0].mxu0
  %v623 = vpop.f32.mrb[0].mxu0
  %v624 = vadd.f32 0.0, %v623
  %v625 = vpop.f32.mrb[0].mxu0
  %626 = vdwg.mxu0
  %vm627 = vcmask 130048
  %v628 = vsel %vm627, %v373, 0.0
  %v629 = vsel %vm627, %v376, 0.0
  %v630 = vadd.f32 %v628, %v629
  %v631 = vsel %vm627, %v381, 0.0
  %v632 = vadd.f32 %v630, %v631
  %v633 = vsel %vm627, %v384, 0.0
  %v634 = vadd.f32 %v632, %v633
  %v635 = vsel %vm627, %v389, 0.0
  %v636 = vadd.f32 %v634, %v635
  %v637 = vsel %vm627, %v392, 0.0
  %v638 = vadd.f32 %v636, %v637
  %v639 = vsel %vm627, %v397, 0.0
  %v640 = vadd.f32 %v638, %v639
  %v641 = vsel %vm627, %v400, 0.0
  %v642 = vadd.f32 %v640, %v641
  %v643 = vsel %vm627, %v405, 0.0
  %v644 = vadd.f32 %v642, %v643
  %v645 = vsel %vm627, %v408, 0.0
  %v646 = vadd.f32 %v644, %v645
  %v647 = vsel %vm627, %v413, 0.0
  %v648 = vadd.f32 %v646, %v647
  %v649 = vsel %vm627, %v416, 0.0
  %v650 = vadd.f32 %v648, %v649
  %v651 = vsel %vm627, %v421, 0.0
  %v652 = vadd.f32 %v650, %v651
  %v653 = vsel %vm627, %v424, 0.0
  %v654 = vadd.f32 %v652, %v653
  %v655 = vsel %vm627, %v429, 0.0
  %v656 = vadd.f32 %v654, %v655
  %v657 = vsel %vm627, %v432, 0.0
  %v658 = vadd.f32 %v656, %v657
  %v659 = vsel %vm627, %v437, 0.0
  %v660 = vadd.f32 %v658, %v659
  %v661 = vsel %vm627, %v440, 0.0
  %v662 = vadd.f32 %v660, %v661
  %v663 = vsel %vm627, %v445, 0.0
  %v664 = vadd.f32 %v662, %v663
  %v665 = vsel %vm627, %v448, 0.0
  %v666 = vadd.f32 %v664, %v665
  %v667 = vsel %vm627, %v453, 0.0
  %v668 = vadd.f32 %v666, %v667
  %v669 = vsel %vm627, %v456, 0.0
  %v670 = vadd.f32 %v668, %v669
  %v671 = vsel %vm627, %v461, 0.0
  %v672 = vadd.f32 %v670, %v671
  %v673 = vsel %vm627, %v464, 0.0
  %v674 = vadd.f32 %v672, %v673
  %v675 = vsel %vm627, %v469, 0.0
  %v676 = vadd.f32 %v674, %v675
  %v677 = vsel %vm627, %v472, 0.0
  %v678 = vadd.f32 %v676, %v677
  %v679 = vsel %vm627, %v477, 0.0
  %v680 = vadd.f32 %v678, %v679
  %v681 = vsel %vm627, %v480, 0.0
  %v682 = vadd.f32 %v680, %v681
  %v683 = vsel %vm627, %v485, 0.0
  %v684 = vadd.f32 %v682, %v683
  %v685 = vsel %vm627, %v488, 0.0
  %v686 = vadd.f32 %v684, %v685
  %v687 = vsel %vm627, %v493, 0.0
  %v688 = vadd.f32 %v686, %v687
  %v689 = vsel %vm627, %v496, 0.0
  %v690 = vadd.f32 %v688, %v689
  %v691 = vsel %vm627, %v501, 0.0
  %v692 = vadd.f32 %v690, %v691
  %v693 = vsel %vm627, %v504, 0.0
  %v694 = vadd.f32 %v692, %v693
  %v695 = vsel %vm627, %v509, 0.0
  %v696 = vadd.f32 %v694, %v695
  %v697 = vsel %vm627, %v512, 0.0
  %v698 = vadd.f32 %v696, %v697
  %v699 = vsel %vm627, %v517, 0.0
  %v700 = vadd.f32 %v698, %v699
  %v701 = vsel %vm627, %v520, 0.0
  %v702 = vadd.f32 %v700, %v701
  %v703 = vsel %vm627, %v525, 0.0
  %v704 = vadd.f32 %v702, %v703
  %v705 = vsel %vm627, %v528, 0.0
  %v706 = vadd.f32 %v704, %v705
  %v707 = vsel %vm627, %v533, 0.0
  %v708 = vadd.f32 %v706, %v707
  %v709 = vsel %vm627, %v536, 0.0
  %v710 = vadd.f32 %v708, %v709
  %v711 = vsel %vm627, %v541, 0.0
  %v712 = vadd.f32 %v710, %v711
  %v713 = vsel %vm627, %v544, 0.0
  %v714 = vadd.f32 %v712, %v713
  %v715 = vsel %vm627, %v549, 0.0
  %v716 = vadd.f32 %v714, %v715
  %v717 = vsel %vm627, %v552, 0.0
  %v718 = vadd.f32 %v716, %v717
  %v719 = vsel %vm627, %v557, 0.0
  %v720 = vadd.f32 %v718, %v719
  %v721 = vsel %vm627, %v560, 0.0
  %v722 = vadd.f32 %v720, %v721
  %v723 = vsel %vm627, %v565, 0.0
  %v724 = vadd.f32 %v722, %v723
  %v725 = vsel %vm627, %v568, 0.0
  %v726 = vadd.f32 %v724, %v725
  %v727 = vsel %vm627, %v573, 0.0
  %v728 = vadd.f32 %v726, %v727
  %v729 = vsel %vm627, %v576, 0.0
  %v730 = vadd.f32 %v728, %v729
  %v731 = vsel %vm627, %v581, 0.0
  %v732 = vadd.f32 %v730, %v731
  %v733 = vsel %vm627, %v584, 0.0
  %v734 = vadd.f32 %v732, %v733
  %v735 = vsel %vm627, %v589, 0.0
  %v736 = vadd.f32 %v734, %v735
  %v737 = vsel %vm627, %v592, 0.0
  %v738 = vadd.f32 %v736, %v737
  %v739 = vsel %vm627, %v597, 0.0
  %v740 = vadd.f32 %v738, %v739
  %v741 = vsel %vm627, %v600, 0.0
  %v742 = vadd.f32 %v740, %v741
  %v743 = vsel %vm627, %v605, 0.0
  %v744 = vadd.f32 %v742, %v743
  %v745 = vsel %vm627, %v608, 0.0
  %v746 = vadd.f32 %v744, %v745
  %v747 = vsel %vm627, %v613, 0.0
  %v748 = vadd.f32 %v746, %v747
  %v749 = vsel %vm627, %v616, 0.0
  %v750 = vadd.f32 %v748, %v749
  %v751 = vsel %vm627, %v621, 0.0
  %v752 = vadd.f32 %v750, %v751
  %v753 = vsel %vm627, %v624, 0.0
  %v754 = vadd.f32 %v752, %v753
  %v755 = vrot.slane %v754, 4
  %v756 = vadd.f32 %v754, %v755
  %v757 = vrot.slane %v756, 2
  %v758 = vadd.f32 %v756, %v757
  %v759 = vrot.slane %v758, 1
  %v760 = vadd.f32 %v758, %v759
  %v761 = vrcp.pop 512.0
  %v762 = vmul.f32 %v760, %v761
  %v763 = vsub.f32 %v373, %v762
  %v764 = vsub.f32 %v376, %v762
  %v765 = vsub.f32 %v381, %v762
  %v766 = vsub.f32 %v384, %v762
  %v767 = vsub.f32 %v389, %v762
  %v768 = vsub.f32 %v392, %v762
  %v769 = vsub.f32 %v397, %v762
  %v770 = vsub.f32 %v400, %v762
  %v771 = vsub.f32 %v405, %v762
  %v772 = vsub.f32 %v408, %v762
  %v773 = vsub.f32 %v413, %v762
  %v774 = vsub.f32 %v416, %v762
  %v775 = vsub.f32 %v421, %v762
  %v776 = vsub.f32 %v424, %v762
  %v777 = vsub.f32 %v429, %v762
  %v778 = vsub.f32 %v432, %v762
  %v779 = vsub.f32 %v437, %v762
  %v780 = vsub.f32 %v440, %v762
  %v781 = vsub.f32 %v445, %v762
  %v782 = vsub.f32 %v448, %v762
  %v783 = vsub.f32 %v453, %v762
  %v784 = vsub.f32 %v456, %v762
  %v785 = vsub.f32 %v461, %v762
  %v786 = vsub.f32 %v464, %v762
  %v787 = vsub.f32 %v469, %v762
  %v788 = vsub.f32 %v472, %v762
  %v789 = vsub.f32 %v477, %v762
  %v790 = vsub.f32 %v480, %v762
  %v791 = vsub.f32 %v485, %v762
  %v792 = vsub.f32 %v488, %v762
  %v793 = vsub.f32 %v493, %v762
  %v794 = vsub.f32 %v496, %v762
  %v795 = vsub.f32 %v501, %v762
  %v796 = vsub.f32 %v504, %v762
  %v797 = vsub.f32 %v509, %v762
  %v798 = vsub.f32 %v512, %v762
  %v799 = vsub.f32 %v517, %v762
  %v800 = vsub.f32 %v520, %v762
  %v801 = vsub.f32 %v525, %v762
  %v802 = vsub.f32 %v528, %v762
  %v803 = vsub.f32 %v533, %v762
  %v804 = vsub.f32 %v536, %v762
  %v805 = vsub.f32 %v541, %v762
  %v806 = vsub.f32 %v544, %v762
  %v807 = vsub.f32 %v549, %v762
  %v808 = vsub.f32 %v552, %v762
  %v809 = vsub.f32 %v557, %v762
  %v810 = vsub.f32 %v560, %v762
  %v811 = vsub.f32 %v565, %v762
  %v812 = vsub.f32 %v568, %v762
  %v813 = vsub.f32 %v573, %v762
  %v814 = vsub.f32 %v576, %v762
  %v815 = vsub.f32 %v581, %v762
  %v816 = vsub.f32 %v584, %v762
  %v817 = vsub.f32 %v589, %v762
  %v818 = vsub.f32 %v592, %v762
  %v819 = vsub.f32 %v597, %v762
  %v820 = vsub.f32 %v600, %v762
  %v821 = vsub.f32 %v605, %v762
  %v822 = vsub.f32 %v608, %v762
  %v823 = vsub.f32 %v613, %v762
  %v824 = vsub.f32 %v616, %v762
  %v825 = vsub.f32 %v621, %v762
  %v826 = vsub.f32 %v624, %v762
  %v827 = vmul.f32 %v763, %v763
  %v828 = vmul.f32 %v764, %v764
  %v829 = vmul.f32 %v765, %v765
  %v830 = vmul.f32 %v766, %v766
  %v831 = vmul.f32 %v767, %v767
  %v832 = vmul.f32 %v768, %v768
  %v833 = vmul.f32 %v769, %v769
  %v834 = vmul.f32 %v770, %v770
  %v835 = vmul.f32 %v771, %v771
  %v836 = vmul.f32 %v772, %v772
  %v837 = vmul.f32 %v773, %v773
  %v838 = vmul.f32 %v774, %v774
  %v839 = vmul.f32 %v775, %v775
  %v840 = vmul.f32 %v776, %v776
  %v841 = vmul.f32 %v777, %v777
  %v842 = vmul.f32 %v778, %v778
  %v843 = vmul.f32 %v779, %v779
  %v844 = vmul.f32 %v780, %v780
  %v845 = vmul.f32 %v781, %v781
  %v846 = vmul.f32 %v782, %v782
  %v847 = vmul.f32 %v783, %v783
  %v848 = vmul.f32 %v784, %v784
  %v849 = vmul.f32 %v785, %v785
  %v850 = vmul.f32 %v786, %v786
  %v851 = vmul.f32 %v787, %v787
  %v852 = vmul.f32 %v788, %v788
  %v853 = vmul.f32 %v789, %v789
  %v854 = vmul.f32 %v790, %v790
  %v855 = vmul.f32 %v791, %v791
  %v856 = vmul.f32 %v792, %v792
  %v857 = vmul.f32 %v793, %v793
  %v858 = vmul.f32 %v794, %v794
  %v859 = vmul.f32 %v795, %v795
  %v860 = vmul.f32 %v796, %v796
  %v861 = vmul.f32 %v797, %v797
  %v862 = vmul.f32 %v798, %v798
  %v863 = vmul.f32 %v799, %v799
  %v864 = vmul.f32 %v800, %v800
  %v865 = vmul.f32 %v801, %v801
  %v866 = vmul.f32 %v802, %v802
  %v867 = vmul.f32 %v803, %v803
  %v868 = vmul.f32 %v804, %v804
  %v869 = vmul.f32 %v805, %v805
  %v870 = vmul.f32 %v806, %v806
  %v871 = vmul.f32 %v807, %v807
  %v872 = vmul.f32 %v808, %v808
  %v873 = vmul.f32 %v809, %v809
  %v874 = vmul.f32 %v810, %v810
  %v875 = vmul.f32 %v811, %v811
  %v876 = vmul.f32 %v812, %v812
  %v877 = vmul.f32 %v813, %v813
  %v878 = vmul.f32 %v814, %v814
  %v879 = vmul.f32 %v815, %v815
  %v880 = vmul.f32 %v816, %v816
  %v881 = vmul.f32 %v817, %v817
  %v882 = vmul.f32 %v818, %v818
  %v883 = vmul.f32 %v819, %v819
  %v884 = vmul.f32 %v820, %v820
  %v885 = vmul.f32 %v821, %v821
  %v886 = vmul.f32 %v822, %v822
  %v887 = vmul.f32 %v823, %v823
  %v888 = vmul.f32 %v824, %v824
  %v889 = vmul.f32 %v825, %v825
  %v890 = vmul.f32 %v826, %v826
  %v891 = vsel %vm627, %v827, 0.0
  %v892 = vsel %vm627, %v828, 0.0
  %v893 = vadd.f32 %v891, %v892
  %v894 = vsel %vm627, %v829, 0.0
  %v895 = vadd.f32 %v893, %v894
  %v896 = vsel %vm627, %v830, 0.0
  %v897 = vadd.f32 %v895, %v896
  %v898 = vsel %vm627, %v831, 0.0
  %v899 = vadd.f32 %v897, %v898
  %v900 = vsel %vm627, %v832, 0.0
  %v901 = vadd.f32 %v899, %v900
  %v902 = vsel %vm627, %v833, 0.0
  %v903 = vadd.f32 %v901, %v902
  %v904 = vsel %vm627, %v834, 0.0
  %v905 = vadd.f32 %v903, %v904
  %v906 = vsel %vm627, %v835, 0.0
  %v907 = vadd.f32 %v905, %v906
  %v908 = vsel %vm627, %v836, 0.0
  %v909 = vadd.f32 %v907, %v908
  %v910 = vsel %vm627, %v837, 0.0
  %v911 = vadd.f32 %v909, %v910
  %v912 = vsel %vm627, %v838, 0.0
  %v913 = vadd.f32 %v911, %v912
  %v914 = vsel %vm627, %v839, 0.0
  %v915 = vadd.f32 %v913, %v914
  %v916 = vsel %vm627, %v840, 0.0
  %v917 = vadd.f32 %v915, %v916
  %v918 = vsel %vm627, %v841, 0.0
  %v919 = vadd.f32 %v917, %v918
  %v920 = vsel %vm627, %v842, 0.0
  %v921 = vadd.f32 %v919, %v920
  %v922 = vsel %vm627, %v843, 0.0
  %v923 = vadd.f32 %v921, %v922
  %v924 = vsel %vm627, %v844, 0.0
  %v925 = vadd.f32 %v923, %v924
  %v926 = vsel %vm627, %v845, 0.0
  %v927 = vadd.f32 %v925, %v926
  %v928 = vsel %vm627, %v846, 0.0
  %v929 = vadd.f32 %v927, %v928
  %v930 = vsel %vm627, %v847, 0.0
  %v931 = vadd.f32 %v929, %v930
  %v932 = vsel %vm627, %v848, 0.0
  %v933 = vadd.f32 %v931, %v932
  %v934 = vsel %vm627, %v849, 0.0
  %v935 = vadd.f32 %v933, %v934
  %v936 = vsel %vm627, %v850, 0.0
  %v937 = vadd.f32 %v935, %v936
  %v938 = vsel %vm627, %v851, 0.0
  %v939 = vadd.f32 %v937, %v938
  %v940 = vsel %vm627, %v852, 0.0
  %v941 = vadd.f32 %v939, %v940
  %v942 = vsel %vm627, %v853, 0.0
  %v943 = vadd.f32 %v941, %v942
  %v944 = vsel %vm627, %v854, 0.0
  %v945 = vadd.f32 %v943, %v944
  %v946 = vsel %vm627, %v855, 0.0
  %v947 = vadd.f32 %v945, %v946
  %v948 = vsel %vm627, %v856, 0.0
  %v949 = vadd.f32 %v947, %v948
  %v950 = vsel %vm627, %v857, 0.0
  %v951 = vadd.f32 %v949, %v950
  %v952 = vsel %vm627, %v858, 0.0
  %v953 = vadd.f32 %v951, %v952
  %v954 = vsel %vm627, %v859, 0.0
  %v955 = vadd.f32 %v953, %v954
  %v956 = vsel %vm627, %v860, 0.0
  %v957 = vadd.f32 %v955, %v956
  %v958 = vsel %vm627, %v861, 0.0
  %v959 = vadd.f32 %v957, %v958
  %v960 = vsel %vm627, %v862, 0.0
  %v961 = vadd.f32 %v959, %v960
  %v962 = vsel %vm627, %v863, 0.0
  %v963 = vadd.f32 %v961, %v962
  %v964 = vsel %vm627, %v864, 0.0
  %v965 = vadd.f32 %v963, %v964
  %v966 = vsel %vm627, %v865, 0.0
  %v967 = vadd.f32 %v965, %v966
  %v968 = vsel %vm627, %v866, 0.0
  %v969 = vadd.f32 %v967, %v968
  %v970 = vsel %vm627, %v867, 0.0
  %v971 = vadd.f32 %v969, %v970
  %v972 = vsel %vm627, %v868, 0.0
  %v973 = vadd.f32 %v971, %v972
  %v974 = vsel %vm627, %v869, 0.0
  %v975 = vadd.f32 %v973, %v974
  %v976 = vsel %vm627, %v870, 0.0
  %v977 = vadd.f32 %v975, %v976
  %v978 = vsel %vm627, %v871, 0.0
  %v979 = vadd.f32 %v977, %v978
  %v980 = vsel %vm627, %v872, 0.0
  %v981 = vadd.f32 %v979, %v980
  %v982 = vsel %vm627, %v873, 0.0
  %v983 = vadd.f32 %v981, %v982
  %v984 = vsel %vm627, %v874, 0.0
  %v985 = vadd.f32 %v983, %v984
  %v986 = vsel %vm627, %v875, 0.0
  %v987 = vadd.f32 %v985, %v986
  %v988 = vsel %vm627, %v876, 0.0
  %v989 = vadd.f32 %v987, %v988
  %v990 = vsel %vm627, %v877, 0.0
  %v991 = vadd.f32 %v989, %v990
  %v992 = vsel %vm627, %v878, 0.0
  %v993 = vadd.f32 %v991, %v992
  %v994 = vsel %vm627, %v879, 0.0
  %v995 = vadd.f32 %v993, %v994
  %v996 = vsel %vm627, %v880, 0.0
  %v997 = vadd.f32 %v995, %v996
  %v998 = vsel %vm627, %v881, 0.0
  %v999 = vadd.f32 %v997, %v998
  %v1000 = vsel %vm627, %v882, 0.0
  %v1001 = vadd.f32 %v999, %v1000
  %v1002 = vsel %vm627, %v883, 0.0
  %v1003 = vadd.f32 %v1001, %v1002
  %v1004 = vsel %vm627, %v884, 0.0
  %v1005 = vadd.f32 %v1003, %v1004
  %v1006 = vsel %vm627, %v885, 0.0
  %v1007 = vadd.f32 %v1005, %v1006
  %v1008 = vsel %vm627, %v886, 0.0
  %v1009 = vadd.f32 %v1007, %v1008
  %v1010 = vsel %vm627, %v887, 0.0
  %v1011 = vadd.f32 %v1009, %v1010
  %v1012 = vsel %vm627, %v888, 0.0
  %v1013 = vadd.f32 %v1011, %v1012
  %v1014 = vsel %vm627, %v889, 0.0
  %v1015 = vadd.f32 %v1013, %v1014
  %v1016 = vsel %vm627, %v890, 0.0
  %v1017 = vadd.f32 %v1015, %v1016
  %v1018 = vrot.slane %v1017, 4
  %v1019 = vadd.f32 %v1017, %v1018
  %v1020 = vrot.slane %v1019, 2
  %v1021 = vadd.f32 %v1019, %v1020
  %v1022 = vrot.slane %v1021, 1
  %v1023 = vadd.f32 %v1021, %v1022
  %v1024 = vmul.f32 %v1023, %v761
  %v1025 = vld [vmem:[%s2] sm:$0x1]
  %v1026 = vadd.f32 %v1024, 1e-05
  %v1027 = vrsqrt.pop %v1026
  %v1028 = vmul.f32 %v1025, %v1027
  %v1030 = vlaneseq
  %v1031 = vshrl.u32 %v1030, 7
  %v1032 = vsub.s32 0, %v1031
  %v1033 = vrot.slane %v1028, %v1032
  %v1035 = vmul.f32 %v763, %v1033
  %v1036 = vmul.f32 %v764, %v1033
  %v1037 = vmul.f32 %v765, %v1033
  %v1038 = vmul.f32 %v766, %v1033
  %v1039 = vmul.f32 %v767, %v1033
  %v1040 = vmul.f32 %v768, %v1033
  %v1041 = vmul.f32 %v769, %v1033
  %v1042 = vmul.f32 %v770, %v1033
  %v1043 = vmul.f32 %v771, %v1033
  %v1044 = vmul.f32 %v772, %v1033
  %v1045 = vmul.f32 %v773, %v1033
  %v1046 = vmul.f32 %v774, %v1033
  %v1047 = vmul.f32 %v775, %v1033
  %v1048 = vmul.f32 %v776, %v1033
  %v1049 = vmul.f32 %v777, %v1033
  %v1050 = vmul.f32 %v778, %v1033
  %v1051 = vmul.f32 %v779, %v1033
  %v1052 = vmul.f32 %v780, %v1033
  %v1053 = vmul.f32 %v781, %v1033
  %v1054 = vmul.f32 %v782, %v1033
  %v1055 = vmul.f32 %v783, %v1033
  %v1056 = vmul.f32 %v784, %v1033
  %v1057 = vmul.f32 %v785, %v1033
  %v1058 = vmul.f32 %v786, %v1033
  %v1059 = vmul.f32 %v787, %v1033
  %v1060 = vmul.f32 %v788, %v1033
  %v1061 = vmul.f32 %v789, %v1033
  %v1062 = vmul.f32 %v790, %v1033
  %v1063 = vmul.f32 %v791, %v1033
  %v1064 = vmul.f32 %v792, %v1033
  %v1065 = vmul.f32 %v793, %v1033
  %v1066 = vmul.f32 %v794, %v1033
  %v1067 = vmul.f32 %v795, %v1033
  %v1068 = vmul.f32 %v796, %v1033
  %v1069 = vmul.f32 %v797, %v1033
  %v1070 = vmul.f32 %v798, %v1033
  %v1071 = vmul.f32 %v799, %v1033
  %v1072 = vmul.f32 %v800, %v1033
  %v1073 = vmul.f32 %v801, %v1033
  %v1074 = vmul.f32 %v802, %v1033
  %v1075 = vmul.f32 %v803, %v1033
  %v1076 = vmul.f32 %v804, %v1033
  %v1077 = vmul.f32 %v805, %v1033
  %v1078 = vmul.f32 %v806, %v1033
  %v1079 = vmul.f32 %v807, %v1033
  %v1080 = vmul.f32 %v808, %v1033
  %v1081 = vmul.f32 %v809, %v1033
  %v1082 = vmul.f32 %v810, %v1033
  %v1083 = vmul.f32 %v811, %v1033
  %v1084 = vmul.f32 %v812, %v1033
  %v1085 = vmul.f32 %v813, %v1033
  %v1086 = vmul.f32 %v814, %v1033
  %v1087 = vmul.f32 %v815, %v1033
  %v1088 = vmul.f32 %v816, %v1033
  %v1089 = vmul.f32 %v817, %v1033
  %v1090 = vmul.f32 %v818, %v1033
  %v1091 = vmul.f32 %v819, %v1033
  %v1092 = vmul.f32 %v820, %v1033
  %v1093 = vmul.f32 %v821, %v1033
  %v1094 = vmul.f32 %v822, %v1033
  %v1095 = vmul.f32 %v823, %v1033
  %v1096 = vmul.f32 %v824, %v1033
  %v1097 = vmul.f32 %v825, %v1033
  %v1098 = vmul.f32 %v826, %v1033
  %v1099 = vld [vmem:[%s3] sm:$0x1]
  %v1101 = vlaneseq
  %v1102 = vshrl.u32 %v1101, 7
  %v1103 = vsub.s32 0, %v1102
  %v1104 = vrot.slane %v1099, %v1103
  %v1106 = vadd.f32 %v1035, %v1104
  %v1107 = vadd.f32 %v1036, %v1104
  %v1108 = vadd.f32 %v1037, %v1104
  %v1109 = vadd.f32 %v1038, %v1104
  %v1110 = vadd.f32 %v1039, %v1104
  %v1111 = vadd.f32 %v1040, %v1104
  %v1112 = vadd.f32 %v1041, %v1104
  %v1113 = vadd.f32 %v1042, %v1104
  %v1114 = vadd.f32 %v1043, %v1104
  %v1115 = vadd.f32 %v1044, %v1104
  %v1116 = vadd.f32 %v1045, %v1104
  %v1117 = vadd.f32 %v1046, %v1104
  %v1118 = vadd.f32 %v1047, %v1104
  %v1119 = vadd.f32 %v1048, %v1104
  %v1120 = vadd.f32 %v1049, %v1104
  %v1121 = vadd.f32 %v1050, %v1104
  %v1122 = vadd.f32 %v1051, %v1104
  %v1123 = vadd.f32 %v1052, %v1104
  %v1124 = vadd.f32 %v1053, %v1104
  %v1125 = vadd.f32 %v1054, %v1104
  %v1126 = vadd.f32 %v1055, %v1104
  %v1127 = vadd.f32 %v1056, %v1104
  %v1128 = vadd.f32 %v1057, %v1104
  %v1129 = vadd.f32 %v1058, %v1104
  %v1130 = vadd.f32 %v1059, %v1104
  %v1131 = vadd.f32 %v1060, %v1104
  %v1132 = vadd.f32 %v1061, %v1104
  %v1133 = vadd.f32 %v1062, %v1104
  %v1134 = vadd.f32 %v1063, %v1104
  %v1135 = vadd.f32 %v1064, %v1104
  %v1136 = vadd.f32 %v1065, %v1104
  %v1137 = vadd.f32 %v1066, %v1104
  %v1138 = vadd.f32 %v1067, %v1104
  %v1139 = vadd.f32 %v1068, %v1104
  %v1140 = vadd.f32 %v1069, %v1104
  %v1141 = vadd.f32 %v1070, %v1104
  %v1142 = vadd.f32 %v1071, %v1104
  %v1143 = vadd.f32 %v1072, %v1104
  %v1144 = vadd.f32 %v1073, %v1104
  %v1145 = vadd.f32 %v1074, %v1104
  %v1146 = vadd.f32 %v1075, %v1104
  %v1147 = vadd.f32 %v1076, %v1104
  %v1148 = vadd.f32 %v1077, %v1104
  %v1149 = vadd.f32 %v1078, %v1104
  %v1150 = vadd.f32 %v1079, %v1104
  %v1151 = vadd.f32 %v1080, %v1104
  %v1152 = vadd.f32 %v1081, %v1104
  %v1153 = vadd.f32 %v1082, %v1104
  %v1154 = vadd.f32 %v1083, %v1104
  %v1155 = vadd.f32 %v1084, %v1104
  %v1156 = vadd.f32 %v1085, %v1104
  %v1157 = vadd.f32 %v1086, %v1104
  %v1158 = vadd.f32 %v1087, %v1104
  %v1159 = vadd.f32 %v1088, %v1104
  %v1160 = vadd.f32 %v1089, %v1104
  %v1161 = vadd.f32 %v1090, %v1104
  %v1162 = vadd.f32 %v1091, %v1104
  %v1163 = vadd.f32 %v1092, %v1104
  %v1164 = vadd.f32 %v1093, %v1104
  %v1165 = vadd.f32 %v1094, %v1104
  %v1166 = vadd.f32 %v1095, %v1104
  %v1167 = vadd.f32 %v1096, %v1104
  %v1168 = vadd.f32 %v1097, %v1104
  %v1169 = vadd.f32 %v1098, %v1104
  %vm1170 = vcmp.gt.f32.partialorder %v1106, 0.0
  %vm1171 = vcmp.gt.f32.partialorder %v1107, 0.0
  %vm1172 = vcmp.gt.f32.partialorder %v1108, 0.0
  %vm1173 = vcmp.gt.f32.partialorder %v1109, 0.0
  %vm1174 = vcmp.gt.f32.partialorder %v1110, 0.0
  %vm1175 = vcmp.gt.f32.partialorder %v1111, 0.0
  %vm1176 = vcmp.gt.f32.partialorder %v1112, 0.0
  %vm1177 = vcmp.gt.f32.partialorder %v1113, 0.0
  %vm1178 = vcmp.gt.f32.partialorder %v1114, 0.0
  %vm1179 = vcmp.gt.f32.partialorder %v1115, 0.0
  %vm1180 = vcmp.gt.f32.partialorder %v1116, 0.0
  %vm1181 = vcmp.gt.f32.partialorder %v1117, 0.0
  %vm1182 = vcmp.gt.f32.partialorder %v1118, 0.0
  %vm1183 = vcmp.gt.f32.partialorder %v1119, 0.0
  %vm1184 = vcmp.gt.f32.partialorder %v1120, 0.0
  %vm1185 = vcmp.gt.f32.partialorder %v1121, 0.0
  %vm1186 = vcmp.gt.f32.partialorder %v1122, 0.0
  %vm1187 = vcmp.gt.f32.partialorder %v1123, 0.0
  %vm1188 = vcmp.gt.f32.partialorder %v1124, 0.0
  %vm1189 = vcmp.gt.f32.partialorder %v1125, 0.0
  %vm1190 = vcmp.gt.f32.partialorder %v1126, 0.0
  %vm1191 = vcmp.gt.f32.partialorder %v1127, 0.0
  %vm1192 = vcmp.gt.f32.partialorder %v1128, 0.0
  %vm1193 = vcmp.gt.f32.partialorder %v1129, 0.0
  %vm1194 = vcmp.gt.f32.partialorder %v1130, 0.0
  %vm1195 = vcmp.gt.f32.partialorder %v1131, 0.0
  %vm1196 = vcmp.gt.f32.partialorder %v1132, 0.0
  %vm1197 = vcmp.gt.f32.partialorder %v1133, 0.0
  %vm1198 = vcmp.gt.f32.partialorder %v1134, 0.0
  %vm1199 = vcmp.gt.f32.partialorder %v1135, 0.0
  %vm1200 = vcmp.gt.f32.partialorder %v1136, 0.0
  %vm1201 = vcmp.gt.f32.partialorder %v1137, 0.0
  %vm1202 = vcmp.gt.f32.partialorder %v1138, 0.0
  %vm1203 = vcmp.gt.f32.partialorder %v1139, 0.0
  %vm1204 = vcmp.gt.f32.partialorder %v1140, 0.0
  %vm1205 = vcmp.gt.f32.partialorder %v1141, 0.0
  %vm1206 = vcmp.gt.f32.partialorder %v1142, 0.0
  %vm1207 = vcmp.gt.f32.partialorder %v1143, 0.0
  %vm1208 = vcmp.gt.f32.partialorder %v1144, 0.0
  %vm1209 = vcmp.gt.f32.partialorder %v1145, 0.0
  %vm1210 = vcmp.gt.f32.partialorder %v1146, 0.0
  %vm1211 = vcmp.gt.f32.partialorder %v1147, 0.0
  %vm1212 = vcmp.gt.f32.partialorder %v1148, 0.0
  %vm1213 = vcmp.gt.f32.partialorder %v1149, 0.0
  %vm1214 = vcmp.gt.f32.partialorder %v1150, 0.0
  %vm1215 = vcmp.gt.f32.partialorder %v1151, 0.0
  %vm1216 = vcmp.gt.f32.partialorder %v1152, 0.0
  %vm1217 = vcmp.gt.f32.partialorder %v1153, 0.0
  %vm1218 = vcmp.gt.f32.partialorder %v1154, 0.0
  %vm1219 = vcmp.gt.f32.partialorder %v1155, 0.0
  %vm1220 = vcmp.gt.f32.partialorder %v1156, 0.0
  %vm1221 = vcmp.gt.f32.partialorder %v1157, 0.0
  %vm1222 = vcmp.gt.f32.partialorder %v1158, 0.0
  %vm1223 = vcmp.gt.f32.partialorder %v1159, 0.0
  %vm1224 = vcmp.gt.f32.partialorder %v1160, 0.0
  %vm1225 = vcmp.gt.f32.partialorder %v1161, 0.0
  %vm1226 = vcmp.gt.f32.partialorder %v1162, 0.0
  %vm1227 = vcmp.gt.f32.partialorder %v1163, 0.0
  %vm1228 = vcmp.gt.f32.partialorder %v1164, 0.0
  %vm1229 = vcmp.gt.f32.partialorder %v1165, 0.0
  %vm1230 = vcmp.gt.f32.partialorder %v1166, 0.0
  %vm1231 = vcmp.gt.f32.partialorder %v1167, 0.0
  %vm1232 = vcmp.gt.f32.partialorder %v1168, 0.0
  %vm1233 = vcmp.gt.f32.partialorder %v1169, 0.0
  %v1234 = vmul.f32 %v1106, 0.2
  %v1235 = vmul.f32 %v1107, 0.2
  %v1236 = vmul.f32 %v1108, 0.2
  %v1237 = vmul.f32 %v1109, 0.2
  %v1238 = vmul.f32 %v1110, 0.2
  %v1239 = vmul.f32 %v1111, 0.2
  %v1240 = vmul.f32 %v1112, 0.2
  %v1241 = vmul.f32 %v1113, 0.2
  %v1242 = vmul.f32 %v1114, 0.2
  %v1243 = vmul.f32 %v1115, 0.2
  %v1244 = vmul.f32 %v1116, 0.2
  %v1245 = vmul.f32 %v1117, 0.2
  %v1246 = vmul.f32 %v1118, 0.2
  %v1247 = vmul.f32 %v1119, 0.2
  %v1248 = vmul.f32 %v1120, 0.2
  %v1249 = vmul.f32 %v1121, 0.2
  %v1250 = vmul.f32 %v1122, 0.2
  %v1251 = vmul.f32 %v1123, 0.2
  %v1252 = vmul.f32 %v1124, 0.2
  %v1253 = vmul.f32 %v1125, 0.2
  %v1254 = vmul.f32 %v1126, 0.2
  %v1255 = vmul.f32 %v1127, 0.2
  %v1256 = vmul.f32 %v1128, 0.2
  %v1257 = vmul.f32 %v1129, 0.2
  %v1258 = vmul.f32 %v1130, 0.2
  %v1259 = vmul.f32 %v1131, 0.2
  %v1260 = vmul.f32 %v1132, 0.2
  %v1261 = vmul.f32 %v1133, 0.2
  %v1262 = vmul.f32 %v1134, 0.2
  %v1263 = vmul.f32 %v1135, 0.2
  %v1264 = vmul.f32 %v1136, 0.2
  %v1265 = vmul.f32 %v1137, 0.2
  %v1266 = vmul.f32 %v1138, 0.2
  %v1267 = vmul.f32 %v1139, 0.2
  %v1268 = vmul.f32 %v1140, 0.2
  %v1269 = vmul.f32 %v1141, 0.2
  %v1270 = vmul.f32 %v1142, 0.2
  %v1271 = vmul.f32 %v1143, 0.2
  %v1272 = vmul.f32 %v1144, 0.2
  %v1273 = vmul.f32 %v1145, 0.2
  %v1274 = vmul.f32 %v1146, 0.2
  %v1275 = vmul.f32 %v1147, 0.2
  %v1276 = vmul.f32 %v1148, 0.2
  %v1277 = vmul.f32 %v1149, 0.2
  %v1278 = vmul.f32 %v1150, 0.2
  %v1279 = vmul.f32 %v1151, 0.2
  %v1280 = vmul.f32 %v1152, 0.2
  %v1281 = vmul.f32 %v1153, 0.2
  %v1282 = vmul.f32 %v1154, 0.2
  %v1283 = vmul.f32 %v1155, 0.2
  %v1284 = vmul.f32 %v1156, 0.2
  %v1285 = vmul.f32 %v1157, 0.2
  %v1286 = vmul.f32 %v1158, 0.2
  %v1287 = vmul.f32 %v1159, 0.2
  %v1288 = vmul.f32 %v1160, 0.2
  %v1289 = vmul.f32 %v1161, 0.2
  %v1290 = vmul.f32 %v1162, 0.2
  %v1291 = vmul.f32 %v1163, 0.2
  %v1292 = vmul.f32 %v1164, 0.2
  %v1293 = vmul.f32 %v1165, 0.2
  %v1294 = vmul.f32 %v1166, 0.2
  %v1295 = vmul.f32 %v1167, 0.2
  %v1296 = vmul.f32 %v1168, 0.2
  %v1297 = vmul.f32 %v1169, 0.2
  %v1298 = vsel %vm1170, %v1106, %v1234
  %v1299 = vsel %vm1171, %v1107, %v1235
  %v1300 = vsel %vm1172, %v1108, %v1236
  %v1301 = vsel %vm1173, %v1109, %v1237
  %v1302 = vsel %vm1174, %v1110, %v1238
  %v1303 = vsel %vm1175, %v1111, %v1239
  %v1304 = vsel %vm1176, %v1112, %v1240
  %v1305 = vsel %vm1177, %v1113, %v1241
  %v1306 = vsel %vm1178, %v1114, %v1242
  %v1307 = vsel %vm1179, %v1115, %v1243
  %v1308 = vsel %vm1180, %v1116, %v1244
  %v1309 = vsel %vm1181, %v1117, %v1245
  %v1310 = vsel %vm1182, %v1118, %v1246
  %v1311 = vsel %vm1183, %v1119, %v1247
  %v1312 = vsel %vm1184, %v1120, %v1248
  %v1313 = vsel %vm1185, %v1121, %v1249
  %v1314 = vsel %vm1186, %v1122, %v1250
  %v1315 = vsel %vm1187, %v1123, %v1251
  %v1316 = vsel %vm1188, %v1124, %v1252
  %v1317 = vsel %vm1189, %v1125, %v1253
  %v1318 = vsel %vm1190, %v1126, %v1254
  %v1319 = vsel %vm1191, %v1127, %v1255
  %v1320 = vsel %vm1192, %v1128, %v1256
  %v1321 = vsel %vm1193, %v1129, %v1257
  %v1322 = vsel %vm1194, %v1130, %v1258
  %v1323 = vsel %vm1195, %v1131, %v1259
  %v1324 = vsel %vm1196, %v1132, %v1260
  %v1325 = vsel %vm1197, %v1133, %v1261
  %v1326 = vsel %vm1198, %v1134, %v1262
  %v1327 = vsel %vm1199, %v1135, %v1263
  %v1328 = vsel %vm1200, %v1136, %v1264
  %v1329 = vsel %vm1201, %v1137, %v1265
  %v1330 = vsel %vm1202, %v1138, %v1266
  %v1331 = vsel %vm1203, %v1139, %v1267
  %v1332 = vsel %vm1204, %v1140, %v1268
  %v1333 = vsel %vm1205, %v1141, %v1269
  %v1334 = vsel %vm1206, %v1142, %v1270
  %v1335 = vsel %vm1207, %v1143, %v1271
  %v1336 = vsel %vm1208, %v1144, %v1272
  %v1337 = vsel %vm1209, %v1145, %v1273
  %v1338 = vsel %vm1210, %v1146, %v1274
  %v1339 = vsel %vm1211, %v1147, %v1275
  %v1340 = vsel %vm1212, %v1148, %v1276
  %v1341 = vsel %vm1213, %v1149, %v1277
  %v1342 = vsel %vm1214, %v1150, %v1278
  %v1343 = vsel %vm1215, %v1151, %v1279
  %v1344 = vsel %vm1216, %v1152, %v1280
  %v1345 = vsel %vm1217, %v1153, %v1281
  %v1346 = vsel %vm1218, %v1154, %v1282
  %v1347 = vsel %vm1219, %v1155, %v1283
  %v1348 = vsel %vm1220, %v1156, %v1284
  %v1349 = vsel %vm1221, %v1157, %v1285
  %v1350 = vsel %vm1222, %v1158, %v1286
  %v1351 = vsel %vm1223, %v1159, %v1287
  %v1352 = vsel %vm1224, %v1160, %v1288
  %v1353 = vsel %vm1225, %v1161, %v1289
  %v1354 = vsel %vm1226, %v1162, %v1290
  %v1355 = vsel %vm1227, %v1163, %v1291
  %v1356 = vsel %vm1228, %v1164, %v1292
  %v1357 = vsel %vm1229, %v1165, %v1293
  %v1358 = vsel %vm1230, %v1166, %v1294
  %v1359 = vsel %vm1231, %v1167, %v1295
  %v1360 = vsel %vm1232, %v1168, %v1296
  %v1361 = vsel %vm1233, %v1169, %v1297
  %v1362 = vpack.c.bf16 %v1299, %v1298
  %v1363 = vpack.c.bf16 %v1301, %v1300
  %v1364 = vpack.c.bf16 %v1303, %v1302
  %v1365 = vpack.c.bf16 %v1305, %v1304
  %v1366 = vpack.c.bf16 %v1307, %v1306
  %v1367 = vpack.c.bf16 %v1309, %v1308
  %v1368 = vpack.c.bf16 %v1311, %v1310
  %v1369 = vpack.c.bf16 %v1313, %v1312
  %v1370 = vpack.c.bf16 %v1315, %v1314
  %v1371 = vpack.c.bf16 %v1317, %v1316
  %v1372 = vpack.c.bf16 %v1319, %v1318
  %v1373 = vpack.c.bf16 %v1321, %v1320
  %v1374 = vpack.c.bf16 %v1323, %v1322
  %v1375 = vpack.c.bf16 %v1325, %v1324
  %v1376 = vpack.c.bf16 %v1327, %v1326
  %v1377 = vpack.c.bf16 %v1329, %v1328
  %v1378 = vpack.c.bf16 %v1331, %v1330
  %v1379 = vpack.c.bf16 %v1333, %v1332
  %v1380 = vpack.c.bf16 %v1335, %v1334
  %v1381 = vpack.c.bf16 %v1337, %v1336
  %v1382 = vpack.c.bf16 %v1339, %v1338
  %v1383 = vpack.c.bf16 %v1341, %v1340
  %v1384 = vpack.c.bf16 %v1343, %v1342
  %v1385 = vpack.c.bf16 %v1345, %v1344
  %v1386 = vpack.c.bf16 %v1347, %v1346
  %v1387 = vpack.c.bf16 %v1349, %v1348
  %v1388 = vpack.c.bf16 %v1351, %v1350
  %v1389 = vpack.c.bf16 %v1353, %v1352
  %v1390 = vpack.c.bf16 %v1355, %v1354
  %v1391 = vpack.c.bf16 %v1357, %v1356
  %v1392 = vpack.c.bf16 %v1359, %v1358
  %v1393 = vpack.c.bf16 %v1361, %v1360
  %v1426 = vunpack.c.l.b16 %v1362
  %v1427 = vunpack.c.h.b16 %v1362
  %v1428 = vunpack.c.l.b16 %v1363
  %v1429 = vunpack.c.h.b16 %v1363
  %v1430 = vunpack.c.l.b16 %v1364
  %v1431 = vunpack.c.h.b16 %v1364
  %v1432 = vunpack.c.l.b16 %v1365
  %v1433 = vunpack.c.h.b16 %v1365
  %v1434 = vunpack.c.l.b16 %v1366
  %v1435 = vunpack.c.h.b16 %v1366
  %v1436 = vunpack.c.l.b16 %v1367
  %v1437 = vunpack.c.h.b16 %v1367
  %v1438 = vunpack.c.l.b16 %v1368
  %v1439 = vunpack.c.h.b16 %v1368
  %v1440 = vunpack.c.l.b16 %v1369
  %v1441 = vunpack.c.h.b16 %v1369
  %v1442 = vunpack.c.l.b16 %v1370
  %v1443 = vunpack.c.h.b16 %v1370
  %v1444 = vunpack.c.l.b16 %v1371
  %v1445 = vunpack.c.h.b16 %v1371
  %v1446 = vunpack.c.l.b16 %v1372
  %v1447 = vunpack.c.h.b16 %v1372
  %v1448 = vunpack.c.l.b16 %v1373
  %v1449 = vunpack.c.h.b16 %v1373
  %v1450 = vunpack.c.l.b16 %v1374
  %v1451 = vunpack.c.h.b16 %v1374
  %v1452 = vunpack.c.l.b16 %v1375
  %v1453 = vunpack.c.h.b16 %v1375
  %v1454 = vunpack.c.l.b16 %v1376
  %v1455 = vunpack.c.h.b16 %v1376
  %v1456 = vunpack.c.l.b16 %v1377
  %v1457 = vunpack.c.h.b16 %v1377
  %v1458 = vunpack.c.l.b16 %v1378
  %v1459 = vunpack.c.h.b16 %v1378
  %v1460 = vunpack.c.l.b16 %v1379
  %v1461 = vunpack.c.h.b16 %v1379
  %v1462 = vunpack.c.l.b16 %v1380
  %v1463 = vunpack.c.h.b16 %v1380
  %v1464 = vunpack.c.l.b16 %v1381
  %v1465 = vunpack.c.h.b16 %v1381
  %v1466 = vunpack.c.l.b16 %v1382
  %v1467 = vunpack.c.h.b16 %v1382
  %v1468 = vunpack.c.l.b16 %v1383
  %v1469 = vunpack.c.h.b16 %v1383
  %v1470 = vunpack.c.l.b16 %v1384
  %v1471 = vunpack.c.h.b16 %v1384
  %v1472 = vunpack.c.l.b16 %v1385
  %v1473 = vunpack.c.h.b16 %v1385
  %v1474 = vunpack.c.l.b16 %v1386
  %v1475 = vunpack.c.h.b16 %v1386
  %v1476 = vunpack.c.l.b16 %v1387
  %v1477 = vunpack.c.h.b16 %v1387
  %v1478 = vunpack.c.l.b16 %v1388
  %v1479 = vunpack.c.h.b16 %v1388
  %v1480 = vunpack.c.l.b16 %v1389
  %v1481 = vunpack.c.h.b16 %v1389
  %v1482 = vunpack.c.l.b16 %v1390
  %v1483 = vunpack.c.h.b16 %v1390
  %v1484 = vunpack.c.l.b16 %v1391
  %v1485 = vunpack.c.h.b16 %v1391
  %v1486 = vunpack.c.l.b16 %v1392
  %v1487 = vunpack.c.h.b16 %v1392
  %v1488 = vunpack.c.l.b16 %v1393
  %v1489 = vunpack.c.h.b16 %v1393
  %v1490 = vpack.c.b16 %v1426, %v1426
  %v1491 = vpack.c.b16 %v1427, %v1427
  %v1492 = vpack.c.b16 %v1428, %v1428
  %v1493 = vpack.c.b16 %v1429, %v1429
  %v1494 = vpack.c.b16 %v1430, %v1430
  %v1495 = vpack.c.b16 %v1431, %v1431
  %v1496 = vpack.c.b16 %v1432, %v1432
  %v1497 = vpack.c.b16 %v1433, %v1433
  %v1498 = vpack.c.b16 %v1434, %v1434
  %v1499 = vpack.c.b16 %v1435, %v1435
  %v1500 = vpack.c.b16 %v1436, %v1436
  %v1501 = vpack.c.b16 %v1437, %v1437
  %v1502 = vpack.c.b16 %v1438, %v1438
  %v1503 = vpack.c.b16 %v1439, %v1439
  %v1504 = vpack.c.b16 %v1440, %v1440
  %v1505 = vpack.c.b16 %v1441, %v1441
  %v1506 = vpack.c.b16 %v1442, %v1442
  %v1507 = vpack.c.b16 %v1443, %v1443
  %v1508 = vpack.c.b16 %v1444, %v1444
  %v1509 = vpack.c.b16 %v1445, %v1445
  %v1510 = vpack.c.b16 %v1446, %v1446
  %v1511 = vpack.c.b16 %v1447, %v1447
  %v1512 = vpack.c.b16 %v1448, %v1448
  %v1513 = vpack.c.b16 %v1449, %v1449
  %v1514 = vpack.c.b16 %v1450, %v1450
  %v1515 = vpack.c.b16 %v1451, %v1451
  %v1516 = vpack.c.b16 %v1452, %v1452
  %v1517 = vpack.c.b16 %v1453, %v1453
  %v1518 = vpack.c.b16 %v1454, %v1454
  %v1519 = vpack.c.b16 %v1455, %v1455
  %v1520 = vpack.c.b16 %v1456, %v1456
  %v1521 = vpack.c.b16 %v1457, %v1457
  %v1522 = vpack.c.b16 %v1458, %v1458
  %v1523 = vpack.c.b16 %v1459, %v1459
  %v1524 = vpack.c.b16 %v1460, %v1460
  %v1525 = vpack.c.b16 %v1461, %v1461
  %v1526 = vpack.c.b16 %v1462, %v1462
  %v1527 = vpack.c.b16 %v1463, %v1463
  %v1528 = vpack.c.b16 %v1464, %v1464
  %v1529 = vpack.c.b16 %v1465, %v1465
  %v1530 = vpack.c.b16 %v1466, %v1466
  %v1531 = vpack.c.b16 %v1467, %v1467
  %v1532 = vpack.c.b16 %v1468, %v1468
  %v1533 = vpack.c.b16 %v1469, %v1469
  %v1534 = vpack.c.b16 %v1470, %v1470
  %v1535 = vpack.c.b16 %v1471, %v1471
  %v1536 = vpack.c.b16 %v1472, %v1472
  %v1537 = vpack.c.b16 %v1473, %v1473
  %v1538 = vpack.c.b16 %v1474, %v1474
  %v1539 = vpack.c.b16 %v1475, %v1475
  %v1540 = vpack.c.b16 %v1476, %v1476
  %v1541 = vpack.c.b16 %v1477, %v1477
  %v1542 = vpack.c.b16 %v1478, %v1478
  %v1543 = vpack.c.b16 %v1479, %v1479
  %v1544 = vpack.c.b16 %v1480, %v1480
  %v1545 = vpack.c.b16 %v1481, %v1481
  %v1546 = vpack.c.b16 %v1482, %v1482
  %v1547 = vpack.c.b16 %v1483, %v1483
  %v1548 = vpack.c.b16 %v1484, %v1484
  %v1549 = vpack.c.b16 %v1485, %v1485
  %v1550 = vpack.c.b16 %v1486, %v1486
  %v1551 = vpack.c.b16 %v1487, %v1487
  %v1552 = vpack.c.b16 %v1488, %v1488
  %v1553 = vpack.c.b16 %v1489, %v1489
  %vm1618 = vcmask 125952
  %1619 = vst.msk [vmem:[%s4] sm:$0xf] %vm1618, %v1490
  %1620 = vst.msk [vmem:[%s4 + $0x4] sm:$0xf] %vm1618, %v1491
  %1621 = vst.msk [vmem:[%s4 + $0x8] sm:$0xf] %vm1618, %v1492
  %1622 = vst.msk [vmem:[%s4 + $0xc] sm:$0xf] %vm1618, %v1493
  %1623 = vst.msk [vmem:[%s4 + $0x10] sm:$0xf] %vm1618, %v1494
  %1624 = vst.msk [vmem:[%s4 + $0x14] sm:$0xf] %vm1618, %v1495
  %1625 = vst.msk [vmem:[%s4 + $0x18] sm:$0xf] %vm1618, %v1496
  %1626 = vst.msk [vmem:[%s4 + $0x1c] sm:$0xf] %vm1618, %v1497
  %1627 = vst.msk [vmem:[%s4 + $0x20] sm:$0xf] %vm1618, %v1498
  %1628 = vst.msk [vmem:[%s4 + $0x24] sm:$0xf] %vm1618, %v1499
  %1629 = vst.msk [vmem:[%s4 + $0x28] sm:$0xf] %vm1618, %v1500
  %1630 = vst.msk [vmem:[%s4 + $0x2c] sm:$0xf] %vm1618, %v1501
  %1631 = vst.msk [vmem:[%s4 + $0x30] sm:$0xf] %vm1618, %v1502
  %1632 = vst.msk [vmem:[%s4 + $0x34] sm:$0xf] %vm1618, %v1503
  %1633 = vst.msk [vmem:[%s4 + $0x38] sm:$0xf] %vm1618, %v1504
  %1634 = vst.msk [vmem:[%s4 + $0x3c] sm:$0xf] %vm1618, %v1505
  %1635 = vst.msk [vmem:[%s4 + $0x40] sm:$0xf] %vm1618, %v1506
  %1636 = vst.msk [vmem:[%s4 + $0x44] sm:$0xf] %vm1618, %v1507
  %1637 = vst.msk [vmem:[%s4 + $0x48] sm:$0xf] %vm1618, %v1508
  %1638 = vst.msk [vmem:[%s4 + $0x4c] sm:$0xf] %vm1618, %v1509
  %1639 = vst.msk [vmem:[%s4 + $0x50] sm:$0xf] %vm1618, %v1510
  %1640 = vst.msk [vmem:[%s4 + $0x54] sm:$0xf] %vm1618, %v1511
  %1641 = vst.msk [vmem:[%s4 + $0x58] sm:$0xf] %vm1618, %v1512
  %1642 = vst.msk [vmem:[%s4 + $0x5c] sm:$0xf] %vm1618, %v1513
  %1643 = vst.msk [vmem:[%s4 + $0x60] sm:$0xf] %vm1618, %v1514
  %1644 = vst.msk [vmem:[%s4 + $0x64] sm:$0xf] %vm1618, %v1515
  %1645 = vst.msk [vmem:[%s4 + $0x68] sm:$0xf] %vm1618, %v1516
  %1646 = vst.msk [vmem:[%s4 + $0x6c] sm:$0xf] %vm1618, %v1517
  %1647 = vst.msk [vmem:[%s4 + $0x70] sm:$0xf] %vm1618, %v1518
  %1648 = vst.msk [vmem:[%s4 + $0x74] sm:$0xf] %vm1618, %v1519
  %1649 = vst.msk [vmem:[%s4 + $0x78] sm:$0xf] %vm1618, %v1520
  %1650 = vst.msk [vmem:[%s4 + $0x7c] sm:$0xf] %vm1618, %v1521
  %1651 = vst.msk [vmem:[%s4 + $0x80] sm:$0xf] %vm1618, %v1522
  %1652 = vst.msk [vmem:[%s4 + $0x84] sm:$0xf] %vm1618, %v1523
  %1653 = vst.msk [vmem:[%s4 + $0x88] sm:$0xf] %vm1618, %v1524
  %1654 = vst.msk [vmem:[%s4 + $0x8c] sm:$0xf] %vm1618, %v1525
  %1655 = vst.msk [vmem:[%s4 + $0x90] sm:$0xf] %vm1618, %v1526
  %1656 = vst.msk [vmem:[%s4 + $0x94] sm:$0xf] %vm1618, %v1527
  %1657 = vst.msk [vmem:[%s4 + $0x98] sm:$0xf] %vm1618, %v1528
  %1658 = vst.msk [vmem:[%s4 + $0x9c] sm:$0xf] %vm1618, %v1529
  %1659 = vst.msk [vmem:[%s4 + $0xa0] sm:$0xf] %vm1618, %v1530
  %1660 = vst.msk [vmem:[%s4 + $0xa4] sm:$0xf] %vm1618, %v1531
  %1661 = vst.msk [vmem:[%s4 + $0xa8] sm:$0xf] %vm1618, %v1532
  %1662 = vst.msk [vmem:[%s4 + $0xac] sm:$0xf] %vm1618, %v1533
  %1663 = vst.msk [vmem:[%s4 + $0xb0] sm:$0xf] %vm1618, %v1534
  %1664 = vst.msk [vmem:[%s4 + $0xb4] sm:$0xf] %vm1618, %v1535
  %1665 = vst.msk [vmem:[%s4 + $0xb8] sm:$0xf] %vm1618, %v1536
  %1666 = vst.msk [vmem:[%s4 + $0xbc] sm:$0xf] %vm1618, %v1537
  %1667 = vst.msk [vmem:[%s4 + $0xc0] sm:$0xf] %vm1618, %v1538
  %1668 = vst.msk [vmem:[%s4 + $0xc4] sm:$0xf] %vm1618, %v1539
  %1669 = vst.msk [vmem:[%s4 + $0xc8] sm:$0xf] %vm1618, %v1540
  %1670 = vst.msk [vmem:[%s4 + $0xcc] sm:$0xf] %vm1618, %v1541
  %1671 = vst.msk [vmem:[%s4 + $0xd0] sm:$0xf] %vm1618, %v1542
  %1672 = vst.msk [vmem:[%s4 + $0xd4] sm:$0xf] %vm1618, %v1543
  %1673 = vst.msk [vmem:[%s4 + $0xd8] sm:$0xf] %vm1618, %v1544
  %1674 = vst.msk [vmem:[%s4 + $0xdc] sm:$0xf] %vm1618, %v1545
  %1675 = vst.msk [vmem:[%s4 + $0xe0] sm:$0xf] %vm1618, %v1546
  %1676 = vst.msk [vmem:[%s4 + $0xe4] sm:$0xf] %vm1618, %v1547
  %1677 = vst.msk [vmem:[%s4 + $0xe8] sm:$0xf] %vm1618, %v1548
  %1678 = vst.msk [vmem:[%s4 + $0xec] sm:$0xf] %vm1618, %v1549
  %1679 = vst.msk [vmem:[%s4 + $0xf0] sm:$0xf] %vm1618, %v1550
  %1680 = vst.msk [vmem:[%s4 + $0xf4] sm:$0xf] %vm1618, %v1551
  %1681 = vst.msk [vmem:[%s4 + $0xf8] sm:$0xf] %vm1618, %v1552
  %1682 = vst.msk [vmem:[%s4 + $0xfc] sm:$0xf] %vm1618, %v1553
  // Predicated region
  $region18: #{_lambda_.5} parent=0 // pred_check
    _
  $region19: #{_lambda_.5} parent=0 // pred_check_branch
    %1684 = sbr.rel (0) target = $region21
  $region20: #{_lambda_.5} parent=0 // pred_region
    _
  $region21: #{_lambda_.5} parent=0 // pred_fallthru
    _
  // Predicated region
  $region22: #{_lambda_.5} parent=0 // pred_check
    _
  $region23: #{_lambda_.5} parent=0 // pred_check_branch
    %1686 = sbr.rel (0) target = $region25
  $region24: #{_lambda_.5} parent=0 // pred_region
    _
  $region25: #{_lambda_.5} parent=0 // pred_fallthru
    _

// kernel: _lambda_.6
$region0: #{_lambda_.6}
  #allocation0 [shape = 'u32[]', space=smem, size = 0x4, offset = 0x4, fixed_abs, tag = 'smem constant byte address 0x4 - core index']
  #allocation1 [shape = 'u32[144,128]{1,0:T(1,128)}', space=vmem, size = 0x12000, scoped, tag = 'internal scratch']
  %s0 = inlined_call_operand.vmem [shape: bf16[128,256], index: 0, kind: input, shape index: {}]
  %s1 = inlined_call_operand.vmem [shape: bf16[256,32], index: 1, kind: input, shape index: {}]
  %s2 = inlined_call_operand.vmem [shape: f32[1,32], index: 2, kind: input, shape index: {}]
  %s3 = inlined_call_operand.vmem [shape: f32[1,32], index: 3, kind: input, shape index: {}]
  %s4 = inlined_call_operand.vmem [shape: bf16[128,32], index: 4, kind: output, shape index: {}]
  %s5 = sld [smem:[#allocation0]]
  $region26: #{_lambda_.6} parent=0
    _
  %s7 = ssub.s32 1, %s5
  %s8 = scalar_select 0, %s7, %s5
  // Predicated region
  $region2: #{_lambda_.6} parent=0 // pred_check
    _
  $region3: #{_lambda_.6} parent=0 // pred_check_branch
    %10 = sbr.rel (0) target = $region5
  $region4: #{_lambda_.6} parent=0 // pred_region
    _
  $region5: #{_lambda_.6} parent=0 // pred_fallthru
    _
  // Predicated region
  $region6: #{_lambda_.6} parent=0 // pred_check
    _
  $region7: #{_lambda_.6} parent=0 // pred_check_branch
    %12 = sbr.rel (0) target = $region9
  $region8: #{_lambda_.6} parent=0 // pred_region
    _
  $region9: #{_lambda_.6} parent=0 // pred_fallthru
    _
  // Predicated region
  $region10: #{_lambda_.6} parent=0 // pred_check
    _
  $region11: #{_lambda_.6} parent=0 // pred_check_branch
    %14 = sbr.rel (0) target = $region13
  $region12: #{_lambda_.6} parent=0 // pred_region
    _
  $region13: #{_lambda_.6} parent=0 // pred_fallthru
    _
  // Predicated region
  $region14: #{_lambda_.6} parent=0 // pred_check
    _
  $region15: #{_lambda_.6} parent=0 // pred_check_branch
    %16 = sbr.rel (0) target = $region17
  $region16: #{_lambda_.6} parent=0 // pred_region
    _
  $region17: #{_lambda_.6} parent=0 // pred_fallthru
    _
  %v18 = vld [vmem:[%s0] sm:$0xff]
  %v19 = vld [vmem:[%s0 + $0x8] sm:$0xff]
  %v20 = vld [vmem:[%s0 + $0x10] sm:$0xff]
  %v21 = vld [vmem:[%s0 + $0x18] sm:$0xff]
  %v22 = vld [vmem:[%s0 + $0x20] sm:$0xff]
  %v23 = vld [vmem:[%s0 + $0x28] sm:$0xff]
  %v24 = vld [vmem:[%s0 + $0x30] sm:$0xff]
  %v25 = vld [vmem:[%s0 + $0x38] sm:$0xff]
  %v26 = vld [vmem:[%s0 + $0x40] sm:$0xff]
  %v27 = vld [vmem:[%s0 + $0x48] sm:$0xff]
  %v28 = vld [vmem:[%s0 + $0x50] sm:$0xff]
  %v29 = vld [vmem:[%s0 + $0x58] sm:$0xff]
  %v30 = vld [vmem:[%s0 + $0x60] sm:$0xff]
  %v31 = vld [vmem:[%s0 + $0x68] sm:$0xff]
  %v32 = vld [vmem:[%s0 + $0x70] sm:$0xff]
  %v33 = vld [vmem:[%s0 + $0x78] sm:$0xff]
  %v34 = vld [vmem:[%s1] sm:$0xf]
  %v35 = vld [vmem:[%s1 + $0x4] sm:$0xf]
  %v36 = vld [vmem:[%s1 + $0x8] sm:$0xf]
  %v37 = vld [vmem:[%s1 + $0xc] sm:$0xf]
  %v38 = vld [vmem:[%s1 + $0x10] sm:$0xf]
  %v39 = vld [vmem:[%s1 + $0x14] sm:$0xf]
  %v40 = vld [vmem:[%s1 + $0x18] sm:$0xf]
  %v41 = vld [vmem:[%s1 + $0x1c] sm:$0xf]
  %v42 = vld [vmem:[%s1 + $0x20] sm:$0xf]
  %v43 = vld [vmem:[%s1 + $0x24] sm:$0xf]
  %v44 = vld [vmem:[%s1 + $0x28] sm:$0xf]
  %v45 = vld [vmem:[%s1 + $0x2c] sm:$0xf]
  %v46 = vld [vmem:[%s1 + $0x30] sm:$0xf]
  %v47 = vld [vmem:[%s1 + $0x34] sm:$0xf]
  %v48 = vld [vmem:[%s1 + $0x38] sm:$0xf]
  %v49 = vld [vmem:[%s1 + $0x3c] sm:$0xf]
  %v50 = vld [vmem:[%s1 + $0x40] sm:$0xf]
  %v51 = vld [vmem:[%s1 + $0x44] sm:$0xf]
  %v52 = vld [vmem:[%s1 + $0x48] sm:$0xf]
  %v53 = vld [vmem:[%s1 + $0x4c] sm:$0xf]
  %v54 = vld [vmem:[%s1 + $0x50] sm:$0xf]
  %v55 = vld [vmem:[%s1 + $0x54] sm:$0xf]
  %v56 = vld [vmem:[%s1 + $0x58] sm:$0xf]
  %v57 = vld [vmem:[%s1 + $0x5c] sm:$0xf]
  %v58 = vld [vmem:[%s1 + $0x60] sm:$0xf]
  %v59 = vld [vmem:[%s1 + $0x64] sm:$0xf]
  %v60 = vld [vmem:[%s1 + $0x68] sm:$0xf]
  %v61 = vld [vmem:[%s1 + $0x6c] sm:$0xf]
  %v62 = vld [vmem:[%s1 + $0x70] sm:$0xf]
  %v63 = vld [vmem:[%s1 + $0x74] sm:$0xf]
  %v64 = vld [vmem:[%s1 + $0x78] sm:$0xf]
  %v65 = vld [vmem:[%s1 + $0x7c] sm:$0xf]
  %v82 = vunpack.c.l.b16 %v18
  %v83 = vunpack.c.h.b16 %v18
  %v84 = vunpack.c.l.b16 %v19
  %v85 = vunpack.c.h.b16 %v19
  %v86 = vunpack.c.l.b16 %v20
  %v87 = vunpack.c.h.b16 %v20
  %v88 = vunpack.c.l.b16 %v21
  %v89 = vunpack.c.h.b16 %v21
  %v90 = vunpack.c.l.b16 %v22
  %v91 = vunpack.c.h.b16 %v22
  %v92 = vunpack.c.l.b16 %v23
  %v93 = vunpack.c.h.b16 %v23
  %v94 = vunpack.c.l.b16 %v24
  %v95 = vunpack.c.h.b16 %v24
  %v96 = vunpack.c.l.b16 %v25
  %v97 = vunpack.c.h.b16 %v25
  %v98 = vunpack.c.l.b16 %v26
  %v99 = vunpack.c.h.b16 %v26
  %v100 = vunpack.c.l.b16 %v27
  %v101 = vunpack.c.h.b16 %v27
  %v102 = vunpack.c.l.b16 %v28
  %v103 = vunpack.c.h.b16 %v28
  %v104 = vunpack.c.l.b16 %v29
  %v105 = vunpack.c.h.b16 %v29
  %v106 = vunpack.c.l.b16 %v30
  %v107 = vunpack.c.h.b16 %v30
  %v108 = vunpack.c.l.b16 %v31
  %v109 = vunpack.c.h.b16 %v31
  %v110 = vunpack.c.l.b16 %v32
  %v111 = vunpack.c.h.b16 %v32
  %v112 = vunpack.c.l.b16 %v33
  %v113 = vunpack.c.h.b16 %v33
  %v114 = vpack.c.b16 %v84, %v82
  %v115 = vpack.c.b16 %v85, %v83
  %v116 = vpack.c.b16 %v88, %v86
  %v117 = vpack.c.b16 %v89, %v87
  %v118 = vpack.c.b16 %v92, %v90
  %v119 = vpack.c.b16 %v93, %v91
  %v120 = vpack.c.b16 %v96, %v94
  %v121 = vpack.c.b16 %v97, %v95
  %v122 = vpack.c.b16 %v100, %v98
  %v123 = vpack.c.b16 %v101, %v99
  %v124 = vpack.c.b16 %v104, %v102
  %v125 = vpack.c.b16 %v105, %v103
  %v126 = vpack.c.b16 %v108, %v106
  %v127 = vpack.c.b16 %v109, %v107
  %v128 = vpack.c.b16 %v112, %v110
  %v129 = vpack.c.b16 %v113, %v111
  %v178 = vunpack.c.l.b16 %v34
  %v179 = vunpack.c.l.b16 %v35
  %v180 = vunpack.c.l.b16 %v36
  %v181 = vunpack.c.l.b16 %v37
  %v182 = vunpack.c.l.b16 %v38
  %v183 = vunpack.c.l.b16 %v39
  %v184 = vunpack.c.l.b16 %v40
  %v185 = vunpack.c.l.b16 %v41
  %v186 = vunpack.c.l.b16 %v42
  %v187 = vunpack.c.l.b16 %v43
  %v188 = vunpack.c.l.b16 %v44
  %v189 = vunpack.c.l.b16 %v45
  %v190 = vunpack.c.l.b16 %v46
  %v191 = vunpack.c.l.b16 %v47
  %v192 = vunpack.c.l.b16 %v48
  %v193 = vunpack.c.l.b16 %v49
  %v194 = vunpack.c.l.b16 %v50
  %v195 = vunpack.c.l.b16 %v51
  %v196 = vunpack.c.l.b16 %v52
  %v197 = vunpack.c.l.b16 %v53
  %v198 = vunpack.c.l.b16 %v54
  %v199 = vunpack.c.l.b16 %v55
  %v200 = vunpack.c.l.b16 %v56
  %v201 = vunpack.c.l.b16 %v57
  %v202 = vunpack.c.l.b16 %v58
  %v203 = vunpack.c.l.b16 %v59
  %v204 = vunpack.c.l.b16 %v60
  %v205 = vunpack.c.l.b16 %v61
  %v206 = vunpack.c.l.b16 %v62
  %v207 = vunpack.c.l.b16 %v63
  %v208 = vunpack.c.l.b16 %v64
  %v209 = vunpack.c.l.b16 %v65
  %v210 = vpack.c.b16 %v179, %v178
  %v211 = vpack.c.b16 %v181, %v180
  %v212 = vpack.c.b16 %v183, %v182
  %v213 = vpack.c.b16 %v185, %v184
  %v214 = vpack.c.b16 %v187, %v186
  %v215 = vpack.c.b16 %v189, %v188
  %v216 = vpack.c.b16 %v191, %v190
  %v217 = vpack.c.b16 %v193, %v192
  %v218 = vpack.c.b16 %v195, %v194
  %v219 = vpack.c.b16 %v197, %v196
  %v220 = vpack.c.b16 %v199, %v198
  %v221 = vpack.c.b16 %v201, %v200
  %v222 = vpack.c.b16 %v203, %v202
  %v223 = vpack.c.b16 %v205, %v204
  %v224 = vpack.c.b16 %v207, %v206
  %v225 = vpack.c.b16 %v209, %v208
  %242 = vmatprep.subr.bf16.mxu0 0
  %243 = vmatpush1.bf16.msra.mxu0 %v210
  %244 = vmatprep.subr.bf16.mxu0 0
  %245 = vmatpush1.bf16.msra.mxu0 %v211
  %246 = vmatprep.subr.bf16.mxu0 0
  %247 = vmatpush1.bf16.msra.mxu0 %v212
  %248 = vmatprep.subr.bf16.mxu0 0
  %249 = vmatpush1.bf16.msra.mxu0 %v213
  %250 = vmatprep.subr.bf16.mxu0 0
  %251 = vmatpush1.bf16.msra.mxu0 %v214
  %252 = vmatprep.subr.bf16.mxu0 0
  %253 = vmatpush1.bf16.msra.mxu0 %v215
  %254 = vmatprep.subr.bf16.mxu0 0
  %255 = vmatpush1.bf16.msra.mxu0 %v216
  %256 = vmatprep.subr.bf16.mxu0 0
  %257 = vmatpush1.bf16.msra.mxu0 %v217
  %258 = vmatprep.subr.bf16.mxu0 0
  %259 = vmatpush1.bf16.msra.mxu0 %v218
  %260 = vmatprep.subr.bf16.mxu0 0
  %261 = vmatpush1.bf16.msra.mxu0 %v219
  %262 = vmatprep.subr.bf16.mxu0 0
  %263 = vmatpush1.bf16.msra.mxu0 %v220
  %264 = vmatprep.subr.bf16.mxu0 0
  %265 = vmatpush1.bf16.msra.mxu0 %v221
  %266 = vmatprep.subr.bf16.mxu0 0
  %267 = vmatpush1.bf16.msra.mxu0 %v222
  %268 = vmatprep.subr.bf16.mxu0 0
  %269 = vmatpush1.bf16.msra.mxu0 %v223
  %270 = vmatprep.subr.bf16.mxu0 0
  %271 = vmatpush1.bf16.msra.mxu0 %v224
  %272 = vmatprep.subr.bf16.mxu0 0
  %273 = vmatpush1.bf16.msra.mxu0 %v225
  %274 = vmatprep.mubr.bf16.mxu0 %v115
  %275 = vmatmul.mubr.bf16.gmra.mrb[0].mxu0 %v114
  %v276 = vpop.f32.mrb[0].mxu0
  %v277 = vadd.f32 0.0, %v276
  %v278 = vpop.f32.mrb[0].mxu0
  %v279 = vpop.f32.mrb[0].mxu0
  %v280 = vadd.f32 0.0, %v279
  %v281 = vpop.f32.mrb[0].mxu0
  %282 = vmatprep.mubr.bf16.mxu0 %v117
  %283 = vmatmul.mubr.bf16.gmra.mrb[0].mxu0 %v116
  %v284 = vpop.f32.mrb[0].mxu0
  %v285 = vadd.f32 0.0, %v284
  %v286 = vpop.f32.mrb[0].mxu0
  %v287 = vpop.f32.mrb[0].mxu0
  %v288 = vadd.f32 0.0, %v287
  %v289 = vpop.f32.mrb[0].mxu0
  %290 = vmatprep.mubr.bf16.mxu0 %v119
  %291 = vmatmul.mubr.bf16.gmra.mrb[0].mxu0 %v118
  %v292 = vpop.f32.mrb[0].mxu0
  %v293 = vadd.f32 0.0, %v292
  %v294 = vpop.f32.mrb[0].mxu0
  %v295 = vpop.f32.mrb[0].mxu0
  %v296 = vadd.f32 0.0, %v295
  %v297 = vpop.f32.mrb[0].mxu0
  %298 = vmatprep.mubr.bf16.mxu0 %v121
  %299 = vmatmul.mubr.bf16.gmra.mrb[0].mxu0 %v120
  %v300 = vpop.f32.mrb[0].mxu0
  %v301 = vadd.f32 0.0, %v300
  %v302 = vpop.f32.mrb[0].mxu0
  %v303 = vpop.f32.mrb[0].mxu0
  %v304 = vadd.f32 0.0, %v303
  %v305 = vpop.f32.mrb[0].mxu0
  %306 = vmatprep.mubr.bf16.mxu0 %v123
  %307 = vmatmul.mubr.bf16.gmra.mrb[0].mxu0 %v122
  %v308 = vpop.f32.mrb[0].mxu0
  %v309 = vadd.f32 0.0, %v308
  %v310 = vpop.f32.mrb[0].mxu0
  %v311 = vpop.f32.mrb[0].mxu0
  %v312 = vadd.f32 0.0, %v311
  %v313 = vpop.f32.mrb[0].mxu0
  %314 = vmatprep.mubr.bf16.mxu0 %v125
  %315 = vmatmul.mubr.bf16.gmra.mrb[0].mxu0 %v124
  %v316 = vpop.f32.mrb[0].mxu0
  %v317 = vadd.f32 0.0, %v316
  %v318 = vpop.f32.mrb[0].mxu0
  %v319 = vpop.f32.mrb[0].mxu0
  %v320 = vadd.f32 0.0, %v319
  %v321 = vpop.f32.mrb[0].mxu0
  %322 = vmatprep.mubr.bf16.mxu0 %v127
  %323 = vmatmul.mubr.bf16.gmra.mrb[0].mxu0 %v126
  %v324 = vpop.f32.mrb[0].mxu0
  %v325 = vadd.f32 0.0, %v324
  %v326 = vpop.f32.mrb[0].mxu0
  %v327 = vpop.f32.mrb[0].mxu0
  %v328 = vadd.f32 0.0, %v327
  %v329 = vpop.f32.mrb[0].mxu0
  %330 = vmatprep.mubr.bf16.mxu0 %v129
  %331 = vmatmul.mubr.bf16.gmra.mrb[0].mxu0 %v128
  %v332 = vpop.f32.mrb[0].mxu0
  %v333 = vadd.f32 0.0, %v332
  %v334 = vpop.f32.mrb[0].mxu0
  %v335 = vpop.f32.mrb[0].mxu0
  %v336 = vadd.f32 0.0, %v335
  %v337 = vpop.f32.mrb[0].mxu0
  %338 = vdwg.mxu0
  %vm339 = vcmask 261120
  %v340 = vsel %vm339, %v277, 0.0
  %v341 = vsel %vm339, %v280, 0.0
  %v342 = vadd.f32 %v340, %v341
  %v343 = vsel %vm339, %v285, 0.0
  %v344 = vadd.f32 %v342, %v343
  %v345 = vsel %vm339, %v288, 0.0
  %v346 = vadd.f32 %v344, %v345
  %v347 = vsel %vm339, %v293, 0.0
  %v348 = vadd.f32 %v346, %v347
  %v349 = vsel %vm339, %v296, 0.0
  %v350 = vadd.f32 %v348, %v349
  %v351 = vsel %vm339, %v301, 0.0
  %v352 = vadd.f32 %v350, %v351
  %v353 = vsel %vm339, %v304, 0.0
  %v354 = vadd.f32 %v352, %v353
  %v355 = vsel %vm339, %v309, 0.0
  %v356 = vadd.f32 %v354, %v355
  %v357 = vsel %vm339, %v312, 0.0
  %v358 = vadd.f32 %v356, %v357
  %v359 = vsel %vm339, %v317, 0.0
  %v360 = vadd.f32 %v358, %v359
  %v361 = vsel %vm339, %v320, 0.0
  %v362 = vadd.f32 %v360, %v361
  %v363 = vsel %vm339, %v325, 0.0
  %v364 = vadd.f32 %v362, %v363
  %v365 = vsel %vm339, %v328, 0.0
  %v366 = vadd.f32 %v364, %v365
  %v367 = vsel %vm339, %v333, 0.0
  %v368 = vadd.f32 %v366, %v367
  %v369 = vsel %vm339, %v336, 0.0
  %v370 = vadd.f32 %v368, %v369
  %v371 = vrot.slane %v370, 4
  %v372 = vadd.f32 %v370, %v371
  %v373 = vrot.slane %v372, 2
  %v374 = vadd.f32 %v372, %v373
  %v375 = vrot.slane %v374, 1
  %v376 = vadd.f32 %v374, %v375
  %v377 = vrcp.pop 128.0
  %v378 = vmul.f32 %v376, %v377
  %v379 = vsub.f32 %v277, %v378
  %v380 = vsub.f32 %v280, %v378
  %v381 = vsub.f32 %v285, %v378
  %v382 = vsub.f32 %v288, %v378
  %v383 = vsub.f32 %v293, %v378
  %v384 = vsub.f32 %v296, %v378
  %v385 = vsub.f32 %v301, %v378
  %v386 = vsub.f32 %v304, %v378
  %v387 = vsub.f32 %v309, %v378
  %v388 = vsub.f32 %v312, %v378
  %v389 = vsub.f32 %v317, %v378
  %v390 = vsub.f32 %v320, %v378
  %v391 = vsub.f32 %v325, %v378
  %v392 = vsub.f32 %v328, %v378
  %v393 = vsub.f32 %v333, %v378
  %v394 = vsub.f32 %v336, %v378
  %v395 = vmul.f32 %v379, %v379
  %v396 = vmul.f32 %v380, %v380
  %v397 = vmul.f32 %v381, %v381
  %v398 = vmul.f32 %v382, %v382
  %v399 = vmul.f32 %v383, %v383
  %v400 = vmul.f32 %v384, %v384
  %v401 = vmul.f32 %v385, %v385
  %v402 = vmul.f32 %v386, %v386
  %v403 = vmul.f32 %v387, %v387
  %v404 = vmul.f32 %v388, %v388
  %v405 = vmul.f32 %v389, %v389
  %v406 = vmul.f32 %v390, %v390
  %v407 = vmul.f32 %v391, %v391
  %v408 = vmul.f32 %v392, %v392
  %v409 = vmul.f32 %v393, %v393
  %v410 = vmul.f32 %v394, %v394
  %v411 = vsel %vm339, %v395, 0.0
  %v412 = vsel %vm339, %v396, 0.0
  %v413 = vadd.f32 %v411, %v412
  %v414 = vsel %vm339, %v397, 0.0
  %v415 = vadd.f32 %v413, %v414
  %v416 = vsel %vm339, %v398, 0.0
  %v417 = vadd.f32 %v415, %v416
  %v418 = vsel %vm339, %v399, 0.0
  %v419 = vadd.f32 %v417, %v418
  %v420 = vsel %vm339, %v400, 0.0
  %v421 = vadd.f32 %v419, %v420
  %v422 = vsel %vm339, %v401, 0.0
  %v423 = vadd.f32 %v421, %v422
  %v424 = vsel %vm339, %v402, 0.0
  %v425 = vadd.f32 %v423, %v424
  %v426 = vsel %vm339, %v403, 0.0
  %v427 = vadd.f32 %v425, %v426
  %v428 = vsel %vm339, %v404, 0.0
  %v429 = vadd.f32 %v427, %v428
  %v430 = vsel %vm339, %v405, 0.0
  %v431 = vadd.f32 %v429, %v430
  %v432 = vsel %vm339, %v406, 0.0
  %v433 = vadd.f32 %v431, %v432
  %v434 = vsel %vm339, %v407, 0.0
  %v435 = vadd.f32 %v433, %v434
  %v436 = vsel %vm339, %v408, 0.0
  %v437 = vadd.f32 %v435, %v436
  %v438 = vsel %vm339, %v409, 0.0
  %v439 = vadd.f32 %v437, %v438
  %v440 = vsel %vm339, %v410, 0.0
  %v441 = vadd.f32 %v439, %v440
  %v442 = vrot.slane %v441, 4
  %v443 = vadd.f32 %v441, %v442
  %v444 = vrot.slane %v443, 2
  %v445 = vadd.f32 %v443, %v444
  %v446 = vrot.slane %v445, 1
  %v447 = vadd.f32 %v445, %v446
  %v448 = vmul.f32 %v447, %v377
  %v449 = vld [vmem:[%s2] sm:$0x1]
  %v450 = vadd.f32 %v448, 1e-05
  %v451 = vrsqrt.pop %v450
  %v452 = vmul.f32 %v449, %v451
  %v454 = vlaneseq
  %v455 = vshrl.u32 %v454, 7
  %v456 = vsub.s32 0, %v455
  %v457 = vrot.slane %v452, %v456
  %v459 = vmul.f32 %v379, %v457
  %v460 = vmul.f32 %v380, %v457
  %v461 = vmul.f32 %v381, %v457
  %v462 = vmul.f32 %v382, %v457
  %v463 = vmul.f32 %v383, %v457
  %v464 = vmul.f32 %v384, %v457
  %v465 = vmul.f32 %v385, %v457
  %v466 = vmul.f32 %v386, %v457
  %v467 = vmul.f32 %v387, %v457
  %v468 = vmul.f32 %v388, %v457
  %v469 = vmul.f32 %v389, %v457
  %v470 = vmul.f32 %v390, %v457
  %v471 = vmul.f32 %v391, %v457
  %v472 = vmul.f32 %v392, %v457
  %v473 = vmul.f32 %v393, %v457
  %v474 = vmul.f32 %v394, %v457
  %v475 = vld [vmem:[%s3] sm:$0x1]
  %v477 = vlaneseq
  %v478 = vshrl.u32 %v477, 7
  %v479 = vsub.s32 0, %v478
  %v480 = vrot.slane %v475, %v479
  %v482 = vadd.f32 %v459, %v480
  %v483 = vadd.f32 %v460, %v480
  %v484 = vadd.f32 %v461, %v480
  %v485 = vadd.f32 %v462, %v480
  %v486 = vadd.f32 %v463, %v480
  %v487 = vadd.f32 %v464, %v480
  %v488 = vadd.f32 %v465, %v480
  %v489 = vadd.f32 %v466, %v480
  %v490 = vadd.f32 %v467, %v480
  %v491 = vadd.f32 %v468, %v480
  %v492 = vadd.f32 %v469, %v480
  %v493 = vadd.f32 %v470, %v480
  %v494 = vadd.f32 %v471, %v480
  %v495 = vadd.f32 %v472, %v480
  %v496 = vadd.f32 %v473, %v480
  %v497 = vadd.f32 %v474, %v480
  %vm498 = vcmp.gt.f32.partialorder %v482, 0.0
  %vm499 = vcmp.gt.f32.partialorder %v483, 0.0
  %vm500 = vcmp.gt.f32.partialorder %v484, 0.0
  %vm501 = vcmp.gt.f32.partialorder %v485, 0.0
  %vm502 = vcmp.gt.f32.partialorder %v486, 0.0
  %vm503 = vcmp.gt.f32.partialorder %v487, 0.0
  %vm504 = vcmp.gt.f32.partialorder %v488, 0.0
  %vm505 = vcmp.gt.f32.partialorder %v489, 0.0
  %vm506 = vcmp.gt.f32.partialorder %v490, 0.0
  %vm507 = vcmp.gt.f32.partialorder %v491, 0.0
  %vm508 = vcmp.gt.f32.partialorder %v492, 0.0
  %vm509 = vcmp.gt.f32.partialorder %v493, 0.0
  %vm510 = vcmp.gt.f32.partialorder %v494, 0.0
  %vm511 = vcmp.gt.f32.partialorder %v495, 0.0
  %vm512 = vcmp.gt.f32.partialorder %v496, 0.0
  %vm513 = vcmp.gt.f32.partialorder %v497, 0.0
  %v514 = vmul.f32 %v482, 0.2
  %v515 = vmul.f32 %v483, 0.2
  %v516 = vmul.f32 %v484, 0.2
  %v517 = vmul.f32 %v485, 0.2
  %v518 = vmul.f32 %v486, 0.2
  %v519 = vmul.f32 %v487, 0.2
  %v520 = vmul.f32 %v488, 0.2
  %v521 = vmul.f32 %v489, 0.2
  %v522 = vmul.f32 %v490, 0.2
  %v523 = vmul.f32 %v491, 0.2
  %v524 = vmul.f32 %v492, 0.2
  %v525 = vmul.f32 %v493, 0.2
  %v526 = vmul.f32 %v494, 0.2
  %v527 = vmul.f32 %v495, 0.2
  %v528 = vmul.f32 %v496, 0.2
  %v529 = vmul.f32 %v497, 0.2
  %v530 = vsel %vm498, %v482, %v514
  %v531 = vsel %vm499, %v483, %v515
  %v532 = vsel %vm500, %v484, %v516
  %v533 = vsel %vm501, %v485, %v517
  %v534 = vsel %vm502, %v486, %v518
  %v535 = vsel %vm503, %v487, %v519
  %v536 = vsel %vm504, %v488, %v520
  %v537 = vsel %vm505, %v489, %v521
  %v538 = vsel %vm506, %v490, %v522
  %v539 = vsel %vm507, %v491, %v523
  %v540 = vsel %vm508, %v492, %v524
  %v541 = vsel %vm509, %v493, %v525
  %v542 = vsel %vm510, %v494, %v526
  %v543 = vsel %vm511, %v495, %v527
  %v544 = vsel %vm512, %v496, %v528
  %v545 = vsel %vm513, %v497, %v529
  %v546 = vpack.c.bf16 %v531, %v530
  %v547 = vpack.c.bf16 %v533, %v532
  %v548 = vpack.c.bf16 %v535, %v534
  %v549 = vpack.c.bf16 %v537, %v536
  %v550 = vpack.c.bf16 %v539, %v538
  %v551 = vpack.c.bf16 %v541, %v540
  %v552 = vpack.c.bf16 %v543, %v542
  %v553 = vpack.c.bf16 %v545, %v544
  %v562 = vunpack.c.l.b16 %v546
  %v563 = vunpack.c.h.b16 %v546
  %v564 = vunpack.c.l.b16 %v547
  %v565 = vunpack.c.h.b16 %v547
  %v566 = vunpack.c.l.b16 %v548
  %v567 = vunpack.c.h.b16 %v548
  %v568 = vunpack.c.l.b16 %v549
  %v569 = vunpack.c.h.b16 %v549
  %v570 = vunpack.c.l.b16 %v550
  %v571 = vunpack.c.h.b16 %v550
  %v572 = vunpack.c.l.b16 %v551
  %v573 = vunpack.c.h.b16 %v551
  %v574 = vunpack.c.l.b16 %v552
  %v575 = vunpack.c.h.b16 %v552
  %v576 = vunpack.c.l.b16 %v553
  %v577 = vunpack.c.h.b16 %v553
  %v578 = vpack.c.b16 %v562, %v562
  %v579 = vpack.c.b16 %v563, %v563
  %v580 = vpack.c.b16 %v564, %v564
  %v581 = vpack.c.b16 %v565, %v565
  %v582 = vpack.c.b16 %v566, %v566
  %v583 = vpack.c.b16 %v567, %v567
  %v584 = vpack.c.b16 %v568, %v568
  %v585 = vpack.c.b16 %v569, %v569
  %v586 = vpack.c.b16 %v570, %v570
  %v587 = vpack.c.b16 %v571, %v571
  %v588 = vpack.c.b16 %v572, %v572
  %v589 = vpack.c.b16 %v573, %v573
  %v590 = vpack.c.b16 %v574, %v574
  %v591 = vpack.c.b16 %v575, %v575
  %v592 = vpack.c.b16 %v576, %v576
  %v593 = vpack.c.b16 %v577, %v577
  %vm610 = vcmask 257024
  %611 = vst.msk [vmem:[%s4] sm:$0xf] %vm610, %v578
  %612 = vst.msk [vmem:[%s4 + $0x4] sm:$0xf] %vm610, %v579
  %613 = vst.msk [vmem:[%s4 + $0x8] sm:$0xf] %vm610, %v580
  %614 = vst.msk [vmem:[%s4 + $0xc] sm:$0xf] %vm610, %v581
  %615 = vst.msk [vmem:[%s4 + $0x10] sm:$0xf] %vm610, %v582
  %616 = vst.msk [vmem:[%s4 + $0x14] sm:$0xf] %vm610, %v583
  %617 = vst.msk [vmem:[%s4 + $0x18] sm:$0xf] %vm610, %v584
  %618 = vst.msk [vmem:[%s4 + $0x1c] sm:$0xf] %vm610, %v585
  %619 = vst.msk [vmem:[%s4 + $0x20] sm:$0xf] %vm610, %v586
  %620 = vst.msk [vmem:[%s4 + $0x24] sm:$0xf] %vm610, %v587
  %621 = vst.msk [vmem:[%s4 + $0x28] sm:$0xf] %vm610, %v588
  %622 = vst.msk [vmem:[%s4 + $0x2c] sm:$0xf] %vm610, %v589
  %623 = vst.msk [vmem:[%s4 + $0x30] sm:$0xf] %vm610, %v590
  %624 = vst.msk [vmem:[%s4 + $0x34] sm:$0xf] %vm610, %v591
  %625 = vst.msk [vmem:[%s4 + $0x38] sm:$0xf] %vm610, %v592
  %626 = vst.msk [vmem:[%s4 + $0x3c] sm:$0xf] %vm610, %v593
  // Predicated region
  $region18: #{_lambda_.6} parent=0 // pred_check
    _
  $region19: #{_lambda_.6} parent=0 // pred_check_branch
    %628 = sbr.rel (0) target = $region21
  $region20: #{_lambda_.6} parent=0 // pred_region
    _
  $region21: #{_lambda_.6} parent=0 // pred_fallthru
    _
  // Predicated region
  $region22: #{_lambda_.6} parent=0 // pred_check
    _
  $region23: #{_lambda_.6} parent=0 // pred_check_branch
    %630 = sbr.rel (0) target = $region25
  $region24: #{_lambda_.6} parent=0 // pred_region
    _
  $region25: #{_lambda_.6} parent=0 // pred_fallthru
    _

// kernel: _lambda_.7
$region0: #{_lambda_.7}
  #allocation0 [shape = 'u32[]', space=smem, size = 0x4, offset = 0x4, fixed_abs, tag = 'smem constant byte address 0x4 - core index']
  #allocation1 [shape = 'u32[144,128]{1,0:T(1,128)}', space=vmem, size = 0x12000, scoped, tag = 'internal scratch']
  %s0 = inlined_call_operand.vmem [shape: bf16[32,512], index: 0, kind: input, shape index: {}]
  %s1 = inlined_call_operand.vmem [shape: bf16[512,64], index: 1, kind: input, shape index: {}]
  %s2 = inlined_call_operand.vmem [shape: f32[1,64], index: 2, kind: input, shape index: {}]
  %s3 = inlined_call_operand.vmem [shape: f32[1,64], index: 3, kind: input, shape index: {}]
  %s4 = inlined_call_operand.vmem [shape: f32[32,64], index: 4, kind: input, shape index: {}]
  %s5 = inlined_call_operand.vmem [shape: f32[2,32], index: 5, kind: input, shape index: {}]
  %s6 = inlined_call_operand.vmem [shape: f32[2,1], index: 6, kind: output, shape index: {}]
  %s7 = sld [smem:[#allocation0]]
  $region34: #{_lambda_.7} parent=0
    _
  %s9 = ssub.s32 1, %s7
  %s10 = scalar_select 0, %s9, %s7
  // Predicated region
  $region2: #{_lambda_.7} parent=0 // pred_check
    _
  $region3: #{_lambda_.7} parent=0 // pred_check_branch
    %12 = sbr.rel (0) target = $region5
  $region4: #{_lambda_.7} parent=0 // pred_region
    _
  $region5: #{_lambda_.7} parent=0 // pred_fallthru
    _
  // Predicated region
  $region6: #{_lambda_.7} parent=0 // pred_check
    _
  $region7: #{_lambda_.7} parent=0 // pred_check_branch
    %14 = sbr.rel (0) target = $region9
  $region8: #{_lambda_.7} parent=0 // pred_region
    _
  $region9: #{_lambda_.7} parent=0 // pred_fallthru
    _
  // Predicated region
  $region10: #{_lambda_.7} parent=0 // pred_check
    _
  $region11: #{_lambda_.7} parent=0 // pred_check_branch
    %16 = sbr.rel (0) target = $region13
  $region12: #{_lambda_.7} parent=0 // pred_region
    _
  $region13: #{_lambda_.7} parent=0 // pred_fallthru
    _
  // Predicated region
  $region14: #{_lambda_.7} parent=0 // pred_check
    _
  $region15: #{_lambda_.7} parent=0 // pred_check_branch
    %18 = sbr.rel (0) target = $region17
  $region16: #{_lambda_.7} parent=0 // pred_region
    _
  $region17: #{_lambda_.7} parent=0 // pred_fallthru
    _
  // Predicated region
  $region18: #{_lambda_.7} parent=0 // pred_check
    _
  $region19: #{_lambda_.7} parent=0 // pred_check_branch
    %20 = sbr.rel (0) target = $region21
  $region20: #{_lambda_.7} parent=0 // pred_region
    _
  $region21: #{_lambda_.7} parent=0 // pred_fallthru
    _
  // Predicated region
  $region22: #{_lambda_.7} parent=0 // pred_check
    _
  $region23: #{_lambda_.7} parent=0 // pred_check_branch
    %22 = sbr.rel (0) target = $region25
  $region24: #{_lambda_.7} parent=0 // pred_region
    _
  $region25: #{_lambda_.7} parent=0 // pred_fallthru
    _
  %v24 = vld [vmem:[%s0] sm:$0xff]
  %v25 = vld [vmem:[%s0 + $0x8] sm:$0xff]
  %v26 = vld [vmem:[%s0 + $0x10] sm:$0xff]
  %v27 = vld [vmem:[%s0 + $0x18] sm:$0xff]
  %v28 = vld [vmem:[%s0 + $0x20] sm:$0xff]
  %v29 = vld [vmem:[%s0 + $0x28] sm:$0xff]
  %v30 = vld [vmem:[%s0 + $0x30] sm:$0xff]
  %v31 = vld [vmem:[%s0 + $0x38] sm:$0xff]
  %v32 = vld [vmem:[%s1] sm:$0xf]
  %v33 = vld [vmem:[%s1 + $0x4] sm:$0xf]
  %v34 = vld [vmem:[%s1 + $0x8] sm:$0xf]
  %v35 = vld [vmem:[%s1 + $0xc] sm:$0xf]
  %v36 = vld [vmem:[%s1 + $0x10] sm:$0xf]
  %v37 = vld [vmem:[%s1 + $0x14] sm:$0xf]
  %v38 = vld [vmem:[%s1 + $0x18] sm:$0xf]
  %v39 = vld [vmem:[%s1 + $0x1c] sm:$0xf]
  %v40 = vld [vmem:[%s1 + $0x20] sm:$0xf]
  %v41 = vld [vmem:[%s1 + $0x24] sm:$0xf]
  %v42 = vld [vmem:[%s1 + $0x28] sm:$0xf]
  %v43 = vld [vmem:[%s1 + $0x2c] sm:$0xf]
  %v44 = vld [vmem:[%s1 + $0x30] sm:$0xf]
  %v45 = vld [vmem:[%s1 + $0x34] sm:$0xf]
  %v46 = vld [vmem:[%s1 + $0x38] sm:$0xf]
  %v47 = vld [vmem:[%s1 + $0x3c] sm:$0xf]
  %v48 = vld [vmem:[%s1 + $0x40] sm:$0xf]
  %v49 = vld [vmem:[%s1 + $0x44] sm:$0xf]
  %v50 = vld [vmem:[%s1 + $0x48] sm:$0xf]
  %v51 = vld [vmem:[%s1 + $0x4c] sm:$0xf]
  %v52 = vld [vmem:[%s1 + $0x50] sm:$0xf]
  %v53 = vld [vmem:[%s1 + $0x54] sm:$0xf]
  %v54 = vld [vmem:[%s1 + $0x58] sm:$0xf]
  %v55 = vld [vmem:[%s1 + $0x5c] sm:$0xf]
  %v56 = vld [vmem:[%s1 + $0x60] sm:$0xf]
  %v57 = vld [vmem:[%s1 + $0x64] sm:$0xf]
  %v58 = vld [vmem:[%s1 + $0x68] sm:$0xf]
  %v59 = vld [vmem:[%s1 + $0x6c] sm:$0xf]
  %v60 = vld [vmem:[%s1 + $0x70] sm:$0xf]
  %v61 = vld [vmem:[%s1 + $0x74] sm:$0xf]
  %v62 = vld [vmem:[%s1 + $0x78] sm:$0xf]
  %v63 = vld [vmem:[%s1 + $0x7c] sm:$0xf]
  %v64 = vld [vmem:[%s1 + $0x80] sm:$0xf]
  %v65 = vld [vmem:[%s1 + $0x84] sm:$0xf]
  %v66 = vld [vmem:[%s1 + $0x88] sm:$0xf]
  %v67 = vld [vmem:[%s1 + $0x8c] sm:$0xf]
  %v68 = vld [vmem:[%s1 + $0x90] sm:$0xf]
  %v69 = vld [vmem:[%s1 + $0x94] sm:$0xf]
  %v70 = vld [vmem:[%s1 + $0x98] sm:$0xf]
  %v71 = vld [vmem:[%s1 + $0x9c] sm:$0xf]
  %v72 = vld [vmem:[%s1 + $0xa0] sm:$0xf]
  %v73 = vld [vmem:[%s1 + $0xa4] sm:$0xf]
  %v74 = vld [vmem:[%s1 + $0xa8] sm:$0xf]
  %v75 = vld [vmem:[%s1 + $0xac] sm:$0xf]
  %v76 = vld [vmem:[%s1 + $0xb0] sm:$0xf]
  %v77 = vld [vmem:[%s1 + $0xb4] sm:$0xf]
  %v78 = vld [vmem:[%s1 + $0xb8] sm:$0xf]
  %v79 = vld [vmem:[%s1 + $0xbc] sm:$0xf]
  %v80 = vld [vmem:[%s1 + $0xc0] sm:$0xf]
  %v81 = vld [vmem:[%s1 + $0xc4] sm:$0xf]
  %v82 = vld [vmem:[%s1 + $0xc8] sm:$0xf]
  %v83 = vld [vmem:[%s1 + $0xcc] sm:$0xf]
  %v84 = vld [vmem:[%s1 + $0xd0] sm:$0xf]
  %v85 = vld [vmem:[%s1 + $0xd4] sm:$0xf]
  %v86 = vld [vmem:[%s1 + $0xd8] sm:$0xf]
  %v87 = vld [vmem:[%s1 + $0xdc] sm:$0xf]
  %v88 = vld [vmem:[%s1 + $0xe0] sm:$0xf]
  %v89 = vld [vmem:[%s1 + $0xe4] sm:$0xf]
  %v90 = vld [vmem:[%s1 + $0xe8] sm:$0xf]
  %v91 = vld [vmem:[%s1 + $0xec] sm:$0xf]
  %v92 = vld [vmem:[%s1 + $0xf0] sm:$0xf]
  %v93 = vld [vmem:[%s1 + $0xf4] sm:$0xf]
  %v94 = vld [vmem:[%s1 + $0xf8] sm:$0xf]
  %v95 = vld [vmem:[%s1 + $0xfc] sm:$0xf]
  %v104 = vunpack.c.l.b16 %v24
  %v105 = vunpack.c.h.b16 %v24
  %v106 = vunpack.c.l.b16 %v25
  %v107 = vunpack.c.h.b16 %v25
  %v108 = vunpack.c.l.b16 %v26
  %v109 = vunpack.c.h.b16 %v26
  %v110 = vunpack.c.l.b16 %v27
  %v111 = vunpack.c.h.b16 %v27
  %v112 = vunpack.c.l.b16 %v28
  %v113 = vunpack.c.h.b16 %v28
  %v114 = vunpack.c.l.b16 %v29
  %v115 = vunpack.c.h.b16 %v29
  %v116 = vunpack.c.l.b16 %v30
  %v117 = vunpack.c.h.b16 %v30
  %v118 = vunpack.c.l.b16 %v31
  %v119 = vunpack.c.h.b16 %v31
  %v120 = vpack.c.b16 %v108, %v104
  %v121 = vpack.c.b16 %v109, %v105
  %v122 = vpack.c.b16 %v110, %v106
  %v123 = vpack.c.b16 %v111, %v107
  %v124 = vpack.c.b16 %v116, %v112
  %v125 = vpack.c.b16 %v117, %v113
  %v126 = vpack.c.b16 %v118, %v114
  %v127 = vpack.c.b16 %v119, %v115
  %v200 = vunpack.c.l.b16 %v32
  %v201 = vunpack.c.l.b16 %v33
  %v202 = vunpack.c.l.b16 %v34
  %v203 = vunpack.c.l.b16 %v35
  %v204 = vunpack.c.l.b16 %v36
  %v205 = vunpack.c.l.b16 %v37
  %v206 = vunpack.c.l.b16 %v38
  %v207 = vunpack.c.l.b16 %v39
  %v208 = vunpack.c.l.b16 %v40
  %v209 = vunpack.c.l.b16 %v41
  %v210 = vunpack.c.l.b16 %v42
  %v211 = vunpack.c.l.b16 %v43
  %v212 = vunpack.c.l.b16 %v44
  %v213 = vunpack.c.l.b16 %v45
  %v214 = vunpack.c.l.b16 %v46
  %v215 = vunpack.c.l.b16 %v47
  %v216 = vunpack.c.l.b16 %v48
  %v217 = vunpack.c.l.b16 %v49
  %v218 = vunpack.c.l.b16 %v50
  %v219 = vunpack.c.l.b16 %v51
  %v220 = vunpack.c.l.b16 %v52
  %v221 = vunpack.c.l.b16 %v53
  %v222 = vunpack.c.l.b16 %v54
  %v223 = vunpack.c.l.b16 %v55
  %v224 = vunpack.c.l.b16 %v56
  %v225 = vunpack.c.l.b16 %v57
  %v226 = vunpack.c.l.b16 %v58
  %v227 = vunpack.c.l.b16 %v59
  %v228 = vunpack.c.l.b16 %v60
  %v229 = vunpack.c.l.b16 %v61
  %v230 = vunpack.c.l.b16 %v62
  %v231 = vunpack.c.l.b16 %v63
  %v232 = vunpack.c.l.b16 %v64
  %v233 = vunpack.c.l.b16 %v65
  %v234 = vunpack.c.l.b16 %v66
  %v235 = vunpack.c.l.b16 %v67
  %v236 = vunpack.c.l.b16 %v68
  %v237 = vunpack.c.l.b16 %v69
  %v238 = vunpack.c.l.b16 %v70
  %v239 = vunpack.c.l.b16 %v71
  %v240 = vunpack.c.l.b16 %v72
  %v241 = vunpack.c.l.b16 %v73
  %v242 = vunpack.c.l.b16 %v74
  %v243 = vunpack.c.l.b16 %v75
  %v244 = vunpack.c.l.b16 %v76
  %v245 = vunpack.c.l.b16 %v77
  %v246 = vunpack.c.l.b16 %v78
  %v247 = vunpack.c.l.b16 %v79
  %v248 = vunpack.c.l.b16 %v80
  %v249 = vunpack.c.l.b16 %v81
  %v250 = vunpack.c.l.b16 %v82
  %v251 = vunpack.c.l.b16 %v83
  %v252 = vunpack.c.l.b16 %v84
  %v253 = vunpack.c.l.b16 %v85
  %v254 = vunpack.c.l.b16 %v86
  %v255 = vunpack.c.l.b16 %v87
  %v256 = vunpack.c.l.b16 %v88
  %v257 = vunpack.c.l.b16 %v89
  %v258 = vunpack.c.l.b16 %v90
  %v259 = vunpack.c.l.b16 %v91
  %v260 = vunpack.c.l.b16 %v92
  %v261 = vunpack.c.l.b16 %v93
  %v262 = vunpack.c.l.b16 %v94
  %v263 = vunpack.c.l.b16 %v95
  %v264 = vpack.c.b16 %v201, %v200
  %v265 = vpack.c.b16 %v203, %v202
  %v266 = vpack.c.b16 %v205, %v204
  %v267 = vpack.c.b16 %v207, %v206
  %v268 = vpack.c.b16 %v209, %v208
  %v269 = vpack.c.b16 %v211, %v210
  %v270 = vpack.c.b16 %v213, %v212
  %v271 = vpack.c.b16 %v215, %v214
  %v272 = vpack.c.b16 %v217, %v216
  %v273 = vpack.c.b16 %v219, %v218
  %v274 = vpack.c.b16 %v221, %v220
  %v275 = vpack.c.b16 %v223, %v222
  %v276 = vpack.c.b16 %v225, %v224
  %v277 = vpack.c.b16 %v227, %v226
  %v278 = vpack.c.b16 %v229, %v228
  %v279 = vpack.c.b16 %v231, %v230
  %v280 = vpack.c.b16 %v233, %v232
  %v281 = vpack.c.b16 %v235, %v234
  %v282 = vpack.c.b16 %v237, %v236
  %v283 = vpack.c.b16 %v239, %v238
  %v284 = vpack.c.b16 %v241, %v240
  %v285 = vpack.c.b16 %v243, %v242
  %v286 = vpack.c.b16 %v245, %v244
  %v287 = vpack.c.b16 %v247, %v246
  %v288 = vpack.c.b16 %v249, %v248
  %v289 = vpack.c.b16 %v251, %v250
  %v290 = vpack.c.b16 %v253, %v252
  %v291 = vpack.c.b16 %v255, %v254
  %v292 = vpack.c.b16 %v257, %v256
  %v293 = vpack.c.b16 %v259, %v258
  %v294 = vpack.c.b16 %v261, %v260
  %v295 = vpack.c.b16 %v263, %v262
  %328 = vmatprep.subr.bf16.mxu0 0
  %329 = vmatpush1.bf16.msra.mxu0 %v264
  %330 = vmatprep.subr.bf16.mxu0 0
  %331 = vmatpush1.bf16.msra.mxu0 %v265
  %332 = vmatprep.subr.bf16.mxu0 0
  %333 = vmatpush1.bf16.msra.mxu0 %v266
  %334 = vmatprep.subr.bf16.mxu0 0
  %335 = vmatpush1.bf16.msra.mxu0 %v267
  %336 = vmatprep.subr.bf16.mxu0 0
  %337 = vmatpush1.bf16.msra.mxu0 %v268
  %338 = vmatprep.subr.bf16.mxu0 0
  %339 = vmatpush1.bf16.msra.mxu0 %v269
  %340 = vmatprep.subr.bf16.mxu0 0
  %341 = vmatpush1.bf16.msra.mxu0 %v270
  %342 = vmatprep.subr.bf16.mxu0 0
  %343 = vmatpush1.bf16.msra.mxu0 %v271
  %344 = vmatprep.subr.bf16.mxu0 0
  %345 = vmatpush1.bf16.msra.mxu0 %v272
  %346 = vmatprep.subr.bf16.mxu0 0
  %347 = vmatpush1.bf16.msra.mxu0 %v273
  %348 = vmatprep.subr.bf16.mxu0 0
  %349 = vmatpush1.bf16.msra.mxu0 %v274
  %350 = vmatprep.subr.bf16.mxu0 0
  %351 = vmatpush1.bf16.msra.mxu0 %v275
  %352 = vmatprep.subr.bf16.mxu0 0
  %353 = vmatpush1.bf16.msra.mxu0 %v276
  %354 = vmatprep.subr.bf16.mxu0 0
  %355 = vmatpush1.bf16.msra.mxu0 %v277
  %356 = vmatprep.subr.bf16.mxu0 0
  %357 = vmatpush1.bf16.msra.mxu0 %v278
  %358 = vmatprep.subr.bf16.mxu0 0
  %359 = vmatpush1.bf16.msra.mxu0 %v279
  %360 = vmatprep.mubr.bf16.mxu0 %v121
  %361 = vmatmul.mubr.bf16.gmra.mrb[0].mxu0 %v120
  %v362 = vpop.f32.mrb[0].mxu0
  %v363 = vadd.f32 0.0, %v362
  %v364 = vpop.f32.mrb[0].mxu0
  %v365 = vpop.f32.mrb[0].mxu0
  %v366 = vadd.f32 0.0, %v365
  %v367 = vpop.f32.mrb[0].mxu0
  %368 = vmatprep.mubr.bf16.mxu0 %v125
  %369 = vmatmul.mubr.bf16.gmra.mrb[0].mxu0 %v124
  %v370 = vpop.f32.mrb[0].mxu0
  %v371 = vadd.f32 0.0, %v370
  %v372 = vpop.f32.mrb[0].mxu0
  %v373 = vpop.f32.mrb[0].mxu0
  %v374 = vadd.f32 0.0, %v373
  %v375 = vpop.f32.mrb[0].mxu0
  %376 = vdwg.mxu0
  %377 = vmatprep.subr.bf16.mxu0 0
  %378 = vmatpush1.bf16.msra.mxu0 %v280
  %379 = vmatprep.subr.bf16.mxu0 0
  %380 = vmatpush1.bf16.msra.mxu0 %v281
  %381 = vmatprep.subr.bf16.mxu0 0
  %382 = vmatpush1.bf16.msra.mxu0 %v282
  %383 = vmatprep.subr.bf16.mxu0 0
  %384 = vmatpush1.bf16.msra.mxu0 %v283
  %385 = vmatprep.subr.bf16.mxu0 0
  %386 = vmatpush1.bf16.msra.mxu0 %v284
  %387 = vmatprep.subr.bf16.mxu0 0
  %388 = vmatpush1.bf16.msra.mxu0 %v285
  %389 = vmatprep.subr.bf16.mxu0 0
  %390 = vmatpush1.bf16.msra.mxu0 %v286
  %391 = vmatprep.subr.bf16.mxu0 0
  %392 = vmatpush1.bf16.msra.mxu0 %v287
  %393 = vmatprep.subr.bf16.mxu0 0
  %394 = vmatpush1.bf16.msra.mxu0 %v288
  %395 = vmatprep.subr.bf16.mxu0 0
  %396 = vmatpush1.bf16.msra.mxu0 %v289
  %397 = vmatprep.subr.bf16.mxu0 0
  %398 = vmatpush1.bf16.msra.mxu0 %v290
  %399 = vmatprep.subr.bf16.mxu0 0
  %400 = vmatpush1.bf16.msra.mxu0 %v291
  %401 = vmatprep.subr.bf16.mxu0 0
  %402 = vmatpush1.bf16.msra.mxu0 %v292
  %403 = vmatprep.subr.bf16.mxu0 0
  %404 = vmatpush1.bf16.msra.mxu0 %v293
  %405 = vmatprep.subr.bf16.mxu0 0
  %406 = vmatpush1.bf16.msra.mxu0 %v294
  %407 = vmatprep.subr.bf16.mxu0 0
  %408 = vmatpush1.bf16.msra.mxu0 %v295
  %409 = vmatprep.mubr.bf16.mxu0 %v123
  %410 = vmatmul.mubr.bf16.gmra.mrb[0].mxu0 %v122
  %v411 = vpop.f32.mrb[0].mxu0
  %v412 = vadd.f32 %v363, %v411
  %v413 = vpop.f32.mrb[0].mxu0
  %v414 = vpop.f32.mrb[0].mxu0
  %v415 = vadd.f32 %v366, %v414
  %v416 = vpop.f32.mrb[0].mxu0
  %417 = vmatprep.mubr.bf16.mxu0 %v127
  %418 = vmatmul.mubr.bf16.gmra.mrb[0].mxu0 %v126
  %v419 = vpop.f32.mrb[0].mxu0
  %v420 = vadd.f32 %v371, %v419
  %v421 = vpop.f32.mrb[0].mxu0
  %v422 = vpop.f32.mrb[0].mxu0
  %v423 = vadd.f32 %v374, %v422
  %v424 = vpop.f32.mrb[0].mxu0
  %425 = vdwg.mxu0
  %vm426 = vcmask 523264
  %v427 = vsel %vm426, %v412, 0.0
  %v428 = vsel %vm426, %v415, 0.0
  %v429 = vadd.f32 %v427, %v428
  %v430 = vsel %vm426, %v420, 0.0
  %v431 = vadd.f32 %v429, %v430
  %v432 = vsel %vm426, %v423, 0.0
  %v433 = vadd.f32 %v431, %v432
  %v434 = vrot.slane %v433, 4
  %v435 = vadd.f32 %v433, %v434
  %v436 = vrot.slane %v435, 2
  %v437 = vadd.f32 %v435, %v436
  %v438 = vrot.slane %v437, 1
  %v439 = vadd.f32 %v437, %v438
  %v440 = vrcp.pop 32.0
  %v441 = vmul.f32 %v439, %v440
  %v442 = vsub.f32 %v412, %v441
  %v443 = vsub.f32 %v415, %v441
  %v444 = vsub.f32 %v420, %v441
  %v445 = vsub.f32 %v423, %v441
  %v446 = vmul.f32 %v442, %v442
  %v447 = vmul.f32 %v443, %v443
  %v448 = vmul.f32 %v444, %v444
  %v449 = vmul.f32 %v445, %v445
  %v450 = vsel %vm426, %v446, 0.0
  %v451 = vsel %vm426, %v447, 0.0
  %v452 = vadd.f32 %v450, %v451
  %v453 = vsel %vm426, %v448, 0.0
  %v454 = vadd.f32 %v452, %v453
  %v455 = vsel %vm426, %v449, 0.0
  %v456 = vadd.f32 %v454, %v455
  %v457 = vrot.slane %v456, 4
  %v458 = vadd.f32 %v456, %v457
  %v459 = vrot.slane %v458, 2
  %v460 = vadd.f32 %v458, %v459
  %v461 = vrot.slane %v460, 1
  %v462 = vadd.f32 %v460, %v461
  %v463 = vmul.f32 %v462, %v440
  %v464 = vld [vmem:[%s2] sm:$0x1]
  %v465 = vadd.f32 %v463, 1e-05
  %v466 = vrsqrt.pop %v465
  %v467 = vmul.f32 %v464, %v466
  %v469 = vlaneseq
  %v470 = vshrl.u32 %v469, 7
  %v471 = vsub.s32 0, %v470
  %v472 = vrot.slane %v467, %v471
  %v474 = vmul.f32 %v442, %v472
  %v475 = vmul.f32 %v443, %v472
  %v476 = vmul.f32 %v444, %v472
  %v477 = vmul.f32 %v445, %v472
  %v478 = vld [vmem:[%s3] sm:$0x1]
  %v480 = vlaneseq
  %v481 = vshrl.u32 %v480, 7
  %v482 = vsub.s32 0, %v481
  %v483 = vrot.slane %v478, %v482
  %v485 = vadd.f32 %v474, %v483
  %v486 = vadd.f32 %v475, %v483
  %v487 = vadd.f32 %v476, %v483
  %v488 = vadd.f32 %v477, %v483
  %vm489 = vcmp.gt.f32.partialorder %v485, 0.0
  %vm490 = vcmp.gt.f32.partialorder %v486, 0.0
  %vm491 = vcmp.gt.f32.partialorder %v487, 0.0
  %vm492 = vcmp.gt.f32.partialorder %v488, 0.0
  %v493 = vmul.f32 %v485, 0.2
  %v494 = vmul.f32 %v486, 0.2
  %v495 = vmul.f32 %v487, 0.2
  %v496 = vmul.f32 %v488, 0.2
  %v497 = vsel %vm489, %v485, %v493
  %v498 = vsel %vm490, %v486, %v494
  %v499 = vsel %vm491, %v487, %v495
  %v500 = vsel %vm492, %v488, %v496
  %v501 = vld [vmem:[%s4] sm:$0xff]
  %v502 = vld [vmem:[%s4 + $0x8] sm:$0xff]
  %v503 = vld [vmem:[%s4 + $0x10] sm:$0xff]
  %v504 = vld [vmem:[%s4 + $0x18] sm:$0xff]
  %v505 = vmul.f32 %v497, %v501
  %v506 = vmul.f32 %v498, %v502
  %v507 = vmul.f32 %v499, %v503
  %v508 = vmul.f32 %v500, %v504
  %v509 = vld [vmem:[%s5] sm:$0x3]
  %vm510 = vcmask 261120
  %v512 = vsel %vm510, %v509, 0
  %514 = vmatprep.subr.mxu0 0.0
  %515 = vmatpush1.msra.mxu0 %v505
  %516 = vmatprep.subr.mxu0 0.0
  %517 = vmatpush1.msra.mxu0 %v506
  %518 = vmatprep.subr.mxu0 0.0
  %519 = vmatpush1.msra.mxu0 %v507
  %520 = vmatprep.subr.mxu0 0.0
  %521 = vmatpush1.msra.mxu0 %v508
  %522 = vmatprep.subr.mxu0 0.0
  %523 = vmatpush1.msra.mxu0 0.0
  %524 = vmatprep.subr.mxu0 0.0
  %525 = vmatpush1.msra.mxu0 0.0
  %526 = vmatprep.subr.mxu0 0.0
  %527 = vmatpush1.msra.mxu0 0.0
  %528 = vmatprep.subr.mxu0 0.0
  %529 = vmatpush1.msra.mxu0 0.0
  %530 = vmatprep.subr.mxu0 0.0
  %531 = vmatpush1.msra.mxu0 0.0
  %532 = vmatprep.subr.mxu0 0.0
  %533 = vmatpush1.msra.mxu0 0.0
  %534 = vmatprep.subr.mxu0 0.0
  %535 = vmatpush1.msra.mxu0 0.0
  %536 = vmatprep.subr.mxu0 0.0
  %537 = vmatpush1.msra.mxu0 0.0
  %538 = vmatprep.subr.mxu0 0.0
  %539 = vmatpush1.msra.mxu0 0.0
  %540 = vmatprep.subr.mxu0 0.0
  %541 = vmatpush1.msra.mxu0 0.0
  %542 = vmatprep.subr.mxu0 0.0
  %543 = vmatpush1.msra.mxu0 0.0
  %544 = vmatprep.subr.mxu0 0.0
  %545 = vmatpush1.msra.mxu0 0.0
  %546 = vmatprep.subr.mxu0 0.0
  %547 = vmatpush1.msra.mxu0 0.0
  %548 = vmatprep.subr.mxu0 0.0
  %549 = vmatpush1.msra.mxu0 0.0
  %550 = vmatprep.subr.mxu0 0.0
  %551 = vmatpush1.msra.mxu0 0.0
  %552 = vmatprep.subr.mxu0 0.0
  %553 = vmatpush1.msra.mxu0 0.0
  %554 = vmatprep.subr.mxu0 0.0
  %555 = vmatpush1.msra.mxu0 0.0
  %556 = vmatprep.subr.mxu0 0.0
  %557 = vmatpush1.msra.mxu0 0.0
  %558 = vmatprep.subr.mxu0 0.0
  %559 = vmatpush1.msra.mxu0 0.0
  %560 = vmatprep.subr.mxu0 0.0
  %561 = vmatpush1.msra.mxu0 0.0
  %562 = vmatprep.subr.mxu0 0.0
  %563 = vmatpush1.msra.mxu0 0.0
  %564 = vmatprep.subr.mxu0 0.0
  %565 = vmatpush1.msra.mxu0 0.0
  %566 = vmatprep.subr.mxu0 0.0
  %567 = vmatpush1.msra.mxu0 0.0
  %568 = vmatprep.subr.mxu0 0.0
  %569 = vmatpush1.msra.mxu0 0.0
  %570 = vmatprep.subr.mxu0 0.0
  %571 = vmatpush1.msra.mxu0 0.0
  %572 = vmatprep.subr.mxu0 0.0
  %573 = vmatpush1.msra.mxu0 0.0
  %574 = vmatprep.subr.mxu0 0.0
  %575 = vmatpush1.msra.mxu0 0.0
  %576 = vmatprep.subr.mxu0 0.0
  %577 = vmatpush1.msra.mxu0 0.0
  %578 = vmatprep.mubr.f32.mxu0 0.0
  %579 = vmatmul.mubr.f32.gmra.mrb[0].mxu0 %v512
  %v580 = vpop.f32.mrb[0].mxu0
  %v581 = vadd.f32 0.0, %v580
  %v582 = vpop.f32.mrb[0].mxu0
  %583 = vdwg.mxu0
  %vm584 = vcmask 517120
  %v585 = vsel %vm584, %v581, 0.0
  %586 = vadd.xlane.f32.xlu0 %v585
  %v587 = vpop.xlane.xlu0 %586
  %vm588 = vcmask 1024
  %589 = vst.msk [vmem:[%s6] sm:$0x3] %vm588, %v587
  // Predicated region
  $region26: #{_lambda_.7} parent=0 // pred_check
    _
  $region27: #{_lambda_.7} parent=0 // pred_check_branch
    %591 = sbr.rel (0) target = $region29
  $region28: #{_lambda_.7} parent=0 // pred_region
    _
  $region29: #{_lambda_.7} parent=0 // pred_fallthru
    _
  // Predicated region
  $region30: #{_lambda_.7} parent=0 // pred_check
    _
  $region31: #{_lambda_.7} parent=0 // pred_check_branch
    %593 = sbr.rel (0) target = $region33
  $region32: #{_lambda_.7} parent=0 // pred_region
    _
  $region33: #{_lambda_.7} parent=0 // pred_fallthru
    _

</llo_original>
